<compile_context>
chip_gen: v6e
topology: v6e:2x2x1
jax: 0.10.0
libtpu: 0.0.40
codegen_flags: <defaults>
</compile_context>

<pallas_src>
import numpy as np
import jax
import jax.numpy as jnp
from jax import lax
from jax.experimental import pallas as pl
from jax.experimental.pallas import tpu as pltpu


# ----------------------------------------------------------------------------
# Bilinear (align_corners=True) interpolation matrices, torch semantics
# ----------------------------------------------------------------------------
def _bilinear_matrix(n_in, n_out):
    """[n_out, n_in] interpolation matrix for align_corners=True bilinear."""
    if n_in == 1:
        return jnp.ones((n_out, 1), jnp.float32)
    src = jnp.arange(n_out, dtype=jnp.float32) * (n_in - 1) / (n_out - 1)
    i0 = jnp.clip(jnp.floor(src).astype(jnp.int32), 0, n_in - 2)
    w = src - i0.astype(jnp.float32)
    rows = jnp.arange(n_out)
    m = jnp.zeros((n_out, n_in), jnp.float32)
    m = m.at[rows, i0].add(1.0 - w)
    m = m.at[rows, i0 + 1].add(w)
    return m


# ----------------------------------------------------------------------------
# Static (Python-int) version of UpConvBlock.padfix
# ----------------------------------------------------------------------------
def _padfix_static(h_up, w_up, h_br, w_br):
    """Returns (crop_t, crop_b, crop_l, crop_r) applied to `up` and
    (pad_t, pad_b, pad_l, pad_r) applied to `bridge`.

    Faithful to the torch code: the bridge only ever gets zero-padded
    (diff > 0), the upsampled tensor only ever gets cropped (F.pad with
    negative amounts when diff < 0)."""
    crop = [0, 0, 0, 0]
    padb = [0, 0, 0, 0]
    dZ = h_up - h_br
    dY = w_up - w_br
    if dZ > 0:
        padb[0], padb[1] = dZ // 2, dZ - dZ // 2
    elif dZ < 0:
        crop[0], crop[1] = -(dZ // 2), -(dZ - dZ // 2)
    if dY > 0:
        padb[2], padb[3] = dY // 2, dY - dY // 2
    elif dY < 0:
        crop[2], crop[3] = -(dY // 2), -(dY - dY // 2)
    return tuple(crop), tuple(padb)


# ----------------------------------------------------------------------------
# Fused kernel: upsample + padfix-crop + concat + 3x (conv3x3 + bias + ReLU)
# ----------------------------------------------------------------------------
def _make_fused_kernel(*, c_up, h_in, w_in, c_out, pad, crop, compute_dtype):
    h_up, w_up = 2 * h_in, 2 * w_in
    ct, cb, cl, cr = crop

    def _pad_spatial(a, p):
        # zero-pad the two trailing (spatial) dims of a [C, H, W] value
        if p == 0:
            return a
        c, h, w = a.shape
        zr = jnp.zeros((c, p, w), a.dtype)
        a = jnp.concatenate([zr, a, zr], axis=1)
        zc = jnp.zeros((c, h + 2 * p, p), a.dtype)
        a = jnp.concatenate([zc, a, zc], axis=2)
        return a

    def _conv3x3_relu(act, w_flat_t, bias_col):
        # act: [Cin, H, W] (compute_dtype); w_flat_t: [Cout, 9*Cin];
        # bias_col: [Cout, 1] f32.  Single K=9*Cin MXU contraction, f32 acc.
        cin, h, w = act.shape
        ap = _pad_spatial(act, pad)
        ho, wo = h + 2 * pad - 2, w + 2 * pad - 2
        slabs = []
        for dy in range(3):                   # im2col gather done once
            for dx in range(3):
                slabs.append(ap[:, dy:dy + ho, dx:dx + wo])
        patches = jnp.concatenate(slabs, axis=0)          # [9*Cin, Ho, Wo]
        patches = patches.reshape(9 * cin, ho * wo)       # [9*Cin, Ho*Wo]
        out = jnp.dot(w_flat_t.astype(compute_dtype),
                      patches.astype(compute_dtype),
                      preferred_element_type=jnp.float32)  # [Cout, Ho*Wo] f32
        out = jnp.maximum(out + bias_col, 0.0)             # bias+ReLU in f32
        return out, ho, wo

    def kernel(x_ref, br_ref, mh_ref, mwt_ref, w1_ref, w2_ref, w3_ref, b_ref,
               o_ref):
        # ---- bilinear x2 upsample (align_corners=True), separable ----------
        # x_ref block: [1, C*H, W]  (channels-major, rows indexed by (c, h))
        x = x_ref[0]                                        # [C*H, W]
        t1 = jnp.dot(x, mwt_ref[...],
                     preferred_element_type=jnp.float32)    # [C*H, Wup]
        t1 = t1.reshape(c_up, h_in, w_up).astype(compute_dtype)
        mh_b = jnp.broadcast_to(mh_ref[...], (c_up, h_up, h_in))
        up = jnp.einsum('coh,chw->cow', mh_b, t1,
                        preferred_element_type=jnp.float32)  # [C, Hup, Wup]
        up = up.astype(compute_dtype)

        # ---- padfix on `up` (static crop; bridge padding done in wrapper) --
        up = up[:, ct:h_up - cb, cl:w_up - cr]               # [C, Ht, Wt]

        # ---- channel concat, kept in VMEM (never round-trips HBM) ----------
        act = jnp.concatenate([up, br_ref[0]], axis=0)       # [C+Cb, Ht, Wt]

        # ---- DownConvBlock(pool=False): 3x (conv3x3 + bias + ReLU) ---------
        b_all = b_ref[...]                                   # [Cout, 3] f32
        o1, h1, w1 = _conv3x3_relu(act, w1_ref[...], b_all[:, 0:1])
        o1 = o1.astype(compute_dtype).reshape(c_out, h1, w1)
        o2, h2, w2 = _conv3x3_relu(o1, w2_ref[...], b_all[:, 1:2])
        o2 = o2.astype(compute_dtype).reshape(c_out, h2, w2)
        o3, _, _ = _conv3x3_relu(o2, w3_ref[...], b_all[:, 2:3])

        # lane-dense NCHW-flattened store: [Cout, Hf*Wf]
        o_ref[0] = o3.astype(o_ref.dtype)

    return kernel


# ----------------------------------------------------------------------------
# UpConvBlock (bilinear=True) with deterministic He-normal weights
# ----------------------------------------------------------------------------
class UpConvBlockPallas:
    def __init__(self, input_dim, output_dim, padding, key,
                 compute_dtype=jnp.bfloat16):
        self.input_dim = int(input_dim)
        self.output_dim = int(output_dim)
        self.padding = int(padding)
        self.compute_dtype = compute_dtype
        ks = jax.random.split(key, 6)

        def he(k, cin, cout):
            fan_in = 3 * 3 * cin
            return (jax.random.normal(k, (3, 3, cin, cout), jnp.float32)
                    * np.sqrt(2.0 / fan_in))

        # conv_block = DownConvBlock(input_dim, output_dim, pool=False)
        self.w1 = he(ks[0], input_dim, output_dim)     # HWIO, f32 (reference)
        self.w2 = he(ks[1], output_dim, output_dim)
        self.w3 = he(ks[2], output_dim, output_dim)
        self.b1 = 0.1 * jax.random.normal(ks[3], (output_dim,), jnp.float32)
        self.b2 = 0.1 * jax.random.normal(ks[4], (output_dim,), jnp.float32)
        self.b3 = 0.1 * jax.random.normal(ks[5], (output_dim,), jnp.float32)

        # Kernel-side weights: flat 2-D [Cout, 9*Cin] slabs (one contiguous
        # DMA each; feeds the single K=9*Cin matmul directly).
        def flat_t(w):
            cin, cout = w.shape[2], w.shape[3]
            return w.reshape(9 * cin, cout).T.astype(compute_dtype)

        self.w1f = flat_t(self.w1)
        self.w2f = flat_t(self.w2)
        self.w3f = flat_t(self.w3)
        # Biases stacked as a single [Cout, 3] f32 block, added in the f32
        # epilogue (no per-conv broadcast input).
        self.b_all = jnp.stack([self.b1, self.b2, self.b3], axis=1)

    def __call__(self, x_nchw, bridge_nchw):
        N, C, H, W = x_nchw.shape
        Nb, Cb, Hb, Wb = bridge_nchw.shape
        assert N == Nb and C + Cb == self.input_dim
        h_up, w_up = 2 * H, 2 * W

        crop, padb = _padfix_static(h_up, w_up, Hb, Wb)
        Ht = h_up - crop[0] - crop[1]
        Wt = w_up - crop[2] - crop[3]
        Hbp = Hb + padb[0] + padb[1]
        Wbp = Wb + padb[2] + padb[3]
        # torch.cat would fail otherwise (module also asserts on the W dim)
        assert Ht == Hbp and Wt == Wbp, "padfix produced mismatched shapes"

        p = self.padding
        Hf, Wf = Ht, Wt
        for _ in range(3):
            Hf, Wf = Hf + 2 * p - 2, Wf + 2 * p - 2
        assert Hf > 0 and Wf > 0

        cdt = self.compute_dtype
        Cout = self.output_dim

        # wrapper-side layout plumbing (cheap XLA ops on tiny tensors)
        x_cm = x_nchw.reshape(N, C * H, W).astype(cdt)
        bridge = bridge_nchw
        if any(padb):
            bridge = jnp.pad(bridge, ((0, 0), (0, 0),
                                      (padb[0], padb[1]), (padb[2], padb[3])))
        bridge = bridge.astype(cdt)                          # [N, Cb, Ht, Wt]

        mh = _bilinear_matrix(H, h_up).astype(cdt)           # [Hup, H]
        mwt = _bilinear_matrix(W, w_up).T.astype(cdt)        # [W,  Wup]

        kernel = _make_fused_kernel(
            c_up=C, h_in=H, w_in=W, c_out=Cout, pad=p, crop=crop,
            compute_dtype=cdt)

        out = pl.pallas_call(
            kernel,
            out_shape=jax.ShapeDtypeStruct((N, Cout, Hf * Wf), jnp.float32),
            grid=(N,),
            in_specs=[
                pl.BlockSpec((1, C * H, W), lambda n: (n, 0, 0)),
                pl.BlockSpec((1, Cb, Ht, Wt), lambda n: (n, 0, 0, 0)),
                pl.BlockSpec((h_up, H), lambda n: (0, 0)),
                pl.BlockSpec((W, w_up), lambda n: (0, 0)),
                pl.BlockSpec((Cout, 9 * self.input_dim), lambda n: (0, 0)),
                pl.BlockSpec((Cout, 9 * Cout), lambda n: (0, 0)),
                pl.BlockSpec((Cout, 9 * Cout), lambda n: (0, 0)),
                pl.BlockSpec((Cout, 3), lambda n: (0, 0)),
            ],
            out_specs=pl.BlockSpec((1, Cout, Hf * Wf), lambda n: (n, 0, 0)),
            compiler_params=pltpu.CompilerParams(
                dimension_semantics=("parallel",),
                vmem_limit_bytes=32 * 1024 * 1024),
        )(x_cm, bridge, mh, mwt, self.w1f, self.w2f, self.w3f, self.b_all)

        return out.reshape(N, Cout, Hf, Wf)                  # NCHW


# ----------------------------------------------------------------------------
# Pure-JAX f32 reference (lax.conv + einsum upsample, independent of the
# Pallas im2col / channels-major layout path)
# ----------------------------------------------------------------------------
def _reference_forward(block, x_nchw, bridge_nchw):
    x = x_nchw.astype(jnp.float32)
    bridge = bridge_nchw.astype(jnp.float32)
    _, _, H, W = x.shape
    mh = _bilinear_matrix(H, 2 * H)
    mw = _bilinear_matrix(W, 2 * W)
    up = jnp.einsum('oh,nchw->ncow', mh, x)
    up = jnp.einsum('pw,ncow->ncop', mw, up)

    def pad_or_crop(a, axis, lo, hi):
        if lo < 0:
            a = lax.slice_in_dim(a, -lo, a.shape[axis], axis=axis)
            lo = 0
        if hi < 0:
            a = lax.slice_in_dim(a, 0, a.shape[axis] + hi, axis=axis)
            hi = 0
        pads = [(0, 0)] * a.ndim
        pads[axis] = (lo, hi)
        return jnp.pad(a, pads)

    dZ = up.shape[2] - bridge.shape[2]
    dY = up.shape[3] - bridge.shape[3]
    if dZ > 0:
        bridge = pad_or_crop(bridge, 2, dZ // 2, dZ - dZ // 2)
    elif dZ < 0:
        up = pad_or_crop(up, 2, dZ // 2, dZ - dZ // 2)
    if dY > 0:
        bridge = pad_or_crop(bridge, 3, dY // 2, dY - dY // 2)
    elif dY < 0:
        up = pad_or_crop(up, 3, dY // 2, dY - dY // 2)
    out = jnp.concatenate([up, bridge], axis=1)

    def conv(o, w, b):
        p = block.padding
        o = lax.conv_general_dilated(
            o, w, window_strides=(1, 1), padding=[(p, p), (p, p)],
            dimension_numbers=('NCHW', 'HWIO', 'NCHW'))
        return jnp.maximum(o + b[None, :, None, None], 0.0)

    out = conv(out, block.w1, block.b1)
    out = conv(out, block.w2, block.b2)
    out = conv(out, block.w3, block.b3)
    return out


if __name__ == "__main__":
    key = jax.random.PRNGKey(0)
    k_param, k_x, k_b, k_b2 = jax.random.split(key, 4)

    # x: [N, C, H, W] low-res features; bridge: skip connection at 2x spatial.
    x = jax.random.normal(k_x, (2, 4, 8, 8), jnp.float32)
    bridge = jax.random.normal(k_b, (2, 4, 16, 16), jnp.float32)

    # --- tight correctness check: f32 compute path vs. lax.conv reference ---
    block_f32 = UpConvBlockPallas(input_dim=8, output_dim=4, padding=1,
                                  key=k_param, compute_dtype=jnp.float32)
    out = jax.block_until_ready(block_f32(x, bridge))
    assert out.shape == (2, 4, 16, 16), out.shape
    ref = jax.block_until_ready(_reference_forward(block_f32, x, bridge))
    np.testing.assert_allclose(np.asarray(out), np.asarray(ref),
                               rtol=1e-4, atol=1e-4)

    # --- padfix path: bridge one row smaller -> zero-padded before concat ---
    bridge_odd = jax.random.normal(k_b2, (2, 4, 15, 16), jnp.float32)
    out_odd = jax.block_until_ready(block_f32(x, bridge_odd))
    ref_odd = jax.block_until_ready(
        _reference_forward(block_f32, x, bridge_odd))
    np.testing.assert_allclose(np.asarray(out_odd), np.asarray(ref_odd),
                               rtol=1e-4, atol=1e-4)

    # --- performance configuration: bf16 MXU inputs, f32 accumulation -------
    block_bf16 = UpConvBlockPallas(input_dim=8, output_dim=4, padding=1,
                                   key=k_param, compute_dtype=jnp.bfloat16)
    out_bf16 = jax.block_until_ready(block_bf16(x, bridge))
    assert out_bf16.shape == (2, 4, 16, 16), out_bf16.shape
    np.testing.assert_allclose(np.asarray(out_bf16), np.asarray(ref),
                               rtol=5e-2, atol=5e-2)   # bf16 vs f32 reference

    print("KERNEL_OK")
</pallas_src>

<mosaic_0001>
module attributes {stable_mosaic.version = 11 : i64} {
  func.func @kernel(%arg0: i32, %arg1: memref<1x32x8xf32, #tpu.memory_space<vmem>>, %arg2: memref<1x4x16x16xf32, #tpu.memory_space<vmem>>, %arg3: memref<16x8xf32, #tpu.memory_space<vmem>>, %arg4: memref<8x16xf32, #tpu.memory_space<vmem>>, %arg5: memref<4x72xf32, #tpu.memory_space<vmem>>, %arg6: memref<4x36xf32, #tpu.memory_space<vmem>>, %arg7: memref<4x36xf32, #tpu.memory_space<vmem>>, %arg8: memref<4x3xf32, #tpu.memory_space<vmem>>, %arg9: memref<1x4x256xf32, #tpu.memory_space<vmem>>) attributes {dimension_semantics = [#tpu.dimension_semantics<parallel>], iteration_bounds = array<i64: 2>, scalar_prefetch = 0 : i64, scratch_operands = 0 : i64, tpu.core_type = #tpu.core_type<tc>, window_params = [{transform_indices = @transform_0, window_bounds = array<i64: 1, 32, 8>}, {transform_indices = @transform_1, window_bounds = array<i64: 1, 4, 16, 16>}, {pipeline_mode = #tpu.pipeline_mode<synchronous>, transform_indices = @transform_2, window_bounds = array<i64: 16, 8>}, {pipeline_mode = #tpu.pipeline_mode<synchronous>, transform_indices = @transform_3, window_bounds = array<i64: 8, 16>}, {pipeline_mode = #tpu.pipeline_mode<synchronous>, transform_indices = @transform_4, window_bounds = array<i64: 4, 72>}, {pipeline_mode = #tpu.pipeline_mode<synchronous>, transform_indices = @transform_5, window_bounds = array<i64: 4, 36>}, {pipeline_mode = #tpu.pipeline_mode<synchronous>, transform_indices = @transform_6, window_bounds = array<i64: 4, 36>}, {pipeline_mode = #tpu.pipeline_mode<synchronous>, transform_indices = @transform_7, window_bounds = array<i64: 4, 3>}, {transform_indices = @transform_8, window_bounds = array<i64: 1, 4, 256>}]} {
    %c0 = arith.constant 0 : index
    %c0_0 = arith.constant 0 : index
    %c0_1 = arith.constant 0 : index
    %0 = vector.load %arg1[%c0, %c0_0, %c0_1] : memref<1x32x8xf32, #tpu.memory_space<vmem>>, vector<1x32x8xf32>
    %1 = vector.shape_cast %0 : vector<1x32x8xf32> to vector<32x8xf32>
    %c0_2 = arith.constant 0 : index
    %c0_3 = arith.constant 0 : index
    %2 = vector.load %arg4[%c0_2, %c0_3] : memref<8x16xf32, #tpu.memory_space<vmem>>, vector<8x16xf32>
    %cst = arith.constant dense<0.000000e+00> : vector<32x16xf32>
    %3 = tpu.matmul %1, %2, %cst {dimension_numbers = #tpu.dot_dimension_numbers<[1], [0], [0], [1], [0, 0, 1, 1], [], []>} : vector<32x8xf32>, vector<8x16xf32>, vector<32x16xf32> -> vector<32x16xf32>
    %4 = vector.shape_cast %3 : vector<32x16xf32> to vector<4x8x16xf32>
    %c0_4 = arith.constant 0 : index
    %c0_5 = arith.constant 0 : index
    %5 = vector.load %arg3[%c0_4, %c0_5] : memref<16x8xf32, #tpu.memory_space<vmem>>, vector<16x8xf32>
    %6 = vector.shape_cast %5 : vector<16x8xf32> to vector<1x16x8xf32>
    %7 = vector.broadcast %6 : vector<1x16x8xf32> to vector<4x16x8xf32>
    "tpu.trace_start"() <{level = 10 : i32, message = "coh,chw->cow"}> : () -> ()
    %cst_6 = arith.constant dense<0.000000e+00> : vector<4x16x16xf32>
    %8 = tpu.matmul %7, %4, %cst_6 {dimension_numbers = #tpu.dot_dimension_numbers<[2], [1], [1], [2], [0, 0, 0, 1, 1, 2], [0], [0]>} : vector<4x16x8xf32>, vector<4x8x16xf32>, vector<4x16x16xf32> -> vector<4x16x16xf32>
    "tpu.trace_stop"() : () -> ()
    %c0_7 = arith.constant 0 : index
    %c0_8 = arith.constant 0 : index
    %c0_9 = arith.constant 0 : index
    %c0_10 = arith.constant 0 : index
    %9 = vector.load %arg2[%c0_7, %c0_8, %c0_9, %c0_10] : memref<1x4x16x16xf32, #tpu.memory_space<vmem>>, vector<1x4x16x16xf32>
    %10 = vector.shape_cast %9 : vector<1x4x16x16xf32> to vector<4x16x16xf32>
    %11 = tpu.concatenate %8, %10 in 0 : vector<4x16x16xf32>, vector<4x16x16xf32> -> vector<8x16x16xf32>
    %c0_11 = arith.constant 0 : index
    %c0_12 = arith.constant 0 : index
    %12 = vector.load %arg8[%c0_11, %c0_12] : memref<4x3xf32, #tpu.memory_space<vmem>>, vector<4x3xf32>
    %c0_13 = arith.constant 0 : index
    %c0_14 = arith.constant 0 : index
    %13 = vector.load %arg5[%c0_13, %c0_14] : memref<4x72xf32, #tpu.memory_space<vmem>>, vector<4x72xf32>
    %14 = vector.extract_strided_slice %12 {offsets = [0, 0], sizes = [4, 1], strides = [1, 1]} : vector<4x3xf32> to vector<4x1xf32>
    %cst_15 = arith.constant 0.000000e+00 : f32
    %15 = vector.broadcast %cst_15 : f32 to vector<8x1x16xf32>
    %16 = tpu.concatenate %15, %11, %15 in 1 : vector<8x1x16xf32>, vector<8x16x16xf32>, vector<8x1x16xf32> -> vector<8x18x16xf32>
    %cst_16 = arith.constant 0.000000e+00 : f32
    %17 = vector.broadcast %cst_16 : f32 to vector<8x18x1xf32>
    %18 = tpu.concatenate %17, %16, %17 in 2 : vector<8x18x1xf32>, vector<8x18x16xf32>, vector<8x18x1xf32> -> vector<8x18x18xf32>
    %19 = vector.extract_strided_slice %18 {offsets = [0, 0, 0], sizes = [8, 16, 16], strides = [1, 1, 1]} : vector<8x18x18xf32> to vector<8x16x16xf32>
    %20 = vector.extract_strided_slice %18 {offsets = [0, 0, 1], sizes = [8, 16, 16], strides = [1, 1, 1]} : vector<8x18x18xf32> to vector<8x16x16xf32>
    %21 = vector.extract_strided_slice %18 {offsets = [0, 0, 2], sizes = [8, 16, 16], strides = [1, 1, 1]} : vector<8x18x18xf32> to vector<8x16x16xf32>
    %22 = vector.extract_strided_slice %18 {offsets = [0, 1, 0], sizes = [8, 16, 16], strides = [1, 1, 1]} : vector<8x18x18xf32> to vector<8x16x16xf32>
    %23 = vector.extract_strided_slice %18 {offsets = [0, 1, 1], sizes = [8, 16, 16], strides = [1, 1, 1]} : vector<8x18x18xf32> to vector<8x16x16xf32>
    %24 = vector.extract_strided_slice %18 {offsets = [0, 1, 2], sizes = [8, 16, 16], strides = [1, 1, 1]} : vector<8x18x18xf32> to vector<8x16x16xf32>
    %25 = vector.extract_strided_slice %18 {offsets = [0, 2, 0], sizes = [8, 16, 16], strides = [1, 1, 1]} : vector<8x18x18xf32> to vector<8x16x16xf32>
    %26 = vector.extract_strided_slice %18 {offsets = [0, 2, 1], sizes = [8, 16, 16], strides = [1, 1, 1]} : vector<8x18x18xf32> to vector<8x16x16xf32>
    %27 = vector.extract_strided_slice %18 {offsets = [0, 2, 2], sizes = [8, 16, 16], strides = [1, 1, 1]} : vector<8x18x18xf32> to vector<8x16x16xf32>
    %28 = tpu.concatenate %19, %20, %21, %22, %23, %24, %25, %26, %27 in 0 : vector<8x16x16xf32>, vector<8x16x16xf32>, vector<8x16x16xf32>, vector<8x16x16xf32>, vector<8x16x16xf32>, vector<8x16x16xf32>, vector<8x16x16xf32>, vector<8x16x16xf32>, vector<8x16x16xf32> -> vector<72x16x16xf32>
    %29 = vector.shape_cast %28 : vector<72x16x16xf32> to vector<72x256xf32>
    %cst_17 = arith.constant dense<0.000000e+00> : vector<4x256xf32>
    %30 = tpu.matmul %13, %29, %cst_17 {dimension_numbers = #tpu.dot_dimension_numbers<[1], [0], [0], [1], [0, 0, 1, 1], [], []>} : vector<4x72xf32>, vector<72x256xf32>, vector<4x256xf32> -> vector<4x256xf32>
    %31 = vector.broadcast %14 : vector<4x1xf32> to vector<4x256xf32>
    %32 = arith.addf %30, %31 : vector<4x256xf32>
    %cst_18 = arith.constant 0.000000e+00 : f32
    %33 = vector.broadcast %cst_18 : f32 to vector<4x256xf32>
    %34 = arith.maximumf %32, %33 : vector<4x256xf32>
    %35 = vector.shape_cast %34 : vector<4x256xf32> to vector<4x16x16xf32>
    %c0_19 = arith.constant 0 : index
    %c0_20 = arith.constant 0 : index
    %36 = vector.load %arg6[%c0_19, %c0_20] : memref<4x36xf32, #tpu.memory_space<vmem>>, vector<4x36xf32>
    %37 = vector.extract_strided_slice %12 {offsets = [0, 1], sizes = [4, 1], strides = [1, 1]} : vector<4x3xf32> to vector<4x1xf32>
    %cst_21 = arith.constant 0.000000e+00 : f32
    %38 = vector.broadcast %cst_21 : f32 to vector<4x1x16xf32>
    %39 = tpu.concatenate %38, %35, %38 in 1 : vector<4x1x16xf32>, vector<4x16x16xf32>, vector<4x1x16xf32> -> vector<4x18x16xf32>
    %cst_22 = arith.constant 0.000000e+00 : f32
    %40 = vector.broadcast %cst_22 : f32 to vector<4x18x1xf32>
    %41 = tpu.concatenate %40, %39, %40 in 2 : vector<4x18x1xf32>, vector<4x18x16xf32>, vector<4x18x1xf32> -> vector<4x18x18xf32>
    %42 = vector.extract_strided_slice %41 {offsets = [0, 0, 0], sizes = [4, 16, 16], strides = [1, 1, 1]} : vector<4x18x18xf32> to vector<4x16x16xf32>
    %43 = vector.extract_strided_slice %41 {offsets = [0, 0, 1], sizes = [4, 16, 16], strides = [1, 1, 1]} : vector<4x18x18xf32> to vector<4x16x16xf32>
    %44 = vector.extract_strided_slice %41 {offsets = [0, 0, 2], sizes = [4, 16, 16], strides = [1, 1, 1]} : vector<4x18x18xf32> to vector<4x16x16xf32>
    %45 = vector.extract_strided_slice %41 {offsets = [0, 1, 0], sizes = [4, 16, 16], strides = [1, 1, 1]} : vector<4x18x18xf32> to vector<4x16x16xf32>
    %46 = vector.extract_strided_slice %41 {offsets = [0, 1, 1], sizes = [4, 16, 16], strides = [1, 1, 1]} : vector<4x18x18xf32> to vector<4x16x16xf32>
    %47 = vector.extract_strided_slice %41 {offsets = [0, 1, 2], sizes = [4, 16, 16], strides = [1, 1, 1]} : vector<4x18x18xf32> to vector<4x16x16xf32>
    %48 = vector.extract_strided_slice %41 {offsets = [0, 2, 0], sizes = [4, 16, 16], strides = [1, 1, 1]} : vector<4x18x18xf32> to vector<4x16x16xf32>
    %49 = vector.extract_strided_slice %41 {offsets = [0, 2, 1], sizes = [4, 16, 16], strides = [1, 1, 1]} : vector<4x18x18xf32> to vector<4x16x16xf32>
    %50 = vector.extract_strided_slice %41 {offsets = [0, 2, 2], sizes = [4, 16, 16], strides = [1, 1, 1]} : vector<4x18x18xf32> to vector<4x16x16xf32>
    %51 = tpu.concatenate %42, %43, %44, %45, %46, %47, %48, %49, %50 in 0 : vector<4x16x16xf32>, vector<4x16x16xf32>, vector<4x16x16xf32>, vector<4x16x16xf32>, vector<4x16x16xf32>, vector<4x16x16xf32>, vector<4x16x16xf32>, vector<4x16x16xf32>, vector<4x16x16xf32> -> vector<36x16x16xf32>
    %52 = vector.shape_cast %51 : vector<36x16x16xf32> to vector<36x256xf32>
    %cst_23 = arith.constant dense<0.000000e+00> : vector<4x256xf32>
    %53 = tpu.matmul %36, %52, %cst_23 {dimension_numbers = #tpu.dot_dimension_numbers<[1], [0], [0], [1], [0, 0, 1, 1], [], []>} : vector<4x36xf32>, vector<36x256xf32>, vector<4x256xf32> -> vector<4x256xf32>
    %54 = vector.broadcast %37 : vector<4x1xf32> to vector<4x256xf32>
    %55 = arith.addf %53, %54 : vector<4x256xf32>
    %cst_24 = arith.constant 0.000000e+00 : f32
    %56 = vector.broadcast %cst_24 : f32 to vector<4x256xf32>
    %57 = arith.maximumf %55, %56 : vector<4x256xf32>
    %58 = vector.shape_cast %57 : vector<4x256xf32> to vector<4x16x16xf32>
    %c0_25 = arith.constant 0 : index
    %c0_26 = arith.constant 0 : index
    %59 = vector.load %arg7[%c0_25, %c0_26] : memref<4x36xf32, #tpu.memory_space<vmem>>, vector<4x36xf32>
    %60 = vector.extract_strided_slice %12 {offsets = [0, 2], sizes = [4, 1], strides = [1, 1]} : vector<4x3xf32> to vector<4x1xf32>
    %cst_27 = arith.constant 0.000000e+00 : f32
    %61 = vector.broadcast %cst_27 : f32 to vector<4x1x16xf32>
    %62 = tpu.concatenate %61, %58, %61 in 1 : vector<4x1x16xf32>, vector<4x16x16xf32>, vector<4x1x16xf32> -> vector<4x18x16xf32>
    %cst_28 = arith.constant 0.000000e+00 : f32
    %63 = vector.broadcast %cst_28 : f32 to vector<4x18x1xf32>
    %64 = tpu.concatenate %63, %62, %63 in 2 : vector<4x18x1xf32>, vector<4x18x16xf32>, vector<4x18x1xf32> -> vector<4x18x18xf32>
    %65 = vector.extract_strided_slice %64 {offsets = [0, 0, 0], sizes = [4, 16, 16], strides = [1, 1, 1]} : vector<4x18x18xf32> to vector<4x16x16xf32>
    %66 = vector.extract_strided_slice %64 {offsets = [0, 0, 1], sizes = [4, 16, 16], strides = [1, 1, 1]} : vector<4x18x18xf32> to vector<4x16x16xf32>
    %67 = vector.extract_strided_slice %64 {offsets = [0, 0, 2], sizes = [4, 16, 16], strides = [1, 1, 1]} : vector<4x18x18xf32> to vector<4x16x16xf32>
    %68 = vector.extract_strided_slice %64 {offsets = [0, 1, 0], sizes = [4, 16, 16], strides = [1, 1, 1]} : vector<4x18x18xf32> to vector<4x16x16xf32>
    %69 = vector.extract_strided_slice %64 {offsets = [0, 1, 1], sizes = [4, 16, 16], strides = [1, 1, 1]} : vector<4x18x18xf32> to vector<4x16x16xf32>
    %70 = vector.extract_strided_slice %64 {offsets = [0, 1, 2], sizes = [4, 16, 16], strides = [1, 1, 1]} : vector<4x18x18xf32> to vector<4x16x16xf32>
    %71 = vector.extract_strided_slice %64 {offsets = [0, 2, 0], sizes = [4, 16, 16], strides = [1, 1, 1]} : vector<4x18x18xf32> to vector<4x16x16xf32>
    %72 = vector.extract_strided_slice %64 {offsets = [0, 2, 1], sizes = [4, 16, 16], strides = [1, 1, 1]} : vector<4x18x18xf32> to vector<4x16x16xf32>
    %73 = vector.extract_strided_slice %64 {offsets = [0, 2, 2], sizes = [4, 16, 16], strides = [1, 1, 1]} : vector<4x18x18xf32> to vector<4x16x16xf32>
    %74 = tpu.concatenate %65, %66, %67, %68, %69, %70, %71, %72, %73 in 0 : vector<4x16x16xf32>, vector<4x16x16xf32>, vector<4x16x16xf32>, vector<4x16x16xf32>, vector<4x16x16xf32>, vector<4x16x16xf32>, vector<4x16x16xf32>, vector<4x16x16xf32>, vector<4x16x16xf32> -> vector<36x16x16xf32>
    %75 = vector.shape_cast %74 : vector<36x16x16xf32> to vector<36x256xf32>
    %cst_29 = arith.constant dense<0.000000e+00> : vector<4x256xf32>
    %76 = tpu.matmul %59, %75, %cst_29 {dimension_numbers = #tpu.dot_dimension_numbers<[1], [0], [0], [1], [0, 0, 1, 1], [], []>} : vector<4x36xf32>, vector<36x256xf32>, vector<4x256xf32> -> vector<4x256xf32>
    %77 = vector.broadcast %60 : vector<4x1xf32> to vector<4x256xf32>
    %78 = arith.addf %76, %77 : vector<4x256xf32>
    %cst_30 = arith.constant 0.000000e+00 : f32
    %79 = vector.broadcast %cst_30 : f32 to vector<4x256xf32>
    %80 = arith.maximumf %78, %79 : vector<4x256xf32>
    %c0_31 = arith.constant 0 : index
    %c0_32 = arith.constant 0 : index
    %c0_33 = arith.constant 0 : index
    %81 = vector.load %arg9[%c0_31, %c0_32, %c0_33] : memref<1x4x256xf32, #tpu.memory_space<vmem>>, vector<1x4x256xf32>
    %82 = vector.shape_cast %81 : vector<1x4x256xf32> to vector<4x256xf32>
    %83 = vector.shape_cast %80 : vector<4x256xf32> to vector<1x4x256xf32>
    tpu.vector_store %arg9[%c0_31, %c0_32, %c0_33], %83 {strides = array<i32>} : memref<1x4x256xf32, #tpu.memory_space<vmem>>, vector<1x4x256xf32>,
    return
  }
  func.func @transform_0(%arg0: i32) -> (i32, i32, i32) {
    %c0_i32 = arith.constant 0 : i32
    %c0_i32_0 = arith.constant 0 : i32
    %c0_i32_1 = arith.constant 0 : i32
    return %arg0, %c0_i32, %c0_i32_0 : i32, i32, i32
  }
  func.func @transform_1(%arg0: i32) -> (i32, i32, i32, i32) {
    %c0_i32 = arith.constant 0 : i32
    %c0_i32_0 = arith.constant 0 : i32
    %c0_i32_1 = arith.constant 0 : i32
    %c0_i32_2 = arith.constant 0 : i32
    return %arg0, %c0_i32, %c0_i32_0, %c0_i32_1 : i32, i32, i32, i32
  }
  func.func @transform_2(%arg0: i32) -> (i32, i32) {
    %c0_i32 = arith.constant 0 : i32
    %c0_i32_0 = arith.constant 0 : i32
    %c0_i32_1 = arith.constant 0 : i32
    return %c0_i32, %c0_i32_0 : i32, i32
  }
  func.func @transform_3(%arg0: i32) -> (i32, i32) {
    %c0_i32 = arith.constant 0 : i32
    %c0_i32_0 = arith.constant 0 : i32
    %c0_i32_1 = arith.constant 0 : i32
    return %c0_i32, %c0_i32_0 : i32, i32
  }
  func.func @transform_4(%arg0: i32) -> (i32, i32) {
    %c0_i32 = arith.constant 0 : i32
    %c0_i32_0 = arith.constant 0 : i32
    %c0_i32_1 = arith.constant 0 : i32
    return %c0_i32, %c0_i32_0 : i32, i32
  }
  func.func @transform_5(%arg0: i32) -> (i32, i32) {
    %c0_i32 = arith.constant 0 : i32
    %c0_i32_0 = arith.constant 0 : i32
    %c0_i32_1 = arith.constant 0 : i32
    return %c0_i32, %c0_i32_0 : i32, i32
  }
  func.func @transform_6(%arg0: i32) -> (i32, i32) {
    %c0_i32 = arith.constant 0 : i32
    %c0_i32_0 = arith.constant 0 : i32
    %c0_i32_1 = arith.constant 0 : i32
    return %c0_i32, %c0_i32_0 : i32, i32
  }
  func.func @transform_7(%arg0: i32) -> (i32, i32) {
    %c0_i32 = arith.constant 0 : i32
    %c0_i32_0 = arith.constant 0 : i32
    %c0_i32_1 = arith.constant 0 : i32
    return %c0_i32, %c0_i32_0 : i32, i32
  }
  func.func @transform_8(%arg0: i32) -> (i32, i32, i32) {
    %c0_i32 = arith.constant 0 : i32
    %c0_i32_0 = arith.constant 0 : i32
    %c0_i32_1 = arith.constant 0 : i32
    return %arg0, %c0_i32, %c0_i32_0 : i32, i32, i32
  }
}

</mosaic_0001>

<llo_original>
// kernel: tpu_custom_call.1
$region0: #{tpu_custom_call.1}
  #allocation0 [shape = 'u32[]', space=smem, size = 0x4, offset = 0x4, fixed_abs, tag = 'smem constant byte address 0x4 - core index']
  #allocation1 [shape = 'u32[144,128]{1,0:T(1,128)}', space=vmem, size = 0x12000, scoped, tag = 'internal scratch']
  %s0 = inlined_call_operand.vmem [shape: f32[2,32,8], index: 0, kind: input, shape index: {}]
  %s1 = inlined_call_operand.hbm [shape: f32[2,4,16,16], index: 1, kind: input, shape index: {}]
  %s2 = inlined_call_operand.vmem [shape: f32[16,8], index: 2, kind: input, shape index: {}]
  %s3 = inlined_call_operand.vmem [shape: f32[8,16], index: 3, kind: input, shape index: {}]
  %s4 = inlined_call_operand.vmem [shape: f32[4,72], index: 4, kind: input, shape index: {}]
  %s5 = inlined_call_operand.vmem [shape: f32[4,36], index: 5, kind: input, shape index: {}]
  %s6 = inlined_call_operand.vmem [shape: f32[4,36], index: 6, kind: input, shape index: {}]
  %s7 = inlined_call_operand.vmem [shape: f32[4,3], index: 7, kind: input, shape index: {}]
  %s8 = inlined_call_operand.hbm [shape: f32[2,4,256], index: 8, kind: output, shape index: {}]
  %s9 = sld [smem:[#allocation0]]
  $region69: #{tpu_custom_call.1} parent=0
    _
  %s11 = ssub.s32 1, %s9
  %s12 = scalar_select 0, %s11, %s9
  $region1: #{tpu_custom_call.1} parent=0
    #allocation2 [shape = 'u8[65536]{0}', space=vmem, size = 0x10000, scoped, tag = 'input window, operand 1']
    #allocation3 [shape = 's32[2]{0}', space=sflag, size = 0x8, scoped, tag = 'scoped memory for tpu_custom_call.1']
    #allocation4 [shape = 's32[2]{0}', space=sflag, size = 0x8, scoped, tag = 'scoped memory for tpu_custom_call.1']
    #allocation5 [shape = 'u8[8192]{0}', space=vmem, size = 0x2000, scoped, tag = 'output window, operand 0']
    %13 = vsyncpa [#allocation3], 0
    %s14 = scalar_lea.sflag [#allocation3], 1
    %15 = vsyncpa %s14, 0
    %16 = vsyncpa [#allocation4], 0
    %s17 = scalar_lea.sflag [#allocation4], 1
    %18 = vsyncpa %s17, 0
    loop: start=0, step=1, limit=4
    $region2: #{tpu_custom_call.1} parent=1 // loop_pre_header
      _
    $region3: #{tpu_custom_call.1} parent=1 // loop_header
      %s20 = sphi 0, %s24
      %p21 = scmp.ge.s32.totalorder %s20, 4
      %s30 = sphi 0, %s32
      %s33 = sphi 0, %s30
      %s34 = sphi 0, %s33
      %s50 = sphi 0, %s34
      %s56 = sphi 0, %s58
      %s59 = sphi 0, %s56
      %s60 = sphi 0, %s59
      %s76 = sphi 0, %s60
      %s80 = sphi 0, %s80
      %s82 = sphi 0, %s80
      %s83 = sphi 0, %s82
      %s97 = sphi 0, %s83
      %s101 = sphi 0, %s101
      %s103 = sphi 0, %s101
      %s104 = sphi 0, %s103
      %s118 = sphi 0, %s104
      %s122 = sphi 0, %s122
      %s124 = sphi 0, %s122
      %s125 = sphi 0, %s124
      %s139 = sphi 0, %s125
      %s143 = sphi 0, %s143
      %s145 = sphi 0, %s143
      %s146 = sphi 0, %s145
      %s160 = sphi 0, %s146
      %s164 = sphi 0, %s164
      %s166 = sphi 0, %s164
      %s167 = sphi 0, %s166
      %s181 = sphi 0, %s167
      %s185 = sphi 0, %s185
      %s187 = sphi 0, %s185
      %s188 = sphi 0, %s187
      %s202 = sphi 0, %s188
      %s208 = sphi 0, %s210
      %s211 = sphi 0, %s208
      %s212 = sphi 0, %s211
      %s228 = sphi 0, %s212
    $region4: #{tpu_custom_call.1} parent=1 // loop_header_branch
      %23 = sbr.rel (%p21) target = $region8
    $region5: #{tpu_custom_call.1} parent=1 // loop_body
      %s25 = ssub.s32 %s20, 1
      %s26 = ssub.s32 %s20, 2
      %s27 = sadd.s32 %s20, 1
      %s28 = ssub.s32 %s20, %s27
      %p29 = scmp.eq.s32.totalorder %s28, 0
      %s31 = sadd.s32 %s30, 1
      %s32 = scalar_select %p29, %s30, %s31
      %p35 = pneg %p29
      %p36 = scmp.eq.s32.totalorder %s20, 1
      %p37 = por %p35, %p36
      %p38 = scmp.ne.s32.totalorder %s30, %s33
      %p39 = scmp.eq.s32.totalorder %s20, 0
      %p40 = por %p38, %p39
      %p41 = scmp.ne.s32.totalorder %s30, %s33
      %p42 = scmp.eq.s32.totalorder %s25, 1
      %p43 = por %p41, %p42
      %p44 = scmp.ne.s32.totalorder %s33, %s34
      %p45 = scmp.eq.s32.totalorder %s25, 0
      %p46 = por %p44, %p45
      %p47 = scmp.ne.s32.totalorder %s33, %s34
      %p48 = scmp.eq.s32.totalorder %s26, 1
      %p49 = por %p47, %p48
      %p51 = scmp.ne.s32.totalorder %s34, %s50
      %p52 = scmp.eq.s32.totalorder %s26, 0
      %p53 = por %p51, %p52
      %s54 = ssub.s32 %s20, %s27
      %p55 = scmp.eq.s32.totalorder %s54, 0
      %s57 = sadd.s32 %s56, 1
      %s58 = scalar_select %p55, %s56, %s57
      %p61 = pneg %p55
      %p62 = scmp.eq.s32.totalorder %s20, 1
      %p63 = por %p61, %p62
      %p64 = scmp.ne.s32.totalorder %s56, %s59
      %p65 = scmp.eq.s32.totalorder %s20, 0
      %p66 = por %p64, %p65
      %p67 = scmp.ne.s32.totalorder %s56, %s59
      %p68 = scmp.eq.s32.totalorder %s25, 1
      %p69 = por %p67, %p68
      %p70 = scmp.ne.s32.totalorder %s59, %s60
      %p71 = scmp.eq.s32.totalorder %s25, 0
      %p72 = por %p70, %p71
      %p73 = scmp.ne.s32.totalorder %s59, %s60
      %p74 = scmp.eq.s32.totalorder %s26, 1
      %p75 = por %p73, %p74
      %p77 = scmp.ne.s32.totalorder %s60, %s76
      %p78 = scmp.eq.s32.totalorder %s26, 0
      %p79 = por %p77, %p78
      %s81 = sadd.s32 %s80, 1
      %p84 = scmp.eq.s32.totalorder %s20, 1
      %p85 = scmp.ne.s32.totalorder %s80, %s82
      %p86 = scmp.eq.s32.totalorder %s20, 0
      %p87 = por %p85, %p86
      %p88 = scmp.ne.s32.totalorder %s80, %s82
      %p89 = scmp.eq.s32.totalorder %s25, 1
      %p90 = por %p88, %p89
      %p91 = scmp.ne.s32.totalorder %s82, %s83
      %p92 = scmp.eq.s32.totalorder %s25, 0
      %p93 = por %p91, %p92
      %p94 = scmp.ne.s32.totalorder %s82, %s83
      %p95 = scmp.eq.s32.totalorder %s26, 1
      %p96 = por %p94, %p95
      %p98 = scmp.ne.s32.totalorder %s83, %s97
      %p99 = scmp.eq.s32.totalorder %s26, 0
      %p100 = por %p98, %p99
      %s102 = sadd.s32 %s101, 1
      %p105 = scmp.eq.s32.totalorder %s20, 1
      %p106 = scmp.ne.s32.totalorder %s101, %s103
      %p107 = scmp.eq.s32.totalorder %s20, 0
      %p108 = por %p106, %p107
      %p109 = scmp.ne.s32.totalorder %s101, %s103
      %p110 = scmp.eq.s32.totalorder %s25, 1
      %p111 = por %p109, %p110
      %p112 = scmp.ne.s32.totalorder %s103, %s104
      %p113 = scmp.eq.s32.totalorder %s25, 0
      %p114 = por %p112, %p113
      %p115 = scmp.ne.s32.totalorder %s103, %s104
      %p116 = scmp.eq.s32.totalorder %s26, 1
      %p117 = por %p115, %p116
      %p119 = scmp.ne.s32.totalorder %s104, %s118
      %p120 = scmp.eq.s32.totalorder %s26, 0
      %p121 = por %p119, %p120
      %s123 = sadd.s32 %s122, 1
      %p126 = scmp.eq.s32.totalorder %s20, 1
      %p127 = scmp.ne.s32.totalorder %s122, %s124
      %p128 = scmp.eq.s32.totalorder %s20, 0
      %p129 = por %p127, %p128
      %p130 = scmp.ne.s32.totalorder %s122, %s124
      %p131 = scmp.eq.s32.totalorder %s25, 1
      %p132 = por %p130, %p131
      %p133 = scmp.ne.s32.totalorder %s124, %s125
      %p134 = scmp.eq.s32.totalorder %s25, 0
      %p135 = por %p133, %p134
      %p136 = scmp.ne.s32.totalorder %s124, %s125
      %p137 = scmp.eq.s32.totalorder %s26, 1
      %p138 = por %p136, %p137
      %p140 = scmp.ne.s32.totalorder %s125, %s139
      %p141 = scmp.eq.s32.totalorder %s26, 0
      %p142 = por %p140, %p141
      %s144 = sadd.s32 %s143, 1
      %p147 = scmp.eq.s32.totalorder %s20, 1
      %p148 = scmp.ne.s32.totalorder %s143, %s145
      %p149 = scmp.eq.s32.totalorder %s20, 0
      %p150 = por %p148, %p149
      %p151 = scmp.ne.s32.totalorder %s143, %s145
      %p152 = scmp.eq.s32.totalorder %s25, 1
      %p153 = por %p151, %p152
      %p154 = scmp.ne.s32.totalorder %s145, %s146
      %p155 = scmp.eq.s32.totalorder %s25, 0
      %p156 = por %p154, %p155
      %p157 = scmp.ne.s32.totalorder %s145, %s146
      %p158 = scmp.eq.s32.totalorder %s26, 1
      %p159 = por %p157, %p158
      %p161 = scmp.ne.s32.totalorder %s146, %s160
      %p162 = scmp.eq.s32.totalorder %s26, 0
      %p163 = por %p161, %p162
      %s165 = sadd.s32 %s164, 1
      %p168 = scmp.eq.s32.totalorder %s20, 1
      %p169 = scmp.ne.s32.totalorder %s164, %s166
      %p170 = scmp.eq.s32.totalorder %s20, 0
      %p171 = por %p169, %p170
      %p172 = scmp.ne.s32.totalorder %s164, %s166
      %p173 = scmp.eq.s32.totalorder %s25, 1
      %p174 = por %p172, %p173
      %p175 = scmp.ne.s32.totalorder %s166, %s167
      %p176 = scmp.eq.s32.totalorder %s25, 0
      %p177 = por %p175, %p176
      %p178 = scmp.ne.s32.totalorder %s166, %s167
      %p179 = scmp.eq.s32.totalorder %s26, 1
      %p180 = por %p178, %p179
      %p182 = scmp.ne.s32.totalorder %s167, %s181
      %p183 = scmp.eq.s32.totalorder %s26, 0
      %p184 = por %p182, %p183
      %s186 = sadd.s32 %s185, 1
      %p189 = scmp.eq.s32.totalorder %s20, 1
      %p190 = scmp.ne.s32.totalorder %s185, %s187
      %p191 = scmp.eq.s32.totalorder %s20, 0
      %p192 = por %p190, %p191
      %p193 = scmp.ne.s32.totalorder %s185, %s187
      %p194 = scmp.eq.s32.totalorder %s25, 1
      %p195 = por %p193, %p194
      %p196 = scmp.ne.s32.totalorder %s187, %s188
      %p197 = scmp.eq.s32.totalorder %s25, 0
      %p198 = por %p196, %p197
      %p199 = scmp.ne.s32.totalorder %s187, %s188
      %p200 = scmp.eq.s32.totalorder %s26, 1
      %p201 = por %p199, %p200
      %p203 = scmp.ne.s32.totalorder %s188, %s202
      %p204 = scmp.eq.s32.totalorder %s26, 0
      %p205 = por %p203, %p204
      %s206 = ssub.s32 %s20, %s27
      %p207 = scmp.eq.s32.totalorder %s206, 0
      %s209 = sadd.s32 %s208, 1
      %s210 = scalar_select %p207, %s208, %s209
      %p213 = pneg %p207
      %p214 = scmp.eq.s32.totalorder %s20, 1
      %p215 = por %p213, %p214
      %p216 = scmp.ne.s32.totalorder %s208, %s211
      %p217 = scmp.eq.s32.totalorder %s20, 0
      %p218 = por %p216, %p217
      %p219 = scmp.ne.s32.totalorder %s208, %s211
      %p220 = scmp.eq.s32.totalorder %s25, 1
      %p221 = por %p219, %p220
      %p222 = scmp.ne.s32.totalorder %s211, %s212
      %p223 = scmp.eq.s32.totalorder %s25, 0
      %p224 = por %p222, %p223
      %p225 = scmp.ne.s32.totalorder %s211, %s212
      %p226 = scmp.eq.s32.totalorder %s26, 1
      %p227 = por %p225, %p226
      %p229 = scmp.ne.s32.totalorder %s212, %s228
      %p230 = scmp.eq.s32.totalorder %s26, 0
      %p231 = por %p229, %p230
      %p232 = scmp.le.s32.totalorder 1, %s20
      %p233 = scmp.lt.s32.totalorder %s20, 3
      %p234 = pnand %p232, %p233
      %p235 = pneg %p234
      // Predicated region
      $region9: #{tpu_custom_call.1} parent=5 // pred_check
        _
      $region10: #{tpu_custom_call.1} parent=5 // pred_check_branch
        %237 = sbr.rel (%p234) target = $region12
      $region11: #{tpu_custom_call.1} parent=5 // pred_region
        %s238 = ssub.s32 %s20, 1
        // Predicated region
        $region13: #{tpu_custom_call.1} parent=11 // pred_check
          %p239 = pneg %p93
        $region14: #{tpu_custom_call.1} parent=11 // pred_check_branch
          %241 = sbr.rel (%p239) target = $region16
        $region15: #{tpu_custom_call.1} parent=11 // pred_region
          _
        $region16: #{tpu_custom_call.1} parent=11 // pred_fallthru
          _
        // Predicated region
        $region17: #{tpu_custom_call.1} parent=11 // pred_check
          %p242 = pneg %p114
        $region18: #{tpu_custom_call.1} parent=11 // pred_check_branch
          %244 = sbr.rel (%p242) target = $region20
        $region19: #{tpu_custom_call.1} parent=11 // pred_region
          _
        $region20: #{tpu_custom_call.1} parent=11 // pred_fallthru
          _
        // Predicated region
        $region21: #{tpu_custom_call.1} parent=11 // pred_check
          %p245 = pneg %p135
        $region22: #{tpu_custom_call.1} parent=11 // pred_check_branch
          %247 = sbr.rel (%p245) target = $region24
        $region23: #{tpu_custom_call.1} parent=11 // pred_region
          _
        $region24: #{tpu_custom_call.1} parent=11 // pred_fallthru
          _
        // Predicated region
        $region25: #{tpu_custom_call.1} parent=11 // pred_check
          %p248 = pneg %p156
        $region26: #{tpu_custom_call.1} parent=11 // pred_check_branch
          %250 = sbr.rel (%p248) target = $region28
        $region27: #{tpu_custom_call.1} parent=11 // pred_region
          _
        $region28: #{tpu_custom_call.1} parent=11 // pred_fallthru
          _
        // Predicated region
        $region29: #{tpu_custom_call.1} parent=11 // pred_check
          %p251 = pneg %p177
        $region30: #{tpu_custom_call.1} parent=11 // pred_check_branch
          %253 = sbr.rel (%p251) target = $region32
        $region31: #{tpu_custom_call.1} parent=11 // pred_region
          _
        $region32: #{tpu_custom_call.1} parent=11 // pred_fallthru
          _
        // Predicated region
        $region33: #{tpu_custom_call.1} parent=11 // pred_check
          %p254 = pneg %p198
        $region34: #{tpu_custom_call.1} parent=11 // pred_check_branch
          %256 = sbr.rel (%p254) target = $region36
        $region35: #{tpu_custom_call.1} parent=11 // pred_region
          _
        $region36: #{tpu_custom_call.1} parent=11 // pred_fallthru
          _
      $region12: #{tpu_custom_call.1} parent=5 // pred_fallthru
        _
      %p257 = scmp.lt.s32.totalorder %s20, 2
      // Predicated region
      $region37: #{tpu_custom_call.1} parent=5 // pred_check
        %p258 = pneg %p257
      $region38: #{tpu_custom_call.1} parent=5 // pred_check_branch
        %260 = sbr.rel (%p258) target = $region40
      $region39: #{tpu_custom_call.1} parent=5 // pred_region
        // Predicated region
        $region41: #{tpu_custom_call.1} parent=39 // pred_check
          %p261 = pneg %p40
        $region42: #{tpu_custom_call.1} parent=39 // pred_check_branch
          %263 = sbr.rel (%p261) target = $region44
        $region43: #{tpu_custom_call.1} parent=39 // pred_region
          %p264 = scmp.lt.s32.totalorder %s20, 1
          %s265 = scalar_select %p264, %s20, 1
          %s266 = smul.addr %s265, 4
          %s267 = smul.addr %s266, 8
          %s268 = scalar_lea.vmem %s0, %s267
        $region44: #{tpu_custom_call.1} parent=39 // pred_fallthru
          _
        // Predicated region
        $region45: #{tpu_custom_call.1} parent=39 // pred_check
          %p269 = pneg %p66
        $region46: #{tpu_custom_call.1} parent=39 // pred_check_branch
          %271 = sbr.rel (%p269) target = $region48
        $region47: #{tpu_custom_call.1} parent=39 // pred_region
          %s272 = sand.u32 %s56, 1
          %s273 = scalar_lea.sflag [#allocation3], %s272
          %s274 = sand.u32 %s56, 1
          %s275 = smul.addr %s274, 64
          %s276 = scalar_lea.vmem [#allocation2], %s275
          %s278 = ssub.s32 1024, 1024
          %279 = vsyncadd %s273, %s278
          %s280 = smul.addr %s20, 8
          %s281 = smul.addr %s280, 128
          %s282 = scalar_lea.hbm %s1, %s281
          %s283 = sshll.u32 %s276, 4
          %s284 = int_to_ptr.vmem [resolvable:$true] %s283
          %289 = dma.hbm_to_vmem [thread:$0]  %s282, 1024, %s284, %s273, 128, 128, 8
        $region48: #{tpu_custom_call.1} parent=39 // pred_fallthru
          _
      $region40: #{tpu_custom_call.1} parent=5 // pred_fallthru
        _
      %p290 = scmp.le.s32.totalorder 1, %s20
      %p291 = scmp.lt.s32.totalorder %s20, 3
      %p292 = pnand %p290, %p291
      %p293 = pneg %p292
      // Predicated region
      $region49: #{tpu_custom_call.1} parent=5 // pred_check
        _
      $region50: #{tpu_custom_call.1} parent=5 // pred_check_branch
        %295 = sbr.rel (%p292) target = $region52
      $region51: #{tpu_custom_call.1} parent=5 // pred_region
        %s296 = ssub.s32 %s20, 1
        %s297 = sand.u32 %s59, 1
        %s298 = scalar_lea.sflag [#allocation3], %s297
        %s299 = sand.u32 %s59, 1
        %s300 = smul.addr %s299, 64
        %s301 = scalar_lea.vmem [#allocation2], %s300
        // Predicated region
        $region53: #{tpu_custom_call.1} parent=51 // pred_check
          %p302 = pneg %p72
        $region54: #{tpu_custom_call.1} parent=51 // pred_check_branch
          %304 = sbr.rel (%p302) target = $region56
        $region55: #{tpu_custom_call.1} parent=51 // pred_region
          %305 = dma.done %s298, 1024
        $region56: #{tpu_custom_call.1} parent=51 // pred_fallthru
          _
        %p306 = scmp.lt.s32.totalorder %s25, 1
        %s307 = scalar_select %p306, %s25, 1
        %s308 = smul.addr %s307, 4
        %s309 = smul.addr %s308, 8
        %s310 = scalar_lea.vmem %s0, %s309
        %p311 = pneg %p46
        %p312 = pneg %p43
        %s313 = sand.u32 %s59, 1
        %s314 = scalar_lea.sflag [#allocation3], %s313
        %s315 = sand.u32 %s59, 1
        %s316 = smul.addr %s315, 64
        %s317 = scalar_lea.vmem [#allocation2], %s316
        %p318 = pneg %p72
        %p319 = pneg %p69
        %p320 = pneg %p93
        %p321 = pneg %p90
        %p322 = pneg %p114
        %p323 = pneg %p111
        %p324 = pneg %p135
        %p325 = pneg %p132
        %p326 = pneg %p156
        %p327 = pneg %p153
        %p328 = pneg %p177
        %p329 = pneg %p174
        %p330 = pneg %p198
        %p331 = pneg %p195
        %p332 = pneg %p224
        %p333 = pneg %p221
        %s334 = sand.u32 %s211, 1
        %s335 = scalar_lea.sflag [#allocation4], %s334
        %s336 = sand.u32 %s211, 1
        %s337 = smul.addr %s336, 8
        %s338 = scalar_lea.vmem [#allocation5], %s337
        %p339 = scmp.lt.s32.totalorder %s25, 1
        %s340 = scalar_select %p339, %s25, 1
        %s341 = smul.addr %s340, 4
        %s342 = smul.addr %s341, 8
        %s343 = scalar_lea.vmem %s0, %s342
        %v344 = vld [vmem:[%s343] sm:$0xff]
        %v345 = vld [vmem:[%s343 + $0x8] sm:$0xff]
        %v346 = vld [vmem:[%s343 + $0x10] sm:$0xff]
        %v347 = vld [vmem:[%s343 + $0x18] sm:$0xff]
        %v348 = vld [vmem:[%s3] sm:$0xff]
        %vm349 = vcmask 64512
        %v351 = vsel %vm349, %v344, 0
        %v354 = vsel %vm349, %v345, 0
        %v357 = vsel %vm349, %v346, 0
        %v360 = vsel %vm349, %v347, 0
        %362 = vmatprep.subr.mxu0 0.0
        %363 = vmatpush1.msra.mxu0 0.0
        %364 = vmatprep.subr.mxu0 0.0
        %365 = vmatpush1.msra.mxu0 0.0
        %366 = vmatprep.subr.mxu0 0.0
        %367 = vmatpush1.msra.mxu0 0.0
        %368 = vmatprep.subr.mxu0 0.0
        %369 = vmatpush1.msra.mxu0 0.0
        %370 = vmatprep.subr.mxu0 0.0
        %371 = vmatpush1.msra.mxu0 0.0
        %372 = vmatprep.subr.mxu0 0.0
        %373 = vmatpush1.msra.mxu0 0.0
        %374 = vmatprep.subr.mxu0 0.0
        %375 = vmatpush1.msra.mxu0 0.0
        %376 = vmatprep.subr.mxu0 0.0
        %377 = vmatpush1.msra.mxu0 0.0
        %378 = vmatprep.subr.mxu0 0.0
        %379 = vmatpush1.msra.mxu0 0.0
        %380 = vmatprep.subr.mxu0 0.0
        %381 = vmatpush1.msra.mxu0 0.0
        %382 = vmatprep.subr.mxu0 0.0
        %383 = vmatpush1.msra.mxu0 0.0
        %384 = vmatprep.subr.mxu0 0.0
        %385 = vmatpush1.msra.mxu0 0.0
        %386 = vmatprep.subr.mxu0 0.0
        %387 = vmatpush1.msra.mxu0 0.0
        %388 = vmatprep.subr.mxu0 0.0
        %389 = vmatpush1.msra.mxu0 0.0
        %390 = vmatprep.subr.mxu0 0.0
        %391 = vmatpush1.msra.mxu0 0.0
        %392 = vmatprep.subr.mxu0 0.0
        %393 = vmatpush1.msra.mxu0 %v348
        %394 = vmatprep.subr.mxu0 0.0
        %395 = vmatpush2.msra.mxu0 0.0
        %396 = vmatprep.subr.mxu0 0.0
        %397 = vmatpush2.msra.mxu0 0.0
        %398 = vmatprep.subr.mxu0 0.0
        %399 = vmatpush2.msra.mxu0 0.0
        %400 = vmatprep.subr.mxu0 0.0
        %401 = vmatpush2.msra.mxu0 0.0
        %402 = vmatprep.subr.mxu0 0.0
        %403 = vmatpush2.msra.mxu0 0.0
        %404 = vmatprep.subr.mxu0 0.0
        %405 = vmatpush2.msra.mxu0 0.0
        %406 = vmatprep.subr.mxu0 0.0
        %407 = vmatpush2.msra.mxu0 0.0
        %408 = vmatprep.subr.mxu0 0.0
        %409 = vmatpush2.msra.mxu0 0.0
        %410 = vmatprep.subr.mxu0 0.0
        %411 = vmatpush2.msra.mxu0 0.0
        %412 = vmatprep.subr.mxu0 0.0
        %413 = vmatpush2.msra.mxu0 0.0
        %414 = vmatprep.subr.mxu0 0.0
        %415 = vmatpush2.msra.mxu0 0.0
        %416 = vmatprep.subr.mxu0 0.0
        %417 = vmatpush2.msra.mxu0 0.0
        %418 = vmatprep.subr.mxu0 0.0
        %419 = vmatpush2.msra.mxu0 0.0
        %420 = vmatprep.subr.mxu0 0.0
        %421 = vmatpush2.msra.mxu0 0.0
        %422 = vmatprep.subr.mxu0 0.0
        %423 = vmatpush2.msra.mxu0 0.0
        %424 = vmatprep.subr.mxu0 0.0
        %425 = vmatpush2.msra.mxu0 0.0
        %426 = vmatprep.mubr.f32.mxu0 0.0
        %427 = vmatmul.mubr.f32.gmra.mxu0 %v351
        %v428 = vpop.f32.mrf.mxu0
        %v429 = vadd.f32 0.0, %v428
        %v430 = vpop.f32.mrf.mxu0
        %431 = vmatprep.mubr.f32.mxu0 0.0
        %432 = vmatmul.mubr.f32.gmra.mxu0 %v354
        %v433 = vpop.f32.mrf.mxu0
        %v434 = vadd.f32 0.0, %v433
        %v435 = vpop.f32.mrf.mxu0
        %436 = vmatprep.mubr.f32.mxu0 0.0
        %437 = vmatmul.mubr.f32.gmra.mxu0 %v357
        %v438 = vpop.f32.mrf.mxu0
        %v439 = vadd.f32 0.0, %v438
        %v440 = vpop.f32.mrf.mxu0
        %441 = vmatprep.mubr.f32.mxu0 0.0
        %442 = vmatmul.mubr.f32.gmra.mxu0 %v360
        %v443 = vpop.f32.mrf.mxu0
        %v444 = vadd.f32 0.0, %v443
        %v445 = vpop.f32.mrf.mxu0
        %446 = vdwg.mxu0
        %v447 = vld [vmem:[%s2] sm:$0xff]
        %v448 = vld [vmem:[%s2 + $0x8] sm:$0xff]
        %v450 = vsel %vm349, %v447, 0
        %v453 = vsel %vm349, %v448, 0
        %455 = vmatprep.subr.mxu0 0.0
        %456 = vmatpush1.msra.mxu0 0.0
        %457 = vmatprep.subr.mxu0 0.0
        %458 = vmatpush1.msra.mxu0 0.0
        %459 = vmatprep.subr.mxu0 0.0
        %460 = vmatpush1.msra.mxu0 0.0
        %461 = vmatprep.subr.mxu0 0.0
        %462 = vmatpush1.msra.mxu0 0.0
        %463 = vmatprep.subr.mxu0 0.0
        %464 = vmatpush1.msra.mxu0 0.0
        %465 = vmatprep.subr.mxu0 0.0
        %466 = vmatpush1.msra.mxu0 0.0
        %467 = vmatprep.subr.mxu0 0.0
        %468 = vmatpush1.msra.mxu0 0.0
        %469 = vmatprep.subr.mxu0 0.0
        %470 = vmatpush1.msra.mxu0 0.0
        %471 = vmatprep.subr.mxu0 0.0
        %472 = vmatpush1.msra.mxu0 0.0
        %473 = vmatprep.subr.mxu0 0.0
        %474 = vmatpush1.msra.mxu0 0.0
        %475 = vmatprep.subr.mxu0 0.0
        %476 = vmatpush1.msra.mxu0 0.0
        %477 = vmatprep.subr.mxu0 0.0
        %478 = vmatpush1.msra.mxu0 0.0
        %479 = vmatprep.subr.mxu0 0.0
        %480 = vmatpush1.msra.mxu0 0.0
        %481 = vmatprep.subr.mxu0 0.0
        %482 = vmatpush1.msra.mxu0 0.0
        %483 = vmatprep.subr.mxu0 0.0
        %484 = vmatpush1.msra.mxu0 0.0
        %485 = vmatprep.subr.mxu0 0.0
        %486 = vmatpush1.msra.mxu0 %v429
        %487 = vmatprep.subr.mxu0 0.0
        %488 = vmatpush2.msra.mxu0 0.0
        %489 = vmatprep.subr.mxu0 0.0
        %490 = vmatpush2.msra.mxu0 0.0
        %491 = vmatprep.subr.mxu0 0.0
        %492 = vmatpush2.msra.mxu0 0.0
        %493 = vmatprep.subr.mxu0 0.0
        %494 = vmatpush2.msra.mxu0 0.0
        %495 = vmatprep.subr.mxu0 0.0
        %496 = vmatpush2.msra.mxu0 0.0
        %497 = vmatprep.subr.mxu0 0.0
        %498 = vmatpush2.msra.mxu0 0.0
        %499 = vmatprep.subr.mxu0 0.0
        %500 = vmatpush2.msra.mxu0 0.0
        %501 = vmatprep.subr.mxu0 0.0
        %502 = vmatpush2.msra.mxu0 0.0
        %503 = vmatprep.subr.mxu0 0.0
        %504 = vmatpush2.msra.mxu0 0.0
        %505 = vmatprep.subr.mxu0 0.0
        %506 = vmatpush2.msra.mxu0 0.0
        %507 = vmatprep.subr.mxu0 0.0
        %508 = vmatpush2.msra.mxu0 0.0
        %509 = vmatprep.subr.mxu0 0.0
        %510 = vmatpush2.msra.mxu0 0.0
        %511 = vmatprep.subr.mxu0 0.0
        %512 = vmatpush2.msra.mxu0 0.0
        %513 = vmatprep.subr.mxu0 0.0
        %514 = vmatpush2.msra.mxu0 0.0
        %515 = vmatprep.subr.mxu0 0.0
        %516 = vmatpush2.msra.mxu0 0.0
        %517 = vmatprep.subr.mxu0 0.0
        %518 = vmatpush2.msra.mxu0 0.0
        %519 = vmatprep.mubr.f32.mxu0 0.0
        %520 = vmatmul.mubr.f32.gmra.mxu0 %v450
        %v521 = vpop.f32.mrf.mxu0
        %v522 = vadd.f32 0.0, %v521
        %v523 = vpop.f32.mrf.mxu0
        %524 = vmatprep.mubr.f32.mxu0 0.0
        %525 = vmatmul.mubr.f32.gmra.mxu0 %v453
        %v526 = vpop.f32.mrf.mxu0
        %v527 = vadd.f32 0.0, %v526
        %v528 = vpop.f32.mrf.mxu0
        %529 = vdwg.mxu0
        %530 = vmatprep.subr.mxu0 0.0
        %531 = vmatpush1.msra.mxu0 0.0
        %532 = vmatprep.subr.mxu0 0.0
        %533 = vmatpush1.msra.mxu0 0.0
        %534 = vmatprep.subr.mxu0 0.0
        %535 = vmatpush1.msra.mxu0 0.0
        %536 = vmatprep.subr.mxu0 0.0
        %537 = vmatpush1.msra.mxu0 0.0
        %538 = vmatprep.subr.mxu0 0.0
        %539 = vmatpush1.msra.mxu0 0.0
        %540 = vmatprep.subr.mxu0 0.0
        %541 = vmatpush1.msra.mxu0 0.0
        %542 = vmatprep.subr.mxu0 0.0
        %543 = vmatpush1.msra.mxu0 0.0
        %544 = vmatprep.subr.mxu0 0.0
        %545 = vmatpush1.msra.mxu0 0.0
        %546 = vmatprep.subr.mxu0 0.0
        %547 = vmatpush1.msra.mxu0 0.0
        %548 = vmatprep.subr.mxu0 0.0
        %549 = vmatpush1.msra.mxu0 0.0
        %550 = vmatprep.subr.mxu0 0.0
        %551 = vmatpush1.msra.mxu0 0.0
        %552 = vmatprep.subr.mxu0 0.0
        %553 = vmatpush1.msra.mxu0 0.0
        %554 = vmatprep.subr.mxu0 0.0
        %555 = vmatpush1.msra.mxu0 0.0
        %556 = vmatprep.subr.mxu0 0.0
        %557 = vmatpush1.msra.mxu0 0.0
        %558 = vmatprep.subr.mxu0 0.0
        %559 = vmatpush1.msra.mxu0 0.0
        %560 = vmatprep.subr.mxu0 0.0
        %561 = vmatpush1.msra.mxu0 %v434
        %562 = vmatprep.subr.mxu0 0.0
        %563 = vmatpush2.msra.mxu0 0.0
        %564 = vmatprep.subr.mxu0 0.0
        %565 = vmatpush2.msra.mxu0 0.0
        %566 = vmatprep.subr.mxu0 0.0
        %567 = vmatpush2.msra.mxu0 0.0
        %568 = vmatprep.subr.mxu0 0.0
        %569 = vmatpush2.msra.mxu0 0.0
        %570 = vmatprep.subr.mxu0 0.0
        %571 = vmatpush2.msra.mxu0 0.0
        %572 = vmatprep.subr.mxu0 0.0
        %573 = vmatpush2.msra.mxu0 0.0
        %574 = vmatprep.subr.mxu0 0.0
        %575 = vmatpush2.msra.mxu0 0.0
        %576 = vmatprep.subr.mxu0 0.0
        %577 = vmatpush2.msra.mxu0 0.0
        %578 = vmatprep.subr.mxu0 0.0
        %579 = vmatpush2.msra.mxu0 0.0
        %580 = vmatprep.subr.mxu0 0.0
        %581 = vmatpush2.msra.mxu0 0.0
        %582 = vmatprep.subr.mxu0 0.0
        %583 = vmatpush2.msra.mxu0 0.0
        %584 = vmatprep.subr.mxu0 0.0
        %585 = vmatpush2.msra.mxu0 0.0
        %586 = vmatprep.subr.mxu0 0.0
        %587 = vmatpush2.msra.mxu0 0.0
        %588 = vmatprep.subr.mxu0 0.0
        %589 = vmatpush2.msra.mxu0 0.0
        %590 = vmatprep.subr.mxu0 0.0
        %591 = vmatpush2.msra.mxu0 0.0
        %592 = vmatprep.subr.mxu0 0.0
        %593 = vmatpush2.msra.mxu0 0.0
        %594 = vmatprep.mubr.f32.mxu0 0.0
        %595 = vmatmul.mubr.f32.gmra.mxu0 %v450
        %v596 = vpop.f32.mrf.mxu0
        %v597 = vadd.f32 0.0, %v596
        %v598 = vpop.f32.mrf.mxu0
        %599 = vmatprep.mubr.f32.mxu0 0.0
        %600 = vmatmul.mubr.f32.gmra.mxu0 %v453
        %v601 = vpop.f32.mrf.mxu0
        %v602 = vadd.f32 0.0, %v601
        %v603 = vpop.f32.mrf.mxu0
        %604 = vdwg.mxu0
        %605 = vmatprep.subr.mxu0 0.0
        %606 = vmatpush1.msra.mxu0 0.0
        %607 = vmatprep.subr.mxu0 0.0
        %608 = vmatpush1.msra.mxu0 0.0
        %609 = vmatprep.subr.mxu0 0.0
        %610 = vmatpush1.msra.mxu0 0.0
        %611 = vmatprep.subr.mxu0 0.0
        %612 = vmatpush1.msra.mxu0 0.0
        %613 = vmatprep.subr.mxu0 0.0
        %614 = vmatpush1.msra.mxu0 0.0
        %615 = vmatprep.subr.mxu0 0.0
        %616 = vmatpush1.msra.mxu0 0.0
        %617 = vmatprep.subr.mxu0 0.0
        %618 = vmatpush1.msra.mxu0 0.0
        %619 = vmatprep.subr.mxu0 0.0
        %620 = vmatpush1.msra.mxu0 0.0
        %621 = vmatprep.subr.mxu0 0.0
        %622 = vmatpush1.msra.mxu0 0.0
        %623 = vmatprep.subr.mxu0 0.0
        %624 = vmatpush1.msra.mxu0 0.0
        %625 = vmatprep.subr.mxu0 0.0
        %626 = vmatpush1.msra.mxu0 0.0
        %627 = vmatprep.subr.mxu0 0.0
        %628 = vmatpush1.msra.mxu0 0.0
        %629 = vmatprep.subr.mxu0 0.0
        %630 = vmatpush1.msra.mxu0 0.0
        %631 = vmatprep.subr.mxu0 0.0
        %632 = vmatpush1.msra.mxu0 0.0
        %633 = vmatprep.subr.mxu0 0.0
        %634 = vmatpush1.msra.mxu0 0.0
        %635 = vmatprep.subr.mxu0 0.0
        %636 = vmatpush1.msra.mxu0 %v439
        %637 = vmatprep.subr.mxu0 0.0
        %638 = vmatpush2.msra.mxu0 0.0
        %639 = vmatprep.subr.mxu0 0.0
        %640 = vmatpush2.msra.mxu0 0.0
        %641 = vmatprep.subr.mxu0 0.0
        %642 = vmatpush2.msra.mxu0 0.0
        %643 = vmatprep.subr.mxu0 0.0
        %644 = vmatpush2.msra.mxu0 0.0
        %645 = vmatprep.subr.mxu0 0.0
        %646 = vmatpush2.msra.mxu0 0.0
        %647 = vmatprep.subr.mxu0 0.0
        %648 = vmatpush2.msra.mxu0 0.0
        %649 = vmatprep.subr.mxu0 0.0
        %650 = vmatpush2.msra.mxu0 0.0
        %651 = vmatprep.subr.mxu0 0.0
        %652 = vmatpush2.msra.mxu0 0.0
        %653 = vmatprep.subr.mxu0 0.0
        %654 = vmatpush2.msra.mxu0 0.0
        %655 = vmatprep.subr.mxu0 0.0
        %656 = vmatpush2.msra.mxu0 0.0
        %657 = vmatprep.subr.mxu0 0.0
        %658 = vmatpush2.msra.mxu0 0.0
        %659 = vmatprep.subr.mxu0 0.0
        %660 = vmatpush2.msra.mxu0 0.0
        %661 = vmatprep.subr.mxu0 0.0
        %662 = vmatpush2.msra.mxu0 0.0
        %663 = vmatprep.subr.mxu0 0.0
        %664 = vmatpush2.msra.mxu0 0.0
        %665 = vmatprep.subr.mxu0 0.0
        %666 = vmatpush2.msra.mxu0 0.0
        %667 = vmatprep.subr.mxu0 0.0
        %668 = vmatpush2.msra.mxu0 0.0
        %669 = vmatprep.mubr.f32.mxu0 0.0
        %670 = vmatmul.mubr.f32.gmra.mxu0 %v450
        %v671 = vpop.f32.mrf.mxu0
        %v672 = vadd.f32 0.0, %v671
        %v673 = vpop.f32.mrf.mxu0
        %674 = vmatprep.mubr.f32.mxu0 0.0
        %675 = vmatmul.mubr.f32.gmra.mxu0 %v453
        %v676 = vpop.f32.mrf.mxu0
        %v677 = vadd.f32 0.0, %v676
        %v678 = vpop.f32.mrf.mxu0
        %679 = vdwg.mxu0
        %680 = vmatprep.subr.mxu0 0.0
        %681 = vmatpush1.msra.mxu0 0.0
        %682 = vmatprep.subr.mxu0 0.0
        %683 = vmatpush1.msra.mxu0 0.0
        %684 = vmatprep.subr.mxu0 0.0
        %685 = vmatpush1.msra.mxu0 0.0
        %686 = vmatprep.subr.mxu0 0.0
        %687 = vmatpush1.msra.mxu0 0.0
        %688 = vmatprep.subr.mxu0 0.0
        %689 = vmatpush1.msra.mxu0 0.0
        %690 = vmatprep.subr.mxu0 0.0
        %691 = vmatpush1.msra.mxu0 0.0
        %692 = vmatprep.subr.mxu0 0.0
        %693 = vmatpush1.msra.mxu0 0.0
        %694 = vmatprep.subr.mxu0 0.0
        %695 = vmatpush1.msra.mxu0 0.0
        %696 = vmatprep.subr.mxu0 0.0
        %697 = vmatpush1.msra.mxu0 0.0
        %698 = vmatprep.subr.mxu0 0.0
        %699 = vmatpush1.msra.mxu0 0.0
        %700 = vmatprep.subr.mxu0 0.0
        %701 = vmatpush1.msra.mxu0 0.0
        %702 = vmatprep.subr.mxu0 0.0
        %703 = vmatpush1.msra.mxu0 0.0
        %704 = vmatprep.subr.mxu0 0.0
        %705 = vmatpush1.msra.mxu0 0.0
        %706 = vmatprep.subr.mxu0 0.0
        %707 = vmatpush1.msra.mxu0 0.0
        %708 = vmatprep.subr.mxu0 0.0
        %709 = vmatpush1.msra.mxu0 0.0
        %710 = vmatprep.subr.mxu0 0.0
        %711 = vmatpush1.msra.mxu0 %v444
        %712 = vmatprep.subr.mxu0 0.0
        %713 = vmatpush2.msra.mxu0 0.0
        %714 = vmatprep.subr.mxu0 0.0
        %715 = vmatpush2.msra.mxu0 0.0
        %716 = vmatprep.subr.mxu0 0.0
        %717 = vmatpush2.msra.mxu0 0.0
        %718 = vmatprep.subr.mxu0 0.0
        %719 = vmatpush2.msra.mxu0 0.0
        %720 = vmatprep.subr.mxu0 0.0
        %721 = vmatpush2.msra.mxu0 0.0
        %722 = vmatprep.subr.mxu0 0.0
        %723 = vmatpush2.msra.mxu0 0.0
        %724 = vmatprep.subr.mxu0 0.0
        %725 = vmatpush2.msra.mxu0 0.0
        %726 = vmatprep.subr.mxu0 0.0
        %727 = vmatpush2.msra.mxu0 0.0
        %728 = vmatprep.subr.mxu0 0.0
        %729 = vmatpush2.msra.mxu0 0.0
        %730 = vmatprep.subr.mxu0 0.0
        %731 = vmatpush2.msra.mxu0 0.0
        %732 = vmatprep.subr.mxu0 0.0
        %733 = vmatpush2.msra.mxu0 0.0
        %734 = vmatprep.subr.mxu0 0.0
        %735 = vmatpush2.msra.mxu0 0.0
        %736 = vmatprep.subr.mxu0 0.0
        %737 = vmatpush2.msra.mxu0 0.0
        %738 = vmatprep.subr.mxu0 0.0
        %739 = vmatpush2.msra.mxu0 0.0
        %740 = vmatprep.subr.mxu0 0.0
        %741 = vmatpush2.msra.mxu0 0.0
        %742 = vmatprep.subr.mxu0 0.0
        %743 = vmatpush2.msra.mxu0 0.0
        %744 = vmatprep.mubr.f32.mxu0 0.0
        %745 = vmatmul.mubr.f32.gmra.mxu0 %v450
        %v746 = vpop.f32.mrf.mxu0
        %v747 = vadd.f32 0.0, %v746
        %v748 = vpop.f32.mrf.mxu0
        %749 = vmatprep.mubr.f32.mxu0 0.0
        %750 = vmatmul.mubr.f32.gmra.mxu0 %v453
        %v751 = vpop.f32.mrf.mxu0
        %v752 = vadd.f32 0.0, %v751
        %v753 = vpop.f32.mrf.mxu0
        %754 = vdwg.mxu0
        %v755 = vld [vmem:[%s301] sm:$0xff]
        %v756 = vld [vmem:[%s301 + $0x8] sm:$0xff]
        %v757 = vld [vmem:[%s301 + $0x10] sm:$0xff]
        %v758 = vld [vmem:[%s301 + $0x18] sm:$0xff]
        %v759 = vld [vmem:[%s301 + $0x20] sm:$0xff]
        %v760 = vld [vmem:[%s301 + $0x28] sm:$0xff]
        %v761 = vld [vmem:[%s301 + $0x30] sm:$0xff]
        %v762 = vld [vmem:[%s301 + $0x38] sm:$0xff]
        %v763 = vld [vmem:[%s7] sm:$0xf]
        %v764 = vld [vmem:[%s4] sm:$0xf]
        %vm781 = vcmask 1040384
        %v782 = vrot.slane %v522, 7
        %v783 = vrot.slane %v527, 7
        %v784 = vsel %vm781, %v782, %v783
        %v785 = vrot.slane %v597, 7
        %v786 = vrot.slane %v602, 7
        %v787 = vsel %vm781, %v785, %v786
        %v788 = vrot.slane %v672, 7
        %v789 = vrot.slane %v677, 7
        %v790 = vsel %vm781, %v788, %v789
        %v791 = vrot.slane %v747, 7
        %v792 = vrot.slane %v752, 7
        %v793 = vsel %vm781, %v791, %v792
        %v794 = vrot.slane %v755, 7
        %v795 = vrot.slane %v756, 7
        %v796 = vsel %vm781, %v794, %v795
        %v797 = vrot.slane %v757, 7
        %v798 = vrot.slane %v758, 7
        %v799 = vsel %vm781, %v797, %v798
        %v800 = vrot.slane %v759, 7
        %v801 = vrot.slane %v760, 7
        %v802 = vsel %vm781, %v800, %v801
        %v803 = vrot.slane %v761, 7
        %v804 = vrot.slane %v762, 7
        %v805 = vsel %vm781, %v803, %v804
        %v822 = vsel %vm781, 0.0, %v782
        %v823 = vsel %vm781, 0.0, %v785
        %v824 = vsel %vm781, 0.0, %v788
        %v825 = vsel %vm781, 0.0, %v791
        %v826 = vsel %vm781, 0.0, %v794
        %v827 = vsel %vm781, 0.0, %v797
        %v828 = vsel %vm781, 0.0, %v800
        %v829 = vsel %vm781, 0.0, %v803
        %v830 = vsel %vm781, %v783, 0.0
        %v831 = vsel %vm781, %v786, 0.0
        %v832 = vsel %vm781, %v789, 0.0
        %v833 = vsel %vm781, %v792, 0.0
        %v834 = vsel %vm781, %v795, 0.0
        %v835 = vsel %vm781, %v798, 0.0
        %v836 = vsel %vm781, %v801, 0.0
        %v837 = vsel %vm781, %v804, 0.0
        %854 = vrot.lane.b32.xlu0 %v822, 1
        %v855 = vpop.permute.xlu0 %854
        %856 = vrot.lane.b32.xlu0 %v784, 1
        %v857 = vpop.permute.xlu0 %856
        %858 = vrot.lane.b32.xlu0 %v830, 1
        %v859 = vpop.permute.xlu0 %858
        %860 = vrot.lane.b32.xlu0 %v823, 1
        %v861 = vpop.permute.xlu0 %860
        %862 = vrot.lane.b32.xlu0 %v787, 1
        %v863 = vpop.permute.xlu0 %862
        %864 = vrot.lane.b32.xlu0 %v831, 1
        %v865 = vpop.permute.xlu0 %864
        %866 = vrot.lane.b32.xlu0 %v824, 1
        %v867 = vpop.permute.xlu0 %866
        %868 = vrot.lane.b32.xlu0 %v790, 1
        %v869 = vpop.permute.xlu0 %868
        %870 = vrot.lane.b32.xlu0 %v832, 1
        %v871 = vpop.permute.xlu0 %870
        %872 = vrot.lane.b32.xlu0 %v825, 1
        %v873 = vpop.permute.xlu0 %872
        %874 = vrot.lane.b32.xlu0 %v793, 1
        %v875 = vpop.permute.xlu0 %874
        %876 = vrot.lane.b32.xlu0 %v833, 1
        %v877 = vpop.permute.xlu0 %876
        %878 = vrot.lane.b32.xlu0 %v826, 1
        %v879 = vpop.permute.xlu0 %878
        %880 = vrot.lane.b32.xlu0 %v796, 1
        %v881 = vpop.permute.xlu0 %880
        %882 = vrot.lane.b32.xlu0 %v834, 1
        %v883 = vpop.permute.xlu0 %882
        %884 = vrot.lane.b32.xlu0 %v827, 1
        %v885 = vpop.permute.xlu0 %884
        %886 = vrot.lane.b32.xlu0 %v799, 1
        %v887 = vpop.permute.xlu0 %886
        %888 = vrot.lane.b32.xlu0 %v835, 1
        %v889 = vpop.permute.xlu0 %888
        %890 = vrot.lane.b32.xlu0 %v828, 1
        %v891 = vpop.permute.xlu0 %890
        %892 = vrot.lane.b32.xlu0 %v802, 1
        %v893 = vpop.permute.xlu0 %892
        %894 = vrot.lane.b32.xlu0 %v836, 1
        %v895 = vpop.permute.xlu0 %894
        %896 = vrot.lane.b32.xlu0 %v829, 1
        %v897 = vpop.permute.xlu0 %896
        %898 = vrot.lane.b32.xlu0 %v805, 1
        %v899 = vpop.permute.xlu0 %898
        %900 = vrot.lane.b32.xlu0 %v837, 1
        %v901 = vpop.permute.xlu0 %900
        %vm926 = vcmask 7168
        %v927 = vsel %vm926, 0.0, %v855
        %v928 = vsel %vm926, 0.0, %v857
        %v929 = vsel %vm926, 0.0, %v859
        %v930 = vsel %vm926, 0.0, %v861
        %v931 = vsel %vm926, 0.0, %v863
        %v932 = vsel %vm926, 0.0, %v865
        %v933 = vsel %vm926, 0.0, %v867
        %v934 = vsel %vm926, 0.0, %v869
        %v935 = vsel %vm926, 0.0, %v871
        %v936 = vsel %vm926, 0.0, %v873
        %v937 = vsel %vm926, 0.0, %v875
        %v938 = vsel %vm926, 0.0, %v877
        %v939 = vsel %vm926, 0.0, %v879
        %v940 = vsel %vm926, 0.0, %v881
        %v941 = vsel %vm926, 0.0, %v883
        %v942 = vsel %vm926, 0.0, %v885
        %v943 = vsel %vm926, 0.0, %v887
        %v944 = vsel %vm926, 0.0, %v889
        %v945 = vsel %vm926, 0.0, %v891
        %v946 = vsel %vm926, 0.0, %v893
        %v947 = vsel %vm926, 0.0, %v895
        %v948 = vsel %vm926, 0.0, %v897
        %v949 = vsel %vm926, 0.0, %v899
        %v950 = vsel %vm926, 0.0, %v901
        %vm951 = vcmask 138240
        %v952 = vsel %vm951, %v927, 0.0
        %v953 = vsel %vm951, %v928, 0.0
        %v954 = vsel %vm951, %v929, 0.0
        %v955 = vsel %vm951, %v930, 0.0
        %v956 = vsel %vm951, %v931, 0.0
        %v957 = vsel %vm951, %v932, 0.0
        %v958 = vsel %vm951, %v933, 0.0
        %v959 = vsel %vm951, %v934, 0.0
        %v960 = vsel %vm951, %v935, 0.0
        %v961 = vsel %vm951, %v936, 0.0
        %v962 = vsel %vm951, %v937, 0.0
        %v963 = vsel %vm951, %v938, 0.0
        %v964 = vsel %vm951, %v939, 0.0
        %v965 = vsel %vm951, %v940, 0.0
        %v966 = vsel %vm951, %v941, 0.0
        %v967 = vsel %vm951, %v942, 0.0
        %v968 = vsel %vm951, %v943, 0.0
        %v969 = vsel %vm951, %v944, 0.0
        %v970 = vsel %vm951, %v945, 0.0
        %v971 = vsel %vm951, %v946, 0.0
        %v972 = vsel %vm951, %v947, 0.0
        %v973 = vsel %vm951, %v948, 0.0
        %v974 = vsel %vm951, %v949, 0.0
        %v975 = vsel %vm951, %v950, 0.0
        %992 = vrot.lane.b32.xlu0 %v952, 127
        %v993 = vpop.permute.xlu0 %992
        %994 = vrot.lane.b32.xlu0 %v953, 127
        %v995 = vpop.permute.xlu0 %994
        %996 = vrot.lane.b32.xlu0 %v955, 127
        %v997 = vpop.permute.xlu0 %996
        %998 = vrot.lane.b32.xlu0 %v956, 127
        %v999 = vpop.permute.xlu0 %998
        %1000 = vrot.lane.b32.xlu0 %v958, 127
        %v1001 = vpop.permute.xlu0 %1000
        %1002 = vrot.lane.b32.xlu0 %v959, 127
        %v1003 = vpop.permute.xlu0 %1002
        %1004 = vrot.lane.b32.xlu0 %v961, 127
        %v1005 = vpop.permute.xlu0 %1004
        %1006 = vrot.lane.b32.xlu0 %v962, 127
        %v1007 = vpop.permute.xlu0 %1006
        %1008 = vrot.lane.b32.xlu0 %v964, 127
        %v1009 = vpop.permute.xlu0 %1008
        %1010 = vrot.lane.b32.xlu0 %v965, 127
        %v1011 = vpop.permute.xlu0 %1010
        %1012 = vrot.lane.b32.xlu0 %v967, 127
        %v1013 = vpop.permute.xlu0 %1012
        %1014 = vrot.lane.b32.xlu0 %v968, 127
        %v1015 = vpop.permute.xlu0 %1014
        %1016 = vrot.lane.b32.xlu0 %v970, 127
        %v1017 = vpop.permute.xlu0 %1016
        %1018 = vrot.lane.b32.xlu0 %v971, 127
        %v1019 = vpop.permute.xlu0 %1018
        %1020 = vrot.lane.b32.xlu0 %v973, 127
        %v1021 = vpop.permute.xlu0 %1020
        %1022 = vrot.lane.b32.xlu0 %v974, 127
        %v1023 = vpop.permute.xlu0 %1022
        %1040 = vrot.lane.b32.xlu0 %v952, 126
        %v1041 = vpop.permute.xlu0 %1040
        %1042 = vrot.lane.b32.xlu0 %v953, 126
        %v1043 = vpop.permute.xlu0 %1042
        %1044 = vrot.lane.b32.xlu0 %v955, 126
        %v1045 = vpop.permute.xlu0 %1044
        %1046 = vrot.lane.b32.xlu0 %v956, 126
        %v1047 = vpop.permute.xlu0 %1046
        %1048 = vrot.lane.b32.xlu0 %v958, 126
        %v1049 = vpop.permute.xlu0 %1048
        %1050 = vrot.lane.b32.xlu0 %v959, 126
        %v1051 = vpop.permute.xlu0 %1050
        %1052 = vrot.lane.b32.xlu0 %v961, 126
        %v1053 = vpop.permute.xlu0 %1052
        %1054 = vrot.lane.b32.xlu0 %v962, 126
        %v1055 = vpop.permute.xlu0 %1054
        %1056 = vrot.lane.b32.xlu0 %v964, 126
        %v1057 = vpop.permute.xlu0 %1056
        %1058 = vrot.lane.b32.xlu0 %v965, 126
        %v1059 = vpop.permute.xlu0 %1058
        %1060 = vrot.lane.b32.xlu0 %v967, 126
        %v1061 = vpop.permute.xlu0 %1060
        %1062 = vrot.lane.b32.xlu0 %v968, 126
        %v1063 = vpop.permute.xlu0 %1062
        %1064 = vrot.lane.b32.xlu0 %v970, 126
        %v1065 = vpop.permute.xlu0 %1064
        %1066 = vrot.lane.b32.xlu0 %v971, 126
        %v1067 = vpop.permute.xlu0 %1066
        %1068 = vrot.lane.b32.xlu0 %v973, 126
        %v1069 = vpop.permute.xlu0 %1068
        %1070 = vrot.lane.b32.xlu0 %v974, 126
        %v1071 = vpop.permute.xlu0 %1070
        %vm1096 = vcmask 1046528
        %v1097 = vrot.slane %v952, 1
        %v1098 = vrot.slane %v953, 1
        %v1099 = vsel %vm1096, %v1097, %v1098
        %v1100 = vrot.slane %v954, 1
        %v1101 = vsel %vm1096, %v1098, %v1100
        %v1102 = vrot.slane %v955, 1
        %v1103 = vrot.slane %v956, 1
        %v1104 = vsel %vm1096, %v1102, %v1103
        %v1105 = vrot.slane %v957, 1
        %v1106 = vsel %vm1096, %v1103, %v1105
        %v1107 = vrot.slane %v958, 1
        %v1108 = vrot.slane %v959, 1
        %v1109 = vsel %vm1096, %v1107, %v1108
        %v1110 = vrot.slane %v960, 1
        %v1111 = vsel %vm1096, %v1108, %v1110
        %v1112 = vrot.slane %v961, 1
        %v1113 = vrot.slane %v962, 1
        %v1114 = vsel %vm1096, %v1112, %v1113
        %v1115 = vrot.slane %v963, 1
        %v1116 = vsel %vm1096, %v1113, %v1115
        %v1117 = vrot.slane %v964, 1
        %v1118 = vrot.slane %v965, 1
        %v1119 = vsel %vm1096, %v1117, %v1118
        %v1120 = vrot.slane %v966, 1
        %v1121 = vsel %vm1096, %v1118, %v1120
        %v1122 = vrot.slane %v967, 1
        %v1123 = vrot.slane %v968, 1
        %v1124 = vsel %vm1096, %v1122, %v1123
        %v1125 = vrot.slane %v969, 1
        %v1126 = vsel %vm1096, %v1123, %v1125
        %v1127 = vrot.slane %v970, 1
        %v1128 = vrot.slane %v971, 1
        %v1129 = vsel %vm1096, %v1127, %v1128
        %v1130 = vrot.slane %v972, 1
        %v1131 = vsel %vm1096, %v1128, %v1130
        %v1132 = vrot.slane %v973, 1
        %v1133 = vrot.slane %v974, 1
        %v1134 = vsel %vm1096, %v1132, %v1133
        %v1135 = vrot.slane %v975, 1
        %v1136 = vsel %vm1096, %v1133, %v1135
        %1153 = vrot.lane.b32.xlu0 %v1099, 127
        %v1154 = vpop.permute.xlu0 %1153
        %1155 = vrot.lane.b32.xlu0 %v1101, 127
        %v1156 = vpop.permute.xlu0 %1155
        %1157 = vrot.lane.b32.xlu0 %v1104, 127
        %v1158 = vpop.permute.xlu0 %1157
        %1159 = vrot.lane.b32.xlu0 %v1106, 127
        %v1160 = vpop.permute.xlu0 %1159
        %1161 = vrot.lane.b32.xlu0 %v1109, 127
        %v1162 = vpop.permute.xlu0 %1161
        %1163 = vrot.lane.b32.xlu0 %v1111, 127
        %v1164 = vpop.permute.xlu0 %1163
        %1165 = vrot.lane.b32.xlu0 %v1114, 127
        %v1166 = vpop.permute.xlu0 %1165
        %1167 = vrot.lane.b32.xlu0 %v1116, 127
        %v1168 = vpop.permute.xlu0 %1167
        %1169 = vrot.lane.b32.xlu0 %v1119, 127
        %v1170 = vpop.permute.xlu0 %1169
        %1171 = vrot.lane.b32.xlu0 %v1121, 127
        %v1172 = vpop.permute.xlu0 %1171
        %1173 = vrot.lane.b32.xlu0 %v1124, 127
        %v1174 = vpop.permute.xlu0 %1173
        %1175 = vrot.lane.b32.xlu0 %v1126, 127
        %v1176 = vpop.permute.xlu0 %1175
        %1177 = vrot.lane.b32.xlu0 %v1129, 127
        %v1178 = vpop.permute.xlu0 %1177
        %1179 = vrot.lane.b32.xlu0 %v1131, 127
        %v1180 = vpop.permute.xlu0 %1179
        %1181 = vrot.lane.b32.xlu0 %v1134, 127
        %v1182 = vpop.permute.xlu0 %1181
        %1183 = vrot.lane.b32.xlu0 %v1136, 127
        %v1184 = vpop.permute.xlu0 %1183
        %1201 = vrot.lane.b32.xlu0 %v1099, 126
        %v1202 = vpop.permute.xlu0 %1201
        %1203 = vrot.lane.b32.xlu0 %v1101, 126
        %v1204 = vpop.permute.xlu0 %1203
        %1205 = vrot.lane.b32.xlu0 %v1104, 126
        %v1206 = vpop.permute.xlu0 %1205
        %1207 = vrot.lane.b32.xlu0 %v1106, 126
        %v1208 = vpop.permute.xlu0 %1207
        %1209 = vrot.lane.b32.xlu0 %v1109, 126
        %v1210 = vpop.permute.xlu0 %1209
        %1211 = vrot.lane.b32.xlu0 %v1111, 126
        %v1212 = vpop.permute.xlu0 %1211
        %1213 = vrot.lane.b32.xlu0 %v1114, 126
        %v1214 = vpop.permute.xlu0 %1213
        %1215 = vrot.lane.b32.xlu0 %v1116, 126
        %v1216 = vpop.permute.xlu0 %1215
        %1217 = vrot.lane.b32.xlu0 %v1119, 126
        %v1218 = vpop.permute.xlu0 %1217
        %1219 = vrot.lane.b32.xlu0 %v1121, 126
        %v1220 = vpop.permute.xlu0 %1219
        %1221 = vrot.lane.b32.xlu0 %v1124, 126
        %v1222 = vpop.permute.xlu0 %1221
        %1223 = vrot.lane.b32.xlu0 %v1126, 126
        %v1224 = vpop.permute.xlu0 %1223
        %1225 = vrot.lane.b32.xlu0 %v1129, 126
        %v1226 = vpop.permute.xlu0 %1225
        %1227 = vrot.lane.b32.xlu0 %v1131, 126
        %v1228 = vpop.permute.xlu0 %1227
        %1229 = vrot.lane.b32.xlu0 %v1134, 126
        %v1230 = vpop.permute.xlu0 %1229
        %1231 = vrot.lane.b32.xlu0 %v1136, 126
        %v1232 = vpop.permute.xlu0 %1231
        %vm1249 = vcmask 1045504
        %v1250 = vrot.slane %v952, 2
        %v1251 = vrot.slane %v953, 2
        %v1252 = vsel %vm1249, %v1250, %v1251
        %v1253 = vrot.slane %v954, 2
        %v1254 = vsel %vm1249, %v1251, %v1253
        %v1255 = vrot.slane %v955, 2
        %v1256 = vrot.slane %v956, 2
        %v1257 = vsel %vm1249, %v1255, %v1256
        %v1258 = vrot.slane %v957, 2
        %v1259 = vsel %vm1249, %v1256, %v1258
        %v1260 = vrot.slane %v958, 2
        %v1261 = vrot.slane %v959, 2
        %v1262 = vsel %vm1249, %v1260, %v1261
        %v1263 = vrot.slane %v960, 2
        %v1264 = vsel %vm1249, %v1261, %v1263
        %v1265 = vrot.slane %v961, 2
        %v1266 = vrot.slane %v962, 2
        %v1267 = vsel %vm1249, %v1265, %v1266
        %v1268 = vrot.slane %v963, 2
        %v1269 = vsel %vm1249, %v1266, %v1268
        %v1270 = vrot.slane %v964, 2
        %v1271 = vrot.slane %v965, 2
        %v1272 = vsel %vm1249, %v1270, %v1271
        %v1273 = vrot.slane %v966, 2
        %v1274 = vsel %vm1249, %v1271, %v1273
        %v1275 = vrot.slane %v967, 2
        %v1276 = vrot.slane %v968, 2
        %v1277 = vsel %vm1249, %v1275, %v1276
        %v1278 = vrot.slane %v969, 2
        %v1279 = vsel %vm1249, %v1276, %v1278
        %v1280 = vrot.slane %v970, 2
        %v1281 = vrot.slane %v971, 2
        %v1282 = vsel %vm1249, %v1280, %v1281
        %v1283 = vrot.slane %v972, 2
        %v1284 = vsel %vm1249, %v1281, %v1283
        %v1285 = vrot.slane %v973, 2
        %v1286 = vrot.slane %v974, 2
        %v1287 = vsel %vm1249, %v1285, %v1286
        %v1288 = vrot.slane %v975, 2
        %v1289 = vsel %vm1249, %v1286, %v1288
        %1306 = vrot.lane.b32.xlu0 %v1252, 127
        %v1307 = vpop.permute.xlu0 %1306
        %1308 = vrot.lane.b32.xlu0 %v1254, 127
        %v1309 = vpop.permute.xlu0 %1308
        %1310 = vrot.lane.b32.xlu0 %v1257, 127
        %v1311 = vpop.permute.xlu0 %1310
        %1312 = vrot.lane.b32.xlu0 %v1259, 127
        %v1313 = vpop.permute.xlu0 %1312
        %1314 = vrot.lane.b32.xlu0 %v1262, 127
        %v1315 = vpop.permute.xlu0 %1314
        %1316 = vrot.lane.b32.xlu0 %v1264, 127
        %v1317 = vpop.permute.xlu0 %1316
        %1318 = vrot.lane.b32.xlu0 %v1267, 127
        %v1319 = vpop.permute.xlu0 %1318
        %1320 = vrot.lane.b32.xlu0 %v1269, 127
        %v1321 = vpop.permute.xlu0 %1320
        %1322 = vrot.lane.b32.xlu0 %v1272, 127
        %v1323 = vpop.permute.xlu0 %1322
        %1324 = vrot.lane.b32.xlu0 %v1274, 127
        %v1325 = vpop.permute.xlu0 %1324
        %1326 = vrot.lane.b32.xlu0 %v1277, 127
        %v1327 = vpop.permute.xlu0 %1326
        %1328 = vrot.lane.b32.xlu0 %v1279, 127
        %v1329 = vpop.permute.xlu0 %1328
        %1330 = vrot.lane.b32.xlu0 %v1282, 127
        %v1331 = vpop.permute.xlu0 %1330
        %1332 = vrot.lane.b32.xlu0 %v1284, 127
        %v1333 = vpop.permute.xlu0 %1332
        %1334 = vrot.lane.b32.xlu0 %v1287, 127
        %v1335 = vpop.permute.xlu0 %1334
        %1336 = vrot.lane.b32.xlu0 %v1289, 127
        %v1337 = vpop.permute.xlu0 %1336
        %1354 = vrot.lane.b32.xlu0 %v1252, 126
        %v1355 = vpop.permute.xlu0 %1354
        %1356 = vrot.lane.b32.xlu0 %v1254, 126
        %v1357 = vpop.permute.xlu0 %1356
        %1358 = vrot.lane.b32.xlu0 %v1257, 126
        %v1359 = vpop.permute.xlu0 %1358
        %1360 = vrot.lane.b32.xlu0 %v1259, 126
        %v1361 = vpop.permute.xlu0 %1360
        %1362 = vrot.lane.b32.xlu0 %v1262, 126
        %v1363 = vpop.permute.xlu0 %1362
        %1364 = vrot.lane.b32.xlu0 %v1264, 126
        %v1365 = vpop.permute.xlu0 %1364
        %1366 = vrot.lane.b32.xlu0 %v1267, 126
        %v1367 = vpop.permute.xlu0 %1366
        %1368 = vrot.lane.b32.xlu0 %v1269, 126
        %v1369 = vpop.permute.xlu0 %1368
        %1370 = vrot.lane.b32.xlu0 %v1272, 126
        %v1371 = vpop.permute.xlu0 %1370
        %1372 = vrot.lane.b32.xlu0 %v1274, 126
        %v1373 = vpop.permute.xlu0 %1372
        %1374 = vrot.lane.b32.xlu0 %v1277, 126
        %v1375 = vpop.permute.xlu0 %1374
        %1376 = vrot.lane.b32.xlu0 %v1279, 126
        %v1377 = vpop.permute.xlu0 %1376
        %1378 = vrot.lane.b32.xlu0 %v1282, 126
        %v1379 = vpop.permute.xlu0 %1378
        %1380 = vrot.lane.b32.xlu0 %v1284, 126
        %v1381 = vpop.permute.xlu0 %1380
        %1382 = vrot.lane.b32.xlu0 %v1287, 126
        %v1383 = vpop.permute.xlu0 %1382
        %1384 = vrot.lane.b32.xlu0 %v1289, 126
        %v1385 = vpop.permute.xlu0 %1384
        %v1402 = vcombine.low %v952, %v958
        %v1403 = vcombine.high %v952, %v958
        %v1405 = vunpack.c.l.s4 1983009808
        %v1406 = vunpack.c.0.s8 %v1405
        %v1407 = vlaneseq
        %v1408 = vshrl.u32 %v1407, 7
        %v1409 = vsub.s32 %v1406, %v1408
        %v1410 = vrot.slane %v1402, %v1409
        %v1412 = vunpack.c.l.s4 1983009808
        %v1413 = vunpack.c.0.s8 %v1412
        %v1414 = vlaneseq
        %v1415 = vshrl.u32 %v1414, 7
        %v1416 = vsub.s32 %v1413, %v1415
        %v1417 = vrot.slane %v1403, %v1416
        %v1418 = vcombine.low %v955, %v961
        %v1419 = vcombine.high %v955, %v961
        %v1421 = vunpack.c.l.s4 1983009808
        %v1422 = vunpack.c.0.s8 %v1421
        %v1423 = vlaneseq
        %v1424 = vshrl.u32 %v1423, 7
        %v1425 = vsub.s32 %v1422, %v1424
        %v1426 = vrot.slane %v1418, %v1425
        %v1428 = vunpack.c.l.s4 1983009808
        %v1429 = vunpack.c.0.s8 %v1428
        %v1430 = vlaneseq
        %v1431 = vshrl.u32 %v1430, 7
        %v1432 = vsub.s32 %v1429, %v1431
        %v1433 = vrot.slane %v1419, %v1432
        %v1434 = vcombine.low %v964, %v970
        %v1435 = vcombine.high %v964, %v970
        %v1437 = vunpack.c.l.s4 1983009808
        %v1438 = vunpack.c.0.s8 %v1437
        %v1439 = vlaneseq
        %v1440 = vshrl.u32 %v1439, 7
        %v1441 = vsub.s32 %v1438, %v1440
        %v1442 = vrot.slane %v1434, %v1441
        %v1444 = vunpack.c.l.s4 1983009808
        %v1445 = vunpack.c.0.s8 %v1444
        %v1446 = vlaneseq
        %v1447 = vshrl.u32 %v1446, 7
        %v1448 = vsub.s32 %v1445, %v1447
        %v1449 = vrot.slane %v1435, %v1448
        %v1450 = vcombine.low %v967, %v973
        %v1451 = vcombine.high %v967, %v973
        %v1453 = vunpack.c.l.s4 1983009808
        %v1454 = vunpack.c.0.s8 %v1453
        %v1455 = vlaneseq
        %v1456 = vshrl.u32 %v1455, 7
        %v1457 = vsub.s32 %v1454, %v1456
        %v1458 = vrot.slane %v1450, %v1457
        %v1460 = vunpack.c.l.s4 1983009808
        %v1461 = vunpack.c.0.s8 %v1460
        %v1462 = vlaneseq
        %v1463 = vshrl.u32 %v1462, 7
        %v1464 = vsub.s32 %v1461, %v1463
        %v1465 = vrot.slane %v1451, %v1464
        %v1466 = vcombine.low %v1410, %v1426
        %v1467 = vcombine.high %v1410, %v1426
        %v1469 = vunpack.c.l.s4 1934713408
        %v1470 = vunpack.c.0.s8 %v1469
        %v1471 = vlaneseq
        %v1472 = vshrl.u32 %v1471, 7
        %v1473 = vsub.s32 %v1470, %v1472
        %v1474 = vrot.slane %v1466, %v1473
        %v1476 = vunpack.c.l.s4 1934713408
        %v1477 = vunpack.c.0.s8 %v1476
        %v1478 = vlaneseq
        %v1479 = vshrl.u32 %v1478, 7
        %v1480 = vsub.s32 %v1477, %v1479
        %v1481 = vrot.slane %v1467, %v1480
        %v1482 = vcombine.low %v1417, %v1433
        %v1483 = vcombine.high %v1417, %v1433
        %v1485 = vunpack.c.l.s4 1934713408
        %v1486 = vunpack.c.0.s8 %v1485
        %v1487 = vlaneseq
        %v1488 = vshrl.u32 %v1487, 7
        %v1489 = vsub.s32 %v1486, %v1488
        %v1490 = vrot.slane %v1482, %v1489
        %v1492 = vunpack.c.l.s4 1934713408
        %v1493 = vunpack.c.0.s8 %v1492
        %v1494 = vlaneseq
        %v1495 = vshrl.u32 %v1494, 7
        %v1496 = vsub.s32 %v1493, %v1495
        %v1497 = vrot.slane %v1483, %v1496
        %v1498 = vcombine.low %v1442, %v1458
        %v1499 = vcombine.high %v1442, %v1458
        %v1501 = vunpack.c.l.s4 1934713408
        %v1502 = vunpack.c.0.s8 %v1501
        %v1503 = vlaneseq
        %v1504 = vshrl.u32 %v1503, 7
        %v1505 = vsub.s32 %v1502, %v1504
        %v1506 = vrot.slane %v1498, %v1505
        %v1508 = vunpack.c.l.s4 1934713408
        %v1509 = vunpack.c.0.s8 %v1508
        %v1510 = vlaneseq
        %v1511 = vshrl.u32 %v1510, 7
        %v1512 = vsub.s32 %v1509, %v1511
        %v1513 = vrot.slane %v1499, %v1512
        %v1514 = vcombine.low %v1449, %v1465
        %v1515 = vcombine.high %v1449, %v1465
        %v1517 = vunpack.c.l.s4 1934713408
        %v1518 = vunpack.c.0.s8 %v1517
        %v1519 = vlaneseq
        %v1520 = vshrl.u32 %v1519, 7
        %v1521 = vsub.s32 %v1518, %v1520
        %v1522 = vrot.slane %v1514, %v1521
        %v1524 = vunpack.c.l.s4 1934713408
        %v1525 = vunpack.c.0.s8 %v1524
        %v1526 = vlaneseq
        %v1527 = vshrl.u32 %v1526, 7
        %v1528 = vsub.s32 %v1525, %v1527
        %v1529 = vrot.slane %v1515, %v1528
        %v1530 = vcombine.low %v1474, %v1506
        %v1531 = vcombine.high %v1474, %v1506
        %v1532 = vcombine.low %v1481, %v1513
        %v1533 = vcombine.high %v1481, %v1513
        %v1534 = vcombine.low %v1490, %v1522
        %v1535 = vcombine.high %v1490, %v1522
        %v1536 = vcombine.low %v1497, %v1529
        %v1537 = vcombine.high %v1497, %v1529
        %v1538 = vcombine.low %v993, %v1001
        %v1539 = vcombine.high %v993, %v1001
        %v1541 = vunpack.c.l.s4 1983009808
        %v1542 = vunpack.c.0.s8 %v1541
        %v1543 = vlaneseq
        %v1544 = vshrl.u32 %v1543, 7
        %v1545 = vsub.s32 %v1542, %v1544
        %v1546 = vrot.slane %v1538, %v1545
        %v1548 = vunpack.c.l.s4 1983009808
        %v1549 = vunpack.c.0.s8 %v1548
        %v1550 = vlaneseq
        %v1551 = vshrl.u32 %v1550, 7
        %v1552 = vsub.s32 %v1549, %v1551
        %v1553 = vrot.slane %v1539, %v1552
        %v1554 = vcombine.low %v997, %v1005
        %v1555 = vcombine.high %v997, %v1005
        %v1557 = vunpack.c.l.s4 1983009808
        %v1558 = vunpack.c.0.s8 %v1557
        %v1559 = vlaneseq
        %v1560 = vshrl.u32 %v1559, 7
        %v1561 = vsub.s32 %v1558, %v1560
        %v1562 = vrot.slane %v1554, %v1561
        %v1564 = vunpack.c.l.s4 1983009808
        %v1565 = vunpack.c.0.s8 %v1564
        %v1566 = vlaneseq
        %v1567 = vshrl.u32 %v1566, 7
        %v1568 = vsub.s32 %v1565, %v1567
        %v1569 = vrot.slane %v1555, %v1568
        %v1570 = vcombine.low %v1009, %v1017
        %v1571 = vcombine.high %v1009, %v1017
        %v1573 = vunpack.c.l.s4 1983009808
        %v1574 = vunpack.c.0.s8 %v1573
        %v1575 = vlaneseq
        %v1576 = vshrl.u32 %v1575, 7
        %v1577 = vsub.s32 %v1574, %v1576
        %v1578 = vrot.slane %v1570, %v1577
        %v1580 = vunpack.c.l.s4 1983009808
        %v1581 = vunpack.c.0.s8 %v1580
        %v1582 = vlaneseq
        %v1583 = vshrl.u32 %v1582, 7
        %v1584 = vsub.s32 %v1581, %v1583
        %v1585 = vrot.slane %v1571, %v1584
        %v1586 = vcombine.low %v1013, %v1021
        %v1587 = vcombine.high %v1013, %v1021
        %v1589 = vunpack.c.l.s4 1983009808
        %v1590 = vunpack.c.0.s8 %v1589
        %v1591 = vlaneseq
        %v1592 = vshrl.u32 %v1591, 7
        %v1593 = vsub.s32 %v1590, %v1592
        %v1594 = vrot.slane %v1586, %v1593
        %v1596 = vunpack.c.l.s4 1983009808
        %v1597 = vunpack.c.0.s8 %v1596
        %v1598 = vlaneseq
        %v1599 = vshrl.u32 %v1598, 7
        %v1600 = vsub.s32 %v1597, %v1599
        %v1601 = vrot.slane %v1587, %v1600
        %v1602 = vcombine.low %v1546, %v1562
        %v1603 = vcombine.high %v1546, %v1562
        %v1605 = vunpack.c.l.s4 1934713408
        %v1606 = vunpack.c.0.s8 %v1605
        %v1607 = vlaneseq
        %v1608 = vshrl.u32 %v1607, 7
        %v1609 = vsub.s32 %v1606, %v1608
        %v1610 = vrot.slane %v1602, %v1609
        %v1612 = vunpack.c.l.s4 1934713408
        %v1613 = vunpack.c.0.s8 %v1612
        %v1614 = vlaneseq
        %v1615 = vshrl.u32 %v1614, 7
        %v1616 = vsub.s32 %v1613, %v1615
        %v1617 = vrot.slane %v1603, %v1616
        %v1618 = vcombine.low %v1553, %v1569
        %v1619 = vcombine.high %v1553, %v1569
        %v1621 = vunpack.c.l.s4 1934713408
        %v1622 = vunpack.c.0.s8 %v1621
        %v1623 = vlaneseq
        %v1624 = vshrl.u32 %v1623, 7
        %v1625 = vsub.s32 %v1622, %v1624
        %v1626 = vrot.slane %v1618, %v1625
        %v1628 = vunpack.c.l.s4 1934713408
        %v1629 = vunpack.c.0.s8 %v1628
        %v1630 = vlaneseq
        %v1631 = vshrl.u32 %v1630, 7
        %v1632 = vsub.s32 %v1629, %v1631
        %v1633 = vrot.slane %v1619, %v1632
        %v1634 = vcombine.low %v1578, %v1594
        %v1635 = vcombine.high %v1578, %v1594
        %v1637 = vunpack.c.l.s4 1934713408
        %v1638 = vunpack.c.0.s8 %v1637
        %v1639 = vlaneseq
        %v1640 = vshrl.u32 %v1639, 7
        %v1641 = vsub.s32 %v1638, %v1640
        %v1642 = vrot.slane %v1634, %v1641
        %v1644 = vunpack.c.l.s4 1934713408
        %v1645 = vunpack.c.0.s8 %v1644
        %v1646 = vlaneseq
        %v1647 = vshrl.u32 %v1646, 7
        %v1648 = vsub.s32 %v1645, %v1647
        %v1649 = vrot.slane %v1635, %v1648
        %v1650 = vcombine.low %v1585, %v1601
        %v1651 = vcombine.high %v1585, %v1601
        %v1653 = vunpack.c.l.s4 1934713408
        %v1654 = vunpack.c.0.s8 %v1653
        %v1655 = vlaneseq
        %v1656 = vshrl.u32 %v1655, 7
        %v1657 = vsub.s32 %v1654, %v1656
        %v1658 = vrot.slane %v1650, %v1657
        %v1660 = vunpack.c.l.s4 1934713408
        %v1661 = vunpack.c.0.s8 %v1660
        %v1662 = vlaneseq
        %v1663 = vshrl.u32 %v1662, 7
        %v1664 = vsub.s32 %v1661, %v1663
        %v1665 = vrot.slane %v1651, %v1664
        %v1666 = vcombine.low %v1610, %v1642
        %v1667 = vcombine.high %v1610, %v1642
        %v1668 = vcombine.low %v1617, %v1649
        %v1669 = vcombine.high %v1617, %v1649
        %v1670 = vcombine.low %v1626, %v1658
        %v1671 = vcombine.high %v1626, %v1658
        %v1672 = vcombine.low %v1633, %v1665
        %v1673 = vcombine.high %v1633, %v1665
        %v1674 = vcombine.low %v1041, %v1049
        %v1675 = vcombine.high %v1041, %v1049
        %v1677 = vunpack.c.l.s4 1983009808
        %v1678 = vunpack.c.0.s8 %v1677
        %v1679 = vlaneseq
        %v1680 = vshrl.u32 %v1679, 7
        %v1681 = vsub.s32 %v1678, %v1680
        %v1682 = vrot.slane %v1674, %v1681
        %v1684 = vunpack.c.l.s4 1983009808
        %v1685 = vunpack.c.0.s8 %v1684
        %v1686 = vlaneseq
        %v1687 = vshrl.u32 %v1686, 7
        %v1688 = vsub.s32 %v1685, %v1687
        %v1689 = vrot.slane %v1675, %v1688
        %v1690 = vcombine.low %v1045, %v1053
        %v1691 = vcombine.high %v1045, %v1053
        %v1693 = vunpack.c.l.s4 1983009808
        %v1694 = vunpack.c.0.s8 %v1693
        %v1695 = vlaneseq
        %v1696 = vshrl.u32 %v1695, 7
        %v1697 = vsub.s32 %v1694, %v1696
        %v1698 = vrot.slane %v1690, %v1697
        %v1700 = vunpack.c.l.s4 1983009808
        %v1701 = vunpack.c.0.s8 %v1700
        %v1702 = vlaneseq
        %v1703 = vshrl.u32 %v1702, 7
        %v1704 = vsub.s32 %v1701, %v1703
        %v1705 = vrot.slane %v1691, %v1704
        %v1706 = vcombine.low %v1057, %v1065
        %v1707 = vcombine.high %v1057, %v1065
        %v1709 = vunpack.c.l.s4 1983009808
        %v1710 = vunpack.c.0.s8 %v1709
        %v1711 = vlaneseq
        %v1712 = vshrl.u32 %v1711, 7
        %v1713 = vsub.s32 %v1710, %v1712
        %v1714 = vrot.slane %v1706, %v1713
        %v1716 = vunpack.c.l.s4 1983009808
        %v1717 = vunpack.c.0.s8 %v1716
        %v1718 = vlaneseq
        %v1719 = vshrl.u32 %v1718, 7
        %v1720 = vsub.s32 %v1717, %v1719
        %v1721 = vrot.slane %v1707, %v1720
        %v1722 = vcombine.low %v1061, %v1069
        %v1723 = vcombine.high %v1061, %v1069
        %v1725 = vunpack.c.l.s4 1983009808
        %v1726 = vunpack.c.0.s8 %v1725
        %v1727 = vlaneseq
        %v1728 = vshrl.u32 %v1727, 7
        %v1729 = vsub.s32 %v1726, %v1728
        %v1730 = vrot.slane %v1722, %v1729
        %v1732 = vunpack.c.l.s4 1983009808
        %v1733 = vunpack.c.0.s8 %v1732
        %v1734 = vlaneseq
        %v1735 = vshrl.u32 %v1734, 7
        %v1736 = vsub.s32 %v1733, %v1735
        %v1737 = vrot.slane %v1723, %v1736
        %v1738 = vcombine.low %v1682, %v1698
        %v1739 = vcombine.high %v1682, %v1698
        %v1741 = vunpack.c.l.s4 1934713408
        %v1742 = vunpack.c.0.s8 %v1741
        %v1743 = vlaneseq
        %v1744 = vshrl.u32 %v1743, 7
        %v1745 = vsub.s32 %v1742, %v1744
        %v1746 = vrot.slane %v1738, %v1745
        %v1748 = vunpack.c.l.s4 1934713408
        %v1749 = vunpack.c.0.s8 %v1748
        %v1750 = vlaneseq
        %v1751 = vshrl.u32 %v1750, 7
        %v1752 = vsub.s32 %v1749, %v1751
        %v1753 = vrot.slane %v1739, %v1752
        %v1754 = vcombine.low %v1689, %v1705
        %v1755 = vcombine.high %v1689, %v1705
        %v1757 = vunpack.c.l.s4 1934713408
        %v1758 = vunpack.c.0.s8 %v1757
        %v1759 = vlaneseq
        %v1760 = vshrl.u32 %v1759, 7
        %v1761 = vsub.s32 %v1758, %v1760
        %v1762 = vrot.slane %v1754, %v1761
        %v1764 = vunpack.c.l.s4 1934713408
        %v1765 = vunpack.c.0.s8 %v1764
        %v1766 = vlaneseq
        %v1767 = vshrl.u32 %v1766, 7
        %v1768 = vsub.s32 %v1765, %v1767
        %v1769 = vrot.slane %v1755, %v1768
        %v1770 = vcombine.low %v1714, %v1730
        %v1771 = vcombine.high %v1714, %v1730
        %v1773 = vunpack.c.l.s4 1934713408
        %v1774 = vunpack.c.0.s8 %v1773
        %v1775 = vlaneseq
        %v1776 = vshrl.u32 %v1775, 7
        %v1777 = vsub.s32 %v1774, %v1776
        %v1778 = vrot.slane %v1770, %v1777
        %v1780 = vunpack.c.l.s4 1934713408
        %v1781 = vunpack.c.0.s8 %v1780
        %v1782 = vlaneseq
        %v1783 = vshrl.u32 %v1782, 7
        %v1784 = vsub.s32 %v1781, %v1783
        %v1785 = vrot.slane %v1771, %v1784
        %v1786 = vcombine.low %v1721, %v1737
        %v1787 = vcombine.high %v1721, %v1737
        %v1789 = vunpack.c.l.s4 1934713408
        %v1790 = vunpack.c.0.s8 %v1789
        %v1791 = vlaneseq
        %v1792 = vshrl.u32 %v1791, 7
        %v1793 = vsub.s32 %v1790, %v1792
        %v1794 = vrot.slane %v1786, %v1793
        %v1796 = vunpack.c.l.s4 1934713408
        %v1797 = vunpack.c.0.s8 %v1796
        %v1798 = vlaneseq
        %v1799 = vshrl.u32 %v1798, 7
        %v1800 = vsub.s32 %v1797, %v1799
        %v1801 = vrot.slane %v1787, %v1800
        %v1802 = vcombine.low %v1746, %v1778
        %v1803 = vcombine.high %v1746, %v1778
        %v1804 = vcombine.low %v1753, %v1785
        %v1805 = vcombine.high %v1753, %v1785
        %v1806 = vcombine.low %v1762, %v1794
        %v1807 = vcombine.high %v1762, %v1794
        %v1808 = vcombine.low %v1769, %v1801
        %v1809 = vcombine.high %v1769, %v1801
        %v1810 = vcombine.low %v1099, %v1109
        %v1811 = vcombine.high %v1099, %v1109
        %v1813 = vunpack.c.l.s4 1983009808
        %v1814 = vunpack.c.0.s8 %v1813
        %v1815 = vlaneseq
        %v1816 = vshrl.u32 %v1815, 7
        %v1817 = vsub.s32 %v1814, %v1816
        %v1818 = vrot.slane %v1810, %v1817
        %v1820 = vunpack.c.l.s4 1983009808
        %v1821 = vunpack.c.0.s8 %v1820
        %v1822 = vlaneseq
        %v1823 = vshrl.u32 %v1822, 7
        %v1824 = vsub.s32 %v1821, %v1823
        %v1825 = vrot.slane %v1811, %v1824
        %v1826 = vcombine.low %v1104, %v1114
        %v1827 = vcombine.high %v1104, %v1114
        %v1829 = vunpack.c.l.s4 1983009808
        %v1830 = vunpack.c.0.s8 %v1829
        %v1831 = vlaneseq
        %v1832 = vshrl.u32 %v1831, 7
        %v1833 = vsub.s32 %v1830, %v1832
        %v1834 = vrot.slane %v1826, %v1833
        %v1836 = vunpack.c.l.s4 1983009808
        %v1837 = vunpack.c.0.s8 %v1836
        %v1838 = vlaneseq
        %v1839 = vshrl.u32 %v1838, 7
        %v1840 = vsub.s32 %v1837, %v1839
        %v1841 = vrot.slane %v1827, %v1840
        %v1842 = vcombine.low %v1119, %v1129
        %v1843 = vcombine.high %v1119, %v1129
        %v1845 = vunpack.c.l.s4 1983009808
        %v1846 = vunpack.c.0.s8 %v1845
        %v1847 = vlaneseq
        %v1848 = vshrl.u32 %v1847, 7
        %v1849 = vsub.s32 %v1846, %v1848
        %v1850 = vrot.slane %v1842, %v1849
        %v1852 = vunpack.c.l.s4 1983009808
        %v1853 = vunpack.c.0.s8 %v1852
        %v1854 = vlaneseq
        %v1855 = vshrl.u32 %v1854, 7
        %v1856 = vsub.s32 %v1853, %v1855
        %v1857 = vrot.slane %v1843, %v1856
        %v1858 = vcombine.low %v1124, %v1134
        %v1859 = vcombine.high %v1124, %v1134
        %v1861 = vunpack.c.l.s4 1983009808
        %v1862 = vunpack.c.0.s8 %v1861
        %v1863 = vlaneseq
        %v1864 = vshrl.u32 %v1863, 7
        %v1865 = vsub.s32 %v1862, %v1864
        %v1866 = vrot.slane %v1858, %v1865
        %v1868 = vunpack.c.l.s4 1983009808
        %v1869 = vunpack.c.0.s8 %v1868
        %v1870 = vlaneseq
        %v1871 = vshrl.u32 %v1870, 7
        %v1872 = vsub.s32 %v1869, %v1871
        %v1873 = vrot.slane %v1859, %v1872
        %v1874 = vcombine.low %v1818, %v1834
        %v1875 = vcombine.high %v1818, %v1834
        %v1877 = vunpack.c.l.s4 1934713408
        %v1878 = vunpack.c.0.s8 %v1877
        %v1879 = vlaneseq
        %v1880 = vshrl.u32 %v1879, 7
        %v1881 = vsub.s32 %v1878, %v1880
        %v1882 = vrot.slane %v1874, %v1881
        %v1884 = vunpack.c.l.s4 1934713408
        %v1885 = vunpack.c.0.s8 %v1884
        %v1886 = vlaneseq
        %v1887 = vshrl.u32 %v1886, 7
        %v1888 = vsub.s32 %v1885, %v1887
        %v1889 = vrot.slane %v1875, %v1888
        %v1890 = vcombine.low %v1825, %v1841
        %v1891 = vcombine.high %v1825, %v1841
        %v1893 = vunpack.c.l.s4 1934713408
        %v1894 = vunpack.c.0.s8 %v1893
        %v1895 = vlaneseq
        %v1896 = vshrl.u32 %v1895, 7
        %v1897 = vsub.s32 %v1894, %v1896
        %v1898 = vrot.slane %v1890, %v1897
        %v1900 = vunpack.c.l.s4 1934713408
        %v1901 = vunpack.c.0.s8 %v1900
        %v1902 = vlaneseq
        %v1903 = vshrl.u32 %v1902, 7
        %v1904 = vsub.s32 %v1901, %v1903
        %v1905 = vrot.slane %v1891, %v1904
        %v1906 = vcombine.low %v1850, %v1866
        %v1907 = vcombine.high %v1850, %v1866
        %v1909 = vunpack.c.l.s4 1934713408
        %v1910 = vunpack.c.0.s8 %v1909
        %v1911 = vlaneseq
        %v1912 = vshrl.u32 %v1911, 7
        %v1913 = vsub.s32 %v1910, %v1912
        %v1914 = vrot.slane %v1906, %v1913
        %v1916 = vunpack.c.l.s4 1934713408
        %v1917 = vunpack.c.0.s8 %v1916
        %v1918 = vlaneseq
        %v1919 = vshrl.u32 %v1918, 7
        %v1920 = vsub.s32 %v1917, %v1919
        %v1921 = vrot.slane %v1907, %v1920
        %v1922 = vcombine.low %v1857, %v1873
        %v1923 = vcombine.high %v1857, %v1873
        %v1925 = vunpack.c.l.s4 1934713408
        %v1926 = vunpack.c.0.s8 %v1925
        %v1927 = vlaneseq
        %v1928 = vshrl.u32 %v1927, 7
        %v1929 = vsub.s32 %v1926, %v1928
        %v1930 = vrot.slane %v1922, %v1929
        %v1932 = vunpack.c.l.s4 1934713408
        %v1933 = vunpack.c.0.s8 %v1932
        %v1934 = vlaneseq
        %v1935 = vshrl.u32 %v1934, 7
        %v1936 = vsub.s32 %v1933, %v1935
        %v1937 = vrot.slane %v1923, %v1936
        %v1938 = vcombine.low %v1882, %v1914
        %v1939 = vcombine.high %v1882, %v1914
        %v1940 = vcombine.low %v1889, %v1921
        %v1941 = vcombine.high %v1889, %v1921
        %v1942 = vcombine.low %v1898, %v1930
        %v1943 = vcombine.high %v1898, %v1930
        %v1944 = vcombine.low %v1905, %v1937
        %v1945 = vcombine.high %v1905, %v1937
        %v1946 = vcombine.low %v1154, %v1162
        %v1947 = vcombine.high %v1154, %v1162
        %v1949 = vunpack.c.l.s4 1983009808
        %v1950 = vunpack.c.0.s8 %v1949
        %v1951 = vlaneseq
        %v1952 = vshrl.u32 %v1951, 7
        %v1953 = vsub.s32 %v1950, %v1952
        %v1954 = vrot.slane %v1946, %v1953
        %v1956 = vunpack.c.l.s4 1983009808
        %v1957 = vunpack.c.0.s8 %v1956
        %v1958 = vlaneseq
        %v1959 = vshrl.u32 %v1958, 7
        %v1960 = vsub.s32 %v1957, %v1959
        %v1961 = vrot.slane %v1947, %v1960
        %v1962 = vcombine.low %v1158, %v1166
        %v1963 = vcombine.high %v1158, %v1166
        %v1965 = vunpack.c.l.s4 1983009808
        %v1966 = vunpack.c.0.s8 %v1965
        %v1967 = vlaneseq
        %v1968 = vshrl.u32 %v1967, 7
        %v1969 = vsub.s32 %v1966, %v1968
        %v1970 = vrot.slane %v1962, %v1969
        %v1972 = vunpack.c.l.s4 1983009808
        %v1973 = vunpack.c.0.s8 %v1972
        %v1974 = vlaneseq
        %v1975 = vshrl.u32 %v1974, 7
        %v1976 = vsub.s32 %v1973, %v1975
        %v1977 = vrot.slane %v1963, %v1976
        %v1978 = vcombine.low %v1170, %v1178
        %v1979 = vcombine.high %v1170, %v1178
        %v1981 = vunpack.c.l.s4 1983009808
        %v1982 = vunpack.c.0.s8 %v1981
        %v1983 = vlaneseq
        %v1984 = vshrl.u32 %v1983, 7
        %v1985 = vsub.s32 %v1982, %v1984
        %v1986 = vrot.slane %v1978, %v1985
        %v1988 = vunpack.c.l.s4 1983009808
        %v1989 = vunpack.c.0.s8 %v1988
        %v1990 = vlaneseq
        %v1991 = vshrl.u32 %v1990, 7
        %v1992 = vsub.s32 %v1989, %v1991
        %v1993 = vrot.slane %v1979, %v1992
        %v1994 = vcombine.low %v1174, %v1182
        %v1995 = vcombine.high %v1174, %v1182
        %v1997 = vunpack.c.l.s4 1983009808
        %v1998 = vunpack.c.0.s8 %v1997
        %v1999 = vlaneseq
        %v2000 = vshrl.u32 %v1999, 7
        %v2001 = vsub.s32 %v1998, %v2000
        %v2002 = vrot.slane %v1994, %v2001
        %v2004 = vunpack.c.l.s4 1983009808
        %v2005 = vunpack.c.0.s8 %v2004
        %v2006 = vlaneseq
        %v2007 = vshrl.u32 %v2006, 7
        %v2008 = vsub.s32 %v2005, %v2007
        %v2009 = vrot.slane %v1995, %v2008
        %v2010 = vcombine.low %v1954, %v1970
        %v2011 = vcombine.high %v1954, %v1970
        %v2013 = vunpack.c.l.s4 1934713408
        %v2014 = vunpack.c.0.s8 %v2013
        %v2015 = vlaneseq
        %v2016 = vshrl.u32 %v2015, 7
        %v2017 = vsub.s32 %v2014, %v2016
        %v2018 = vrot.slane %v2010, %v2017
        %v2020 = vunpack.c.l.s4 1934713408
        %v2021 = vunpack.c.0.s8 %v2020
        %v2022 = vlaneseq
        %v2023 = vshrl.u32 %v2022, 7
        %v2024 = vsub.s32 %v2021, %v2023
        %v2025 = vrot.slane %v2011, %v2024
        %v2026 = vcombine.low %v1961, %v1977
        %v2027 = vcombine.high %v1961, %v1977
        %v2029 = vunpack.c.l.s4 1934713408
        %v2030 = vunpack.c.0.s8 %v2029
        %v2031 = vlaneseq
        %v2032 = vshrl.u32 %v2031, 7
        %v2033 = vsub.s32 %v2030, %v2032
        %v2034 = vrot.slane %v2026, %v2033
        %v2036 = vunpack.c.l.s4 1934713408
        %v2037 = vunpack.c.0.s8 %v2036
        %v2038 = vlaneseq
        %v2039 = vshrl.u32 %v2038, 7
        %v2040 = vsub.s32 %v2037, %v2039
        %v2041 = vrot.slane %v2027, %v2040
        %v2042 = vcombine.low %v1986, %v2002
        %v2043 = vcombine.high %v1986, %v2002
        %v2045 = vunpack.c.l.s4 1934713408
        %v2046 = vunpack.c.0.s8 %v2045
        %v2047 = vlaneseq
        %v2048 = vshrl.u32 %v2047, 7
        %v2049 = vsub.s32 %v2046, %v2048
        %v2050 = vrot.slane %v2042, %v2049
        %v2052 = vunpack.c.l.s4 1934713408
        %v2053 = vunpack.c.0.s8 %v2052
        %v2054 = vlaneseq
        %v2055 = vshrl.u32 %v2054, 7
        %v2056 = vsub.s32 %v2053, %v2055
        %v2057 = vrot.slane %v2043, %v2056
        %v2058 = vcombine.low %v1993, %v2009
        %v2059 = vcombine.high %v1993, %v2009
        %v2061 = vunpack.c.l.s4 1934713408
        %v2062 = vunpack.c.0.s8 %v2061
        %v2063 = vlaneseq
        %v2064 = vshrl.u32 %v2063, 7
        %v2065 = vsub.s32 %v2062, %v2064
        %v2066 = vrot.slane %v2058, %v2065
        %v2068 = vunpack.c.l.s4 1934713408
        %v2069 = vunpack.c.0.s8 %v2068
        %v2070 = vlaneseq
        %v2071 = vshrl.u32 %v2070, 7
        %v2072 = vsub.s32 %v2069, %v2071
        %v2073 = vrot.slane %v2059, %v2072
        %v2074 = vcombine.low %v2018, %v2050
        %v2075 = vcombine.high %v2018, %v2050
        %v2076 = vcombine.low %v2025, %v2057
        %v2077 = vcombine.high %v2025, %v2057
        %v2078 = vcombine.low %v2034, %v2066
        %v2079 = vcombine.high %v2034, %v2066
        %v2080 = vcombine.low %v2041, %v2073
        %v2081 = vcombine.high %v2041, %v2073
        %v2082 = vcombine.low %v1202, %v1210
        %v2083 = vcombine.high %v1202, %v1210
        %v2085 = vunpack.c.l.s4 1983009808
        %v2086 = vunpack.c.0.s8 %v2085
        %v2087 = vlaneseq
        %v2088 = vshrl.u32 %v2087, 7
        %v2089 = vsub.s32 %v2086, %v2088
        %v2090 = vrot.slane %v2082, %v2089
        %v2092 = vunpack.c.l.s4 1983009808
        %v2093 = vunpack.c.0.s8 %v2092
        %v2094 = vlaneseq
        %v2095 = vshrl.u32 %v2094, 7
        %v2096 = vsub.s32 %v2093, %v2095
        %v2097 = vrot.slane %v2083, %v2096
        %v2098 = vcombine.low %v1206, %v1214
        %v2099 = vcombine.high %v1206, %v1214
        %v2101 = vunpack.c.l.s4 1983009808
        %v2102 = vunpack.c.0.s8 %v2101
        %v2103 = vlaneseq
        %v2104 = vshrl.u32 %v2103, 7
        %v2105 = vsub.s32 %v2102, %v2104
        %v2106 = vrot.slane %v2098, %v2105
        %v2108 = vunpack.c.l.s4 1983009808
        %v2109 = vunpack.c.0.s8 %v2108
        %v2110 = vlaneseq
        %v2111 = vshrl.u32 %v2110, 7
        %v2112 = vsub.s32 %v2109, %v2111
        %v2113 = vrot.slane %v2099, %v2112
        %v2114 = vcombine.low %v1218, %v1226
        %v2115 = vcombine.high %v1218, %v1226
        %v2117 = vunpack.c.l.s4 1983009808
        %v2118 = vunpack.c.0.s8 %v2117
        %v2119 = vlaneseq
        %v2120 = vshrl.u32 %v2119, 7
        %v2121 = vsub.s32 %v2118, %v2120
        %v2122 = vrot.slane %v2114, %v2121
        %v2124 = vunpack.c.l.s4 1983009808
        %v2125 = vunpack.c.0.s8 %v2124
        %v2126 = vlaneseq
        %v2127 = vshrl.u32 %v2126, 7
        %v2128 = vsub.s32 %v2125, %v2127
        %v2129 = vrot.slane %v2115, %v2128
        %v2130 = vcombine.low %v1222, %v1230
        %v2131 = vcombine.high %v1222, %v1230
        %v2133 = vunpack.c.l.s4 1983009808
        %v2134 = vunpack.c.0.s8 %v2133
        %v2135 = vlaneseq
        %v2136 = vshrl.u32 %v2135, 7
        %v2137 = vsub.s32 %v2134, %v2136
        %v2138 = vrot.slane %v2130, %v2137
        %v2140 = vunpack.c.l.s4 1983009808
        %v2141 = vunpack.c.0.s8 %v2140
        %v2142 = vlaneseq
        %v2143 = vshrl.u32 %v2142, 7
        %v2144 = vsub.s32 %v2141, %v2143
        %v2145 = vrot.slane %v2131, %v2144
        %v2146 = vcombine.low %v2090, %v2106
        %v2147 = vcombine.high %v2090, %v2106
        %v2149 = vunpack.c.l.s4 1934713408
        %v2150 = vunpack.c.0.s8 %v2149
        %v2151 = vlaneseq
        %v2152 = vshrl.u32 %v2151, 7
        %v2153 = vsub.s32 %v2150, %v2152
        %v2154 = vrot.slane %v2146, %v2153
        %v2156 = vunpack.c.l.s4 1934713408
        %v2157 = vunpack.c.0.s8 %v2156
        %v2158 = vlaneseq
        %v2159 = vshrl.u32 %v2158, 7
        %v2160 = vsub.s32 %v2157, %v2159
        %v2161 = vrot.slane %v2147, %v2160
        %v2162 = vcombine.low %v2097, %v2113
        %v2163 = vcombine.high %v2097, %v2113
        %v2165 = vunpack.c.l.s4 1934713408
        %v2166 = vunpack.c.0.s8 %v2165
        %v2167 = vlaneseq
        %v2168 = vshrl.u32 %v2167, 7
        %v2169 = vsub.s32 %v2166, %v2168
        %v2170 = vrot.slane %v2162, %v2169
        %v2172 = vunpack.c.l.s4 1934713408
        %v2173 = vunpack.c.0.s8 %v2172
        %v2174 = vlaneseq
        %v2175 = vshrl.u32 %v2174, 7
        %v2176 = vsub.s32 %v2173, %v2175
        %v2177 = vrot.slane %v2163, %v2176
        %v2178 = vcombine.low %v2122, %v2138
        %v2179 = vcombine.high %v2122, %v2138
        %v2181 = vunpack.c.l.s4 1934713408
        %v2182 = vunpack.c.0.s8 %v2181
        %v2183 = vlaneseq
        %v2184 = vshrl.u32 %v2183, 7
        %v2185 = vsub.s32 %v2182, %v2184
        %v2186 = vrot.slane %v2178, %v2185
        %v2188 = vunpack.c.l.s4 1934713408
        %v2189 = vunpack.c.0.s8 %v2188
        %v2190 = vlaneseq
        %v2191 = vshrl.u32 %v2190, 7
        %v2192 = vsub.s32 %v2189, %v2191
        %v2193 = vrot.slane %v2179, %v2192
        %v2194 = vcombine.low %v2129, %v2145
        %v2195 = vcombine.high %v2129, %v2145
        %v2197 = vunpack.c.l.s4 1934713408
        %v2198 = vunpack.c.0.s8 %v2197
        %v2199 = vlaneseq
        %v2200 = vshrl.u32 %v2199, 7
        %v2201 = vsub.s32 %v2198, %v2200
        %v2202 = vrot.slane %v2194, %v2201
        %v2204 = vunpack.c.l.s4 1934713408
        %v2205 = vunpack.c.0.s8 %v2204
        %v2206 = vlaneseq
        %v2207 = vshrl.u32 %v2206, 7
        %v2208 = vsub.s32 %v2205, %v2207
        %v2209 = vrot.slane %v2195, %v2208
        %v2210 = vcombine.low %v2154, %v2186
        %v2211 = vcombine.high %v2154, %v2186
        %v2212 = vcombine.low %v2161, %v2193
        %v2213 = vcombine.high %v2161, %v2193
        %v2214 = vcombine.low %v2170, %v2202
        %v2215 = vcombine.high %v2170, %v2202
        %v2216 = vcombine.low %v2177, %v2209
        %v2217 = vcombine.high %v2177, %v2209
        %v2218 = vcombine.low %v1252, %v1262
        %v2219 = vcombine.high %v1252, %v1262
        %v2221 = vunpack.c.l.s4 1983009808
        %v2222 = vunpack.c.0.s8 %v2221
        %v2223 = vlaneseq
        %v2224 = vshrl.u32 %v2223, 7
        %v2225 = vsub.s32 %v2222, %v2224
        %v2226 = vrot.slane %v2218, %v2225
        %v2228 = vunpack.c.l.s4 1983009808
        %v2229 = vunpack.c.0.s8 %v2228
        %v2230 = vlaneseq
        %v2231 = vshrl.u32 %v2230, 7
        %v2232 = vsub.s32 %v2229, %v2231
        %v2233 = vrot.slane %v2219, %v2232
        %v2234 = vcombine.low %v1257, %v1267
        %v2235 = vcombine.high %v1257, %v1267
        %v2237 = vunpack.c.l.s4 1983009808
        %v2238 = vunpack.c.0.s8 %v2237
        %v2239 = vlaneseq
        %v2240 = vshrl.u32 %v2239, 7
        %v2241 = vsub.s32 %v2238, %v2240
        %v2242 = vrot.slane %v2234, %v2241
        %v2244 = vunpack.c.l.s4 1983009808
        %v2245 = vunpack.c.0.s8 %v2244
        %v2246 = vlaneseq
        %v2247 = vshrl.u32 %v2246, 7
        %v2248 = vsub.s32 %v2245, %v2247
        %v2249 = vrot.slane %v2235, %v2248
        %v2250 = vcombine.low %v1272, %v1282
        %v2251 = vcombine.high %v1272, %v1282
        %v2253 = vunpack.c.l.s4 1983009808
        %v2254 = vunpack.c.0.s8 %v2253
        %v2255 = vlaneseq
        %v2256 = vshrl.u32 %v2255, 7
        %v2257 = vsub.s32 %v2254, %v2256
        %v2258 = vrot.slane %v2250, %v2257
        %v2260 = vunpack.c.l.s4 1983009808
        %v2261 = vunpack.c.0.s8 %v2260
        %v2262 = vlaneseq
        %v2263 = vshrl.u32 %v2262, 7
        %v2264 = vsub.s32 %v2261, %v2263
        %v2265 = vrot.slane %v2251, %v2264
        %v2266 = vcombine.low %v1277, %v1287
        %v2267 = vcombine.high %v1277, %v1287
        %v2269 = vunpack.c.l.s4 1983009808
        %v2270 = vunpack.c.0.s8 %v2269
        %v2271 = vlaneseq
        %v2272 = vshrl.u32 %v2271, 7
        %v2273 = vsub.s32 %v2270, %v2272
        %v2274 = vrot.slane %v2266, %v2273
        %v2276 = vunpack.c.l.s4 1983009808
        %v2277 = vunpack.c.0.s8 %v2276
        %v2278 = vlaneseq
        %v2279 = vshrl.u32 %v2278, 7
        %v2280 = vsub.s32 %v2277, %v2279
        %v2281 = vrot.slane %v2267, %v2280
        %v2282 = vcombine.low %v2226, %v2242
        %v2283 = vcombine.high %v2226, %v2242
        %v2285 = vunpack.c.l.s4 1934713408
        %v2286 = vunpack.c.0.s8 %v2285
        %v2287 = vlaneseq
        %v2288 = vshrl.u32 %v2287, 7
        %v2289 = vsub.s32 %v2286, %v2288
        %v2290 = vrot.slane %v2282, %v2289
        %v2292 = vunpack.c.l.s4 1934713408
        %v2293 = vunpack.c.0.s8 %v2292
        %v2294 = vlaneseq
        %v2295 = vshrl.u32 %v2294, 7
        %v2296 = vsub.s32 %v2293, %v2295
        %v2297 = vrot.slane %v2283, %v2296
        %v2298 = vcombine.low %v2233, %v2249
        %v2299 = vcombine.high %v2233, %v2249
        %v2301 = vunpack.c.l.s4 1934713408
        %v2302 = vunpack.c.0.s8 %v2301
        %v2303 = vlaneseq
        %v2304 = vshrl.u32 %v2303, 7
        %v2305 = vsub.s32 %v2302, %v2304
        %v2306 = vrot.slane %v2298, %v2305
        %v2308 = vunpack.c.l.s4 1934713408
        %v2309 = vunpack.c.0.s8 %v2308
        %v2310 = vlaneseq
        %v2311 = vshrl.u32 %v2310, 7
        %v2312 = vsub.s32 %v2309, %v2311
        %v2313 = vrot.slane %v2299, %v2312
        %v2314 = vcombine.low %v2258, %v2274
        %v2315 = vcombine.high %v2258, %v2274
        %v2317 = vunpack.c.l.s4 1934713408
        %v2318 = vunpack.c.0.s8 %v2317
        %v2319 = vlaneseq
        %v2320 = vshrl.u32 %v2319, 7
        %v2321 = vsub.s32 %v2318, %v2320
        %v2322 = vrot.slane %v2314, %v2321
        %v2324 = vunpack.c.l.s4 1934713408
        %v2325 = vunpack.c.0.s8 %v2324
        %v2326 = vlaneseq
        %v2327 = vshrl.u32 %v2326, 7
        %v2328 = vsub.s32 %v2325, %v2327
        %v2329 = vrot.slane %v2315, %v2328
        %v2330 = vcombine.low %v2265, %v2281
        %v2331 = vcombine.high %v2265, %v2281
        %v2333 = vunpack.c.l.s4 1934713408
        %v2334 = vunpack.c.0.s8 %v2333
        %v2335 = vlaneseq
        %v2336 = vshrl.u32 %v2335, 7
        %v2337 = vsub.s32 %v2334, %v2336
        %v2338 = vrot.slane %v2330, %v2337
        %v2340 = vunpack.c.l.s4 1934713408
        %v2341 = vunpack.c.0.s8 %v2340
        %v2342 = vlaneseq
        %v2343 = vshrl.u32 %v2342, 7
        %v2344 = vsub.s32 %v2341, %v2343
        %v2345 = vrot.slane %v2331, %v2344
        %v2346 = vcombine.low %v2290, %v2322
        %v2347 = vcombine.high %v2290, %v2322
        %v2348 = vcombine.low %v2297, %v2329
        %v2349 = vcombine.high %v2297, %v2329
        %v2350 = vcombine.low %v2306, %v2338
        %v2351 = vcombine.high %v2306, %v2338
        %v2352 = vcombine.low %v2313, %v2345
        %v2353 = vcombine.high %v2313, %v2345
        %v2354 = vcombine.low %v1307, %v1315
        %v2355 = vcombine.high %v1307, %v1315
        %v2357 = vunpack.c.l.s4 1983009808
        %v2358 = vunpack.c.0.s8 %v2357
        %v2359 = vlaneseq
        %v2360 = vshrl.u32 %v2359, 7
        %v2361 = vsub.s32 %v2358, %v2360
        %v2362 = vrot.slane %v2354, %v2361
        %v2364 = vunpack.c.l.s4 1983009808
        %v2365 = vunpack.c.0.s8 %v2364
        %v2366 = vlaneseq
        %v2367 = vshrl.u32 %v2366, 7
        %v2368 = vsub.s32 %v2365, %v2367
        %v2369 = vrot.slane %v2355, %v2368
        %v2370 = vcombine.low %v1311, %v1319
        %v2371 = vcombine.high %v1311, %v1319
        %v2373 = vunpack.c.l.s4 1983009808
        %v2374 = vunpack.c.0.s8 %v2373
        %v2375 = vlaneseq
        %v2376 = vshrl.u32 %v2375, 7
        %v2377 = vsub.s32 %v2374, %v2376
        %v2378 = vrot.slane %v2370, %v2377
        %v2380 = vunpack.c.l.s4 1983009808
        %v2381 = vunpack.c.0.s8 %v2380
        %v2382 = vlaneseq
        %v2383 = vshrl.u32 %v2382, 7
        %v2384 = vsub.s32 %v2381, %v2383
        %v2385 = vrot.slane %v2371, %v2384
        %v2386 = vcombine.low %v1323, %v1331
        %v2387 = vcombine.high %v1323, %v1331
        %v2389 = vunpack.c.l.s4 1983009808
        %v2390 = vunpack.c.0.s8 %v2389
        %v2391 = vlaneseq
        %v2392 = vshrl.u32 %v2391, 7
        %v2393 = vsub.s32 %v2390, %v2392
        %v2394 = vrot.slane %v2386, %v2393
        %v2396 = vunpack.c.l.s4 1983009808
        %v2397 = vunpack.c.0.s8 %v2396
        %v2398 = vlaneseq
        %v2399 = vshrl.u32 %v2398, 7
        %v2400 = vsub.s32 %v2397, %v2399
        %v2401 = vrot.slane %v2387, %v2400
        %v2402 = vcombine.low %v1327, %v1335
        %v2403 = vcombine.high %v1327, %v1335
        %v2405 = vunpack.c.l.s4 1983009808
        %v2406 = vunpack.c.0.s8 %v2405
        %v2407 = vlaneseq
        %v2408 = vshrl.u32 %v2407, 7
        %v2409 = vsub.s32 %v2406, %v2408
        %v2410 = vrot.slane %v2402, %v2409
        %v2412 = vunpack.c.l.s4 1983009808
        %v2413 = vunpack.c.0.s8 %v2412
        %v2414 = vlaneseq
        %v2415 = vshrl.u32 %v2414, 7
        %v2416 = vsub.s32 %v2413, %v2415
        %v2417 = vrot.slane %v2403, %v2416
        %v2418 = vcombine.low %v2362, %v2378
        %v2419 = vcombine.high %v2362, %v2378
        %v2421 = vunpack.c.l.s4 1934713408
        %v2422 = vunpack.c.0.s8 %v2421
        %v2423 = vlaneseq
        %v2424 = vshrl.u32 %v2423, 7
        %v2425 = vsub.s32 %v2422, %v2424
        %v2426 = vrot.slane %v2418, %v2425
        %v2428 = vunpack.c.l.s4 1934713408
        %v2429 = vunpack.c.0.s8 %v2428
        %v2430 = vlaneseq
        %v2431 = vshrl.u32 %v2430, 7
        %v2432 = vsub.s32 %v2429, %v2431
        %v2433 = vrot.slane %v2419, %v2432
        %v2434 = vcombine.low %v2369, %v2385
        %v2435 = vcombine.high %v2369, %v2385
        %v2437 = vunpack.c.l.s4 1934713408
        %v2438 = vunpack.c.0.s8 %v2437
        %v2439 = vlaneseq
        %v2440 = vshrl.u32 %v2439, 7
        %v2441 = vsub.s32 %v2438, %v2440
        %v2442 = vrot.slane %v2434, %v2441
        %v2444 = vunpack.c.l.s4 1934713408
        %v2445 = vunpack.c.0.s8 %v2444
        %v2446 = vlaneseq
        %v2447 = vshrl.u32 %v2446, 7
        %v2448 = vsub.s32 %v2445, %v2447
        %v2449 = vrot.slane %v2435, %v2448
        %v2450 = vcombine.low %v2394, %v2410
        %v2451 = vcombine.high %v2394, %v2410
        %v2453 = vunpack.c.l.s4 1934713408
        %v2454 = vunpack.c.0.s8 %v2453
        %v2455 = vlaneseq
        %v2456 = vshrl.u32 %v2455, 7
        %v2457 = vsub.s32 %v2454, %v2456
        %v2458 = vrot.slane %v2450, %v2457
        %v2460 = vunpack.c.l.s4 1934713408
        %v2461 = vunpack.c.0.s8 %v2460
        %v2462 = vlaneseq
        %v2463 = vshrl.u32 %v2462, 7
        %v2464 = vsub.s32 %v2461, %v2463
        %v2465 = vrot.slane %v2451, %v2464
        %v2466 = vcombine.low %v2401, %v2417
        %v2467 = vcombine.high %v2401, %v2417
        %v2469 = vunpack.c.l.s4 1934713408
        %v2470 = vunpack.c.0.s8 %v2469
        %v2471 = vlaneseq
        %v2472 = vshrl.u32 %v2471, 7
        %v2473 = vsub.s32 %v2470, %v2472
        %v2474 = vrot.slane %v2466, %v2473
        %v2476 = vunpack.c.l.s4 1934713408
        %v2477 = vunpack.c.0.s8 %v2476
        %v2478 = vlaneseq
        %v2479 = vshrl.u32 %v2478, 7
        %v2480 = vsub.s32 %v2477, %v2479
        %v2481 = vrot.slane %v2467, %v2480
        %v2482 = vcombine.low %v2426, %v2458
        %v2483 = vcombine.high %v2426, %v2458
        %v2484 = vcombine.low %v2433, %v2465
        %v2485 = vcombine.high %v2433, %v2465
        %v2486 = vcombine.low %v2442, %v2474
        %v2487 = vcombine.high %v2442, %v2474
        %v2488 = vcombine.low %v2449, %v2481
        %v2489 = vcombine.high %v2449, %v2481
        %v2490 = vcombine.low %v1355, %v1363
        %v2491 = vcombine.high %v1355, %v1363
        %v2493 = vunpack.c.l.s4 1983009808
        %v2494 = vunpack.c.0.s8 %v2493
        %v2495 = vlaneseq
        %v2496 = vshrl.u32 %v2495, 7
        %v2497 = vsub.s32 %v2494, %v2496
        %v2498 = vrot.slane %v2490, %v2497
        %v2500 = vunpack.c.l.s4 1983009808
        %v2501 = vunpack.c.0.s8 %v2500
        %v2502 = vlaneseq
        %v2503 = vshrl.u32 %v2502, 7
        %v2504 = vsub.s32 %v2501, %v2503
        %v2505 = vrot.slane %v2491, %v2504
        %v2506 = vcombine.low %v1359, %v1367
        %v2507 = vcombine.high %v1359, %v1367
        %v2509 = vunpack.c.l.s4 1983009808
        %v2510 = vunpack.c.0.s8 %v2509
        %v2511 = vlaneseq
        %v2512 = vshrl.u32 %v2511, 7
        %v2513 = vsub.s32 %v2510, %v2512
        %v2514 = vrot.slane %v2506, %v2513
        %v2516 = vunpack.c.l.s4 1983009808
        %v2517 = vunpack.c.0.s8 %v2516
        %v2518 = vlaneseq
        %v2519 = vshrl.u32 %v2518, 7
        %v2520 = vsub.s32 %v2517, %v2519
        %v2521 = vrot.slane %v2507, %v2520
        %v2522 = vcombine.low %v1371, %v1379
        %v2523 = vcombine.high %v1371, %v1379
        %v2525 = vunpack.c.l.s4 1983009808
        %v2526 = vunpack.c.0.s8 %v2525
        %v2527 = vlaneseq
        %v2528 = vshrl.u32 %v2527, 7
        %v2529 = vsub.s32 %v2526, %v2528
        %v2530 = vrot.slane %v2522, %v2529
        %v2532 = vunpack.c.l.s4 1983009808
        %v2533 = vunpack.c.0.s8 %v2532
        %v2534 = vlaneseq
        %v2535 = vshrl.u32 %v2534, 7
        %v2536 = vsub.s32 %v2533, %v2535
        %v2537 = vrot.slane %v2523, %v2536
        %v2538 = vcombine.low %v1375, %v1383
        %v2539 = vcombine.high %v1375, %v1383
        %v2541 = vunpack.c.l.s4 1983009808
        %v2542 = vunpack.c.0.s8 %v2541
        %v2543 = vlaneseq
        %v2544 = vshrl.u32 %v2543, 7
        %v2545 = vsub.s32 %v2542, %v2544
        %v2546 = vrot.slane %v2538, %v2545
        %v2548 = vunpack.c.l.s4 1983009808
        %v2549 = vunpack.c.0.s8 %v2548
        %v2550 = vlaneseq
        %v2551 = vshrl.u32 %v2550, 7
        %v2552 = vsub.s32 %v2549, %v2551
        %v2553 = vrot.slane %v2539, %v2552
        %v2554 = vcombine.low %v2498, %v2514
        %v2555 = vcombine.high %v2498, %v2514
        %v2557 = vunpack.c.l.s4 1934713408
        %v2558 = vunpack.c.0.s8 %v2557
        %v2559 = vlaneseq
        %v2560 = vshrl.u32 %v2559, 7
        %v2561 = vsub.s32 %v2558, %v2560
        %v2562 = vrot.slane %v2554, %v2561
        %v2564 = vunpack.c.l.s4 1934713408
        %v2565 = vunpack.c.0.s8 %v2564
        %v2566 = vlaneseq
        %v2567 = vshrl.u32 %v2566, 7
        %v2568 = vsub.s32 %v2565, %v2567
        %v2569 = vrot.slane %v2555, %v2568
        %v2570 = vcombine.low %v2505, %v2521
        %v2571 = vcombine.high %v2505, %v2521
        %v2573 = vunpack.c.l.s4 1934713408
        %v2574 = vunpack.c.0.s8 %v2573
        %v2575 = vlaneseq
        %v2576 = vshrl.u32 %v2575, 7
        %v2577 = vsub.s32 %v2574, %v2576
        %v2578 = vrot.slane %v2570, %v2577
        %v2580 = vunpack.c.l.s4 1934713408
        %v2581 = vunpack.c.0.s8 %v2580
        %v2582 = vlaneseq
        %v2583 = vshrl.u32 %v2582, 7
        %v2584 = vsub.s32 %v2581, %v2583
        %v2585 = vrot.slane %v2571, %v2584
        %v2586 = vcombine.low %v2530, %v2546
        %v2587 = vcombine.high %v2530, %v2546
        %v2589 = vunpack.c.l.s4 1934713408
        %v2590 = vunpack.c.0.s8 %v2589
        %v2591 = vlaneseq
        %v2592 = vshrl.u32 %v2591, 7
        %v2593 = vsub.s32 %v2590, %v2592
        %v2594 = vrot.slane %v2586, %v2593
        %v2596 = vunpack.c.l.s4 1934713408
        %v2597 = vunpack.c.0.s8 %v2596
        %v2598 = vlaneseq
        %v2599 = vshrl.u32 %v2598, 7
        %v2600 = vsub.s32 %v2597, %v2599
        %v2601 = vrot.slane %v2587, %v2600
        %v2602 = vcombine.low %v2537, %v2553
        %v2603 = vcombine.high %v2537, %v2553
        %v2605 = vunpack.c.l.s4 1934713408
        %v2606 = vunpack.c.0.s8 %v2605
        %v2607 = vlaneseq
        %v2608 = vshrl.u32 %v2607, 7
        %v2609 = vsub.s32 %v2606, %v2608
        %v2610 = vrot.slane %v2602, %v2609
        %v2612 = vunpack.c.l.s4 1934713408
        %v2613 = vunpack.c.0.s8 %v2612
        %v2614 = vlaneseq
        %v2615 = vshrl.u32 %v2614, 7
        %v2616 = vsub.s32 %v2613, %v2615
        %v2617 = vrot.slane %v2603, %v2616
        %v2618 = vcombine.low %v2562, %v2594
        %v2619 = vcombine.high %v2562, %v2594
        %v2620 = vcombine.low %v2569, %v2601
        %v2621 = vcombine.high %v2569, %v2601
        %v2622 = vcombine.low %v2578, %v2610
        %v2623 = vcombine.high %v2578, %v2610
        %v2624 = vcombine.low %v2585, %v2617
        %v2625 = vcombine.high %v2585, %v2617
        %v2626 = vcombine.low %v953, %v959
        %v2627 = vcombine.high %v953, %v959
        %v2629 = vunpack.c.l.s4 1983009808
        %v2630 = vunpack.c.0.s8 %v2629
        %v2631 = vlaneseq
        %v2632 = vshrl.u32 %v2631, 7
        %v2633 = vsub.s32 %v2630, %v2632
        %v2634 = vrot.slane %v2626, %v2633
        %v2636 = vunpack.c.l.s4 1983009808
        %v2637 = vunpack.c.0.s8 %v2636
        %v2638 = vlaneseq
        %v2639 = vshrl.u32 %v2638, 7
        %v2640 = vsub.s32 %v2637, %v2639
        %v2641 = vrot.slane %v2627, %v2640
        %v2642 = vcombine.low %v956, %v962
        %v2643 = vcombine.high %v956, %v962
        %v2645 = vunpack.c.l.s4 1983009808
        %v2646 = vunpack.c.0.s8 %v2645
        %v2647 = vlaneseq
        %v2648 = vshrl.u32 %v2647, 7
        %v2649 = vsub.s32 %v2646, %v2648
        %v2650 = vrot.slane %v2642, %v2649
        %v2652 = vunpack.c.l.s4 1983009808
        %v2653 = vunpack.c.0.s8 %v2652
        %v2654 = vlaneseq
        %v2655 = vshrl.u32 %v2654, 7
        %v2656 = vsub.s32 %v2653, %v2655
        %v2657 = vrot.slane %v2643, %v2656
        %v2658 = vcombine.low %v965, %v971
        %v2659 = vcombine.high %v965, %v971
        %v2661 = vunpack.c.l.s4 1983009808
        %v2662 = vunpack.c.0.s8 %v2661
        %v2663 = vlaneseq
        %v2664 = vshrl.u32 %v2663, 7
        %v2665 = vsub.s32 %v2662, %v2664
        %v2666 = vrot.slane %v2658, %v2665
        %v2668 = vunpack.c.l.s4 1983009808
        %v2669 = vunpack.c.0.s8 %v2668
        %v2670 = vlaneseq
        %v2671 = vshrl.u32 %v2670, 7
        %v2672 = vsub.s32 %v2669, %v2671
        %v2673 = vrot.slane %v2659, %v2672
        %v2674 = vcombine.low %v968, %v974
        %v2675 = vcombine.high %v968, %v974
        %v2677 = vunpack.c.l.s4 1983009808
        %v2678 = vunpack.c.0.s8 %v2677
        %v2679 = vlaneseq
        %v2680 = vshrl.u32 %v2679, 7
        %v2681 = vsub.s32 %v2678, %v2680
        %v2682 = vrot.slane %v2674, %v2681
        %v2684 = vunpack.c.l.s4 1983009808
        %v2685 = vunpack.c.0.s8 %v2684
        %v2686 = vlaneseq
        %v2687 = vshrl.u32 %v2686, 7
        %v2688 = vsub.s32 %v2685, %v2687
        %v2689 = vrot.slane %v2675, %v2688
        %v2690 = vcombine.low %v2634, %v2650
        %v2691 = vcombine.high %v2634, %v2650
        %v2693 = vunpack.c.l.s4 1934713408
        %v2694 = vunpack.c.0.s8 %v2693
        %v2695 = vlaneseq
        %v2696 = vshrl.u32 %v2695, 7
        %v2697 = vsub.s32 %v2694, %v2696
        %v2698 = vrot.slane %v2690, %v2697
        %v2700 = vunpack.c.l.s4 1934713408
        %v2701 = vunpack.c.0.s8 %v2700
        %v2702 = vlaneseq
        %v2703 = vshrl.u32 %v2702, 7
        %v2704 = vsub.s32 %v2701, %v2703
        %v2705 = vrot.slane %v2691, %v2704
        %v2706 = vcombine.low %v2641, %v2657
        %v2707 = vcombine.high %v2641, %v2657
        %v2709 = vunpack.c.l.s4 1934713408
        %v2710 = vunpack.c.0.s8 %v2709
        %v2711 = vlaneseq
        %v2712 = vshrl.u32 %v2711, 7
        %v2713 = vsub.s32 %v2710, %v2712
        %v2714 = vrot.slane %v2706, %v2713
        %v2716 = vunpack.c.l.s4 1934713408
        %v2717 = vunpack.c.0.s8 %v2716
        %v2718 = vlaneseq
        %v2719 = vshrl.u32 %v2718, 7
        %v2720 = vsub.s32 %v2717, %v2719
        %v2721 = vrot.slane %v2707, %v2720
        %v2722 = vcombine.low %v2666, %v2682
        %v2723 = vcombine.high %v2666, %v2682
        %v2725 = vunpack.c.l.s4 1934713408
        %v2726 = vunpack.c.0.s8 %v2725
        %v2727 = vlaneseq
        %v2728 = vshrl.u32 %v2727, 7
        %v2729 = vsub.s32 %v2726, %v2728
        %v2730 = vrot.slane %v2722, %v2729
        %v2732 = vunpack.c.l.s4 1934713408
        %v2733 = vunpack.c.0.s8 %v2732
        %v2734 = vlaneseq
        %v2735 = vshrl.u32 %v2734, 7
        %v2736 = vsub.s32 %v2733, %v2735
        %v2737 = vrot.slane %v2723, %v2736
        %v2738 = vcombine.low %v2673, %v2689
        %v2739 = vcombine.high %v2673, %v2689
        %v2741 = vunpack.c.l.s4 1934713408
        %v2742 = vunpack.c.0.s8 %v2741
        %v2743 = vlaneseq
        %v2744 = vshrl.u32 %v2743, 7
        %v2745 = vsub.s32 %v2742, %v2744
        %v2746 = vrot.slane %v2738, %v2745
        %v2748 = vunpack.c.l.s4 1934713408
        %v2749 = vunpack.c.0.s8 %v2748
        %v2750 = vlaneseq
        %v2751 = vshrl.u32 %v2750, 7
        %v2752 = vsub.s32 %v2749, %v2751
        %v2753 = vrot.slane %v2739, %v2752
        %v2754 = vcombine.low %v2698, %v2730
        %v2755 = vcombine.high %v2698, %v2730
        %v2756 = vcombine.low %v2705, %v2737
        %v2757 = vcombine.high %v2705, %v2737
        %v2758 = vcombine.low %v2714, %v2746
        %v2759 = vcombine.high %v2714, %v2746
        %v2760 = vcombine.low %v2721, %v2753
        %v2761 = vcombine.high %v2721, %v2753
        %v2762 = vcombine.low %v995, %v1003
        %v2763 = vcombine.high %v995, %v1003
        %v2765 = vunpack.c.l.s4 1983009808
        %v2766 = vunpack.c.0.s8 %v2765
        %v2767 = vlaneseq
        %v2768 = vshrl.u32 %v2767, 7
        %v2769 = vsub.s32 %v2766, %v2768
        %v2770 = vrot.slane %v2762, %v2769
        %v2772 = vunpack.c.l.s4 1983009808
        %v2773 = vunpack.c.0.s8 %v2772
        %v2774 = vlaneseq
        %v2775 = vshrl.u32 %v2774, 7
        %v2776 = vsub.s32 %v2773, %v2775
        %v2777 = vrot.slane %v2763, %v2776
        %v2778 = vcombine.low %v999, %v1007
        %v2779 = vcombine.high %v999, %v1007
        %v2781 = vunpack.c.l.s4 1983009808
        %v2782 = vunpack.c.0.s8 %v2781
        %v2783 = vlaneseq
        %v2784 = vshrl.u32 %v2783, 7
        %v2785 = vsub.s32 %v2782, %v2784
        %v2786 = vrot.slane %v2778, %v2785
        %v2788 = vunpack.c.l.s4 1983009808
        %v2789 = vunpack.c.0.s8 %v2788
        %v2790 = vlaneseq
        %v2791 = vshrl.u32 %v2790, 7
        %v2792 = vsub.s32 %v2789, %v2791
        %v2793 = vrot.slane %v2779, %v2792
        %v2794 = vcombine.low %v1011, %v1019
        %v2795 = vcombine.high %v1011, %v1019
        %v2797 = vunpack.c.l.s4 1983009808
        %v2798 = vunpack.c.0.s8 %v2797
        %v2799 = vlaneseq
        %v2800 = vshrl.u32 %v2799, 7
        %v2801 = vsub.s32 %v2798, %v2800
        %v2802 = vrot.slane %v2794, %v2801
        %v2804 = vunpack.c.l.s4 1983009808
        %v2805 = vunpack.c.0.s8 %v2804
        %v2806 = vlaneseq
        %v2807 = vshrl.u32 %v2806, 7
        %v2808 = vsub.s32 %v2805, %v2807
        %v2809 = vrot.slane %v2795, %v2808
        %v2810 = vcombine.low %v1015, %v1023
        %v2811 = vcombine.high %v1015, %v1023
        %v2813 = vunpack.c.l.s4 1983009808
        %v2814 = vunpack.c.0.s8 %v2813
        %v2815 = vlaneseq
        %v2816 = vshrl.u32 %v2815, 7
        %v2817 = vsub.s32 %v2814, %v2816
        %v2818 = vrot.slane %v2810, %v2817
        %v2820 = vunpack.c.l.s4 1983009808
        %v2821 = vunpack.c.0.s8 %v2820
        %v2822 = vlaneseq
        %v2823 = vshrl.u32 %v2822, 7
        %v2824 = vsub.s32 %v2821, %v2823
        %v2825 = vrot.slane %v2811, %v2824
        %v2826 = vcombine.low %v2770, %v2786
        %v2827 = vcombine.high %v2770, %v2786
        %v2829 = vunpack.c.l.s4 1934713408
        %v2830 = vunpack.c.0.s8 %v2829
        %v2831 = vlaneseq
        %v2832 = vshrl.u32 %v2831, 7
        %v2833 = vsub.s32 %v2830, %v2832
        %v2834 = vrot.slane %v2826, %v2833
        %v2836 = vunpack.c.l.s4 1934713408
        %v2837 = vunpack.c.0.s8 %v2836
        %v2838 = vlaneseq
        %v2839 = vshrl.u32 %v2838, 7
        %v2840 = vsub.s32 %v2837, %v2839
        %v2841 = vrot.slane %v2827, %v2840
        %v2842 = vcombine.low %v2777, %v2793
        %v2843 = vcombine.high %v2777, %v2793
        %v2845 = vunpack.c.l.s4 1934713408
        %v2846 = vunpack.c.0.s8 %v2845
        %v2847 = vlaneseq
        %v2848 = vshrl.u32 %v2847, 7
        %v2849 = vsub.s32 %v2846, %v2848
        %v2850 = vrot.slane %v2842, %v2849
        %v2852 = vunpack.c.l.s4 1934713408
        %v2853 = vunpack.c.0.s8 %v2852
        %v2854 = vlaneseq
        %v2855 = vshrl.u32 %v2854, 7
        %v2856 = vsub.s32 %v2853, %v2855
        %v2857 = vrot.slane %v2843, %v2856
        %v2858 = vcombine.low %v2802, %v2818
        %v2859 = vcombine.high %v2802, %v2818
        %v2861 = vunpack.c.l.s4 1934713408
        %v2862 = vunpack.c.0.s8 %v2861
        %v2863 = vlaneseq
        %v2864 = vshrl.u32 %v2863, 7
        %v2865 = vsub.s32 %v2862, %v2864
        %v2866 = vrot.slane %v2858, %v2865
        %v2868 = vunpack.c.l.s4 1934713408
        %v2869 = vunpack.c.0.s8 %v2868
        %v2870 = vlaneseq
        %v2871 = vshrl.u32 %v2870, 7
        %v2872 = vsub.s32 %v2869, %v2871
        %v2873 = vrot.slane %v2859, %v2872
        %v2874 = vcombine.low %v2809, %v2825
        %v2875 = vcombine.high %v2809, %v2825
        %v2877 = vunpack.c.l.s4 1934713408
        %v2878 = vunpack.c.0.s8 %v2877
        %v2879 = vlaneseq
        %v2880 = vshrl.u32 %v2879, 7
        %v2881 = vsub.s32 %v2878, %v2880
        %v2882 = vrot.slane %v2874, %v2881
        %v2884 = vunpack.c.l.s4 1934713408
        %v2885 = vunpack.c.0.s8 %v2884
        %v2886 = vlaneseq
        %v2887 = vshrl.u32 %v2886, 7
        %v2888 = vsub.s32 %v2885, %v2887
        %v2889 = vrot.slane %v2875, %v2888
        %v2890 = vcombine.low %v2834, %v2866
        %v2891 = vcombine.high %v2834, %v2866
        %v2892 = vcombine.low %v2841, %v2873
        %v2893 = vcombine.high %v2841, %v2873
        %v2894 = vcombine.low %v2850, %v2882
        %v2895 = vcombine.high %v2850, %v2882
        %v2896 = vcombine.low %v2857, %v2889
        %v2897 = vcombine.high %v2857, %v2889
        %v2898 = vcombine.low %v1043, %v1051
        %v2899 = vcombine.high %v1043, %v1051
        %v2901 = vunpack.c.l.s4 1983009808
        %v2902 = vunpack.c.0.s8 %v2901
        %v2903 = vlaneseq
        %v2904 = vshrl.u32 %v2903, 7
        %v2905 = vsub.s32 %v2902, %v2904
        %v2906 = vrot.slane %v2898, %v2905
        %v2908 = vunpack.c.l.s4 1983009808
        %v2909 = vunpack.c.0.s8 %v2908
        %v2910 = vlaneseq
        %v2911 = vshrl.u32 %v2910, 7
        %v2912 = vsub.s32 %v2909, %v2911
        %v2913 = vrot.slane %v2899, %v2912
        %v2914 = vcombine.low %v1047, %v1055
        %v2915 = vcombine.high %v1047, %v1055
        %v2917 = vunpack.c.l.s4 1983009808
        %v2918 = vunpack.c.0.s8 %v2917
        %v2919 = vlaneseq
        %v2920 = vshrl.u32 %v2919, 7
        %v2921 = vsub.s32 %v2918, %v2920
        %v2922 = vrot.slane %v2914, %v2921
        %v2924 = vunpack.c.l.s4 1983009808
        %v2925 = vunpack.c.0.s8 %v2924
        %v2926 = vlaneseq
        %v2927 = vshrl.u32 %v2926, 7
        %v2928 = vsub.s32 %v2925, %v2927
        %v2929 = vrot.slane %v2915, %v2928
        %v2930 = vcombine.low %v1059, %v1067
        %v2931 = vcombine.high %v1059, %v1067
        %v2933 = vunpack.c.l.s4 1983009808
        %v2934 = vunpack.c.0.s8 %v2933
        %v2935 = vlaneseq
        %v2936 = vshrl.u32 %v2935, 7
        %v2937 = vsub.s32 %v2934, %v2936
        %v2938 = vrot.slane %v2930, %v2937
        %v2940 = vunpack.c.l.s4 1983009808
        %v2941 = vunpack.c.0.s8 %v2940
        %v2942 = vlaneseq
        %v2943 = vshrl.u32 %v2942, 7
        %v2944 = vsub.s32 %v2941, %v2943
        %v2945 = vrot.slane %v2931, %v2944
        %v2946 = vcombine.low %v1063, %v1071
        %v2947 = vcombine.high %v1063, %v1071
        %v2949 = vunpack.c.l.s4 1983009808
        %v2950 = vunpack.c.0.s8 %v2949
        %v2951 = vlaneseq
        %v2952 = vshrl.u32 %v2951, 7
        %v2953 = vsub.s32 %v2950, %v2952
        %v2954 = vrot.slane %v2946, %v2953
        %v2956 = vunpack.c.l.s4 1983009808
        %v2957 = vunpack.c.0.s8 %v2956
        %v2958 = vlaneseq
        %v2959 = vshrl.u32 %v2958, 7
        %v2960 = vsub.s32 %v2957, %v2959
        %v2961 = vrot.slane %v2947, %v2960
        %v2962 = vcombine.low %v2906, %v2922
        %v2963 = vcombine.high %v2906, %v2922
        %v2965 = vunpack.c.l.s4 1934713408
        %v2966 = vunpack.c.0.s8 %v2965
        %v2967 = vlaneseq
        %v2968 = vshrl.u32 %v2967, 7
        %v2969 = vsub.s32 %v2966, %v2968
        %v2970 = vrot.slane %v2962, %v2969
        %v2972 = vunpack.c.l.s4 1934713408
        %v2973 = vunpack.c.0.s8 %v2972
        %v2974 = vlaneseq
        %v2975 = vshrl.u32 %v2974, 7
        %v2976 = vsub.s32 %v2973, %v2975
        %v2977 = vrot.slane %v2963, %v2976
        %v2978 = vcombine.low %v2913, %v2929
        %v2979 = vcombine.high %v2913, %v2929
        %v2981 = vunpack.c.l.s4 1934713408
        %v2982 = vunpack.c.0.s8 %v2981
        %v2983 = vlaneseq
        %v2984 = vshrl.u32 %v2983, 7
        %v2985 = vsub.s32 %v2982, %v2984
        %v2986 = vrot.slane %v2978, %v2985
        %v2988 = vunpack.c.l.s4 1934713408
        %v2989 = vunpack.c.0.s8 %v2988
        %v2990 = vlaneseq
        %v2991 = vshrl.u32 %v2990, 7
        %v2992 = vsub.s32 %v2989, %v2991
        %v2993 = vrot.slane %v2979, %v2992
        %v2994 = vcombine.low %v2938, %v2954
        %v2995 = vcombine.high %v2938, %v2954
        %v2997 = vunpack.c.l.s4 1934713408
        %v2998 = vunpack.c.0.s8 %v2997
        %v2999 = vlaneseq
        %v3000 = vshrl.u32 %v2999, 7
        %v3001 = vsub.s32 %v2998, %v3000
        %v3002 = vrot.slane %v2994, %v3001
        %v3004 = vunpack.c.l.s4 1934713408
        %v3005 = vunpack.c.0.s8 %v3004
        %v3006 = vlaneseq
        %v3007 = vshrl.u32 %v3006, 7
        %v3008 = vsub.s32 %v3005, %v3007
        %v3009 = vrot.slane %v2995, %v3008
        %v3010 = vcombine.low %v2945, %v2961
        %v3011 = vcombine.high %v2945, %v2961
        %v3013 = vunpack.c.l.s4 1934713408
        %v3014 = vunpack.c.0.s8 %v3013
        %v3015 = vlaneseq
        %v3016 = vshrl.u32 %v3015, 7
        %v3017 = vsub.s32 %v3014, %v3016
        %v3018 = vrot.slane %v3010, %v3017
        %v3020 = vunpack.c.l.s4 1934713408
        %v3021 = vunpack.c.0.s8 %v3020
        %v3022 = vlaneseq
        %v3023 = vshrl.u32 %v3022, 7
        %v3024 = vsub.s32 %v3021, %v3023
        %v3025 = vrot.slane %v3011, %v3024
        %v3026 = vcombine.low %v2970, %v3002
        %v3027 = vcombine.high %v2970, %v3002
        %v3028 = vcombine.low %v2977, %v3009
        %v3029 = vcombine.high %v2977, %v3009
        %v3030 = vcombine.low %v2986, %v3018
        %v3031 = vcombine.high %v2986, %v3018
        %v3032 = vcombine.low %v2993, %v3025
        %v3033 = vcombine.high %v2993, %v3025
        %v3034 = vcombine.low %v1101, %v1111
        %v3035 = vcombine.high %v1101, %v1111
        %v3037 = vunpack.c.l.s4 1983009808
        %v3038 = vunpack.c.0.s8 %v3037
        %v3039 = vlaneseq
        %v3040 = vshrl.u32 %v3039, 7
        %v3041 = vsub.s32 %v3038, %v3040
        %v3042 = vrot.slane %v3034, %v3041
        %v3044 = vunpack.c.l.s4 1983009808
        %v3045 = vunpack.c.0.s8 %v3044
        %v3046 = vlaneseq
        %v3047 = vshrl.u32 %v3046, 7
        %v3048 = vsub.s32 %v3045, %v3047
        %v3049 = vrot.slane %v3035, %v3048
        %v3050 = vcombine.low %v1106, %v1116
        %v3051 = vcombine.high %v1106, %v1116
        %v3053 = vunpack.c.l.s4 1983009808
        %v3054 = vunpack.c.0.s8 %v3053
        %v3055 = vlaneseq
        %v3056 = vshrl.u32 %v3055, 7
        %v3057 = vsub.s32 %v3054, %v3056
        %v3058 = vrot.slane %v3050, %v3057
        %v3060 = vunpack.c.l.s4 1983009808
        %v3061 = vunpack.c.0.s8 %v3060
        %v3062 = vlaneseq
        %v3063 = vshrl.u32 %v3062, 7
        %v3064 = vsub.s32 %v3061, %v3063
        %v3065 = vrot.slane %v3051, %v3064
        %v3066 = vcombine.low %v1121, %v1131
        %v3067 = vcombine.high %v1121, %v1131
        %v3069 = vunpack.c.l.s4 1983009808
        %v3070 = vunpack.c.0.s8 %v3069
        %v3071 = vlaneseq
        %v3072 = vshrl.u32 %v3071, 7
        %v3073 = vsub.s32 %v3070, %v3072
        %v3074 = vrot.slane %v3066, %v3073
        %v3076 = vunpack.c.l.s4 1983009808
        %v3077 = vunpack.c.0.s8 %v3076
        %v3078 = vlaneseq
        %v3079 = vshrl.u32 %v3078, 7
        %v3080 = vsub.s32 %v3077, %v3079
        %v3081 = vrot.slane %v3067, %v3080
        %v3082 = vcombine.low %v1126, %v1136
        %v3083 = vcombine.high %v1126, %v1136
        %v3085 = vunpack.c.l.s4 1983009808
        %v3086 = vunpack.c.0.s8 %v3085
        %v3087 = vlaneseq
        %v3088 = vshrl.u32 %v3087, 7
        %v3089 = vsub.s32 %v3086, %v3088
        %v3090 = vrot.slane %v3082, %v3089
        %v3092 = vunpack.c.l.s4 1983009808
        %v3093 = vunpack.c.0.s8 %v3092
        %v3094 = vlaneseq
        %v3095 = vshrl.u32 %v3094, 7
        %v3096 = vsub.s32 %v3093, %v3095
        %v3097 = vrot.slane %v3083, %v3096
        %v3098 = vcombine.low %v3042, %v3058
        %v3099 = vcombine.high %v3042, %v3058
        %v3101 = vunpack.c.l.s4 1934713408
        %v3102 = vunpack.c.0.s8 %v3101
        %v3103 = vlaneseq
        %v3104 = vshrl.u32 %v3103, 7
        %v3105 = vsub.s32 %v3102, %v3104
        %v3106 = vrot.slane %v3098, %v3105
        %v3108 = vunpack.c.l.s4 1934713408
        %v3109 = vunpack.c.0.s8 %v3108
        %v3110 = vlaneseq
        %v3111 = vshrl.u32 %v3110, 7
        %v3112 = vsub.s32 %v3109, %v3111
        %v3113 = vrot.slane %v3099, %v3112
        %v3114 = vcombine.low %v3049, %v3065
        %v3115 = vcombine.high %v3049, %v3065
        %v3117 = vunpack.c.l.s4 1934713408
        %v3118 = vunpack.c.0.s8 %v3117
        %v3119 = vlaneseq
        %v3120 = vshrl.u32 %v3119, 7
        %v3121 = vsub.s32 %v3118, %v3120
        %v3122 = vrot.slane %v3114, %v3121
        %v3124 = vunpack.c.l.s4 1934713408
        %v3125 = vunpack.c.0.s8 %v3124
        %v3126 = vlaneseq
        %v3127 = vshrl.u32 %v3126, 7
        %v3128 = vsub.s32 %v3125, %v3127
        %v3129 = vrot.slane %v3115, %v3128
        %v3130 = vcombine.low %v3074, %v3090
        %v3131 = vcombine.high %v3074, %v3090
        %v3133 = vunpack.c.l.s4 1934713408
        %v3134 = vunpack.c.0.s8 %v3133
        %v3135 = vlaneseq
        %v3136 = vshrl.u32 %v3135, 7
        %v3137 = vsub.s32 %v3134, %v3136
        %v3138 = vrot.slane %v3130, %v3137
        %v3140 = vunpack.c.l.s4 1934713408
        %v3141 = vunpack.c.0.s8 %v3140
        %v3142 = vlaneseq
        %v3143 = vshrl.u32 %v3142, 7
        %v3144 = vsub.s32 %v3141, %v3143
        %v3145 = vrot.slane %v3131, %v3144
        %v3146 = vcombine.low %v3081, %v3097
        %v3147 = vcombine.high %v3081, %v3097
        %v3149 = vunpack.c.l.s4 1934713408
        %v3150 = vunpack.c.0.s8 %v3149
        %v3151 = vlaneseq
        %v3152 = vshrl.u32 %v3151, 7
        %v3153 = vsub.s32 %v3150, %v3152
        %v3154 = vrot.slane %v3146, %v3153
        %v3156 = vunpack.c.l.s4 1934713408
        %v3157 = vunpack.c.0.s8 %v3156
        %v3158 = vlaneseq
        %v3159 = vshrl.u32 %v3158, 7
        %v3160 = vsub.s32 %v3157, %v3159
        %v3161 = vrot.slane %v3147, %v3160
        %v3162 = vcombine.low %v3106, %v3138
        %v3163 = vcombine.high %v3106, %v3138
        %v3164 = vcombine.low %v3113, %v3145
        %v3165 = vcombine.high %v3113, %v3145
        %v3166 = vcombine.low %v3122, %v3154
        %v3167 = vcombine.high %v3122, %v3154
        %v3168 = vcombine.low %v3129, %v3161
        %v3169 = vcombine.high %v3129, %v3161
        %v3170 = vcombine.low %v1156, %v1164
        %v3171 = vcombine.high %v1156, %v1164
        %v3173 = vunpack.c.l.s4 1983009808
        %v3174 = vunpack.c.0.s8 %v3173
        %v3175 = vlaneseq
        %v3176 = vshrl.u32 %v3175, 7
        %v3177 = vsub.s32 %v3174, %v3176
        %v3178 = vrot.slane %v3170, %v3177
        %v3180 = vunpack.c.l.s4 1983009808
        %v3181 = vunpack.c.0.s8 %v3180
        %v3182 = vlaneseq
        %v3183 = vshrl.u32 %v3182, 7
        %v3184 = vsub.s32 %v3181, %v3183
        %v3185 = vrot.slane %v3171, %v3184
        %v3186 = vcombine.low %v1160, %v1168
        %v3187 = vcombine.high %v1160, %v1168
        %v3189 = vunpack.c.l.s4 1983009808
        %v3190 = vunpack.c.0.s8 %v3189
        %v3191 = vlaneseq
        %v3192 = vshrl.u32 %v3191, 7
        %v3193 = vsub.s32 %v3190, %v3192
        %v3194 = vrot.slane %v3186, %v3193
        %v3196 = vunpack.c.l.s4 1983009808
        %v3197 = vunpack.c.0.s8 %v3196
        %v3198 = vlaneseq
        %v3199 = vshrl.u32 %v3198, 7
        %v3200 = vsub.s32 %v3197, %v3199
        %v3201 = vrot.slane %v3187, %v3200
        %v3202 = vcombine.low %v1172, %v1180
        %v3203 = vcombine.high %v1172, %v1180
        %v3205 = vunpack.c.l.s4 1983009808
        %v3206 = vunpack.c.0.s8 %v3205
        %v3207 = vlaneseq
        %v3208 = vshrl.u32 %v3207, 7
        %v3209 = vsub.s32 %v3206, %v3208
        %v3210 = vrot.slane %v3202, %v3209
        %v3212 = vunpack.c.l.s4 1983009808
        %v3213 = vunpack.c.0.s8 %v3212
        %v3214 = vlaneseq
        %v3215 = vshrl.u32 %v3214, 7
        %v3216 = vsub.s32 %v3213, %v3215
        %v3217 = vrot.slane %v3203, %v3216
        %v3218 = vcombine.low %v1176, %v1184
        %v3219 = vcombine.high %v1176, %v1184
        %v3221 = vunpack.c.l.s4 1983009808
        %v3222 = vunpack.c.0.s8 %v3221
        %v3223 = vlaneseq
        %v3224 = vshrl.u32 %v3223, 7
        %v3225 = vsub.s32 %v3222, %v3224
        %v3226 = vrot.slane %v3218, %v3225
        %v3228 = vunpack.c.l.s4 1983009808
        %v3229 = vunpack.c.0.s8 %v3228
        %v3230 = vlaneseq
        %v3231 = vshrl.u32 %v3230, 7
        %v3232 = vsub.s32 %v3229, %v3231
        %v3233 = vrot.slane %v3219, %v3232
        %v3234 = vcombine.low %v3178, %v3194
        %v3235 = vcombine.high %v3178, %v3194
        %v3237 = vunpack.c.l.s4 1934713408
        %v3238 = vunpack.c.0.s8 %v3237
        %v3239 = vlaneseq
        %v3240 = vshrl.u32 %v3239, 7
        %v3241 = vsub.s32 %v3238, %v3240
        %v3242 = vrot.slane %v3234, %v3241
        %v3244 = vunpack.c.l.s4 1934713408
        %v3245 = vunpack.c.0.s8 %v3244
        %v3246 = vlaneseq
        %v3247 = vshrl.u32 %v3246, 7
        %v3248 = vsub.s32 %v3245, %v3247
        %v3249 = vrot.slane %v3235, %v3248
        %v3250 = vcombine.low %v3185, %v3201
        %v3251 = vcombine.high %v3185, %v3201
        %v3253 = vunpack.c.l.s4 1934713408
        %v3254 = vunpack.c.0.s8 %v3253
        %v3255 = vlaneseq
        %v3256 = vshrl.u32 %v3255, 7
        %v3257 = vsub.s32 %v3254, %v3256
        %v3258 = vrot.slane %v3250, %v3257
        %v3260 = vunpack.c.l.s4 1934713408
        %v3261 = vunpack.c.0.s8 %v3260
        %v3262 = vlaneseq
        %v3263 = vshrl.u32 %v3262, 7
        %v3264 = vsub.s32 %v3261, %v3263
        %v3265 = vrot.slane %v3251, %v3264
        %v3266 = vcombine.low %v3210, %v3226
        %v3267 = vcombine.high %v3210, %v3226
        %v3269 = vunpack.c.l.s4 1934713408
        %v3270 = vunpack.c.0.s8 %v3269
        %v3271 = vlaneseq
        %v3272 = vshrl.u32 %v3271, 7
        %v3273 = vsub.s32 %v3270, %v3272
        %v3274 = vrot.slane %v3266, %v3273
        %v3276 = vunpack.c.l.s4 1934713408
        %v3277 = vunpack.c.0.s8 %v3276
        %v3278 = vlaneseq
        %v3279 = vshrl.u32 %v3278, 7
        %v3280 = vsub.s32 %v3277, %v3279
        %v3281 = vrot.slane %v3267, %v3280
        %v3282 = vcombine.low %v3217, %v3233
        %v3283 = vcombine.high %v3217, %v3233
        %v3285 = vunpack.c.l.s4 1934713408
        %v3286 = vunpack.c.0.s8 %v3285
        %v3287 = vlaneseq
        %v3288 = vshrl.u32 %v3287, 7
        %v3289 = vsub.s32 %v3286, %v3288
        %v3290 = vrot.slane %v3282, %v3289
        %v3292 = vunpack.c.l.s4 1934713408
        %v3293 = vunpack.c.0.s8 %v3292
        %v3294 = vlaneseq
        %v3295 = vshrl.u32 %v3294, 7
        %v3296 = vsub.s32 %v3293, %v3295
        %v3297 = vrot.slane %v3283, %v3296
        %v3298 = vcombine.low %v3242, %v3274
        %v3299 = vcombine.high %v3242, %v3274
        %v3300 = vcombine.low %v3249, %v3281
        %v3301 = vcombine.high %v3249, %v3281
        %v3302 = vcombine.low %v3258, %v3290
        %v3303 = vcombine.high %v3258, %v3290
        %v3304 = vcombine.low %v3265, %v3297
        %v3305 = vcombine.high %v3265, %v3297
        %v3306 = vcombine.low %v1204, %v1212
        %v3307 = vcombine.high %v1204, %v1212
        %v3309 = vunpack.c.l.s4 1983009808
        %v3310 = vunpack.c.0.s8 %v3309
        %v3311 = vlaneseq
        %v3312 = vshrl.u32 %v3311, 7
        %v3313 = vsub.s32 %v3310, %v3312
        %v3314 = vrot.slane %v3306, %v3313
        %v3316 = vunpack.c.l.s4 1983009808
        %v3317 = vunpack.c.0.s8 %v3316
        %v3318 = vlaneseq
        %v3319 = vshrl.u32 %v3318, 7
        %v3320 = vsub.s32 %v3317, %v3319
        %v3321 = vrot.slane %v3307, %v3320
        %v3322 = vcombine.low %v1208, %v1216
        %v3323 = vcombine.high %v1208, %v1216
        %v3325 = vunpack.c.l.s4 1983009808
        %v3326 = vunpack.c.0.s8 %v3325
        %v3327 = vlaneseq
        %v3328 = vshrl.u32 %v3327, 7
        %v3329 = vsub.s32 %v3326, %v3328
        %v3330 = vrot.slane %v3322, %v3329
        %v3332 = vunpack.c.l.s4 1983009808
        %v3333 = vunpack.c.0.s8 %v3332
        %v3334 = vlaneseq
        %v3335 = vshrl.u32 %v3334, 7
        %v3336 = vsub.s32 %v3333, %v3335
        %v3337 = vrot.slane %v3323, %v3336
        %v3338 = vcombine.low %v1220, %v1228
        %v3339 = vcombine.high %v1220, %v1228
        %v3341 = vunpack.c.l.s4 1983009808
        %v3342 = vunpack.c.0.s8 %v3341
        %v3343 = vlaneseq
        %v3344 = vshrl.u32 %v3343, 7
        %v3345 = vsub.s32 %v3342, %v3344
        %v3346 = vrot.slane %v3338, %v3345
        %v3348 = vunpack.c.l.s4 1983009808
        %v3349 = vunpack.c.0.s8 %v3348
        %v3350 = vlaneseq
        %v3351 = vshrl.u32 %v3350, 7
        %v3352 = vsub.s32 %v3349, %v3351
        %v3353 = vrot.slane %v3339, %v3352
        %v3354 = vcombine.low %v1224, %v1232
        %v3355 = vcombine.high %v1224, %v1232
        %v3357 = vunpack.c.l.s4 1983009808
        %v3358 = vunpack.c.0.s8 %v3357
        %v3359 = vlaneseq
        %v3360 = vshrl.u32 %v3359, 7
        %v3361 = vsub.s32 %v3358, %v3360
        %v3362 = vrot.slane %v3354, %v3361
        %v3364 = vunpack.c.l.s4 1983009808
        %v3365 = vunpack.c.0.s8 %v3364
        %v3366 = vlaneseq
        %v3367 = vshrl.u32 %v3366, 7
        %v3368 = vsub.s32 %v3365, %v3367
        %v3369 = vrot.slane %v3355, %v3368
        %v3370 = vcombine.low %v3314, %v3330
        %v3371 = vcombine.high %v3314, %v3330
        %v3373 = vunpack.c.l.s4 1934713408
        %v3374 = vunpack.c.0.s8 %v3373
        %v3375 = vlaneseq
        %v3376 = vshrl.u32 %v3375, 7
        %v3377 = vsub.s32 %v3374, %v3376
        %v3378 = vrot.slane %v3370, %v3377
        %v3380 = vunpack.c.l.s4 1934713408
        %v3381 = vunpack.c.0.s8 %v3380
        %v3382 = vlaneseq
        %v3383 = vshrl.u32 %v3382, 7
        %v3384 = vsub.s32 %v3381, %v3383
        %v3385 = vrot.slane %v3371, %v3384
        %v3386 = vcombine.low %v3321, %v3337
        %v3387 = vcombine.high %v3321, %v3337
        %v3389 = vunpack.c.l.s4 1934713408
        %v3390 = vunpack.c.0.s8 %v3389
        %v3391 = vlaneseq
        %v3392 = vshrl.u32 %v3391, 7
        %v3393 = vsub.s32 %v3390, %v3392
        %v3394 = vrot.slane %v3386, %v3393
        %v3396 = vunpack.c.l.s4 1934713408
        %v3397 = vunpack.c.0.s8 %v3396
        %v3398 = vlaneseq
        %v3399 = vshrl.u32 %v3398, 7
        %v3400 = vsub.s32 %v3397, %v3399
        %v3401 = vrot.slane %v3387, %v3400
        %v3402 = vcombine.low %v3346, %v3362
        %v3403 = vcombine.high %v3346, %v3362
        %v3405 = vunpack.c.l.s4 1934713408
        %v3406 = vunpack.c.0.s8 %v3405
        %v3407 = vlaneseq
        %v3408 = vshrl.u32 %v3407, 7
        %v3409 = vsub.s32 %v3406, %v3408
        %v3410 = vrot.slane %v3402, %v3409
        %v3412 = vunpack.c.l.s4 1934713408
        %v3413 = vunpack.c.0.s8 %v3412
        %v3414 = vlaneseq
        %v3415 = vshrl.u32 %v3414, 7
        %v3416 = vsub.s32 %v3413, %v3415
        %v3417 = vrot.slane %v3403, %v3416
        %v3418 = vcombine.low %v3353, %v3369
        %v3419 = vcombine.high %v3353, %v3369
        %v3421 = vunpack.c.l.s4 1934713408
        %v3422 = vunpack.c.0.s8 %v3421
        %v3423 = vlaneseq
        %v3424 = vshrl.u32 %v3423, 7
        %v3425 = vsub.s32 %v3422, %v3424
        %v3426 = vrot.slane %v3418, %v3425
        %v3428 = vunpack.c.l.s4 1934713408
        %v3429 = vunpack.c.0.s8 %v3428
        %v3430 = vlaneseq
        %v3431 = vshrl.u32 %v3430, 7
        %v3432 = vsub.s32 %v3429, %v3431
        %v3433 = vrot.slane %v3419, %v3432
        %v3434 = vcombine.low %v3378, %v3410
        %v3435 = vcombine.high %v3378, %v3410
        %v3436 = vcombine.low %v3385, %v3417
        %v3437 = vcombine.high %v3385, %v3417
        %v3438 = vcombine.low %v3394, %v3426
        %v3439 = vcombine.high %v3394, %v3426
        %v3440 = vcombine.low %v3401, %v3433
        %v3441 = vcombine.high %v3401, %v3433
        %v3442 = vcombine.low %v1254, %v1264
        %v3443 = vcombine.high %v1254, %v1264
        %v3445 = vunpack.c.l.s4 1983009808
        %v3446 = vunpack.c.0.s8 %v3445
        %v3447 = vlaneseq
        %v3448 = vshrl.u32 %v3447, 7
        %v3449 = vsub.s32 %v3446, %v3448
        %v3450 = vrot.slane %v3442, %v3449
        %v3452 = vunpack.c.l.s4 1983009808
        %v3453 = vunpack.c.0.s8 %v3452
        %v3454 = vlaneseq
        %v3455 = vshrl.u32 %v3454, 7
        %v3456 = vsub.s32 %v3453, %v3455
        %v3457 = vrot.slane %v3443, %v3456
        %v3458 = vcombine.low %v1259, %v1269
        %v3459 = vcombine.high %v1259, %v1269
        %v3461 = vunpack.c.l.s4 1983009808
        %v3462 = vunpack.c.0.s8 %v3461
        %v3463 = vlaneseq
        %v3464 = vshrl.u32 %v3463, 7
        %v3465 = vsub.s32 %v3462, %v3464
        %v3466 = vrot.slane %v3458, %v3465
        %v3468 = vunpack.c.l.s4 1983009808
        %v3469 = vunpack.c.0.s8 %v3468
        %v3470 = vlaneseq
        %v3471 = vshrl.u32 %v3470, 7
        %v3472 = vsub.s32 %v3469, %v3471
        %v3473 = vrot.slane %v3459, %v3472
        %v3474 = vcombine.low %v1274, %v1284
        %v3475 = vcombine.high %v1274, %v1284
        %v3477 = vunpack.c.l.s4 1983009808
        %v3478 = vunpack.c.0.s8 %v3477
        %v3479 = vlaneseq
        %v3480 = vshrl.u32 %v3479, 7
        %v3481 = vsub.s32 %v3478, %v3480
        %v3482 = vrot.slane %v3474, %v3481
        %v3484 = vunpack.c.l.s4 1983009808
        %v3485 = vunpack.c.0.s8 %v3484
        %v3486 = vlaneseq
        %v3487 = vshrl.u32 %v3486, 7
        %v3488 = vsub.s32 %v3485, %v3487
        %v3489 = vrot.slane %v3475, %v3488
        %v3490 = vcombine.low %v1279, %v1289
        %v3491 = vcombine.high %v1279, %v1289
        %v3493 = vunpack.c.l.s4 1983009808
        %v3494 = vunpack.c.0.s8 %v3493
        %v3495 = vlaneseq
        %v3496 = vshrl.u32 %v3495, 7
        %v3497 = vsub.s32 %v3494, %v3496
        %v3498 = vrot.slane %v3490, %v3497
        %v3500 = vunpack.c.l.s4 1983009808
        %v3501 = vunpack.c.0.s8 %v3500
        %v3502 = vlaneseq
        %v3503 = vshrl.u32 %v3502, 7
        %v3504 = vsub.s32 %v3501, %v3503
        %v3505 = vrot.slane %v3491, %v3504
        %v3506 = vcombine.low %v3450, %v3466
        %v3507 = vcombine.high %v3450, %v3466
        %v3509 = vunpack.c.l.s4 1934713408
        %v3510 = vunpack.c.0.s8 %v3509
        %v3511 = vlaneseq
        %v3512 = vshrl.u32 %v3511, 7
        %v3513 = vsub.s32 %v3510, %v3512
        %v3514 = vrot.slane %v3506, %v3513
        %v3516 = vunpack.c.l.s4 1934713408
        %v3517 = vunpack.c.0.s8 %v3516
        %v3518 = vlaneseq
        %v3519 = vshrl.u32 %v3518, 7
        %v3520 = vsub.s32 %v3517, %v3519
        %v3521 = vrot.slane %v3507, %v3520
        %v3522 = vcombine.low %v3457, %v3473
        %v3523 = vcombine.high %v3457, %v3473
        %v3525 = vunpack.c.l.s4 1934713408
        %v3526 = vunpack.c.0.s8 %v3525
        %v3527 = vlaneseq
        %v3528 = vshrl.u32 %v3527, 7
        %v3529 = vsub.s32 %v3526, %v3528
        %v3530 = vrot.slane %v3522, %v3529
        %v3532 = vunpack.c.l.s4 1934713408
        %v3533 = vunpack.c.0.s8 %v3532
        %v3534 = vlaneseq
        %v3535 = vshrl.u32 %v3534, 7
        %v3536 = vsub.s32 %v3533, %v3535
        %v3537 = vrot.slane %v3523, %v3536
        %v3538 = vcombine.low %v3482, %v3498
        %v3539 = vcombine.high %v3482, %v3498
        %v3541 = vunpack.c.l.s4 1934713408
        %v3542 = vunpack.c.0.s8 %v3541
        %v3543 = vlaneseq
        %v3544 = vshrl.u32 %v3543, 7
        %v3545 = vsub.s32 %v3542, %v3544
        %v3546 = vrot.slane %v3538, %v3545
        %v3548 = vunpack.c.l.s4 1934713408
        %v3549 = vunpack.c.0.s8 %v3548
        %v3550 = vlaneseq
        %v3551 = vshrl.u32 %v3550, 7
        %v3552 = vsub.s32 %v3549, %v3551
        %v3553 = vrot.slane %v3539, %v3552
        %v3554 = vcombine.low %v3489, %v3505
        %v3555 = vcombine.high %v3489, %v3505
        %v3557 = vunpack.c.l.s4 1934713408
        %v3558 = vunpack.c.0.s8 %v3557
        %v3559 = vlaneseq
        %v3560 = vshrl.u32 %v3559, 7
        %v3561 = vsub.s32 %v3558, %v3560
        %v3562 = vrot.slane %v3554, %v3561
        %v3564 = vunpack.c.l.s4 1934713408
        %v3565 = vunpack.c.0.s8 %v3564
        %v3566 = vlaneseq
        %v3567 = vshrl.u32 %v3566, 7
        %v3568 = vsub.s32 %v3565, %v3567
        %v3569 = vrot.slane %v3555, %v3568
        %v3570 = vcombine.low %v3514, %v3546
        %v3571 = vcombine.high %v3514, %v3546
        %v3572 = vcombine.low %v3521, %v3553
        %v3573 = vcombine.high %v3521, %v3553
        %v3574 = vcombine.low %v3530, %v3562
        %v3575 = vcombine.high %v3530, %v3562
        %v3576 = vcombine.low %v3537, %v3569
        %v3577 = vcombine.high %v3537, %v3569
        %v3578 = vcombine.low %v1309, %v1317
        %v3579 = vcombine.high %v1309, %v1317
        %v3581 = vunpack.c.l.s4 1983009808
        %v3582 = vunpack.c.0.s8 %v3581
        %v3583 = vlaneseq
        %v3584 = vshrl.u32 %v3583, 7
        %v3585 = vsub.s32 %v3582, %v3584
        %v3586 = vrot.slane %v3578, %v3585
        %v3588 = vunpack.c.l.s4 1983009808
        %v3589 = vunpack.c.0.s8 %v3588
        %v3590 = vlaneseq
        %v3591 = vshrl.u32 %v3590, 7
        %v3592 = vsub.s32 %v3589, %v3591
        %v3593 = vrot.slane %v3579, %v3592
        %v3594 = vcombine.low %v1313, %v1321
        %v3595 = vcombine.high %v1313, %v1321
        %v3597 = vunpack.c.l.s4 1983009808
        %v3598 = vunpack.c.0.s8 %v3597
        %v3599 = vlaneseq
        %v3600 = vshrl.u32 %v3599, 7
        %v3601 = vsub.s32 %v3598, %v3600
        %v3602 = vrot.slane %v3594, %v3601
        %v3604 = vunpack.c.l.s4 1983009808
        %v3605 = vunpack.c.0.s8 %v3604
        %v3606 = vlaneseq
        %v3607 = vshrl.u32 %v3606, 7
        %v3608 = vsub.s32 %v3605, %v3607
        %v3609 = vrot.slane %v3595, %v3608
        %v3610 = vcombine.low %v1325, %v1333
        %v3611 = vcombine.high %v1325, %v1333
        %v3613 = vunpack.c.l.s4 1983009808
        %v3614 = vunpack.c.0.s8 %v3613
        %v3615 = vlaneseq
        %v3616 = vshrl.u32 %v3615, 7
        %v3617 = vsub.s32 %v3614, %v3616
        %v3618 = vrot.slane %v3610, %v3617
        %v3620 = vunpack.c.l.s4 1983009808
        %v3621 = vunpack.c.0.s8 %v3620
        %v3622 = vlaneseq
        %v3623 = vshrl.u32 %v3622, 7
        %v3624 = vsub.s32 %v3621, %v3623
        %v3625 = vrot.slane %v3611, %v3624
        %v3626 = vcombine.low %v1329, %v1337
        %v3627 = vcombine.high %v1329, %v1337
        %v3629 = vunpack.c.l.s4 1983009808
        %v3630 = vunpack.c.0.s8 %v3629
        %v3631 = vlaneseq
        %v3632 = vshrl.u32 %v3631, 7
        %v3633 = vsub.s32 %v3630, %v3632
        %v3634 = vrot.slane %v3626, %v3633
        %v3636 = vunpack.c.l.s4 1983009808
        %v3637 = vunpack.c.0.s8 %v3636
        %v3638 = vlaneseq
        %v3639 = vshrl.u32 %v3638, 7
        %v3640 = vsub.s32 %v3637, %v3639
        %v3641 = vrot.slane %v3627, %v3640
        %v3642 = vcombine.low %v3586, %v3602
        %v3643 = vcombine.high %v3586, %v3602
        %v3645 = vunpack.c.l.s4 1934713408
        %v3646 = vunpack.c.0.s8 %v3645
        %v3647 = vlaneseq
        %v3648 = vshrl.u32 %v3647, 7
        %v3649 = vsub.s32 %v3646, %v3648
        %v3650 = vrot.slane %v3642, %v3649
        %v3652 = vunpack.c.l.s4 1934713408
        %v3653 = vunpack.c.0.s8 %v3652
        %v3654 = vlaneseq
        %v3655 = vshrl.u32 %v3654, 7
        %v3656 = vsub.s32 %v3653, %v3655
        %v3657 = vrot.slane %v3643, %v3656
        %v3658 = vcombine.low %v3593, %v3609
        %v3659 = vcombine.high %v3593, %v3609
        %v3661 = vunpack.c.l.s4 1934713408
        %v3662 = vunpack.c.0.s8 %v3661
        %v3663 = vlaneseq
        %v3664 = vshrl.u32 %v3663, 7
        %v3665 = vsub.s32 %v3662, %v3664
        %v3666 = vrot.slane %v3658, %v3665
        %v3668 = vunpack.c.l.s4 1934713408
        %v3669 = vunpack.c.0.s8 %v3668
        %v3670 = vlaneseq
        %v3671 = vshrl.u32 %v3670, 7
        %v3672 = vsub.s32 %v3669, %v3671
        %v3673 = vrot.slane %v3659, %v3672
        %v3674 = vcombine.low %v3618, %v3634
        %v3675 = vcombine.high %v3618, %v3634
        %v3677 = vunpack.c.l.s4 1934713408
        %v3678 = vunpack.c.0.s8 %v3677
        %v3679 = vlaneseq
        %v3680 = vshrl.u32 %v3679, 7
        %v3681 = vsub.s32 %v3678, %v3680
        %v3682 = vrot.slane %v3674, %v3681
        %v3684 = vunpack.c.l.s4 1934713408
        %v3685 = vunpack.c.0.s8 %v3684
        %v3686 = vlaneseq
        %v3687 = vshrl.u32 %v3686, 7
        %v3688 = vsub.s32 %v3685, %v3687
        %v3689 = vrot.slane %v3675, %v3688
        %v3690 = vcombine.low %v3625, %v3641
        %v3691 = vcombine.high %v3625, %v3641
        %v3693 = vunpack.c.l.s4 1934713408
        %v3694 = vunpack.c.0.s8 %v3693
        %v3695 = vlaneseq
        %v3696 = vshrl.u32 %v3695, 7
        %v3697 = vsub.s32 %v3694, %v3696
        %v3698 = vrot.slane %v3690, %v3697
        %v3700 = vunpack.c.l.s4 1934713408
        %v3701 = vunpack.c.0.s8 %v3700
        %v3702 = vlaneseq
        %v3703 = vshrl.u32 %v3702, 7
        %v3704 = vsub.s32 %v3701, %v3703
        %v3705 = vrot.slane %v3691, %v3704
        %v3706 = vcombine.low %v3650, %v3682
        %v3707 = vcombine.high %v3650, %v3682
        %v3708 = vcombine.low %v3657, %v3689
        %v3709 = vcombine.high %v3657, %v3689
        %v3710 = vcombine.low %v3666, %v3698
        %v3711 = vcombine.high %v3666, %v3698
        %v3712 = vcombine.low %v3673, %v3705
        %v3713 = vcombine.high %v3673, %v3705
        %v3714 = vcombine.low %v1357, %v1365
        %v3715 = vcombine.high %v1357, %v1365
        %v3717 = vunpack.c.l.s4 1983009808
        %v3718 = vunpack.c.0.s8 %v3717
        %v3719 = vlaneseq
        %v3720 = vshrl.u32 %v3719, 7
        %v3721 = vsub.s32 %v3718, %v3720
        %v3722 = vrot.slane %v3714, %v3721
        %v3724 = vunpack.c.l.s4 1983009808
        %v3725 = vunpack.c.0.s8 %v3724
        %v3726 = vlaneseq
        %v3727 = vshrl.u32 %v3726, 7
        %v3728 = vsub.s32 %v3725, %v3727
        %v3729 = vrot.slane %v3715, %v3728
        %v3730 = vcombine.low %v1361, %v1369
        %v3731 = vcombine.high %v1361, %v1369
        %v3733 = vunpack.c.l.s4 1983009808
        %v3734 = vunpack.c.0.s8 %v3733
        %v3735 = vlaneseq
        %v3736 = vshrl.u32 %v3735, 7
        %v3737 = vsub.s32 %v3734, %v3736
        %v3738 = vrot.slane %v3730, %v3737
        %v3740 = vunpack.c.l.s4 1983009808
        %v3741 = vunpack.c.0.s8 %v3740
        %v3742 = vlaneseq
        %v3743 = vshrl.u32 %v3742, 7
        %v3744 = vsub.s32 %v3741, %v3743
        %v3745 = vrot.slane %v3731, %v3744
        %v3746 = vcombine.low %v1373, %v1381
        %v3747 = vcombine.high %v1373, %v1381
        %v3749 = vunpack.c.l.s4 1983009808
        %v3750 = vunpack.c.0.s8 %v3749
        %v3751 = vlaneseq
        %v3752 = vshrl.u32 %v3751, 7
        %v3753 = vsub.s32 %v3750, %v3752
        %v3754 = vrot.slane %v3746, %v3753
        %v3756 = vunpack.c.l.s4 1983009808
        %v3757 = vunpack.c.0.s8 %v3756
        %v3758 = vlaneseq
        %v3759 = vshrl.u32 %v3758, 7
        %v3760 = vsub.s32 %v3757, %v3759
        %v3761 = vrot.slane %v3747, %v3760
        %v3762 = vcombine.low %v1377, %v1385
        %v3763 = vcombine.high %v1377, %v1385
        %v3765 = vunpack.c.l.s4 1983009808
        %v3766 = vunpack.c.0.s8 %v3765
        %v3767 = vlaneseq
        %v3768 = vshrl.u32 %v3767, 7
        %v3769 = vsub.s32 %v3766, %v3768
        %v3770 = vrot.slane %v3762, %v3769
        %v3772 = vunpack.c.l.s4 1983009808
        %v3773 = vunpack.c.0.s8 %v3772
        %v3774 = vlaneseq
        %v3775 = vshrl.u32 %v3774, 7
        %v3776 = vsub.s32 %v3773, %v3775
        %v3777 = vrot.slane %v3763, %v3776
        %v3778 = vcombine.low %v3722, %v3738
        %v3779 = vcombine.high %v3722, %v3738
        %v3781 = vunpack.c.l.s4 1934713408
        %v3782 = vunpack.c.0.s8 %v3781
        %v3783 = vlaneseq
        %v3784 = vshrl.u32 %v3783, 7
        %v3785 = vsub.s32 %v3782, %v3784
        %v3786 = vrot.slane %v3778, %v3785
        %v3788 = vunpack.c.l.s4 1934713408
        %v3789 = vunpack.c.0.s8 %v3788
        %v3790 = vlaneseq
        %v3791 = vshrl.u32 %v3790, 7
        %v3792 = vsub.s32 %v3789, %v3791
        %v3793 = vrot.slane %v3779, %v3792
        %v3794 = vcombine.low %v3729, %v3745
        %v3795 = vcombine.high %v3729, %v3745
        %v3797 = vunpack.c.l.s4 1934713408
        %v3798 = vunpack.c.0.s8 %v3797
        %v3799 = vlaneseq
        %v3800 = vshrl.u32 %v3799, 7
        %v3801 = vsub.s32 %v3798, %v3800
        %v3802 = vrot.slane %v3794, %v3801
        %v3804 = vunpack.c.l.s4 1934713408
        %v3805 = vunpack.c.0.s8 %v3804
        %v3806 = vlaneseq
        %v3807 = vshrl.u32 %v3806, 7
        %v3808 = vsub.s32 %v3805, %v3807
        %v3809 = vrot.slane %v3795, %v3808
        %v3810 = vcombine.low %v3754, %v3770
        %v3811 = vcombine.high %v3754, %v3770
        %v3813 = vunpack.c.l.s4 1934713408
        %v3814 = vunpack.c.0.s8 %v3813
        %v3815 = vlaneseq
        %v3816 = vshrl.u32 %v3815, 7
        %v3817 = vsub.s32 %v3814, %v3816
        %v3818 = vrot.slane %v3810, %v3817
        %v3820 = vunpack.c.l.s4 1934713408
        %v3821 = vunpack.c.0.s8 %v3820
        %v3822 = vlaneseq
        %v3823 = vshrl.u32 %v3822, 7
        %v3824 = vsub.s32 %v3821, %v3823
        %v3825 = vrot.slane %v3811, %v3824
        %v3826 = vcombine.low %v3761, %v3777
        %v3827 = vcombine.high %v3761, %v3777
        %v3829 = vunpack.c.l.s4 1934713408
        %v3830 = vunpack.c.0.s8 %v3829
        %v3831 = vlaneseq
        %v3832 = vshrl.u32 %v3831, 7
        %v3833 = vsub.s32 %v3830, %v3832
        %v3834 = vrot.slane %v3826, %v3833
        %v3836 = vunpack.c.l.s4 1934713408
        %v3837 = vunpack.c.0.s8 %v3836
        %v3838 = vlaneseq
        %v3839 = vshrl.u32 %v3838, 7
        %v3840 = vsub.s32 %v3837, %v3839
        %v3841 = vrot.slane %v3827, %v3840
        %v3842 = vcombine.low %v3786, %v3818
        %v3843 = vcombine.high %v3786, %v3818
        %v3844 = vcombine.low %v3793, %v3825
        %v3845 = vcombine.high %v3793, %v3825
        %v3846 = vcombine.low %v3802, %v3834
        %v3847 = vcombine.high %v3802, %v3834
        %v3848 = vcombine.low %v3809, %v3841
        %v3849 = vcombine.high %v3809, %v3841
        %3859 = vrot.lane.b32.xlu0 %v1531, 16
        %v3860 = vpop.permute.xlu0 %3859
        %3861 = vrot.lane.b32.xlu0 %v1667, 16
        %v3862 = vpop.permute.xlu0 %3861
        %3863 = vrot.lane.b32.xlu0 %v1803, 16
        %v3864 = vpop.permute.xlu0 %3863
        %3865 = vrot.lane.b32.xlu0 %v1939, 16
        %v3866 = vpop.permute.xlu0 %3865
        %3867 = vrot.lane.b32.xlu0 %v2075, 16
        %v3868 = vpop.permute.xlu0 %3867
        %3869 = vrot.lane.b32.xlu0 %v2211, 16
        %v3870 = vpop.permute.xlu0 %3869
        %3871 = vrot.lane.b32.xlu0 %v2347, 16
        %v3872 = vpop.permute.xlu0 %3871
        %3873 = vrot.lane.b32.xlu0 %v2483, 16
        %v3874 = vpop.permute.xlu0 %3873
        %3875 = vrot.lane.b32.xlu0 %v2619, 16
        %v3876 = vpop.permute.xlu0 %3875
        %3895 = vrot.lane.b32.xlu0 %v1532, 32
        %v3896 = vpop.permute.xlu0 %3895
        %3897 = vrot.lane.b32.xlu0 %v1668, 32
        %v3898 = vpop.permute.xlu0 %3897
        %3899 = vrot.lane.b32.xlu0 %v1804, 32
        %v3900 = vpop.permute.xlu0 %3899
        %3901 = vrot.lane.b32.xlu0 %v1940, 32
        %v3902 = vpop.permute.xlu0 %3901
        %3903 = vrot.lane.b32.xlu0 %v2076, 32
        %v3904 = vpop.permute.xlu0 %3903
        %3905 = vrot.lane.b32.xlu0 %v2212, 32
        %v3906 = vpop.permute.xlu0 %3905
        %3907 = vrot.lane.b32.xlu0 %v2348, 32
        %v3908 = vpop.permute.xlu0 %3907
        %3909 = vrot.lane.b32.xlu0 %v2484, 32
        %v3910 = vpop.permute.xlu0 %3909
        %3911 = vrot.lane.b32.xlu0 %v2620, 32
        %v3912 = vpop.permute.xlu0 %3911
        %3931 = vrot.lane.b32.xlu0 %v1533, 48
        %v3932 = vpop.permute.xlu0 %3931
        %3933 = vrot.lane.b32.xlu0 %v1669, 48
        %v3934 = vpop.permute.xlu0 %3933
        %3935 = vrot.lane.b32.xlu0 %v1805, 48
        %v3936 = vpop.permute.xlu0 %3935
        %3937 = vrot.lane.b32.xlu0 %v1941, 48
        %v3938 = vpop.permute.xlu0 %3937
        %3939 = vrot.lane.b32.xlu0 %v2077, 48
        %v3940 = vpop.permute.xlu0 %3939
        %3941 = vrot.lane.b32.xlu0 %v2213, 48
        %v3942 = vpop.permute.xlu0 %3941
        %3943 = vrot.lane.b32.xlu0 %v2349, 48
        %v3944 = vpop.permute.xlu0 %3943
        %3945 = vrot.lane.b32.xlu0 %v2485, 48
        %v3946 = vpop.permute.xlu0 %3945
        %3947 = vrot.lane.b32.xlu0 %v2621, 48
        %v3948 = vpop.permute.xlu0 %3947
        %3967 = vrot.lane.b32.xlu0 %v1534, 64
        %v3968 = vpop.permute.xlu0 %3967
        %3969 = vrot.lane.b32.xlu0 %v1670, 64
        %v3970 = vpop.permute.xlu0 %3969
        %3971 = vrot.lane.b32.xlu0 %v1806, 64
        %v3972 = vpop.permute.xlu0 %3971
        %3973 = vrot.lane.b32.xlu0 %v1942, 64
        %v3974 = vpop.permute.xlu0 %3973
        %3975 = vrot.lane.b32.xlu0 %v2078, 64
        %v3976 = vpop.permute.xlu0 %3975
        %3977 = vrot.lane.b32.xlu0 %v2214, 64
        %v3978 = vpop.permute.xlu0 %3977
        %3979 = vrot.lane.b32.xlu0 %v2350, 64
        %v3980 = vpop.permute.xlu0 %3979
        %3981 = vrot.lane.b32.xlu0 %v2486, 64
        %v3982 = vpop.permute.xlu0 %3981
        %3983 = vrot.lane.b32.xlu0 %v2622, 64
        %v3984 = vpop.permute.xlu0 %3983
        %4003 = vrot.lane.b32.xlu0 %v1535, 80
        %v4004 = vpop.permute.xlu0 %4003
        %4005 = vrot.lane.b32.xlu0 %v1671, 80
        %v4006 = vpop.permute.xlu0 %4005
        %4007 = vrot.lane.b32.xlu0 %v1807, 80
        %v4008 = vpop.permute.xlu0 %4007
        %4009 = vrot.lane.b32.xlu0 %v1943, 80
        %v4010 = vpop.permute.xlu0 %4009
        %4011 = vrot.lane.b32.xlu0 %v2079, 80
        %v4012 = vpop.permute.xlu0 %4011
        %4013 = vrot.lane.b32.xlu0 %v2215, 80
        %v4014 = vpop.permute.xlu0 %4013
        %4015 = vrot.lane.b32.xlu0 %v2351, 80
        %v4016 = vpop.permute.xlu0 %4015
        %4017 = vrot.lane.b32.xlu0 %v2487, 80
        %v4018 = vpop.permute.xlu0 %4017
        %4019 = vrot.lane.b32.xlu0 %v2623, 80
        %v4020 = vpop.permute.xlu0 %4019
        %4039 = vrot.lane.b32.xlu0 %v1536, 96
        %v4040 = vpop.permute.xlu0 %4039
        %4041 = vrot.lane.b32.xlu0 %v1672, 96
        %v4042 = vpop.permute.xlu0 %4041
        %4043 = vrot.lane.b32.xlu0 %v1808, 96
        %v4044 = vpop.permute.xlu0 %4043
        %4045 = vrot.lane.b32.xlu0 %v1944, 96
        %v4046 = vpop.permute.xlu0 %4045
        %4047 = vrot.lane.b32.xlu0 %v2080, 96
        %v4048 = vpop.permute.xlu0 %4047
        %4049 = vrot.lane.b32.xlu0 %v2216, 96
        %v4050 = vpop.permute.xlu0 %4049
        %4051 = vrot.lane.b32.xlu0 %v2352, 96
        %v4052 = vpop.permute.xlu0 %4051
        %4053 = vrot.lane.b32.xlu0 %v2488, 96
        %v4054 = vpop.permute.xlu0 %4053
        %4055 = vrot.lane.b32.xlu0 %v2624, 96
        %v4056 = vpop.permute.xlu0 %4055
        %4075 = vrot.lane.b32.xlu0 %v1537, 112
        %v4076 = vpop.permute.xlu0 %4075
        %4077 = vrot.lane.b32.xlu0 %v1673, 112
        %v4078 = vpop.permute.xlu0 %4077
        %4079 = vrot.lane.b32.xlu0 %v1809, 112
        %v4080 = vpop.permute.xlu0 %4079
        %4081 = vrot.lane.b32.xlu0 %v1945, 112
        %v4082 = vpop.permute.xlu0 %4081
        %4083 = vrot.lane.b32.xlu0 %v2081, 112
        %v4084 = vpop.permute.xlu0 %4083
        %4085 = vrot.lane.b32.xlu0 %v2217, 112
        %v4086 = vpop.permute.xlu0 %4085
        %4087 = vrot.lane.b32.xlu0 %v2353, 112
        %v4088 = vpop.permute.xlu0 %4087
        %4089 = vrot.lane.b32.xlu0 %v2489, 112
        %v4090 = vpop.permute.xlu0 %4089
        %4091 = vrot.lane.b32.xlu0 %v2625, 112
        %v4092 = vpop.permute.xlu0 %4091
        %4111 = vrot.lane.b32.xlu0 %v2755, 16
        %v4112 = vpop.permute.xlu0 %4111
        %4113 = vrot.lane.b32.xlu0 %v2891, 16
        %v4114 = vpop.permute.xlu0 %4113
        %4115 = vrot.lane.b32.xlu0 %v3027, 16
        %v4116 = vpop.permute.xlu0 %4115
        %4117 = vrot.lane.b32.xlu0 %v3163, 16
        %v4118 = vpop.permute.xlu0 %4117
        %4119 = vrot.lane.b32.xlu0 %v3299, 16
        %v4120 = vpop.permute.xlu0 %4119
        %4121 = vrot.lane.b32.xlu0 %v3435, 16
        %v4122 = vpop.permute.xlu0 %4121
        %4123 = vrot.lane.b32.xlu0 %v3571, 16
        %v4124 = vpop.permute.xlu0 %4123
        %4125 = vrot.lane.b32.xlu0 %v3707, 16
        %v4126 = vpop.permute.xlu0 %4125
        %4127 = vrot.lane.b32.xlu0 %v3843, 16
        %v4128 = vpop.permute.xlu0 %4127
        %4147 = vrot.lane.b32.xlu0 %v2756, 32
        %v4148 = vpop.permute.xlu0 %4147
        %4149 = vrot.lane.b32.xlu0 %v2892, 32
        %v4150 = vpop.permute.xlu0 %4149
        %4151 = vrot.lane.b32.xlu0 %v3028, 32
        %v4152 = vpop.permute.xlu0 %4151
        %4153 = vrot.lane.b32.xlu0 %v3164, 32
        %v4154 = vpop.permute.xlu0 %4153
        %4155 = vrot.lane.b32.xlu0 %v3300, 32
        %v4156 = vpop.permute.xlu0 %4155
        %4157 = vrot.lane.b32.xlu0 %v3436, 32
        %v4158 = vpop.permute.xlu0 %4157
        %4159 = vrot.lane.b32.xlu0 %v3572, 32
        %v4160 = vpop.permute.xlu0 %4159
        %4161 = vrot.lane.b32.xlu0 %v3708, 32
        %v4162 = vpop.permute.xlu0 %4161
        %4163 = vrot.lane.b32.xlu0 %v3844, 32
        %v4164 = vpop.permute.xlu0 %4163
        %4183 = vrot.lane.b32.xlu0 %v2757, 48
        %v4184 = vpop.permute.xlu0 %4183
        %4185 = vrot.lane.b32.xlu0 %v2893, 48
        %v4186 = vpop.permute.xlu0 %4185
        %4187 = vrot.lane.b32.xlu0 %v3029, 48
        %v4188 = vpop.permute.xlu0 %4187
        %4189 = vrot.lane.b32.xlu0 %v3165, 48
        %v4190 = vpop.permute.xlu0 %4189
        %4191 = vrot.lane.b32.xlu0 %v3301, 48
        %v4192 = vpop.permute.xlu0 %4191
        %4193 = vrot.lane.b32.xlu0 %v3437, 48
        %v4194 = vpop.permute.xlu0 %4193
        %4195 = vrot.lane.b32.xlu0 %v3573, 48
        %v4196 = vpop.permute.xlu0 %4195
        %4197 = vrot.lane.b32.xlu0 %v3709, 48
        %v4198 = vpop.permute.xlu0 %4197
        %4199 = vrot.lane.b32.xlu0 %v3845, 48
        %v4200 = vpop.permute.xlu0 %4199
        %4219 = vrot.lane.b32.xlu0 %v2758, 64
        %v4220 = vpop.permute.xlu0 %4219
        %4221 = vrot.lane.b32.xlu0 %v2894, 64
        %v4222 = vpop.permute.xlu0 %4221
        %4223 = vrot.lane.b32.xlu0 %v3030, 64
        %v4224 = vpop.permute.xlu0 %4223
        %4225 = vrot.lane.b32.xlu0 %v3166, 64
        %v4226 = vpop.permute.xlu0 %4225
        %4227 = vrot.lane.b32.xlu0 %v3302, 64
        %v4228 = vpop.permute.xlu0 %4227
        %4229 = vrot.lane.b32.xlu0 %v3438, 64
        %v4230 = vpop.permute.xlu0 %4229
        %4231 = vrot.lane.b32.xlu0 %v3574, 64
        %v4232 = vpop.permute.xlu0 %4231
        %4233 = vrot.lane.b32.xlu0 %v3710, 64
        %v4234 = vpop.permute.xlu0 %4233
        %4235 = vrot.lane.b32.xlu0 %v3846, 64
        %v4236 = vpop.permute.xlu0 %4235
        %4255 = vrot.lane.b32.xlu0 %v2759, 80
        %v4256 = vpop.permute.xlu0 %4255
        %4257 = vrot.lane.b32.xlu0 %v2895, 80
        %v4258 = vpop.permute.xlu0 %4257
        %4259 = vrot.lane.b32.xlu0 %v3031, 80
        %v4260 = vpop.permute.xlu0 %4259
        %4261 = vrot.lane.b32.xlu0 %v3167, 80
        %v4262 = vpop.permute.xlu0 %4261
        %4263 = vrot.lane.b32.xlu0 %v3303, 80
        %v4264 = vpop.permute.xlu0 %4263
        %4265 = vrot.lane.b32.xlu0 %v3439, 80
        %v4266 = vpop.permute.xlu0 %4265
        %4267 = vrot.lane.b32.xlu0 %v3575, 80
        %v4268 = vpop.permute.xlu0 %4267
        %4269 = vrot.lane.b32.xlu0 %v3711, 80
        %v4270 = vpop.permute.xlu0 %4269
        %4271 = vrot.lane.b32.xlu0 %v3847, 80
        %v4272 = vpop.permute.xlu0 %4271
        %4291 = vrot.lane.b32.xlu0 %v2760, 96
        %v4292 = vpop.permute.xlu0 %4291
        %4293 = vrot.lane.b32.xlu0 %v2896, 96
        %v4294 = vpop.permute.xlu0 %4293
        %4295 = vrot.lane.b32.xlu0 %v3032, 96
        %v4296 = vpop.permute.xlu0 %4295
        %4297 = vrot.lane.b32.xlu0 %v3168, 96
        %v4298 = vpop.permute.xlu0 %4297
        %4299 = vrot.lane.b32.xlu0 %v3304, 96
        %v4300 = vpop.permute.xlu0 %4299
        %4301 = vrot.lane.b32.xlu0 %v3440, 96
        %v4302 = vpop.permute.xlu0 %4301
        %4303 = vrot.lane.b32.xlu0 %v3576, 96
        %v4304 = vpop.permute.xlu0 %4303
        %4305 = vrot.lane.b32.xlu0 %v3712, 96
        %v4306 = vpop.permute.xlu0 %4305
        %4307 = vrot.lane.b32.xlu0 %v3848, 96
        %v4308 = vpop.permute.xlu0 %4307
        %4327 = vrot.lane.b32.xlu0 %v2761, 112
        %v4328 = vpop.permute.xlu0 %4327
        %4329 = vrot.lane.b32.xlu0 %v2897, 112
        %v4330 = vpop.permute.xlu0 %4329
        %4331 = vrot.lane.b32.xlu0 %v3033, 112
        %v4332 = vpop.permute.xlu0 %4331
        %4333 = vrot.lane.b32.xlu0 %v3169, 112
        %v4334 = vpop.permute.xlu0 %4333
        %4335 = vrot.lane.b32.xlu0 %v3305, 112
        %v4336 = vpop.permute.xlu0 %4335
        %4337 = vrot.lane.b32.xlu0 %v3441, 112
        %v4338 = vpop.permute.xlu0 %4337
        %4339 = vrot.lane.b32.xlu0 %v3577, 112
        %v4340 = vpop.permute.xlu0 %4339
        %4341 = vrot.lane.b32.xlu0 %v3713, 112
        %v4342 = vpop.permute.xlu0 %4341
        %4343 = vrot.lane.b32.xlu0 %v3849, 112
        %v4344 = vpop.permute.xlu0 %4343
        %vm4354 = vcmask 130048
        %v4355 = vsel %vm4354, %v1530, %v3860
        %v4356 = vsel %vm4354, %v1666, %v3862
        %v4357 = vsel %vm4354, %v1802, %v3864
        %v4358 = vsel %vm4354, %v1938, %v3866
        %v4359 = vsel %vm4354, %v2074, %v3868
        %v4360 = vsel %vm4354, %v2210, %v3870
        %v4361 = vsel %vm4354, %v2346, %v3872
        %v4362 = vsel %vm4354, %v2482, %v3874
        %v4363 = vsel %vm4354, %v2618, %v3876
        %vm4364 = vcmask 261120
        %v4365 = vsel %vm4364, %v4355, %v3896
        %v4366 = vsel %vm4364, %v4356, %v3898
        %v4367 = vsel %vm4364, %v4357, %v3900
        %v4368 = vsel %vm4364, %v4358, %v3902
        %v4369 = vsel %vm4364, %v4359, %v3904
        %v4370 = vsel %vm4364, %v4360, %v3906
        %v4371 = vsel %vm4364, %v4361, %v3908
        %v4372 = vsel %vm4364, %v4362, %v3910
        %v4373 = vsel %vm4364, %v4363, %v3912
        %vm4374 = vcmask 392192
        %v4375 = vsel %vm4374, %v4365, %v3932
        %v4376 = vsel %vm4374, %v4366, %v3934
        %v4377 = vsel %vm4374, %v4367, %v3936
        %v4378 = vsel %vm4374, %v4368, %v3938
        %v4379 = vsel %vm4374, %v4369, %v3940
        %v4380 = vsel %vm4374, %v4370, %v3942
        %v4381 = vsel %vm4374, %v4371, %v3944
        %v4382 = vsel %vm4374, %v4372, %v3946
        %v4383 = vsel %vm4374, %v4373, %v3948
        %vm4384 = vcmask 523264
        %v4385 = vsel %vm4384, %v4375, %v3968
        %v4386 = vsel %vm4384, %v4376, %v3970
        %v4387 = vsel %vm4384, %v4377, %v3972
        %v4388 = vsel %vm4384, %v4378, %v3974
        %v4389 = vsel %vm4384, %v4379, %v3976
        %v4390 = vsel %vm4384, %v4380, %v3978
        %v4391 = vsel %vm4384, %v4381, %v3980
        %v4392 = vsel %vm4384, %v4382, %v3982
        %v4393 = vsel %vm4384, %v4383, %v3984
        %vm4394 = vcmask 654336
        %v4395 = vsel %vm4394, %v4385, %v4004
        %v4396 = vsel %vm4394, %v4386, %v4006
        %v4397 = vsel %vm4394, %v4387, %v4008
        %v4398 = vsel %vm4394, %v4388, %v4010
        %v4399 = vsel %vm4394, %v4389, %v4012
        %v4400 = vsel %vm4394, %v4390, %v4014
        %v4401 = vsel %vm4394, %v4391, %v4016
        %v4402 = vsel %vm4394, %v4392, %v4018
        %v4403 = vsel %vm4394, %v4393, %v4020
        %vm4404 = vcmask 785408
        %v4405 = vsel %vm4404, %v4395, %v4040
        %v4406 = vsel %vm4404, %v4396, %v4042
        %v4407 = vsel %vm4404, %v4397, %v4044
        %v4408 = vsel %vm4404, %v4398, %v4046
        %v4409 = vsel %vm4404, %v4399, %v4048
        %v4410 = vsel %vm4404, %v4400, %v4050
        %v4411 = vsel %vm4404, %v4401, %v4052
        %v4412 = vsel %vm4404, %v4402, %v4054
        %v4413 = vsel %vm4404, %v4403, %v4056
        %vm4414 = vcmask 916480
        %v4415 = vsel %vm4414, %v4405, %v4076
        %v4416 = vsel %vm4414, %v4406, %v4078
        %v4417 = vsel %vm4414, %v4407, %v4080
        %v4418 = vsel %vm4414, %v4408, %v4082
        %v4419 = vsel %vm4414, %v4409, %v4084
        %v4420 = vsel %vm4414, %v4410, %v4086
        %v4421 = vsel %vm4414, %v4411, %v4088
        %v4422 = vsel %vm4414, %v4412, %v4090
        %v4423 = vsel %vm4414, %v4413, %v4092
        %v4424 = vsel %vm4354, %v2754, %v4112
        %v4425 = vsel %vm4354, %v2890, %v4114
        %v4426 = vsel %vm4354, %v3026, %v4116
        %v4427 = vsel %vm4354, %v3162, %v4118
        %v4428 = vsel %vm4354, %v3298, %v4120
        %v4429 = vsel %vm4354, %v3434, %v4122
        %v4430 = vsel %vm4354, %v3570, %v4124
        %v4431 = vsel %vm4354, %v3706, %v4126
        %v4432 = vsel %vm4354, %v3842, %v4128
        %v4433 = vsel %vm4364, %v4424, %v4148
        %v4434 = vsel %vm4364, %v4425, %v4150
        %v4435 = vsel %vm4364, %v4426, %v4152
        %v4436 = vsel %vm4364, %v4427, %v4154
        %v4437 = vsel %vm4364, %v4428, %v4156
        %v4438 = vsel %vm4364, %v4429, %v4158
        %v4439 = vsel %vm4364, %v4430, %v4160
        %v4440 = vsel %vm4364, %v4431, %v4162
        %v4441 = vsel %vm4364, %v4432, %v4164
        %v4442 = vsel %vm4374, %v4433, %v4184
        %v4443 = vsel %vm4374, %v4434, %v4186
        %v4444 = vsel %vm4374, %v4435, %v4188
        %v4445 = vsel %vm4374, %v4436, %v4190
        %v4446 = vsel %vm4374, %v4437, %v4192
        %v4447 = vsel %vm4374, %v4438, %v4194
        %v4448 = vsel %vm4374, %v4439, %v4196
        %v4449 = vsel %vm4374, %v4440, %v4198
        %v4450 = vsel %vm4374, %v4441, %v4200
        %v4451 = vsel %vm4384, %v4442, %v4220
        %v4452 = vsel %vm4384, %v4443, %v4222
        %v4453 = vsel %vm4384, %v4444, %v4224
        %v4454 = vsel %vm4384, %v4445, %v4226
        %v4455 = vsel %vm4384, %v4446, %v4228
        %v4456 = vsel %vm4384, %v4447, %v4230
        %v4457 = vsel %vm4384, %v4448, %v4232
        %v4458 = vsel %vm4384, %v4449, %v4234
        %v4459 = vsel %vm4384, %v4450, %v4236
        %v4460 = vsel %vm4394, %v4451, %v4256
        %v4461 = vsel %vm4394, %v4452, %v4258
        %v4462 = vsel %vm4394, %v4453, %v4260
        %v4463 = vsel %vm4394, %v4454, %v4262
        %v4464 = vsel %vm4394, %v4455, %v4264
        %v4465 = vsel %vm4394, %v4456, %v4266
        %v4466 = vsel %vm4394, %v4457, %v4268
        %v4467 = vsel %vm4394, %v4458, %v4270
        %v4468 = vsel %vm4394, %v4459, %v4272
        %v4469 = vsel %vm4404, %v4460, %v4292
        %v4470 = vsel %vm4404, %v4461, %v4294
        %v4471 = vsel %vm4404, %v4462, %v4296
        %v4472 = vsel %vm4404, %v4463, %v4298
        %v4473 = vsel %vm4404, %v4464, %v4300
        %v4474 = vsel %vm4404, %v4465, %v4302
        %v4475 = vsel %vm4404, %v4466, %v4304
        %v4476 = vsel %vm4404, %v4467, %v4306
        %v4477 = vsel %vm4404, %v4468, %v4308
        %v4478 = vsel %vm4414, %v4469, %v4328
        %v4479 = vsel %vm4414, %v4470, %v4330
        %v4480 = vsel %vm4414, %v4471, %v4332
        %v4481 = vsel %vm4414, %v4472, %v4334
        %v4482 = vsel %vm4414, %v4473, %v4336
        %v4483 = vsel %vm4414, %v4474, %v4338
        %v4484 = vsel %vm4414, %v4475, %v4340
        %v4485 = vsel %vm4414, %v4476, %v4342
        %v4486 = vsel %vm4414, %v4477, %v4344
        %4488 = vset.pattern.permute.xlu0 0
        %4489 = vperm.xlu0 %4488, %v763
        %v4490 = vpop.permute.xlu0 %4489
        %vm4492 = vcmask 588800
        %v4494 = vsel %vm4492, %v764, 0
        %4496 = vmatprep.subr.mxu0 0.0
        %4497 = vmatpush1.msra.mxu0 0.0
        %4498 = vmatprep.subr.mxu0 0.0
        %4499 = vmatpush1.msra.mxu0 0.0
        %4500 = vmatprep.subr.mxu0 0.0
        %4501 = vmatpush1.msra.mxu0 0.0
        %4502 = vmatprep.subr.mxu0 0.0
        %4503 = vmatpush1.msra.mxu0 0.0
        %4504 = vmatprep.subr.mxu0 0.0
        %4505 = vmatpush1.msra.mxu0 0.0
        %4506 = vmatprep.subr.mxu0 0.0
        %4507 = vmatpush1.msra.mxu0 0.0
        %4508 = vmatprep.subr.mxu0 0.0
        %4509 = vmatpush1.msra.mxu0 0.0
        %4510 = vmatprep.subr.mxu0 %v4486
        %4511 = vmatpush1.msra.mxu0 %v4423
        %4512 = vmatprep.subr.mxu0 %v4485
        %4513 = vmatpush1.msra.mxu0 %v4422
        %4514 = vmatprep.subr.mxu0 %v4484
        %4515 = vmatpush1.msra.mxu0 %v4421
        %4516 = vmatprep.subr.mxu0 %v4483
        %4517 = vmatpush1.msra.mxu0 %v4420
        %4518 = vmatprep.subr.mxu0 %v4482
        %4519 = vmatpush1.msra.mxu0 %v4419
        %4520 = vmatprep.subr.mxu0 %v4481
        %4521 = vmatpush1.msra.mxu0 %v4418
        %4522 = vmatprep.subr.mxu0 %v4480
        %4523 = vmatpush1.msra.mxu0 %v4417
        %4524 = vmatprep.subr.mxu0 %v4479
        %4525 = vmatpush1.msra.mxu0 %v4416
        %4526 = vmatprep.subr.mxu0 %v4478
        %4527 = vmatpush1.msra.mxu0 %v4415
        %4528 = vmatprep.subr.mxu0 0.0
        %4529 = vmatpush2.msra.mxu0 0.0
        %4530 = vmatprep.subr.mxu0 0.0
        %4531 = vmatpush2.msra.mxu0 0.0
        %4532 = vmatprep.subr.mxu0 0.0
        %4533 = vmatpush2.msra.mxu0 0.0
        %4534 = vmatprep.subr.mxu0 0.0
        %4535 = vmatpush2.msra.mxu0 0.0
        %4536 = vmatprep.subr.mxu0 0.0
        %4537 = vmatpush2.msra.mxu0 0.0
        %4538 = vmatprep.subr.mxu0 0.0
        %4539 = vmatpush2.msra.mxu0 0.0
        %4540 = vmatprep.subr.mxu0 0.0
        %4541 = vmatpush2.msra.mxu0 0.0
        %4542 = vmatprep.subr.mxu0 0.0
        %4543 = vmatpush2.msra.mxu0 0.0
        %4544 = vmatprep.subr.mxu0 0.0
        %4545 = vmatpush2.msra.mxu0 0.0
        %4546 = vmatprep.subr.mxu0 0.0
        %4547 = vmatpush2.msra.mxu0 0.0
        %4548 = vmatprep.subr.mxu0 0.0
        %4549 = vmatpush2.msra.mxu0 0.0
        %4550 = vmatprep.subr.mxu0 0.0
        %4551 = vmatpush2.msra.mxu0 0.0
        %4552 = vmatprep.subr.mxu0 0.0
        %4553 = vmatpush2.msra.mxu0 0.0
        %4554 = vmatprep.subr.mxu0 0.0
        %4555 = vmatpush2.msra.mxu0 0.0
        %4556 = vmatprep.subr.mxu0 0.0
        %4557 = vmatpush2.msra.mxu0 0.0
        %4558 = vmatprep.subr.mxu0 0.0
        %4559 = vmatpush2.msra.mxu0 0.0
        %4560 = vmatprep.mubr.f32.mxu0 0.0
        %4561 = vmatmul.mubr.f32.gmra.mxu0 %v4494
        %v4562 = vpop.f32.mrf.mxu0
        %v4563 = vadd.f32 %v4490, %v4562
        %v4564 = vpop.f32.mrf.mxu0
        %v4565 = vadd.f32 %v4490, %v4564
        %4566 = vdwg.mxu0
        %v4567 = vmax.f32 %v4563, 0.0
        %v4568 = vmax.f32 %v4565, 0.0
        %4570 = vrot.lane.b32.xlu0 %v4567, 112
        %v4571 = vpop.permute.xlu0 %4570
        %4573 = vrot.lane.b32.xlu0 %v4567, 96
        %v4574 = vpop.permute.xlu0 %4573
        %4576 = vrot.lane.b32.xlu0 %v4567, 80
        %v4577 = vpop.permute.xlu0 %4576
        %4579 = vrot.lane.b32.xlu0 %v4567, 64
        %v4580 = vpop.permute.xlu0 %4579
        %4582 = vrot.lane.b32.xlu0 %v4567, 48
        %v4583 = vpop.permute.xlu0 %4582
        %4585 = vrot.lane.b32.xlu0 %v4567, 32
        %v4586 = vpop.permute.xlu0 %4585
        %4588 = vrot.lane.b32.xlu0 %v4567, 16
        %v4589 = vpop.permute.xlu0 %4588
        %4592 = vrot.lane.b32.xlu0 %v4568, 112
        %v4593 = vpop.permute.xlu0 %4592
        %4595 = vrot.lane.b32.xlu0 %v4568, 96
        %v4596 = vpop.permute.xlu0 %4595
        %4598 = vrot.lane.b32.xlu0 %v4568, 80
        %v4599 = vpop.permute.xlu0 %4598
        %4601 = vrot.lane.b32.xlu0 %v4568, 64
        %v4602 = vpop.permute.xlu0 %4601
        %4604 = vrot.lane.b32.xlu0 %v4568, 48
        %v4605 = vpop.permute.xlu0 %4604
        %4607 = vrot.lane.b32.xlu0 %v4568, 32
        %v4608 = vpop.permute.xlu0 %4607
        %4610 = vrot.lane.b32.xlu0 %v4568, 16
        %v4611 = vpop.permute.xlu0 %4610
        %v4613 = vcombine.low %v4567, %v4574
        %v4615 = vunpack.c.l.s4 1983009808
        %v4616 = vunpack.c.0.s8 %v4615
        %v4617 = vlaneseq
        %v4618 = vshrl.u32 %v4617, 7
        %v4619 = vsub.s32 %v4616, %v4618
        %v4620 = vrot.slane %v4613, %v4619
        %v4621 = vcombine.low %v4571, %v4577
        %v4623 = vunpack.c.l.s4 1983009808
        %v4624 = vunpack.c.0.s8 %v4623
        %v4625 = vlaneseq
        %v4626 = vshrl.u32 %v4625, 7
        %v4627 = vsub.s32 %v4624, %v4626
        %v4628 = vrot.slane %v4621, %v4627
        %v4629 = vcombine.low %v4580, %v4586
        %v4631 = vunpack.c.l.s4 1983009808
        %v4632 = vunpack.c.0.s8 %v4631
        %v4633 = vlaneseq
        %v4634 = vshrl.u32 %v4633, 7
        %v4635 = vsub.s32 %v4632, %v4634
        %v4636 = vrot.slane %v4629, %v4635
        %v4637 = vcombine.low %v4583, %v4589
        %v4639 = vunpack.c.l.s4 1983009808
        %v4640 = vunpack.c.0.s8 %v4639
        %v4641 = vlaneseq
        %v4642 = vshrl.u32 %v4641, 7
        %v4643 = vsub.s32 %v4640, %v4642
        %v4644 = vrot.slane %v4637, %v4643
        %v4645 = vcombine.low %v4620, %v4628
        %v4646 = vcombine.high %v4620, %v4628
        %v4648 = vunpack.c.l.s4 1934713408
        %v4649 = vunpack.c.0.s8 %v4648
        %v4650 = vlaneseq
        %v4651 = vshrl.u32 %v4650, 7
        %v4652 = vsub.s32 %v4649, %v4651
        %v4653 = vrot.slane %v4645, %v4652
        %v4655 = vunpack.c.l.s4 1934713408
        %v4656 = vunpack.c.0.s8 %v4655
        %v4657 = vlaneseq
        %v4658 = vshrl.u32 %v4657, 7
        %v4659 = vsub.s32 %v4656, %v4658
        %v4660 = vrot.slane %v4646, %v4659
        %v4661 = vcombine.low %v4636, %v4644
        %v4662 = vcombine.high %v4636, %v4644
        %v4664 = vunpack.c.l.s4 1934713408
        %v4665 = vunpack.c.0.s8 %v4664
        %v4666 = vlaneseq
        %v4667 = vshrl.u32 %v4666, 7
        %v4668 = vsub.s32 %v4665, %v4667
        %v4669 = vrot.slane %v4661, %v4668
        %v4671 = vunpack.c.l.s4 1934713408
        %v4672 = vunpack.c.0.s8 %v4671
        %v4673 = vlaneseq
        %v4674 = vshrl.u32 %v4673, 7
        %v4675 = vsub.s32 %v4672, %v4674
        %v4676 = vrot.slane %v4662, %v4675
        %v4677 = vcombine.low %v4653, %v4669
        %v4678 = vcombine.high %v4653, %v4669
        %v4679 = vcombine.low %v4660, %v4676
        %v4680 = vcombine.high %v4660, %v4676
        %v4681 = vcombine.low %v4568, %v4596
        %v4683 = vunpack.c.l.s4 1983009808
        %v4684 = vunpack.c.0.s8 %v4683
        %v4685 = vlaneseq
        %v4686 = vshrl.u32 %v4685, 7
        %v4687 = vsub.s32 %v4684, %v4686
        %v4688 = vrot.slane %v4681, %v4687
        %v4689 = vcombine.low %v4593, %v4599
        %v4691 = vunpack.c.l.s4 1983009808
        %v4692 = vunpack.c.0.s8 %v4691
        %v4693 = vlaneseq
        %v4694 = vshrl.u32 %v4693, 7
        %v4695 = vsub.s32 %v4692, %v4694
        %v4696 = vrot.slane %v4689, %v4695
        %v4697 = vcombine.low %v4602, %v4608
        %v4699 = vunpack.c.l.s4 1983009808
        %v4700 = vunpack.c.0.s8 %v4699
        %v4701 = vlaneseq
        %v4702 = vshrl.u32 %v4701, 7
        %v4703 = vsub.s32 %v4700, %v4702
        %v4704 = vrot.slane %v4697, %v4703
        %v4705 = vcombine.low %v4605, %v4611
        %v4707 = vunpack.c.l.s4 1983009808
        %v4708 = vunpack.c.0.s8 %v4707
        %v4709 = vlaneseq
        %v4710 = vshrl.u32 %v4709, 7
        %v4711 = vsub.s32 %v4708, %v4710
        %v4712 = vrot.slane %v4705, %v4711
        %v4713 = vcombine.low %v4688, %v4696
        %v4714 = vcombine.high %v4688, %v4696
        %v4716 = vunpack.c.l.s4 1934713408
        %v4717 = vunpack.c.0.s8 %v4716
        %v4718 = vlaneseq
        %v4719 = vshrl.u32 %v4718, 7
        %v4720 = vsub.s32 %v4717, %v4719
        %v4721 = vrot.slane %v4713, %v4720
        %v4723 = vunpack.c.l.s4 1934713408
        %v4724 = vunpack.c.0.s8 %v4723
        %v4725 = vlaneseq
        %v4726 = vshrl.u32 %v4725, 7
        %v4727 = vsub.s32 %v4724, %v4726
        %v4728 = vrot.slane %v4714, %v4727
        %v4729 = vcombine.low %v4704, %v4712
        %v4730 = vcombine.high %v4704, %v4712
        %v4732 = vunpack.c.l.s4 1934713408
        %v4733 = vunpack.c.0.s8 %v4732
        %v4734 = vlaneseq
        %v4735 = vshrl.u32 %v4734, 7
        %v4736 = vsub.s32 %v4733, %v4735
        %v4737 = vrot.slane %v4729, %v4736
        %v4739 = vunpack.c.l.s4 1934713408
        %v4740 = vunpack.c.0.s8 %v4739
        %v4741 = vlaneseq
        %v4742 = vshrl.u32 %v4741, 7
        %v4743 = vsub.s32 %v4740, %v4742
        %v4744 = vrot.slane %v4730, %v4743
        %v4745 = vcombine.low %v4721, %v4737
        %v4746 = vcombine.high %v4721, %v4737
        %v4747 = vcombine.low %v4728, %v4744
        %v4748 = vcombine.high %v4728, %v4744
        %v4749 = vld [vmem:[%s5] sm:$0xf]
        %v4758 = vrot.slane %v4677, 7
        %v4759 = vrot.slane %v4745, 7
        %v4760 = vsel %vm781, %v4758, %v4759
        %v4761 = vrot.slane %v4678, 7
        %v4762 = vrot.slane %v4746, 7
        %v4763 = vsel %vm781, %v4761, %v4762
        %v4764 = vrot.slane %v4679, 7
        %v4765 = vrot.slane %v4747, 7
        %v4766 = vsel %vm781, %v4764, %v4765
        %v4767 = vrot.slane %v4680, 7
        %v4768 = vrot.slane %v4748, 7
        %v4769 = vsel %vm781, %v4767, %v4768
        %v4778 = vsel %vm781, 0.0, %v4758
        %v4779 = vsel %vm781, 0.0, %v4761
        %v4780 = vsel %vm781, 0.0, %v4764
        %v4781 = vsel %vm781, 0.0, %v4767
        %v4782 = vsel %vm781, %v4759, 0.0
        %v4783 = vsel %vm781, %v4762, 0.0
        %v4784 = vsel %vm781, %v4765, 0.0
        %v4785 = vsel %vm781, %v4768, 0.0
        %4794 = vrot.lane.b32.xlu0 %v4778, 1
        %v4795 = vpop.permute.xlu0 %4794
        %4796 = vrot.lane.b32.xlu0 %v4760, 1
        %v4797 = vpop.permute.xlu0 %4796
        %4798 = vrot.lane.b32.xlu0 %v4782, 1
        %v4799 = vpop.permute.xlu0 %4798
        %4800 = vrot.lane.b32.xlu0 %v4779, 1
        %v4801 = vpop.permute.xlu0 %4800
        %4802 = vrot.lane.b32.xlu0 %v4763, 1
        %v4803 = vpop.permute.xlu0 %4802
        %4804 = vrot.lane.b32.xlu0 %v4783, 1
        %v4805 = vpop.permute.xlu0 %4804
        %4806 = vrot.lane.b32.xlu0 %v4780, 1
        %v4807 = vpop.permute.xlu0 %4806
        %4808 = vrot.lane.b32.xlu0 %v4766, 1
        %v4809 = vpop.permute.xlu0 %4808
        %4810 = vrot.lane.b32.xlu0 %v4784, 1
        %v4811 = vpop.permute.xlu0 %4810
        %4812 = vrot.lane.b32.xlu0 %v4781, 1
        %v4813 = vpop.permute.xlu0 %4812
        %4814 = vrot.lane.b32.xlu0 %v4769, 1
        %v4815 = vpop.permute.xlu0 %4814
        %4816 = vrot.lane.b32.xlu0 %v4785, 1
        %v4817 = vpop.permute.xlu0 %4816
        %v4830 = vsel %vm926, 0.0, %v4795
        %v4831 = vsel %vm926, 0.0, %v4797
        %v4832 = vsel %vm926, 0.0, %v4799
        %v4833 = vsel %vm926, 0.0, %v4801
        %v4834 = vsel %vm926, 0.0, %v4803
        %v4835 = vsel %vm926, 0.0, %v4805
        %v4836 = vsel %vm926, 0.0, %v4807
        %v4837 = vsel %vm926, 0.0, %v4809
        %v4838 = vsel %vm926, 0.0, %v4811
        %v4839 = vsel %vm926, 0.0, %v4813
        %v4840 = vsel %vm926, 0.0, %v4815
        %v4841 = vsel %vm926, 0.0, %v4817
        %v4842 = vsel %vm951, %v4830, 0.0
        %v4843 = vsel %vm951, %v4831, 0.0
        %v4844 = vsel %vm951, %v4832, 0.0
        %v4845 = vsel %vm951, %v4833, 0.0
        %v4846 = vsel %vm951, %v4834, 0.0
        %v4847 = vsel %vm951, %v4835, 0.0
        %v4848 = vsel %vm951, %v4836, 0.0
        %v4849 = vsel %vm951, %v4837, 0.0
        %v4850 = vsel %vm951, %v4838, 0.0
        %v4851 = vsel %vm951, %v4839, 0.0
        %v4852 = vsel %vm951, %v4840, 0.0
        %v4853 = vsel %vm951, %v4841, 0.0
        %4862 = vrot.lane.b32.xlu0 %v4842, 127
        %v4863 = vpop.permute.xlu0 %4862
        %4864 = vrot.lane.b32.xlu0 %v4843, 127
        %v4865 = vpop.permute.xlu0 %4864
        %4866 = vrot.lane.b32.xlu0 %v4845, 127
        %v4867 = vpop.permute.xlu0 %4866
        %4868 = vrot.lane.b32.xlu0 %v4846, 127
        %v4869 = vpop.permute.xlu0 %4868
        %4870 = vrot.lane.b32.xlu0 %v4848, 127
        %v4871 = vpop.permute.xlu0 %4870
        %4872 = vrot.lane.b32.xlu0 %v4849, 127
        %v4873 = vpop.permute.xlu0 %4872
        %4874 = vrot.lane.b32.xlu0 %v4851, 127
        %v4875 = vpop.permute.xlu0 %4874
        %4876 = vrot.lane.b32.xlu0 %v4852, 127
        %v4877 = vpop.permute.xlu0 %4876
        %4886 = vrot.lane.b32.xlu0 %v4842, 126
        %v4887 = vpop.permute.xlu0 %4886
        %4888 = vrot.lane.b32.xlu0 %v4843, 126
        %v4889 = vpop.permute.xlu0 %4888
        %4890 = vrot.lane.b32.xlu0 %v4845, 126
        %v4891 = vpop.permute.xlu0 %4890
        %4892 = vrot.lane.b32.xlu0 %v4846, 126
        %v4893 = vpop.permute.xlu0 %4892
        %4894 = vrot.lane.b32.xlu0 %v4848, 126
        %v4895 = vpop.permute.xlu0 %4894
        %4896 = vrot.lane.b32.xlu0 %v4849, 126
        %v4897 = vpop.permute.xlu0 %4896
        %4898 = vrot.lane.b32.xlu0 %v4851, 126
        %v4899 = vpop.permute.xlu0 %4898
        %4900 = vrot.lane.b32.xlu0 %v4852, 126
        %v4901 = vpop.permute.xlu0 %4900
        %v4914 = vrot.slane %v4842, 1
        %v4915 = vrot.slane %v4843, 1
        %v4916 = vsel %vm1096, %v4914, %v4915
        %v4917 = vrot.slane %v4844, 1
        %v4918 = vsel %vm1096, %v4915, %v4917
        %v4919 = vrot.slane %v4845, 1
        %v4920 = vrot.slane %v4846, 1
        %v4921 = vsel %vm1096, %v4919, %v4920
        %v4922 = vrot.slane %v4847, 1
        %v4923 = vsel %vm1096, %v4920, %v4922
        %v4924 = vrot.slane %v4848, 1
        %v4925 = vrot.slane %v4849, 1
        %v4926 = vsel %vm1096, %v4924, %v4925
        %v4927 = vrot.slane %v4850, 1
        %v4928 = vsel %vm1096, %v4925, %v4927
        %v4929 = vrot.slane %v4851, 1
        %v4930 = vrot.slane %v4852, 1
        %v4931 = vsel %vm1096, %v4929, %v4930
        %v4932 = vrot.slane %v4853, 1
        %v4933 = vsel %vm1096, %v4930, %v4932
        %4942 = vrot.lane.b32.xlu0 %v4916, 127
        %v4943 = vpop.permute.xlu0 %4942
        %4944 = vrot.lane.b32.xlu0 %v4918, 127
        %v4945 = vpop.permute.xlu0 %4944
        %4946 = vrot.lane.b32.xlu0 %v4921, 127
        %v4947 = vpop.permute.xlu0 %4946
        %4948 = vrot.lane.b32.xlu0 %v4923, 127
        %v4949 = vpop.permute.xlu0 %4948
        %4950 = vrot.lane.b32.xlu0 %v4926, 127
        %v4951 = vpop.permute.xlu0 %4950
        %4952 = vrot.lane.b32.xlu0 %v4928, 127
        %v4953 = vpop.permute.xlu0 %4952
        %4954 = vrot.lane.b32.xlu0 %v4931, 127
        %v4955 = vpop.permute.xlu0 %4954
        %4956 = vrot.lane.b32.xlu0 %v4933, 127
        %v4957 = vpop.permute.xlu0 %4956
        %4966 = vrot.lane.b32.xlu0 %v4916, 126
        %v4967 = vpop.permute.xlu0 %4966
        %4968 = vrot.lane.b32.xlu0 %v4918, 126
        %v4969 = vpop.permute.xlu0 %4968
        %4970 = vrot.lane.b32.xlu0 %v4921, 126
        %v4971 = vpop.permute.xlu0 %4970
        %4972 = vrot.lane.b32.xlu0 %v4923, 126
        %v4973 = vpop.permute.xlu0 %4972
        %4974 = vrot.lane.b32.xlu0 %v4926, 126
        %v4975 = vpop.permute.xlu0 %4974
        %4976 = vrot.lane.b32.xlu0 %v4928, 126
        %v4977 = vpop.permute.xlu0 %4976
        %4978 = vrot.lane.b32.xlu0 %v4931, 126
        %v4979 = vpop.permute.xlu0 %4978
        %4980 = vrot.lane.b32.xlu0 %v4933, 126
        %v4981 = vpop.permute.xlu0 %4980
        %v4990 = vrot.slane %v4842, 2
        %v4991 = vrot.slane %v4843, 2
        %v4992 = vsel %vm1249, %v4990, %v4991
        %v4993 = vrot.slane %v4844, 2
        %v4994 = vsel %vm1249, %v4991, %v4993
        %v4995 = vrot.slane %v4845, 2
        %v4996 = vrot.slane %v4846, 2
        %v4997 = vsel %vm1249, %v4995, %v4996
        %v4998 = vrot.slane %v4847, 2
        %v4999 = vsel %vm1249, %v4996, %v4998
        %v5000 = vrot.slane %v4848, 2
        %v5001 = vrot.slane %v4849, 2
        %v5002 = vsel %vm1249, %v5000, %v5001
        %v5003 = vrot.slane %v4850, 2
        %v5004 = vsel %vm1249, %v5001, %v5003
        %v5005 = vrot.slane %v4851, 2
        %v5006 = vrot.slane %v4852, 2
        %v5007 = vsel %vm1249, %v5005, %v5006
        %v5008 = vrot.slane %v4853, 2
        %v5009 = vsel %vm1249, %v5006, %v5008
        %5018 = vrot.lane.b32.xlu0 %v4992, 127
        %v5019 = vpop.permute.xlu0 %5018
        %5020 = vrot.lane.b32.xlu0 %v4994, 127
        %v5021 = vpop.permute.xlu0 %5020
        %5022 = vrot.lane.b32.xlu0 %v4997, 127
        %v5023 = vpop.permute.xlu0 %5022
        %5024 = vrot.lane.b32.xlu0 %v4999, 127
        %v5025 = vpop.permute.xlu0 %5024
        %5026 = vrot.lane.b32.xlu0 %v5002, 127
        %v5027 = vpop.permute.xlu0 %5026
        %5028 = vrot.lane.b32.xlu0 %v5004, 127
        %v5029 = vpop.permute.xlu0 %5028
        %5030 = vrot.lane.b32.xlu0 %v5007, 127
        %v5031 = vpop.permute.xlu0 %5030
        %5032 = vrot.lane.b32.xlu0 %v5009, 127
        %v5033 = vpop.permute.xlu0 %5032
        %5042 = vrot.lane.b32.xlu0 %v4992, 126
        %v5043 = vpop.permute.xlu0 %5042
        %5044 = vrot.lane.b32.xlu0 %v4994, 126
        %v5045 = vpop.permute.xlu0 %5044
        %5046 = vrot.lane.b32.xlu0 %v4997, 126
        %v5047 = vpop.permute.xlu0 %5046
        %5048 = vrot.lane.b32.xlu0 %v4999, 126
        %v5049 = vpop.permute.xlu0 %5048
        %5050 = vrot.lane.b32.xlu0 %v5002, 126
        %v5051 = vpop.permute.xlu0 %5050
        %5052 = vrot.lane.b32.xlu0 %v5004, 126
        %v5053 = vpop.permute.xlu0 %5052
        %5054 = vrot.lane.b32.xlu0 %v5007, 126
        %v5055 = vpop.permute.xlu0 %5054
        %5056 = vrot.lane.b32.xlu0 %v5009, 126
        %v5057 = vpop.permute.xlu0 %5056
        %v5066 = vcombine.low %v4842, %v4848
        %v5067 = vcombine.high %v4842, %v4848
        %v5069 = vunpack.c.l.s4 1983009808
        %v5070 = vunpack.c.0.s8 %v5069
        %v5071 = vlaneseq
        %v5072 = vshrl.u32 %v5071, 7
        %v5073 = vsub.s32 %v5070, %v5072
        %v5074 = vrot.slane %v5066, %v5073
        %v5076 = vunpack.c.l.s4 1983009808
        %v5077 = vunpack.c.0.s8 %v5076
        %v5078 = vlaneseq
        %v5079 = vshrl.u32 %v5078, 7
        %v5080 = vsub.s32 %v5077, %v5079
        %v5081 = vrot.slane %v5067, %v5080
        %v5082 = vcombine.low %v4845, %v4851
        %v5083 = vcombine.high %v4845, %v4851
        %v5085 = vunpack.c.l.s4 1983009808
        %v5086 = vunpack.c.0.s8 %v5085
        %v5087 = vlaneseq
        %v5088 = vshrl.u32 %v5087, 7
        %v5089 = vsub.s32 %v5086, %v5088
        %v5090 = vrot.slane %v5082, %v5089
        %v5092 = vunpack.c.l.s4 1983009808
        %v5093 = vunpack.c.0.s8 %v5092
        %v5094 = vlaneseq
        %v5095 = vshrl.u32 %v5094, 7
        %v5096 = vsub.s32 %v5093, %v5095
        %v5097 = vrot.slane %v5083, %v5096
        %v5098 = vcombine.low %v4863, %v4871
        %v5099 = vcombine.high %v4863, %v4871
        %v5101 = vunpack.c.l.s4 1983009808
        %v5102 = vunpack.c.0.s8 %v5101
        %v5103 = vlaneseq
        %v5104 = vshrl.u32 %v5103, 7
        %v5105 = vsub.s32 %v5102, %v5104
        %v5106 = vrot.slane %v5098, %v5105
        %v5108 = vunpack.c.l.s4 1983009808
        %v5109 = vunpack.c.0.s8 %v5108
        %v5110 = vlaneseq
        %v5111 = vshrl.u32 %v5110, 7
        %v5112 = vsub.s32 %v5109, %v5111
        %v5113 = vrot.slane %v5099, %v5112
        %v5114 = vcombine.low %v4867, %v4875
        %v5115 = vcombine.high %v4867, %v4875
        %v5117 = vunpack.c.l.s4 1983009808
        %v5118 = vunpack.c.0.s8 %v5117
        %v5119 = vlaneseq
        %v5120 = vshrl.u32 %v5119, 7
        %v5121 = vsub.s32 %v5118, %v5120
        %v5122 = vrot.slane %v5114, %v5121
        %v5124 = vunpack.c.l.s4 1983009808
        %v5125 = vunpack.c.0.s8 %v5124
        %v5126 = vlaneseq
        %v5127 = vshrl.u32 %v5126, 7
        %v5128 = vsub.s32 %v5125, %v5127
        %v5129 = vrot.slane %v5115, %v5128
        %v5130 = vcombine.low %v5074, %v5090
        %v5131 = vcombine.high %v5074, %v5090
        %v5133 = vunpack.c.l.s4 1934713408
        %v5134 = vunpack.c.0.s8 %v5133
        %v5135 = vlaneseq
        %v5136 = vshrl.u32 %v5135, 7
        %v5137 = vsub.s32 %v5134, %v5136
        %v5138 = vrot.slane %v5130, %v5137
        %v5140 = vunpack.c.l.s4 1934713408
        %v5141 = vunpack.c.0.s8 %v5140
        %v5142 = vlaneseq
        %v5143 = vshrl.u32 %v5142, 7
        %v5144 = vsub.s32 %v5141, %v5143
        %v5145 = vrot.slane %v5131, %v5144
        %v5146 = vcombine.low %v5081, %v5097
        %v5147 = vcombine.high %v5081, %v5097
        %v5149 = vunpack.c.l.s4 1934713408
        %v5150 = vunpack.c.0.s8 %v5149
        %v5151 = vlaneseq
        %v5152 = vshrl.u32 %v5151, 7
        %v5153 = vsub.s32 %v5150, %v5152
        %v5154 = vrot.slane %v5146, %v5153
        %v5156 = vunpack.c.l.s4 1934713408
        %v5157 = vunpack.c.0.s8 %v5156
        %v5158 = vlaneseq
        %v5159 = vshrl.u32 %v5158, 7
        %v5160 = vsub.s32 %v5157, %v5159
        %v5161 = vrot.slane %v5147, %v5160
        %v5162 = vcombine.low %v5106, %v5122
        %v5163 = vcombine.high %v5106, %v5122
        %v5165 = vunpack.c.l.s4 1934713408
        %v5166 = vunpack.c.0.s8 %v5165
        %v5167 = vlaneseq
        %v5168 = vshrl.u32 %v5167, 7
        %v5169 = vsub.s32 %v5166, %v5168
        %v5170 = vrot.slane %v5162, %v5169
        %v5172 = vunpack.c.l.s4 1934713408
        %v5173 = vunpack.c.0.s8 %v5172
        %v5174 = vlaneseq
        %v5175 = vshrl.u32 %v5174, 7
        %v5176 = vsub.s32 %v5173, %v5175
        %v5177 = vrot.slane %v5163, %v5176
        %v5178 = vcombine.low %v5113, %v5129
        %v5179 = vcombine.high %v5113, %v5129
        %v5181 = vunpack.c.l.s4 1934713408
        %v5182 = vunpack.c.0.s8 %v5181
        %v5183 = vlaneseq
        %v5184 = vshrl.u32 %v5183, 7
        %v5185 = vsub.s32 %v5182, %v5184
        %v5186 = vrot.slane %v5178, %v5185
        %v5188 = vunpack.c.l.s4 1934713408
        %v5189 = vunpack.c.0.s8 %v5188
        %v5190 = vlaneseq
        %v5191 = vshrl.u32 %v5190, 7
        %v5192 = vsub.s32 %v5189, %v5191
        %v5193 = vrot.slane %v5179, %v5192
        %v5194 = vcombine.low %v5138, %v5170
        %v5195 = vcombine.high %v5138, %v5170
        %v5196 = vcombine.low %v5145, %v5177
        %v5197 = vcombine.high %v5145, %v5177
        %v5198 = vcombine.low %v5154, %v5186
        %v5199 = vcombine.high %v5154, %v5186
        %v5200 = vcombine.low %v5161, %v5193
        %v5201 = vcombine.high %v5161, %v5193
        %v5202 = vcombine.low %v4887, %v4895
        %v5203 = vcombine.high %v4887, %v4895
        %v5205 = vunpack.c.l.s4 1983009808
        %v5206 = vunpack.c.0.s8 %v5205
        %v5207 = vlaneseq
        %v5208 = vshrl.u32 %v5207, 7
        %v5209 = vsub.s32 %v5206, %v5208
        %v5210 = vrot.slane %v5202, %v5209
        %v5212 = vunpack.c.l.s4 1983009808
        %v5213 = vunpack.c.0.s8 %v5212
        %v5214 = vlaneseq
        %v5215 = vshrl.u32 %v5214, 7
        %v5216 = vsub.s32 %v5213, %v5215
        %v5217 = vrot.slane %v5203, %v5216
        %v5218 = vcombine.low %v4891, %v4899
        %v5219 = vcombine.high %v4891, %v4899
        %v5221 = vunpack.c.l.s4 1983009808
        %v5222 = vunpack.c.0.s8 %v5221
        %v5223 = vlaneseq
        %v5224 = vshrl.u32 %v5223, 7
        %v5225 = vsub.s32 %v5222, %v5224
        %v5226 = vrot.slane %v5218, %v5225
        %v5228 = vunpack.c.l.s4 1983009808
        %v5229 = vunpack.c.0.s8 %v5228
        %v5230 = vlaneseq
        %v5231 = vshrl.u32 %v5230, 7
        %v5232 = vsub.s32 %v5229, %v5231
        %v5233 = vrot.slane %v5219, %v5232
        %v5234 = vcombine.low %v4916, %v4926
        %v5235 = vcombine.high %v4916, %v4926
        %v5237 = vunpack.c.l.s4 1983009808
        %v5238 = vunpack.c.0.s8 %v5237
        %v5239 = vlaneseq
        %v5240 = vshrl.u32 %v5239, 7
        %v5241 = vsub.s32 %v5238, %v5240
        %v5242 = vrot.slane %v5234, %v5241
        %v5244 = vunpack.c.l.s4 1983009808
        %v5245 = vunpack.c.0.s8 %v5244
        %v5246 = vlaneseq
        %v5247 = vshrl.u32 %v5246, 7
        %v5248 = vsub.s32 %v5245, %v5247
        %v5249 = vrot.slane %v5235, %v5248
        %v5250 = vcombine.low %v4921, %v4931
        %v5251 = vcombine.high %v4921, %v4931
        %v5253 = vunpack.c.l.s4 1983009808
        %v5254 = vunpack.c.0.s8 %v5253
        %v5255 = vlaneseq
        %v5256 = vshrl.u32 %v5255, 7
        %v5257 = vsub.s32 %v5254, %v5256
        %v5258 = vrot.slane %v5250, %v5257
        %v5260 = vunpack.c.l.s4 1983009808
        %v5261 = vunpack.c.0.s8 %v5260
        %v5262 = vlaneseq
        %v5263 = vshrl.u32 %v5262, 7
        %v5264 = vsub.s32 %v5261, %v5263
        %v5265 = vrot.slane %v5251, %v5264
        %v5266 = vcombine.low %v5210, %v5226
        %v5267 = vcombine.high %v5210, %v5226
        %v5269 = vunpack.c.l.s4 1934713408
        %v5270 = vunpack.c.0.s8 %v5269
        %v5271 = vlaneseq
        %v5272 = vshrl.u32 %v5271, 7
        %v5273 = vsub.s32 %v5270, %v5272
        %v5274 = vrot.slane %v5266, %v5273
        %v5276 = vunpack.c.l.s4 1934713408
        %v5277 = vunpack.c.0.s8 %v5276
        %v5278 = vlaneseq
        %v5279 = vshrl.u32 %v5278, 7
        %v5280 = vsub.s32 %v5277, %v5279
        %v5281 = vrot.slane %v5267, %v5280
        %v5282 = vcombine.low %v5217, %v5233
        %v5283 = vcombine.high %v5217, %v5233
        %v5285 = vunpack.c.l.s4 1934713408
        %v5286 = vunpack.c.0.s8 %v5285
        %v5287 = vlaneseq
        %v5288 = vshrl.u32 %v5287, 7
        %v5289 = vsub.s32 %v5286, %v5288
        %v5290 = vrot.slane %v5282, %v5289
        %v5292 = vunpack.c.l.s4 1934713408
        %v5293 = vunpack.c.0.s8 %v5292
        %v5294 = vlaneseq
        %v5295 = vshrl.u32 %v5294, 7
        %v5296 = vsub.s32 %v5293, %v5295
        %v5297 = vrot.slane %v5283, %v5296
        %v5298 = vcombine.low %v5242, %v5258
        %v5299 = vcombine.high %v5242, %v5258
        %v5301 = vunpack.c.l.s4 1934713408
        %v5302 = vunpack.c.0.s8 %v5301
        %v5303 = vlaneseq
        %v5304 = vshrl.u32 %v5303, 7
        %v5305 = vsub.s32 %v5302, %v5304
        %v5306 = vrot.slane %v5298, %v5305
        %v5308 = vunpack.c.l.s4 1934713408
        %v5309 = vunpack.c.0.s8 %v5308
        %v5310 = vlaneseq
        %v5311 = vshrl.u32 %v5310, 7
        %v5312 = vsub.s32 %v5309, %v5311
        %v5313 = vrot.slane %v5299, %v5312
        %v5314 = vcombine.low %v5249, %v5265
        %v5315 = vcombine.high %v5249, %v5265
        %v5317 = vunpack.c.l.s4 1934713408
        %v5318 = vunpack.c.0.s8 %v5317
        %v5319 = vlaneseq
        %v5320 = vshrl.u32 %v5319, 7
        %v5321 = vsub.s32 %v5318, %v5320
        %v5322 = vrot.slane %v5314, %v5321
        %v5324 = vunpack.c.l.s4 1934713408
        %v5325 = vunpack.c.0.s8 %v5324
        %v5326 = vlaneseq
        %v5327 = vshrl.u32 %v5326, 7
        %v5328 = vsub.s32 %v5325, %v5327
        %v5329 = vrot.slane %v5315, %v5328
        %v5330 = vcombine.low %v5274, %v5306
        %v5331 = vcombine.high %v5274, %v5306
        %v5332 = vcombine.low %v5281, %v5313
        %v5333 = vcombine.high %v5281, %v5313
        %v5334 = vcombine.low %v5290, %v5322
        %v5335 = vcombine.high %v5290, %v5322
        %v5336 = vcombine.low %v5297, %v5329
        %v5337 = vcombine.high %v5297, %v5329
        %v5338 = vcombine.low %v4943, %v4951
        %v5339 = vcombine.high %v4943, %v4951
        %v5341 = vunpack.c.l.s4 1983009808
        %v5342 = vunpack.c.0.s8 %v5341
        %v5343 = vlaneseq
        %v5344 = vshrl.u32 %v5343, 7
        %v5345 = vsub.s32 %v5342, %v5344
        %v5346 = vrot.slane %v5338, %v5345
        %v5348 = vunpack.c.l.s4 1983009808
        %v5349 = vunpack.c.0.s8 %v5348
        %v5350 = vlaneseq
        %v5351 = vshrl.u32 %v5350, 7
        %v5352 = vsub.s32 %v5349, %v5351
        %v5353 = vrot.slane %v5339, %v5352
        %v5354 = vcombine.low %v4947, %v4955
        %v5355 = vcombine.high %v4947, %v4955
        %v5357 = vunpack.c.l.s4 1983009808
        %v5358 = vunpack.c.0.s8 %v5357
        %v5359 = vlaneseq
        %v5360 = vshrl.u32 %v5359, 7
        %v5361 = vsub.s32 %v5358, %v5360
        %v5362 = vrot.slane %v5354, %v5361
        %v5364 = vunpack.c.l.s4 1983009808
        %v5365 = vunpack.c.0.s8 %v5364
        %v5366 = vlaneseq
        %v5367 = vshrl.u32 %v5366, 7
        %v5368 = vsub.s32 %v5365, %v5367
        %v5369 = vrot.slane %v5355, %v5368
        %v5370 = vcombine.low %v4967, %v4975
        %v5371 = vcombine.high %v4967, %v4975
        %v5373 = vunpack.c.l.s4 1983009808
        %v5374 = vunpack.c.0.s8 %v5373
        %v5375 = vlaneseq
        %v5376 = vshrl.u32 %v5375, 7
        %v5377 = vsub.s32 %v5374, %v5376
        %v5378 = vrot.slane %v5370, %v5377
        %v5380 = vunpack.c.l.s4 1983009808
        %v5381 = vunpack.c.0.s8 %v5380
        %v5382 = vlaneseq
        %v5383 = vshrl.u32 %v5382, 7
        %v5384 = vsub.s32 %v5381, %v5383
        %v5385 = vrot.slane %v5371, %v5384
        %v5386 = vcombine.low %v4971, %v4979
        %v5387 = vcombine.high %v4971, %v4979
        %v5389 = vunpack.c.l.s4 1983009808
        %v5390 = vunpack.c.0.s8 %v5389
        %v5391 = vlaneseq
        %v5392 = vshrl.u32 %v5391, 7
        %v5393 = vsub.s32 %v5390, %v5392
        %v5394 = vrot.slane %v5386, %v5393
        %v5396 = vunpack.c.l.s4 1983009808
        %v5397 = vunpack.c.0.s8 %v5396
        %v5398 = vlaneseq
        %v5399 = vshrl.u32 %v5398, 7
        %v5400 = vsub.s32 %v5397, %v5399
        %v5401 = vrot.slane %v5387, %v5400
        %v5402 = vcombine.low %v5346, %v5362
        %v5403 = vcombine.high %v5346, %v5362
        %v5405 = vunpack.c.l.s4 1934713408
        %v5406 = vunpack.c.0.s8 %v5405
        %v5407 = vlaneseq
        %v5408 = vshrl.u32 %v5407, 7
        %v5409 = vsub.s32 %v5406, %v5408
        %v5410 = vrot.slane %v5402, %v5409
        %v5412 = vunpack.c.l.s4 1934713408
        %v5413 = vunpack.c.0.s8 %v5412
        %v5414 = vlaneseq
        %v5415 = vshrl.u32 %v5414, 7
        %v5416 = vsub.s32 %v5413, %v5415
        %v5417 = vrot.slane %v5403, %v5416
        %v5418 = vcombine.low %v5353, %v5369
        %v5419 = vcombine.high %v5353, %v5369
        %v5421 = vunpack.c.l.s4 1934713408
        %v5422 = vunpack.c.0.s8 %v5421
        %v5423 = vlaneseq
        %v5424 = vshrl.u32 %v5423, 7
        %v5425 = vsub.s32 %v5422, %v5424
        %v5426 = vrot.slane %v5418, %v5425
        %v5428 = vunpack.c.l.s4 1934713408
        %v5429 = vunpack.c.0.s8 %v5428
        %v5430 = vlaneseq
        %v5431 = vshrl.u32 %v5430, 7
        %v5432 = vsub.s32 %v5429, %v5431
        %v5433 = vrot.slane %v5419, %v5432
        %v5434 = vcombine.low %v5378, %v5394
        %v5435 = vcombine.high %v5378, %v5394
        %v5437 = vunpack.c.l.s4 1934713408
        %v5438 = vunpack.c.0.s8 %v5437
        %v5439 = vlaneseq
        %v5440 = vshrl.u32 %v5439, 7
        %v5441 = vsub.s32 %v5438, %v5440
        %v5442 = vrot.slane %v5434, %v5441
        %v5444 = vunpack.c.l.s4 1934713408
        %v5445 = vunpack.c.0.s8 %v5444
        %v5446 = vlaneseq
        %v5447 = vshrl.u32 %v5446, 7
        %v5448 = vsub.s32 %v5445, %v5447
        %v5449 = vrot.slane %v5435, %v5448
        %v5450 = vcombine.low %v5385, %v5401
        %v5451 = vcombine.high %v5385, %v5401
        %v5453 = vunpack.c.l.s4 1934713408
        %v5454 = vunpack.c.0.s8 %v5453
        %v5455 = vlaneseq
        %v5456 = vshrl.u32 %v5455, 7
        %v5457 = vsub.s32 %v5454, %v5456
        %v5458 = vrot.slane %v5450, %v5457
        %v5460 = vunpack.c.l.s4 1934713408
        %v5461 = vunpack.c.0.s8 %v5460
        %v5462 = vlaneseq
        %v5463 = vshrl.u32 %v5462, 7
        %v5464 = vsub.s32 %v5461, %v5463
        %v5465 = vrot.slane %v5451, %v5464
        %v5466 = vcombine.low %v5410, %v5442
        %v5467 = vcombine.high %v5410, %v5442
        %v5468 = vcombine.low %v5417, %v5449
        %v5469 = vcombine.high %v5417, %v5449
        %v5470 = vcombine.low %v5426, %v5458
        %v5471 = vcombine.high %v5426, %v5458
        %v5472 = vcombine.low %v5433, %v5465
        %v5473 = vcombine.high %v5433, %v5465
        %v5474 = vcombine.low %v4992, %v5002
        %v5475 = vcombine.high %v4992, %v5002
        %v5477 = vunpack.c.l.s4 1983009808
        %v5478 = vunpack.c.0.s8 %v5477
        %v5479 = vlaneseq
        %v5480 = vshrl.u32 %v5479, 7
        %v5481 = vsub.s32 %v5478, %v5480
        %v5482 = vrot.slane %v5474, %v5481
        %v5484 = vunpack.c.l.s4 1983009808
        %v5485 = vunpack.c.0.s8 %v5484
        %v5486 = vlaneseq
        %v5487 = vshrl.u32 %v5486, 7
        %v5488 = vsub.s32 %v5485, %v5487
        %v5489 = vrot.slane %v5475, %v5488
        %v5490 = vcombine.low %v4997, %v5007
        %v5491 = vcombine.high %v4997, %v5007
        %v5493 = vunpack.c.l.s4 1983009808
        %v5494 = vunpack.c.0.s8 %v5493
        %v5495 = vlaneseq
        %v5496 = vshrl.u32 %v5495, 7
        %v5497 = vsub.s32 %v5494, %v5496
        %v5498 = vrot.slane %v5490, %v5497
        %v5500 = vunpack.c.l.s4 1983009808
        %v5501 = vunpack.c.0.s8 %v5500
        %v5502 = vlaneseq
        %v5503 = vshrl.u32 %v5502, 7
        %v5504 = vsub.s32 %v5501, %v5503
        %v5505 = vrot.slane %v5491, %v5504
        %v5506 = vcombine.low %v5019, %v5027
        %v5507 = vcombine.high %v5019, %v5027
        %v5509 = vunpack.c.l.s4 1983009808
        %v5510 = vunpack.c.0.s8 %v5509
        %v5511 = vlaneseq
        %v5512 = vshrl.u32 %v5511, 7
        %v5513 = vsub.s32 %v5510, %v5512
        %v5514 = vrot.slane %v5506, %v5513
        %v5516 = vunpack.c.l.s4 1983009808
        %v5517 = vunpack.c.0.s8 %v5516
        %v5518 = vlaneseq
        %v5519 = vshrl.u32 %v5518, 7
        %v5520 = vsub.s32 %v5517, %v5519
        %v5521 = vrot.slane %v5507, %v5520
        %v5522 = vcombine.low %v5023, %v5031
        %v5523 = vcombine.high %v5023, %v5031
        %v5525 = vunpack.c.l.s4 1983009808
        %v5526 = vunpack.c.0.s8 %v5525
        %v5527 = vlaneseq
        %v5528 = vshrl.u32 %v5527, 7
        %v5529 = vsub.s32 %v5526, %v5528
        %v5530 = vrot.slane %v5522, %v5529
        %v5532 = vunpack.c.l.s4 1983009808
        %v5533 = vunpack.c.0.s8 %v5532
        %v5534 = vlaneseq
        %v5535 = vshrl.u32 %v5534, 7
        %v5536 = vsub.s32 %v5533, %v5535
        %v5537 = vrot.slane %v5523, %v5536
        %v5538 = vcombine.low %v5482, %v5498
        %v5539 = vcombine.high %v5482, %v5498
        %v5541 = vunpack.c.l.s4 1934713408
        %v5542 = vunpack.c.0.s8 %v5541
        %v5543 = vlaneseq
        %v5544 = vshrl.u32 %v5543, 7
        %v5545 = vsub.s32 %v5542, %v5544
        %v5546 = vrot.slane %v5538, %v5545
        %v5548 = vunpack.c.l.s4 1934713408
        %v5549 = vunpack.c.0.s8 %v5548
        %v5550 = vlaneseq
        %v5551 = vshrl.u32 %v5550, 7
        %v5552 = vsub.s32 %v5549, %v5551
        %v5553 = vrot.slane %v5539, %v5552
        %v5554 = vcombine.low %v5489, %v5505
        %v5555 = vcombine.high %v5489, %v5505
        %v5557 = vunpack.c.l.s4 1934713408
        %v5558 = vunpack.c.0.s8 %v5557
        %v5559 = vlaneseq
        %v5560 = vshrl.u32 %v5559, 7
        %v5561 = vsub.s32 %v5558, %v5560
        %v5562 = vrot.slane %v5554, %v5561
        %v5564 = vunpack.c.l.s4 1934713408
        %v5565 = vunpack.c.0.s8 %v5564
        %v5566 = vlaneseq
        %v5567 = vshrl.u32 %v5566, 7
        %v5568 = vsub.s32 %v5565, %v5567
        %v5569 = vrot.slane %v5555, %v5568
        %v5570 = vcombine.low %v5514, %v5530
        %v5571 = vcombine.high %v5514, %v5530
        %v5573 = vunpack.c.l.s4 1934713408
        %v5574 = vunpack.c.0.s8 %v5573
        %v5575 = vlaneseq
        %v5576 = vshrl.u32 %v5575, 7
        %v5577 = vsub.s32 %v5574, %v5576
        %v5578 = vrot.slane %v5570, %v5577
        %v5580 = vunpack.c.l.s4 1934713408
        %v5581 = vunpack.c.0.s8 %v5580
        %v5582 = vlaneseq
        %v5583 = vshrl.u32 %v5582, 7
        %v5584 = vsub.s32 %v5581, %v5583
        %v5585 = vrot.slane %v5571, %v5584
        %v5586 = vcombine.low %v5521, %v5537
        %v5587 = vcombine.high %v5521, %v5537
        %v5589 = vunpack.c.l.s4 1934713408
        %v5590 = vunpack.c.0.s8 %v5589
        %v5591 = vlaneseq
        %v5592 = vshrl.u32 %v5591, 7
        %v5593 = vsub.s32 %v5590, %v5592
        %v5594 = vrot.slane %v5586, %v5593
        %v5596 = vunpack.c.l.s4 1934713408
        %v5597 = vunpack.c.0.s8 %v5596
        %v5598 = vlaneseq
        %v5599 = vshrl.u32 %v5598, 7
        %v5600 = vsub.s32 %v5597, %v5599
        %v5601 = vrot.slane %v5587, %v5600
        %v5602 = vcombine.low %v5546, %v5578
        %v5603 = vcombine.high %v5546, %v5578
        %v5604 = vcombine.low %v5553, %v5585
        %v5605 = vcombine.high %v5553, %v5585
        %v5606 = vcombine.low %v5562, %v5594
        %v5607 = vcombine.high %v5562, %v5594
        %v5608 = vcombine.low %v5569, %v5601
        %v5609 = vcombine.high %v5569, %v5601
        %v5610 = vcombine.low %v5043, %v5051
        %v5611 = vcombine.high %v5043, %v5051
        %v5613 = vunpack.c.l.s4 1983009808
        %v5614 = vunpack.c.0.s8 %v5613
        %v5615 = vlaneseq
        %v5616 = vshrl.u32 %v5615, 7
        %v5617 = vsub.s32 %v5614, %v5616
        %v5618 = vrot.slane %v5610, %v5617
        %v5620 = vunpack.c.l.s4 1983009808
        %v5621 = vunpack.c.0.s8 %v5620
        %v5622 = vlaneseq
        %v5623 = vshrl.u32 %v5622, 7
        %v5624 = vsub.s32 %v5621, %v5623
        %v5625 = vrot.slane %v5611, %v5624
        %v5626 = vcombine.low %v5047, %v5055
        %v5627 = vcombine.high %v5047, %v5055
        %v5629 = vunpack.c.l.s4 1983009808
        %v5630 = vunpack.c.0.s8 %v5629
        %v5631 = vlaneseq
        %v5632 = vshrl.u32 %v5631, 7
        %v5633 = vsub.s32 %v5630, %v5632
        %v5634 = vrot.slane %v5626, %v5633
        %v5636 = vunpack.c.l.s4 1983009808
        %v5637 = vunpack.c.0.s8 %v5636
        %v5638 = vlaneseq
        %v5639 = vshrl.u32 %v5638, 7
        %v5640 = vsub.s32 %v5637, %v5639
        %v5641 = vrot.slane %v5627, %v5640
        %v5642 = vcombine.low %v5618, %v5634
        %v5643 = vcombine.high %v5618, %v5634
        %v5645 = vunpack.c.l.s4 1934713408
        %v5646 = vunpack.c.0.s8 %v5645
        %v5647 = vlaneseq
        %v5648 = vshrl.u32 %v5647, 7
        %v5649 = vsub.s32 %v5646, %v5648
        %v5650 = vrot.slane %v5642, %v5649
        %v5652 = vunpack.c.l.s4 1934713408
        %v5653 = vunpack.c.0.s8 %v5652
        %v5654 = vlaneseq
        %v5655 = vshrl.u32 %v5654, 7
        %v5656 = vsub.s32 %v5653, %v5655
        %v5657 = vrot.slane %v5643, %v5656
        %v5658 = vcombine.low %v5625, %v5641
        %v5659 = vcombine.high %v5625, %v5641
        %v5661 = vunpack.c.l.s4 1934713408
        %v5662 = vunpack.c.0.s8 %v5661
        %v5663 = vlaneseq
        %v5664 = vshrl.u32 %v5663, 7
        %v5665 = vsub.s32 %v5662, %v5664
        %v5666 = vrot.slane %v5658, %v5665
        %v5668 = vunpack.c.l.s4 1934713408
        %v5669 = vunpack.c.0.s8 %v5668
        %v5670 = vlaneseq
        %v5671 = vshrl.u32 %v5670, 7
        %v5672 = vsub.s32 %v5669, %v5671
        %v5673 = vrot.slane %v5659, %v5672
        %v5674 = vcombine.high %v5650, 0.0
        %v5675 = vcombine.high %v5657, 0.0
        %v5676 = vcombine.high %v5666, 0.0
        %v5677 = vcombine.high %v5673, 0.0
        %v5678 = vcombine.low %v4843, %v4849
        %v5679 = vcombine.high %v4843, %v4849
        %v5681 = vunpack.c.l.s4 1983009808
        %v5682 = vunpack.c.0.s8 %v5681
        %v5683 = vlaneseq
        %v5684 = vshrl.u32 %v5683, 7
        %v5685 = vsub.s32 %v5682, %v5684
        %v5686 = vrot.slane %v5678, %v5685
        %v5688 = vunpack.c.l.s4 1983009808
        %v5689 = vunpack.c.0.s8 %v5688
        %v5690 = vlaneseq
        %v5691 = vshrl.u32 %v5690, 7
        %v5692 = vsub.s32 %v5689, %v5691
        %v5693 = vrot.slane %v5679, %v5692
        %v5694 = vcombine.low %v4846, %v4852
        %v5695 = vcombine.high %v4846, %v4852
        %v5697 = vunpack.c.l.s4 1983009808
        %v5698 = vunpack.c.0.s8 %v5697
        %v5699 = vlaneseq
        %v5700 = vshrl.u32 %v5699, 7
        %v5701 = vsub.s32 %v5698, %v5700
        %v5702 = vrot.slane %v5694, %v5701
        %v5704 = vunpack.c.l.s4 1983009808
        %v5705 = vunpack.c.0.s8 %v5704
        %v5706 = vlaneseq
        %v5707 = vshrl.u32 %v5706, 7
        %v5708 = vsub.s32 %v5705, %v5707
        %v5709 = vrot.slane %v5695, %v5708
        %v5710 = vcombine.low %v4865, %v4873
        %v5711 = vcombine.high %v4865, %v4873
        %v5713 = vunpack.c.l.s4 1983009808
        %v5714 = vunpack.c.0.s8 %v5713
        %v5715 = vlaneseq
        %v5716 = vshrl.u32 %v5715, 7
        %v5717 = vsub.s32 %v5714, %v5716
        %v5718 = vrot.slane %v5710, %v5717
        %v5720 = vunpack.c.l.s4 1983009808
        %v5721 = vunpack.c.0.s8 %v5720
        %v5722 = vlaneseq
        %v5723 = vshrl.u32 %v5722, 7
        %v5724 = vsub.s32 %v5721, %v5723
        %v5725 = vrot.slane %v5711, %v5724
        %v5726 = vcombine.low %v4869, %v4877
        %v5727 = vcombine.high %v4869, %v4877
        %v5729 = vunpack.c.l.s4 1983009808
        %v5730 = vunpack.c.0.s8 %v5729
        %v5731 = vlaneseq
        %v5732 = vshrl.u32 %v5731, 7
        %v5733 = vsub.s32 %v5730, %v5732
        %v5734 = vrot.slane %v5726, %v5733
        %v5736 = vunpack.c.l.s4 1983009808
        %v5737 = vunpack.c.0.s8 %v5736
        %v5738 = vlaneseq
        %v5739 = vshrl.u32 %v5738, 7
        %v5740 = vsub.s32 %v5737, %v5739
        %v5741 = vrot.slane %v5727, %v5740
        %v5742 = vcombine.low %v5686, %v5702
        %v5743 = vcombine.high %v5686, %v5702
        %v5745 = vunpack.c.l.s4 1934713408
        %v5746 = vunpack.c.0.s8 %v5745
        %v5747 = vlaneseq
        %v5748 = vshrl.u32 %v5747, 7
        %v5749 = vsub.s32 %v5746, %v5748
        %v5750 = vrot.slane %v5742, %v5749
        %v5752 = vunpack.c.l.s4 1934713408
        %v5753 = vunpack.c.0.s8 %v5752
        %v5754 = vlaneseq
        %v5755 = vshrl.u32 %v5754, 7
        %v5756 = vsub.s32 %v5753, %v5755
        %v5757 = vrot.slane %v5743, %v5756
        %v5758 = vcombine.low %v5693, %v5709
        %v5759 = vcombine.high %v5693, %v5709
        %v5761 = vunpack.c.l.s4 1934713408
        %v5762 = vunpack.c.0.s8 %v5761
        %v5763 = vlaneseq
        %v5764 = vshrl.u32 %v5763, 7
        %v5765 = vsub.s32 %v5762, %v5764
        %v5766 = vrot.slane %v5758, %v5765
        %v5768 = vunpack.c.l.s4 1934713408
        %v5769 = vunpack.c.0.s8 %v5768
        %v5770 = vlaneseq
        %v5771 = vshrl.u32 %v5770, 7
        %v5772 = vsub.s32 %v5769, %v5771
        %v5773 = vrot.slane %v5759, %v5772
        %v5774 = vcombine.low %v5718, %v5734
        %v5775 = vcombine.high %v5718, %v5734
        %v5777 = vunpack.c.l.s4 1934713408
        %v5778 = vunpack.c.0.s8 %v5777
        %v5779 = vlaneseq
        %v5780 = vshrl.u32 %v5779, 7
        %v5781 = vsub.s32 %v5778, %v5780
        %v5782 = vrot.slane %v5774, %v5781
        %v5784 = vunpack.c.l.s4 1934713408
        %v5785 = vunpack.c.0.s8 %v5784
        %v5786 = vlaneseq
        %v5787 = vshrl.u32 %v5786, 7
        %v5788 = vsub.s32 %v5785, %v5787
        %v5789 = vrot.slane %v5775, %v5788
        %v5790 = vcombine.low %v5725, %v5741
        %v5791 = vcombine.high %v5725, %v5741
        %v5793 = vunpack.c.l.s4 1934713408
        %v5794 = vunpack.c.0.s8 %v5793
        %v5795 = vlaneseq
        %v5796 = vshrl.u32 %v5795, 7
        %v5797 = vsub.s32 %v5794, %v5796
        %v5798 = vrot.slane %v5790, %v5797
        %v5800 = vunpack.c.l.s4 1934713408
        %v5801 = vunpack.c.0.s8 %v5800
        %v5802 = vlaneseq
        %v5803 = vshrl.u32 %v5802, 7
        %v5804 = vsub.s32 %v5801, %v5803
        %v5805 = vrot.slane %v5791, %v5804
        %v5806 = vcombine.low %v5750, %v5782
        %v5807 = vcombine.high %v5750, %v5782
        %v5808 = vcombine.low %v5757, %v5789
        %v5809 = vcombine.high %v5757, %v5789
        %v5810 = vcombine.low %v5766, %v5798
        %v5811 = vcombine.high %v5766, %v5798
        %v5812 = vcombine.low %v5773, %v5805
        %v5813 = vcombine.high %v5773, %v5805
        %v5814 = vcombine.low %v4889, %v4897
        %v5815 = vcombine.high %v4889, %v4897
        %v5817 = vunpack.c.l.s4 1983009808
        %v5818 = vunpack.c.0.s8 %v5817
        %v5819 = vlaneseq
        %v5820 = vshrl.u32 %v5819, 7
        %v5821 = vsub.s32 %v5818, %v5820
        %v5822 = vrot.slane %v5814, %v5821
        %v5824 = vunpack.c.l.s4 1983009808
        %v5825 = vunpack.c.0.s8 %v5824
        %v5826 = vlaneseq
        %v5827 = vshrl.u32 %v5826, 7
        %v5828 = vsub.s32 %v5825, %v5827
        %v5829 = vrot.slane %v5815, %v5828
        %v5830 = vcombine.low %v4893, %v4901
        %v5831 = vcombine.high %v4893, %v4901
        %v5833 = vunpack.c.l.s4 1983009808
        %v5834 = vunpack.c.0.s8 %v5833
        %v5835 = vlaneseq
        %v5836 = vshrl.u32 %v5835, 7
        %v5837 = vsub.s32 %v5834, %v5836
        %v5838 = vrot.slane %v5830, %v5837
        %v5840 = vunpack.c.l.s4 1983009808
        %v5841 = vunpack.c.0.s8 %v5840
        %v5842 = vlaneseq
        %v5843 = vshrl.u32 %v5842, 7
        %v5844 = vsub.s32 %v5841, %v5843
        %v5845 = vrot.slane %v5831, %v5844
        %v5846 = vcombine.low %v4918, %v4928
        %v5847 = vcombine.high %v4918, %v4928
        %v5849 = vunpack.c.l.s4 1983009808
        %v5850 = vunpack.c.0.s8 %v5849
        %v5851 = vlaneseq
        %v5852 = vshrl.u32 %v5851, 7
        %v5853 = vsub.s32 %v5850, %v5852
        %v5854 = vrot.slane %v5846, %v5853
        %v5856 = vunpack.c.l.s4 1983009808
        %v5857 = vunpack.c.0.s8 %v5856
        %v5858 = vlaneseq
        %v5859 = vshrl.u32 %v5858, 7
        %v5860 = vsub.s32 %v5857, %v5859
        %v5861 = vrot.slane %v5847, %v5860
        %v5862 = vcombine.low %v4923, %v4933
        %v5863 = vcombine.high %v4923, %v4933
        %v5865 = vunpack.c.l.s4 1983009808
        %v5866 = vunpack.c.0.s8 %v5865
        %v5867 = vlaneseq
        %v5868 = vshrl.u32 %v5867, 7
        %v5869 = vsub.s32 %v5866, %v5868
        %v5870 = vrot.slane %v5862, %v5869
        %v5872 = vunpack.c.l.s4 1983009808
        %v5873 = vunpack.c.0.s8 %v5872
        %v5874 = vlaneseq
        %v5875 = vshrl.u32 %v5874, 7
        %v5876 = vsub.s32 %v5873, %v5875
        %v5877 = vrot.slane %v5863, %v5876
        %v5878 = vcombine.low %v5822, %v5838
        %v5879 = vcombine.high %v5822, %v5838
        %v5881 = vunpack.c.l.s4 1934713408
        %v5882 = vunpack.c.0.s8 %v5881
        %v5883 = vlaneseq
        %v5884 = vshrl.u32 %v5883, 7
        %v5885 = vsub.s32 %v5882, %v5884
        %v5886 = vrot.slane %v5878, %v5885
        %v5888 = vunpack.c.l.s4 1934713408
        %v5889 = vunpack.c.0.s8 %v5888
        %v5890 = vlaneseq
        %v5891 = vshrl.u32 %v5890, 7
        %v5892 = vsub.s32 %v5889, %v5891
        %v5893 = vrot.slane %v5879, %v5892
        %v5894 = vcombine.low %v5829, %v5845
        %v5895 = vcombine.high %v5829, %v5845
        %v5897 = vunpack.c.l.s4 1934713408
        %v5898 = vunpack.c.0.s8 %v5897
        %v5899 = vlaneseq
        %v5900 = vshrl.u32 %v5899, 7
        %v5901 = vsub.s32 %v5898, %v5900
        %v5902 = vrot.slane %v5894, %v5901
        %v5904 = vunpack.c.l.s4 1934713408
        %v5905 = vunpack.c.0.s8 %v5904
        %v5906 = vlaneseq
        %v5907 = vshrl.u32 %v5906, 7
        %v5908 = vsub.s32 %v5905, %v5907
        %v5909 = vrot.slane %v5895, %v5908
        %v5910 = vcombine.low %v5854, %v5870
        %v5911 = vcombine.high %v5854, %v5870
        %v5913 = vunpack.c.l.s4 1934713408
        %v5914 = vunpack.c.0.s8 %v5913
        %v5915 = vlaneseq
        %v5916 = vshrl.u32 %v5915, 7
        %v5917 = vsub.s32 %v5914, %v5916
        %v5918 = vrot.slane %v5910, %v5917
        %v5920 = vunpack.c.l.s4 1934713408
        %v5921 = vunpack.c.0.s8 %v5920
        %v5922 = vlaneseq
        %v5923 = vshrl.u32 %v5922, 7
        %v5924 = vsub.s32 %v5921, %v5923
        %v5925 = vrot.slane %v5911, %v5924
        %v5926 = vcombine.low %v5861, %v5877
        %v5927 = vcombine.high %v5861, %v5877
        %v5929 = vunpack.c.l.s4 1934713408
        %v5930 = vunpack.c.0.s8 %v5929
        %v5931 = vlaneseq
        %v5932 = vshrl.u32 %v5931, 7
        %v5933 = vsub.s32 %v5930, %v5932
        %v5934 = vrot.slane %v5926, %v5933
        %v5936 = vunpack.c.l.s4 1934713408
        %v5937 = vunpack.c.0.s8 %v5936
        %v5938 = vlaneseq
        %v5939 = vshrl.u32 %v5938, 7
        %v5940 = vsub.s32 %v5937, %v5939
        %v5941 = vrot.slane %v5927, %v5940
        %v5942 = vcombine.low %v5886, %v5918
        %v5943 = vcombine.high %v5886, %v5918
        %v5944 = vcombine.low %v5893, %v5925
        %v5945 = vcombine.high %v5893, %v5925
        %v5946 = vcombine.low %v5902, %v5934
        %v5947 = vcombine.high %v5902, %v5934
        %v5948 = vcombine.low %v5909, %v5941
        %v5949 = vcombine.high %v5909, %v5941
        %v5950 = vcombine.low %v4945, %v4953
        %v5951 = vcombine.high %v4945, %v4953
        %v5953 = vunpack.c.l.s4 1983009808
        %v5954 = vunpack.c.0.s8 %v5953
        %v5955 = vlaneseq
        %v5956 = vshrl.u32 %v5955, 7
        %v5957 = vsub.s32 %v5954, %v5956
        %v5958 = vrot.slane %v5950, %v5957
        %v5960 = vunpack.c.l.s4 1983009808
        %v5961 = vunpack.c.0.s8 %v5960
        %v5962 = vlaneseq
        %v5963 = vshrl.u32 %v5962, 7
        %v5964 = vsub.s32 %v5961, %v5963
        %v5965 = vrot.slane %v5951, %v5964
        %v5966 = vcombine.low %v4949, %v4957
        %v5967 = vcombine.high %v4949, %v4957
        %v5969 = vunpack.c.l.s4 1983009808
        %v5970 = vunpack.c.0.s8 %v5969
        %v5971 = vlaneseq
        %v5972 = vshrl.u32 %v5971, 7
        %v5973 = vsub.s32 %v5970, %v5972
        %v5974 = vrot.slane %v5966, %v5973
        %v5976 = vunpack.c.l.s4 1983009808
        %v5977 = vunpack.c.0.s8 %v5976
        %v5978 = vlaneseq
        %v5979 = vshrl.u32 %v5978, 7
        %v5980 = vsub.s32 %v5977, %v5979
        %v5981 = vrot.slane %v5967, %v5980
        %v5982 = vcombine.low %v4969, %v4977
        %v5983 = vcombine.high %v4969, %v4977
        %v5985 = vunpack.c.l.s4 1983009808
        %v5986 = vunpack.c.0.s8 %v5985
        %v5987 = vlaneseq
        %v5988 = vshrl.u32 %v5987, 7
        %v5989 = vsub.s32 %v5986, %v5988
        %v5990 = vrot.slane %v5982, %v5989
        %v5992 = vunpack.c.l.s4 1983009808
        %v5993 = vunpack.c.0.s8 %v5992
        %v5994 = vlaneseq
        %v5995 = vshrl.u32 %v5994, 7
        %v5996 = vsub.s32 %v5993, %v5995
        %v5997 = vrot.slane %v5983, %v5996
        %v5998 = vcombine.low %v4973, %v4981
        %v5999 = vcombine.high %v4973, %v4981
        %v6001 = vunpack.c.l.s4 1983009808
        %v6002 = vunpack.c.0.s8 %v6001
        %v6003 = vlaneseq
        %v6004 = vshrl.u32 %v6003, 7
        %v6005 = vsub.s32 %v6002, %v6004
        %v6006 = vrot.slane %v5998, %v6005
        %v6008 = vunpack.c.l.s4 1983009808
        %v6009 = vunpack.c.0.s8 %v6008
        %v6010 = vlaneseq
        %v6011 = vshrl.u32 %v6010, 7
        %v6012 = vsub.s32 %v6009, %v6011
        %v6013 = vrot.slane %v5999, %v6012
        %v6014 = vcombine.low %v5958, %v5974
        %v6015 = vcombine.high %v5958, %v5974
        %v6017 = vunpack.c.l.s4 1934713408
        %v6018 = vunpack.c.0.s8 %v6017
        %v6019 = vlaneseq
        %v6020 = vshrl.u32 %v6019, 7
        %v6021 = vsub.s32 %v6018, %v6020
        %v6022 = vrot.slane %v6014, %v6021
        %v6024 = vunpack.c.l.s4 1934713408
        %v6025 = vunpack.c.0.s8 %v6024
        %v6026 = vlaneseq
        %v6027 = vshrl.u32 %v6026, 7
        %v6028 = vsub.s32 %v6025, %v6027
        %v6029 = vrot.slane %v6015, %v6028
        %v6030 = vcombine.low %v5965, %v5981
        %v6031 = vcombine.high %v5965, %v5981
        %v6033 = vunpack.c.l.s4 1934713408
        %v6034 = vunpack.c.0.s8 %v6033
        %v6035 = vlaneseq
        %v6036 = vshrl.u32 %v6035, 7
        %v6037 = vsub.s32 %v6034, %v6036
        %v6038 = vrot.slane %v6030, %v6037
        %v6040 = vunpack.c.l.s4 1934713408
        %v6041 = vunpack.c.0.s8 %v6040
        %v6042 = vlaneseq
        %v6043 = vshrl.u32 %v6042, 7
        %v6044 = vsub.s32 %v6041, %v6043
        %v6045 = vrot.slane %v6031, %v6044
        %v6046 = vcombine.low %v5990, %v6006
        %v6047 = vcombine.high %v5990, %v6006
        %v6049 = vunpack.c.l.s4 1934713408
        %v6050 = vunpack.c.0.s8 %v6049
        %v6051 = vlaneseq
        %v6052 = vshrl.u32 %v6051, 7
        %v6053 = vsub.s32 %v6050, %v6052
        %v6054 = vrot.slane %v6046, %v6053
        %v6056 = vunpack.c.l.s4 1934713408
        %v6057 = vunpack.c.0.s8 %v6056
        %v6058 = vlaneseq
        %v6059 = vshrl.u32 %v6058, 7
        %v6060 = vsub.s32 %v6057, %v6059
        %v6061 = vrot.slane %v6047, %v6060
        %v6062 = vcombine.low %v5997, %v6013
        %v6063 = vcombine.high %v5997, %v6013
        %v6065 = vunpack.c.l.s4 1934713408
        %v6066 = vunpack.c.0.s8 %v6065
        %v6067 = vlaneseq
        %v6068 = vshrl.u32 %v6067, 7
        %v6069 = vsub.s32 %v6066, %v6068
        %v6070 = vrot.slane %v6062, %v6069
        %v6072 = vunpack.c.l.s4 1934713408
        %v6073 = vunpack.c.0.s8 %v6072
        %v6074 = vlaneseq
        %v6075 = vshrl.u32 %v6074, 7
        %v6076 = vsub.s32 %v6073, %v6075
        %v6077 = vrot.slane %v6063, %v6076
        %v6078 = vcombine.low %v6022, %v6054
        %v6079 = vcombine.high %v6022, %v6054
        %v6080 = vcombine.low %v6029, %v6061
        %v6081 = vcombine.high %v6029, %v6061
        %v6082 = vcombine.low %v6038, %v6070
        %v6083 = vcombine.high %v6038, %v6070
        %v6084 = vcombine.low %v6045, %v6077
        %v6085 = vcombine.high %v6045, %v6077
        %v6086 = vcombine.low %v4994, %v5004
        %v6087 = vcombine.high %v4994, %v5004
        %v6089 = vunpack.c.l.s4 1983009808
        %v6090 = vunpack.c.0.s8 %v6089
        %v6091 = vlaneseq
        %v6092 = vshrl.u32 %v6091, 7
        %v6093 = vsub.s32 %v6090, %v6092
        %v6094 = vrot.slane %v6086, %v6093
        %v6096 = vunpack.c.l.s4 1983009808
        %v6097 = vunpack.c.0.s8 %v6096
        %v6098 = vlaneseq
        %v6099 = vshrl.u32 %v6098, 7
        %v6100 = vsub.s32 %v6097, %v6099
        %v6101 = vrot.slane %v6087, %v6100
        %v6102 = vcombine.low %v4999, %v5009
        %v6103 = vcombine.high %v4999, %v5009
        %v6105 = vunpack.c.l.s4 1983009808
        %v6106 = vunpack.c.0.s8 %v6105
        %v6107 = vlaneseq
        %v6108 = vshrl.u32 %v6107, 7
        %v6109 = vsub.s32 %v6106, %v6108
        %v6110 = vrot.slane %v6102, %v6109
        %v6112 = vunpack.c.l.s4 1983009808
        %v6113 = vunpack.c.0.s8 %v6112
        %v6114 = vlaneseq
        %v6115 = vshrl.u32 %v6114, 7
        %v6116 = vsub.s32 %v6113, %v6115
        %v6117 = vrot.slane %v6103, %v6116
        %v6118 = vcombine.low %v5021, %v5029
        %v6119 = vcombine.high %v5021, %v5029
        %v6121 = vunpack.c.l.s4 1983009808
        %v6122 = vunpack.c.0.s8 %v6121
        %v6123 = vlaneseq
        %v6124 = vshrl.u32 %v6123, 7
        %v6125 = vsub.s32 %v6122, %v6124
        %v6126 = vrot.slane %v6118, %v6125
        %v6128 = vunpack.c.l.s4 1983009808
        %v6129 = vunpack.c.0.s8 %v6128
        %v6130 = vlaneseq
        %v6131 = vshrl.u32 %v6130, 7
        %v6132 = vsub.s32 %v6129, %v6131
        %v6133 = vrot.slane %v6119, %v6132
        %v6134 = vcombine.low %v5025, %v5033
        %v6135 = vcombine.high %v5025, %v5033
        %v6137 = vunpack.c.l.s4 1983009808
        %v6138 = vunpack.c.0.s8 %v6137
        %v6139 = vlaneseq
        %v6140 = vshrl.u32 %v6139, 7
        %v6141 = vsub.s32 %v6138, %v6140
        %v6142 = vrot.slane %v6134, %v6141
        %v6144 = vunpack.c.l.s4 1983009808
        %v6145 = vunpack.c.0.s8 %v6144
        %v6146 = vlaneseq
        %v6147 = vshrl.u32 %v6146, 7
        %v6148 = vsub.s32 %v6145, %v6147
        %v6149 = vrot.slane %v6135, %v6148
        %v6150 = vcombine.low %v6094, %v6110
        %v6151 = vcombine.high %v6094, %v6110
        %v6153 = vunpack.c.l.s4 1934713408
        %v6154 = vunpack.c.0.s8 %v6153
        %v6155 = vlaneseq
        %v6156 = vshrl.u32 %v6155, 7
        %v6157 = vsub.s32 %v6154, %v6156
        %v6158 = vrot.slane %v6150, %v6157
        %v6160 = vunpack.c.l.s4 1934713408
        %v6161 = vunpack.c.0.s8 %v6160
        %v6162 = vlaneseq
        %v6163 = vshrl.u32 %v6162, 7
        %v6164 = vsub.s32 %v6161, %v6163
        %v6165 = vrot.slane %v6151, %v6164
        %v6166 = vcombine.low %v6101, %v6117
        %v6167 = vcombine.high %v6101, %v6117
        %v6169 = vunpack.c.l.s4 1934713408
        %v6170 = vunpack.c.0.s8 %v6169
        %v6171 = vlaneseq
        %v6172 = vshrl.u32 %v6171, 7
        %v6173 = vsub.s32 %v6170, %v6172
        %v6174 = vrot.slane %v6166, %v6173
        %v6176 = vunpack.c.l.s4 1934713408
        %v6177 = vunpack.c.0.s8 %v6176
        %v6178 = vlaneseq
        %v6179 = vshrl.u32 %v6178, 7
        %v6180 = vsub.s32 %v6177, %v6179
        %v6181 = vrot.slane %v6167, %v6180
        %v6182 = vcombine.low %v6126, %v6142
        %v6183 = vcombine.high %v6126, %v6142
        %v6185 = vunpack.c.l.s4 1934713408
        %v6186 = vunpack.c.0.s8 %v6185
        %v6187 = vlaneseq
        %v6188 = vshrl.u32 %v6187, 7
        %v6189 = vsub.s32 %v6186, %v6188
        %v6190 = vrot.slane %v6182, %v6189
        %v6192 = vunpack.c.l.s4 1934713408
        %v6193 = vunpack.c.0.s8 %v6192
        %v6194 = vlaneseq
        %v6195 = vshrl.u32 %v6194, 7
        %v6196 = vsub.s32 %v6193, %v6195
        %v6197 = vrot.slane %v6183, %v6196
        %v6198 = vcombine.low %v6133, %v6149
        %v6199 = vcombine.high %v6133, %v6149
        %v6201 = vunpack.c.l.s4 1934713408
        %v6202 = vunpack.c.0.s8 %v6201
        %v6203 = vlaneseq
        %v6204 = vshrl.u32 %v6203, 7
        %v6205 = vsub.s32 %v6202, %v6204
        %v6206 = vrot.slane %v6198, %v6205
        %v6208 = vunpack.c.l.s4 1934713408
        %v6209 = vunpack.c.0.s8 %v6208
        %v6210 = vlaneseq
        %v6211 = vshrl.u32 %v6210, 7
        %v6212 = vsub.s32 %v6209, %v6211
        %v6213 = vrot.slane %v6199, %v6212
        %v6214 = vcombine.low %v6158, %v6190
        %v6215 = vcombine.high %v6158, %v6190
        %v6216 = vcombine.low %v6165, %v6197
        %v6217 = vcombine.high %v6165, %v6197
        %v6218 = vcombine.low %v6174, %v6206
        %v6219 = vcombine.high %v6174, %v6206
        %v6220 = vcombine.low %v6181, %v6213
        %v6221 = vcombine.high %v6181, %v6213
        %v6222 = vcombine.low %v5045, %v5053
        %v6223 = vcombine.high %v5045, %v5053
        %v6225 = vunpack.c.l.s4 1983009808
        %v6226 = vunpack.c.0.s8 %v6225
        %v6227 = vlaneseq
        %v6228 = vshrl.u32 %v6227, 7
        %v6229 = vsub.s32 %v6226, %v6228
        %v6230 = vrot.slane %v6222, %v6229
        %v6232 = vunpack.c.l.s4 1983009808
        %v6233 = vunpack.c.0.s8 %v6232
        %v6234 = vlaneseq
        %v6235 = vshrl.u32 %v6234, 7
        %v6236 = vsub.s32 %v6233, %v6235
        %v6237 = vrot.slane %v6223, %v6236
        %v6238 = vcombine.low %v5049, %v5057
        %v6239 = vcombine.high %v5049, %v5057
        %v6241 = vunpack.c.l.s4 1983009808
        %v6242 = vunpack.c.0.s8 %v6241
        %v6243 = vlaneseq
        %v6244 = vshrl.u32 %v6243, 7
        %v6245 = vsub.s32 %v6242, %v6244
        %v6246 = vrot.slane %v6238, %v6245
        %v6248 = vunpack.c.l.s4 1983009808
        %v6249 = vunpack.c.0.s8 %v6248
        %v6250 = vlaneseq
        %v6251 = vshrl.u32 %v6250, 7
        %v6252 = vsub.s32 %v6249, %v6251
        %v6253 = vrot.slane %v6239, %v6252
        %v6254 = vcombine.low %v6230, %v6246
        %v6255 = vcombine.high %v6230, %v6246
        %v6257 = vunpack.c.l.s4 1934713408
        %v6258 = vunpack.c.0.s8 %v6257
        %v6259 = vlaneseq
        %v6260 = vshrl.u32 %v6259, 7
        %v6261 = vsub.s32 %v6258, %v6260
        %v6262 = vrot.slane %v6254, %v6261
        %v6264 = vunpack.c.l.s4 1934713408
        %v6265 = vunpack.c.0.s8 %v6264
        %v6266 = vlaneseq
        %v6267 = vshrl.u32 %v6266, 7
        %v6268 = vsub.s32 %v6265, %v6267
        %v6269 = vrot.slane %v6255, %v6268
        %v6270 = vcombine.low %v6237, %v6253
        %v6271 = vcombine.high %v6237, %v6253
        %v6273 = vunpack.c.l.s4 1934713408
        %v6274 = vunpack.c.0.s8 %v6273
        %v6275 = vlaneseq
        %v6276 = vshrl.u32 %v6275, 7
        %v6277 = vsub.s32 %v6274, %v6276
        %v6278 = vrot.slane %v6270, %v6277
        %v6280 = vunpack.c.l.s4 1934713408
        %v6281 = vunpack.c.0.s8 %v6280
        %v6282 = vlaneseq
        %v6283 = vshrl.u32 %v6282, 7
        %v6284 = vsub.s32 %v6281, %v6283
        %v6285 = vrot.slane %v6271, %v6284
        %v6286 = vcombine.high %v6262, 0.0
        %v6287 = vcombine.high %v6269, 0.0
        %v6288 = vcombine.high %v6278, 0.0
        %v6289 = vcombine.high %v6285, 0.0
        %6295 = vrot.lane.b32.xlu0 %v5195, 16
        %v6296 = vpop.permute.xlu0 %6295
        %6297 = vrot.lane.b32.xlu0 %v5331, 16
        %v6298 = vpop.permute.xlu0 %6297
        %6299 = vrot.lane.b32.xlu0 %v5467, 16
        %v6300 = vpop.permute.xlu0 %6299
        %6301 = vrot.lane.b32.xlu0 %v5603, 16
        %v6302 = vpop.permute.xlu0 %6301
        %6303 = vrot.lane.b32.xlu0 %v5674, 16
        %v6304 = vpop.permute.xlu0 %6303
        %6315 = vrot.lane.b32.xlu0 %v5196, 32
        %v6316 = vpop.permute.xlu0 %6315
        %6317 = vrot.lane.b32.xlu0 %v5332, 32
        %v6318 = vpop.permute.xlu0 %6317
        %6319 = vrot.lane.b32.xlu0 %v5468, 32
        %v6320 = vpop.permute.xlu0 %6319
        %6321 = vrot.lane.b32.xlu0 %v5604, 32
        %v6322 = vpop.permute.xlu0 %6321
        %6323 = vrot.lane.b32.xlu0 %v5657, 32
        %v6324 = vpop.permute.xlu0 %6323
        %6335 = vrot.lane.b32.xlu0 %v5197, 48
        %v6336 = vpop.permute.xlu0 %6335
        %6337 = vrot.lane.b32.xlu0 %v5333, 48
        %v6338 = vpop.permute.xlu0 %6337
        %6339 = vrot.lane.b32.xlu0 %v5469, 48
        %v6340 = vpop.permute.xlu0 %6339
        %6341 = vrot.lane.b32.xlu0 %v5605, 48
        %v6342 = vpop.permute.xlu0 %6341
        %6343 = vrot.lane.b32.xlu0 %v5675, 48
        %v6344 = vpop.permute.xlu0 %6343
        %6355 = vrot.lane.b32.xlu0 %v5198, 64
        %v6356 = vpop.permute.xlu0 %6355
        %6357 = vrot.lane.b32.xlu0 %v5334, 64
        %v6358 = vpop.permute.xlu0 %6357
        %6359 = vrot.lane.b32.xlu0 %v5470, 64
        %v6360 = vpop.permute.xlu0 %6359
        %6361 = vrot.lane.b32.xlu0 %v5606, 64
        %v6362 = vpop.permute.xlu0 %6361
        %6363 = vrot.lane.b32.xlu0 %v5666, 64
        %v6364 = vpop.permute.xlu0 %6363
        %6375 = vrot.lane.b32.xlu0 %v5199, 80
        %v6376 = vpop.permute.xlu0 %6375
        %6377 = vrot.lane.b32.xlu0 %v5335, 80
        %v6378 = vpop.permute.xlu0 %6377
        %6379 = vrot.lane.b32.xlu0 %v5471, 80
        %v6380 = vpop.permute.xlu0 %6379
        %6381 = vrot.lane.b32.xlu0 %v5607, 80
        %v6382 = vpop.permute.xlu0 %6381
        %6383 = vrot.lane.b32.xlu0 %v5676, 80
        %v6384 = vpop.permute.xlu0 %6383
        %6395 = vrot.lane.b32.xlu0 %v5200, 96
        %v6396 = vpop.permute.xlu0 %6395
        %6397 = vrot.lane.b32.xlu0 %v5336, 96
        %v6398 = vpop.permute.xlu0 %6397
        %6399 = vrot.lane.b32.xlu0 %v5472, 96
        %v6400 = vpop.permute.xlu0 %6399
        %6401 = vrot.lane.b32.xlu0 %v5608, 96
        %v6402 = vpop.permute.xlu0 %6401
        %6403 = vrot.lane.b32.xlu0 %v5673, 96
        %v6404 = vpop.permute.xlu0 %6403
        %6415 = vrot.lane.b32.xlu0 %v5201, 112
        %v6416 = vpop.permute.xlu0 %6415
        %6417 = vrot.lane.b32.xlu0 %v5337, 112
        %v6418 = vpop.permute.xlu0 %6417
        %6419 = vrot.lane.b32.xlu0 %v5473, 112
        %v6420 = vpop.permute.xlu0 %6419
        %6421 = vrot.lane.b32.xlu0 %v5609, 112
        %v6422 = vpop.permute.xlu0 %6421
        %6423 = vrot.lane.b32.xlu0 %v5677, 112
        %v6424 = vpop.permute.xlu0 %6423
        %6435 = vrot.lane.b32.xlu0 %v5807, 16
        %v6436 = vpop.permute.xlu0 %6435
        %6437 = vrot.lane.b32.xlu0 %v5943, 16
        %v6438 = vpop.permute.xlu0 %6437
        %6439 = vrot.lane.b32.xlu0 %v6079, 16
        %v6440 = vpop.permute.xlu0 %6439
        %6441 = vrot.lane.b32.xlu0 %v6215, 16
        %v6442 = vpop.permute.xlu0 %6441
        %6443 = vrot.lane.b32.xlu0 %v6286, 16
        %v6444 = vpop.permute.xlu0 %6443
        %6455 = vrot.lane.b32.xlu0 %v5808, 32
        %v6456 = vpop.permute.xlu0 %6455
        %6457 = vrot.lane.b32.xlu0 %v5944, 32
        %v6458 = vpop.permute.xlu0 %6457
        %6459 = vrot.lane.b32.xlu0 %v6080, 32
        %v6460 = vpop.permute.xlu0 %6459
        %6461 = vrot.lane.b32.xlu0 %v6216, 32
        %v6462 = vpop.permute.xlu0 %6461
        %6463 = vrot.lane.b32.xlu0 %v6269, 32
        %v6464 = vpop.permute.xlu0 %6463
        %6475 = vrot.lane.b32.xlu0 %v5809, 48
        %v6476 = vpop.permute.xlu0 %6475
        %6477 = vrot.lane.b32.xlu0 %v5945, 48
        %v6478 = vpop.permute.xlu0 %6477
        %6479 = vrot.lane.b32.xlu0 %v6081, 48
        %v6480 = vpop.permute.xlu0 %6479
        %6481 = vrot.lane.b32.xlu0 %v6217, 48
        %v6482 = vpop.permute.xlu0 %6481
        %6483 = vrot.lane.b32.xlu0 %v6287, 48
        %v6484 = vpop.permute.xlu0 %6483
        %6495 = vrot.lane.b32.xlu0 %v5810, 64
        %v6496 = vpop.permute.xlu0 %6495
        %6497 = vrot.lane.b32.xlu0 %v5946, 64
        %v6498 = vpop.permute.xlu0 %6497
        %6499 = vrot.lane.b32.xlu0 %v6082, 64
        %v6500 = vpop.permute.xlu0 %6499
        %6501 = vrot.lane.b32.xlu0 %v6218, 64
        %v6502 = vpop.permute.xlu0 %6501
        %6503 = vrot.lane.b32.xlu0 %v6278, 64
        %v6504 = vpop.permute.xlu0 %6503
        %6515 = vrot.lane.b32.xlu0 %v5811, 80
        %v6516 = vpop.permute.xlu0 %6515
        %6517 = vrot.lane.b32.xlu0 %v5947, 80
        %v6518 = vpop.permute.xlu0 %6517
        %6519 = vrot.lane.b32.xlu0 %v6083, 80
        %v6520 = vpop.permute.xlu0 %6519
        %6521 = vrot.lane.b32.xlu0 %v6219, 80
        %v6522 = vpop.permute.xlu0 %6521
        %6523 = vrot.lane.b32.xlu0 %v6288, 80
        %v6524 = vpop.permute.xlu0 %6523
        %6535 = vrot.lane.b32.xlu0 %v5812, 96
        %v6536 = vpop.permute.xlu0 %6535
        %6537 = vrot.lane.b32.xlu0 %v5948, 96
        %v6538 = vpop.permute.xlu0 %6537
        %6539 = vrot.lane.b32.xlu0 %v6084, 96
        %v6540 = vpop.permute.xlu0 %6539
        %6541 = vrot.lane.b32.xlu0 %v6220, 96
        %v6542 = vpop.permute.xlu0 %6541
        %6543 = vrot.lane.b32.xlu0 %v6285, 96
        %v6544 = vpop.permute.xlu0 %6543
        %6555 = vrot.lane.b32.xlu0 %v5813, 112
        %v6556 = vpop.permute.xlu0 %6555
        %6557 = vrot.lane.b32.xlu0 %v5949, 112
        %v6558 = vpop.permute.xlu0 %6557
        %6559 = vrot.lane.b32.xlu0 %v6085, 112
        %v6560 = vpop.permute.xlu0 %6559
        %6561 = vrot.lane.b32.xlu0 %v6221, 112
        %v6562 = vpop.permute.xlu0 %6561
        %6563 = vrot.lane.b32.xlu0 %v6289, 112
        %v6564 = vpop.permute.xlu0 %6563
        %v6570 = vsel %vm4354, %v5194, %v6296
        %v6571 = vsel %vm4354, %v5330, %v6298
        %v6572 = vsel %vm4354, %v5466, %v6300
        %v6573 = vsel %vm4354, %v5602, %v6302
        %v6574 = vsel %vm4354, %v5650, %v6304
        %v6575 = vsel %vm4364, %v6570, %v6316
        %v6576 = vsel %vm4364, %v6571, %v6318
        %v6577 = vsel %vm4364, %v6572, %v6320
        %v6578 = vsel %vm4364, %v6573, %v6322
        %v6579 = vsel %vm4364, %v6574, %v6324
        %v6580 = vsel %vm4374, %v6575, %v6336
        %v6581 = vsel %vm4374, %v6576, %v6338
        %v6582 = vsel %vm4374, %v6577, %v6340
        %v6583 = vsel %vm4374, %v6578, %v6342
        %v6584 = vsel %vm4374, %v6579, %v6344
        %v6585 = vsel %vm4384, %v6580, %v6356
        %v6586 = vsel %vm4384, %v6581, %v6358
        %v6587 = vsel %vm4384, %v6582, %v6360
        %v6588 = vsel %vm4384, %v6583, %v6362
        %v6589 = vsel %vm4384, %v6584, %v6364
        %v6590 = vsel %vm4394, %v6585, %v6376
        %v6591 = vsel %vm4394, %v6586, %v6378
        %v6592 = vsel %vm4394, %v6587, %v6380
        %v6593 = vsel %vm4394, %v6588, %v6382
        %v6594 = vsel %vm4394, %v6589, %v6384
        %v6595 = vsel %vm4404, %v6590, %v6396
        %v6596 = vsel %vm4404, %v6591, %v6398
        %v6597 = vsel %vm4404, %v6592, %v6400
        %v6598 = vsel %vm4404, %v6593, %v6402
        %v6599 = vsel %vm4404, %v6594, %v6404
        %v6600 = vsel %vm4414, %v6595, %v6416
        %v6601 = vsel %vm4414, %v6596, %v6418
        %v6602 = vsel %vm4414, %v6597, %v6420
        %v6603 = vsel %vm4414, %v6598, %v6422
        %v6604 = vsel %vm4414, %v6599, %v6424
        %v6605 = vsel %vm4354, %v5806, %v6436
        %v6606 = vsel %vm4354, %v5942, %v6438
        %v6607 = vsel %vm4354, %v6078, %v6440
        %v6608 = vsel %vm4354, %v6214, %v6442
        %v6609 = vsel %vm4354, %v6262, %v6444
        %v6610 = vsel %vm4364, %v6605, %v6456
        %v6611 = vsel %vm4364, %v6606, %v6458
        %v6612 = vsel %vm4364, %v6607, %v6460
        %v6613 = vsel %vm4364, %v6608, %v6462
        %v6614 = vsel %vm4364, %v6609, %v6464
        %v6615 = vsel %vm4374, %v6610, %v6476
        %v6616 = vsel %vm4374, %v6611, %v6478
        %v6617 = vsel %vm4374, %v6612, %v6480
        %v6618 = vsel %vm4374, %v6613, %v6482
        %v6619 = vsel %vm4374, %v6614, %v6484
        %v6620 = vsel %vm4384, %v6615, %v6496
        %v6621 = vsel %vm4384, %v6616, %v6498
        %v6622 = vsel %vm4384, %v6617, %v6500
        %v6623 = vsel %vm4384, %v6618, %v6502
        %v6624 = vsel %vm4384, %v6619, %v6504
        %v6625 = vsel %vm4394, %v6620, %v6516
        %v6626 = vsel %vm4394, %v6621, %v6518
        %v6627 = vsel %vm4394, %v6622, %v6520
        %v6628 = vsel %vm4394, %v6623, %v6522
        %v6629 = vsel %vm4394, %v6624, %v6524
        %v6630 = vsel %vm4404, %v6625, %v6536
        %v6631 = vsel %vm4404, %v6626, %v6538
        %v6632 = vsel %vm4404, %v6627, %v6540
        %v6633 = vsel %vm4404, %v6628, %v6542
        %v6634 = vsel %vm4404, %v6629, %v6544
        %v6635 = vsel %vm4414, %v6630, %v6556
        %v6636 = vsel %vm4414, %v6631, %v6558
        %v6637 = vsel %vm4414, %v6632, %v6560
        %v6638 = vsel %vm4414, %v6633, %v6562
        %v6639 = vsel %vm4414, %v6634, %v6564
        %6640 = vset.pattern.permute.xlu0 1
        %6641 = vperm.xlu0 %6640, %v763
        %v6642 = vpop.permute.xlu0 %6641
        %vm6644 = vcmask 293888
        %v6646 = vsel %vm6644, %v4749, 0
        %vm6648 = vcmask 1043456
        %v6650 = vsel %vm6648, %v6604, 0
        %v6653 = vsel %vm6648, %v6639, 0
        %6655 = vmatprep.subr.mxu0 0.0
        %6656 = vmatpush1.msra.mxu0 0.0
        %6657 = vmatprep.subr.mxu0 0.0
        %6658 = vmatpush1.msra.mxu0 0.0
        %6659 = vmatprep.subr.mxu0 0.0
        %6660 = vmatpush1.msra.mxu0 0.0
        %6661 = vmatprep.subr.mxu0 0.0
        %6662 = vmatpush1.msra.mxu0 0.0
        %6663 = vmatprep.subr.mxu0 0.0
        %6664 = vmatpush1.msra.mxu0 0.0
        %6665 = vmatprep.subr.mxu0 0.0
        %6666 = vmatpush1.msra.mxu0 0.0
        %6667 = vmatprep.subr.mxu0 0.0
        %6668 = vmatpush1.msra.mxu0 0.0
        %6669 = vmatprep.subr.mxu0 0.0
        %6670 = vmatpush1.msra.mxu0 0.0
        %6671 = vmatprep.subr.mxu0 0.0
        %6672 = vmatpush1.msra.mxu0 0.0
        %6673 = vmatprep.subr.mxu0 0.0
        %6674 = vmatpush1.msra.mxu0 0.0
        %6675 = vmatprep.subr.mxu0 0.0
        %6676 = vmatpush1.msra.mxu0 0.0
        %6677 = vmatprep.subr.mxu0 %v6653
        %6678 = vmatpush1.msra.mxu0 %v6650
        %6679 = vmatprep.subr.mxu0 %v6638
        %6680 = vmatpush1.msra.mxu0 %v6603
        %6681 = vmatprep.subr.mxu0 %v6637
        %6682 = vmatpush1.msra.mxu0 %v6602
        %6683 = vmatprep.subr.mxu0 %v6636
        %6684 = vmatpush1.msra.mxu0 %v6601
        %6685 = vmatprep.subr.mxu0 %v6635
        %6686 = vmatpush1.msra.mxu0 %v6600
        %6687 = vmatprep.subr.mxu0 0.0
        %6688 = vmatpush2.msra.mxu0 0.0
        %6689 = vmatprep.subr.mxu0 0.0
        %6690 = vmatpush2.msra.mxu0 0.0
        %6691 = vmatprep.subr.mxu0 0.0
        %6692 = vmatpush2.msra.mxu0 0.0
        %6693 = vmatprep.subr.mxu0 0.0
        %6694 = vmatpush2.msra.mxu0 0.0
        %6695 = vmatprep.subr.mxu0 0.0
        %6696 = vmatpush2.msra.mxu0 0.0
        %6697 = vmatprep.subr.mxu0 0.0
        %6698 = vmatpush2.msra.mxu0 0.0
        %6699 = vmatprep.subr.mxu0 0.0
        %6700 = vmatpush2.msra.mxu0 0.0
        %6701 = vmatprep.subr.mxu0 0.0
        %6702 = vmatpush2.msra.mxu0 0.0
        %6703 = vmatprep.subr.mxu0 0.0
        %6704 = vmatpush2.msra.mxu0 0.0
        %6705 = vmatprep.subr.mxu0 0.0
        %6706 = vmatpush2.msra.mxu0 0.0
        %6707 = vmatprep.subr.mxu0 0.0
        %6708 = vmatpush2.msra.mxu0 0.0
        %6709 = vmatprep.subr.mxu0 0.0
        %6710 = vmatpush2.msra.mxu0 0.0
        %6711 = vmatprep.subr.mxu0 0.0
        %6712 = vmatpush2.msra.mxu0 0.0
        %6713 = vmatprep.subr.mxu0 0.0
        %6714 = vmatpush2.msra.mxu0 0.0
        %6715 = vmatprep.subr.mxu0 0.0
        %6716 = vmatpush2.msra.mxu0 0.0
        %6717 = vmatprep.subr.mxu0 0.0
        %6718 = vmatpush2.msra.mxu0 0.0
        %6719 = vmatprep.mubr.f32.mxu0 0.0
        %6720 = vmatmul.mubr.f32.gmra.mxu0 %v6646
        %v6721 = vpop.f32.mrf.mxu0
        %v6722 = vadd.f32 %v6642, %v6721
        %v6723 = vpop.f32.mrf.mxu0
        %v6724 = vadd.f32 %v6642, %v6723
        %6725 = vdwg.mxu0
        %v6726 = vmax.f32 %v6722, 0.0
        %v6727 = vmax.f32 %v6724, 0.0
        %6729 = vrot.lane.b32.xlu0 %v6726, 112
        %v6730 = vpop.permute.xlu0 %6729
        %6732 = vrot.lane.b32.xlu0 %v6726, 96
        %v6733 = vpop.permute.xlu0 %6732
        %6735 = vrot.lane.b32.xlu0 %v6726, 80
        %v6736 = vpop.permute.xlu0 %6735
        %6738 = vrot.lane.b32.xlu0 %v6726, 64
        %v6739 = vpop.permute.xlu0 %6738
        %6741 = vrot.lane.b32.xlu0 %v6726, 48
        %v6742 = vpop.permute.xlu0 %6741
        %6744 = vrot.lane.b32.xlu0 %v6726, 32
        %v6745 = vpop.permute.xlu0 %6744
        %6747 = vrot.lane.b32.xlu0 %v6726, 16
        %v6748 = vpop.permute.xlu0 %6747
        %6751 = vrot.lane.b32.xlu0 %v6727, 112
        %v6752 = vpop.permute.xlu0 %6751
        %6754 = vrot.lane.b32.xlu0 %v6727, 96
        %v6755 = vpop.permute.xlu0 %6754
        %6757 = vrot.lane.b32.xlu0 %v6727, 80
        %v6758 = vpop.permute.xlu0 %6757
        %6760 = vrot.lane.b32.xlu0 %v6727, 64
        %v6761 = vpop.permute.xlu0 %6760
        %6763 = vrot.lane.b32.xlu0 %v6727, 48
        %v6764 = vpop.permute.xlu0 %6763
        %6766 = vrot.lane.b32.xlu0 %v6727, 32
        %v6767 = vpop.permute.xlu0 %6766
        %6769 = vrot.lane.b32.xlu0 %v6727, 16
        %v6770 = vpop.permute.xlu0 %6769
        %v6772 = vcombine.low %v6726, %v6733
        %v6774 = vunpack.c.l.s4 1983009808
        %v6775 = vunpack.c.0.s8 %v6774
        %v6776 = vlaneseq
        %v6777 = vshrl.u32 %v6776, 7
        %v6778 = vsub.s32 %v6775, %v6777
        %v6779 = vrot.slane %v6772, %v6778
        %v6780 = vcombine.low %v6730, %v6736
        %v6782 = vunpack.c.l.s4 1983009808
        %v6783 = vunpack.c.0.s8 %v6782
        %v6784 = vlaneseq
        %v6785 = vshrl.u32 %v6784, 7
        %v6786 = vsub.s32 %v6783, %v6785
        %v6787 = vrot.slane %v6780, %v6786
        %v6788 = vcombine.low %v6739, %v6745
        %v6790 = vunpack.c.l.s4 1983009808
        %v6791 = vunpack.c.0.s8 %v6790
        %v6792 = vlaneseq
        %v6793 = vshrl.u32 %v6792, 7
        %v6794 = vsub.s32 %v6791, %v6793
        %v6795 = vrot.slane %v6788, %v6794
        %v6796 = vcombine.low %v6742, %v6748
        %v6798 = vunpack.c.l.s4 1983009808
        %v6799 = vunpack.c.0.s8 %v6798
        %v6800 = vlaneseq
        %v6801 = vshrl.u32 %v6800, 7
        %v6802 = vsub.s32 %v6799, %v6801
        %v6803 = vrot.slane %v6796, %v6802
        %v6804 = vcombine.low %v6779, %v6787
        %v6805 = vcombine.high %v6779, %v6787
        %v6807 = vunpack.c.l.s4 1934713408
        %v6808 = vunpack.c.0.s8 %v6807
        %v6809 = vlaneseq
        %v6810 = vshrl.u32 %v6809, 7
        %v6811 = vsub.s32 %v6808, %v6810
        %v6812 = vrot.slane %v6804, %v6811
        %v6814 = vunpack.c.l.s4 1934713408
        %v6815 = vunpack.c.0.s8 %v6814
        %v6816 = vlaneseq
        %v6817 = vshrl.u32 %v6816, 7
        %v6818 = vsub.s32 %v6815, %v6817
        %v6819 = vrot.slane %v6805, %v6818
        %v6820 = vcombine.low %v6795, %v6803
        %v6821 = vcombine.high %v6795, %v6803
        %v6823 = vunpack.c.l.s4 1934713408
        %v6824 = vunpack.c.0.s8 %v6823
        %v6825 = vlaneseq
        %v6826 = vshrl.u32 %v6825, 7
        %v6827 = vsub.s32 %v6824, %v6826
        %v6828 = vrot.slane %v6820, %v6827
        %v6830 = vunpack.c.l.s4 1934713408
        %v6831 = vunpack.c.0.s8 %v6830
        %v6832 = vlaneseq
        %v6833 = vshrl.u32 %v6832, 7
        %v6834 = vsub.s32 %v6831, %v6833
        %v6835 = vrot.slane %v6821, %v6834
        %v6836 = vcombine.low %v6812, %v6828
        %v6837 = vcombine.high %v6812, %v6828
        %v6838 = vcombine.low %v6819, %v6835
        %v6839 = vcombine.high %v6819, %v6835
        %v6840 = vcombine.low %v6727, %v6755
        %v6842 = vunpack.c.l.s4 1983009808
        %v6843 = vunpack.c.0.s8 %v6842
        %v6844 = vlaneseq
        %v6845 = vshrl.u32 %v6844, 7
        %v6846 = vsub.s32 %v6843, %v6845
        %v6847 = vrot.slane %v6840, %v6846
        %v6848 = vcombine.low %v6752, %v6758
        %v6850 = vunpack.c.l.s4 1983009808
        %v6851 = vunpack.c.0.s8 %v6850
        %v6852 = vlaneseq
        %v6853 = vshrl.u32 %v6852, 7
        %v6854 = vsub.s32 %v6851, %v6853
        %v6855 = vrot.slane %v6848, %v6854
        %v6856 = vcombine.low %v6761, %v6767
        %v6858 = vunpack.c.l.s4 1983009808
        %v6859 = vunpack.c.0.s8 %v6858
        %v6860 = vlaneseq
        %v6861 = vshrl.u32 %v6860, 7
        %v6862 = vsub.s32 %v6859, %v6861
        %v6863 = vrot.slane %v6856, %v6862
        %v6864 = vcombine.low %v6764, %v6770
        %v6866 = vunpack.c.l.s4 1983009808
        %v6867 = vunpack.c.0.s8 %v6866
        %v6868 = vlaneseq
        %v6869 = vshrl.u32 %v6868, 7
        %v6870 = vsub.s32 %v6867, %v6869
        %v6871 = vrot.slane %v6864, %v6870
        %v6872 = vcombine.low %v6847, %v6855
        %v6873 = vcombine.high %v6847, %v6855
        %v6875 = vunpack.c.l.s4 1934713408
        %v6876 = vunpack.c.0.s8 %v6875
        %v6877 = vlaneseq
        %v6878 = vshrl.u32 %v6877, 7
        %v6879 = vsub.s32 %v6876, %v6878
        %v6880 = vrot.slane %v6872, %v6879
        %v6882 = vunpack.c.l.s4 1934713408
        %v6883 = vunpack.c.0.s8 %v6882
        %v6884 = vlaneseq
        %v6885 = vshrl.u32 %v6884, 7
        %v6886 = vsub.s32 %v6883, %v6885
        %v6887 = vrot.slane %v6873, %v6886
        %v6888 = vcombine.low %v6863, %v6871
        %v6889 = vcombine.high %v6863, %v6871
        %v6891 = vunpack.c.l.s4 1934713408
        %v6892 = vunpack.c.0.s8 %v6891
        %v6893 = vlaneseq
        %v6894 = vshrl.u32 %v6893, 7
        %v6895 = vsub.s32 %v6892, %v6894
        %v6896 = vrot.slane %v6888, %v6895
        %v6898 = vunpack.c.l.s4 1934713408
        %v6899 = vunpack.c.0.s8 %v6898
        %v6900 = vlaneseq
        %v6901 = vshrl.u32 %v6900, 7
        %v6902 = vsub.s32 %v6899, %v6901
        %v6903 = vrot.slane %v6889, %v6902
        %v6904 = vcombine.low %v6880, %v6896
        %v6905 = vcombine.high %v6880, %v6896
        %v6906 = vcombine.low %v6887, %v6903
        %v6907 = vcombine.high %v6887, %v6903
        %v6908 = vld [vmem:[%s6] sm:$0xf]
        %v6917 = vrot.slane %v6836, 7
        %v6918 = vrot.slane %v6904, 7
        %v6919 = vsel %vm781, %v6917, %v6918
        %v6920 = vrot.slane %v6837, 7
        %v6921 = vrot.slane %v6905, 7
        %v6922 = vsel %vm781, %v6920, %v6921
        %v6923 = vrot.slane %v6838, 7
        %v6924 = vrot.slane %v6906, 7
        %v6925 = vsel %vm781, %v6923, %v6924
        %v6926 = vrot.slane %v6839, 7
        %v6927 = vrot.slane %v6907, 7
        %v6928 = vsel %vm781, %v6926, %v6927
        %v6937 = vsel %vm781, 0.0, %v6917
        %v6938 = vsel %vm781, 0.0, %v6920
        %v6939 = vsel %vm781, 0.0, %v6923
        %v6940 = vsel %vm781, 0.0, %v6926
        %v6941 = vsel %vm781, %v6918, 0.0
        %v6942 = vsel %vm781, %v6921, 0.0
        %v6943 = vsel %vm781, %v6924, 0.0
        %v6944 = vsel %vm781, %v6927, 0.0
        %6953 = vrot.lane.b32.xlu0 %v6937, 1
        %v6954 = vpop.permute.xlu0 %6953
        %6955 = vrot.lane.b32.xlu0 %v6919, 1
        %v6956 = vpop.permute.xlu0 %6955
        %6957 = vrot.lane.b32.xlu0 %v6941, 1
        %v6958 = vpop.permute.xlu0 %6957
        %6959 = vrot.lane.b32.xlu0 %v6938, 1
        %v6960 = vpop.permute.xlu0 %6959
        %6961 = vrot.lane.b32.xlu0 %v6922, 1
        %v6962 = vpop.permute.xlu0 %6961
        %6963 = vrot.lane.b32.xlu0 %v6942, 1
        %v6964 = vpop.permute.xlu0 %6963
        %6965 = vrot.lane.b32.xlu0 %v6939, 1
        %v6966 = vpop.permute.xlu0 %6965
        %6967 = vrot.lane.b32.xlu0 %v6925, 1
        %v6968 = vpop.permute.xlu0 %6967
        %6969 = vrot.lane.b32.xlu0 %v6943, 1
        %v6970 = vpop.permute.xlu0 %6969
        %6971 = vrot.lane.b32.xlu0 %v6940, 1
        %v6972 = vpop.permute.xlu0 %6971
        %6973 = vrot.lane.b32.xlu0 %v6928, 1
        %v6974 = vpop.permute.xlu0 %6973
        %6975 = vrot.lane.b32.xlu0 %v6944, 1
        %v6976 = vpop.permute.xlu0 %6975
        %v6989 = vsel %vm926, 0.0, %v6954
        %v6990 = vsel %vm926, 0.0, %v6956
        %v6991 = vsel %vm926, 0.0, %v6958
        %v6992 = vsel %vm926, 0.0, %v6960
        %v6993 = vsel %vm926, 0.0, %v6962
        %v6994 = vsel %vm926, 0.0, %v6964
        %v6995 = vsel %vm926, 0.0, %v6966
        %v6996 = vsel %vm926, 0.0, %v6968
        %v6997 = vsel %vm926, 0.0, %v6970
        %v6998 = vsel %vm926, 0.0, %v6972
        %v6999 = vsel %vm926, 0.0, %v6974
        %v7000 = vsel %vm926, 0.0, %v6976
        %v7001 = vsel %vm951, %v6989, 0.0
        %v7002 = vsel %vm951, %v6990, 0.0
        %v7003 = vsel %vm951, %v6991, 0.0
        %v7004 = vsel %vm951, %v6992, 0.0
        %v7005 = vsel %vm951, %v6993, 0.0
        %v7006 = vsel %vm951, %v6994, 0.0
        %v7007 = vsel %vm951, %v6995, 0.0
        %v7008 = vsel %vm951, %v6996, 0.0
        %v7009 = vsel %vm951, %v6997, 0.0
        %v7010 = vsel %vm951, %v6998, 0.0
        %v7011 = vsel %vm951, %v6999, 0.0
        %v7012 = vsel %vm951, %v7000, 0.0
        %7021 = vrot.lane.b32.xlu0 %v7001, 127
        %v7022 = vpop.permute.xlu0 %7021
        %7023 = vrot.lane.b32.xlu0 %v7002, 127
        %v7024 = vpop.permute.xlu0 %7023
        %7025 = vrot.lane.b32.xlu0 %v7004, 127
        %v7026 = vpop.permute.xlu0 %7025
        %7027 = vrot.lane.b32.xlu0 %v7005, 127
        %v7028 = vpop.permute.xlu0 %7027
        %7029 = vrot.lane.b32.xlu0 %v7007, 127
        %v7030 = vpop.permute.xlu0 %7029
        %7031 = vrot.lane.b32.xlu0 %v7008, 127
        %v7032 = vpop.permute.xlu0 %7031
        %7033 = vrot.lane.b32.xlu0 %v7010, 127
        %v7034 = vpop.permute.xlu0 %7033
        %7035 = vrot.lane.b32.xlu0 %v7011, 127
        %v7036 = vpop.permute.xlu0 %7035
        %7045 = vrot.lane.b32.xlu0 %v7001, 126
        %v7046 = vpop.permute.xlu0 %7045
        %7047 = vrot.lane.b32.xlu0 %v7002, 126
        %v7048 = vpop.permute.xlu0 %7047
        %7049 = vrot.lane.b32.xlu0 %v7004, 126
        %v7050 = vpop.permute.xlu0 %7049
        %7051 = vrot.lane.b32.xlu0 %v7005, 126
        %v7052 = vpop.permute.xlu0 %7051
        %7053 = vrot.lane.b32.xlu0 %v7007, 126
        %v7054 = vpop.permute.xlu0 %7053
        %7055 = vrot.lane.b32.xlu0 %v7008, 126
        %v7056 = vpop.permute.xlu0 %7055
        %7057 = vrot.lane.b32.xlu0 %v7010, 126
        %v7058 = vpop.permute.xlu0 %7057
        %7059 = vrot.lane.b32.xlu0 %v7011, 126
        %v7060 = vpop.permute.xlu0 %7059
        %v7073 = vrot.slane %v7001, 1
        %v7074 = vrot.slane %v7002, 1
        %v7075 = vsel %vm1096, %v7073, %v7074
        %v7076 = vrot.slane %v7003, 1
        %v7077 = vsel %vm1096, %v7074, %v7076
        %v7078 = vrot.slane %v7004, 1
        %v7079 = vrot.slane %v7005, 1
        %v7080 = vsel %vm1096, %v7078, %v7079
        %v7081 = vrot.slane %v7006, 1
        %v7082 = vsel %vm1096, %v7079, %v7081
        %v7083 = vrot.slane %v7007, 1
        %v7084 = vrot.slane %v7008, 1
        %v7085 = vsel %vm1096, %v7083, %v7084
        %v7086 = vrot.slane %v7009, 1
        %v7087 = vsel %vm1096, %v7084, %v7086
        %v7088 = vrot.slane %v7010, 1
        %v7089 = vrot.slane %v7011, 1
        %v7090 = vsel %vm1096, %v7088, %v7089
        %v7091 = vrot.slane %v7012, 1
        %v7092 = vsel %vm1096, %v7089, %v7091
        %7101 = vrot.lane.b32.xlu0 %v7075, 127
        %v7102 = vpop.permute.xlu0 %7101
        %7103 = vrot.lane.b32.xlu0 %v7077, 127
        %v7104 = vpop.permute.xlu0 %7103
        %7105 = vrot.lane.b32.xlu0 %v7080, 127
        %v7106 = vpop.permute.xlu0 %7105
        %7107 = vrot.lane.b32.xlu0 %v7082, 127
        %v7108 = vpop.permute.xlu0 %7107
        %7109 = vrot.lane.b32.xlu0 %v7085, 127
        %v7110 = vpop.permute.xlu0 %7109
        %7111 = vrot.lane.b32.xlu0 %v7087, 127
        %v7112 = vpop.permute.xlu0 %7111
        %7113 = vrot.lane.b32.xlu0 %v7090, 127
        %v7114 = vpop.permute.xlu0 %7113
        %7115 = vrot.lane.b32.xlu0 %v7092, 127
        %v7116 = vpop.permute.xlu0 %7115
        %7125 = vrot.lane.b32.xlu0 %v7075, 126
        %v7126 = vpop.permute.xlu0 %7125
        %7127 = vrot.lane.b32.xlu0 %v7077, 126
        %v7128 = vpop.permute.xlu0 %7127
        %7129 = vrot.lane.b32.xlu0 %v7080, 126
        %v7130 = vpop.permute.xlu0 %7129
        %7131 = vrot.lane.b32.xlu0 %v7082, 126
        %v7132 = vpop.permute.xlu0 %7131
        %7133 = vrot.lane.b32.xlu0 %v7085, 126
        %v7134 = vpop.permute.xlu0 %7133
        %7135 = vrot.lane.b32.xlu0 %v7087, 126
        %v7136 = vpop.permute.xlu0 %7135
        %7137 = vrot.lane.b32.xlu0 %v7090, 126
        %v7138 = vpop.permute.xlu0 %7137
        %7139 = vrot.lane.b32.xlu0 %v7092, 126
        %v7140 = vpop.permute.xlu0 %7139
        %v7149 = vrot.slane %v7001, 2
        %v7150 = vrot.slane %v7002, 2
        %v7151 = vsel %vm1249, %v7149, %v7150
        %v7152 = vrot.slane %v7003, 2
        %v7153 = vsel %vm1249, %v7150, %v7152
        %v7154 = vrot.slane %v7004, 2
        %v7155 = vrot.slane %v7005, 2
        %v7156 = vsel %vm1249, %v7154, %v7155
        %v7157 = vrot.slane %v7006, 2
        %v7158 = vsel %vm1249, %v7155, %v7157
        %v7159 = vrot.slane %v7007, 2
        %v7160 = vrot.slane %v7008, 2
        %v7161 = vsel %vm1249, %v7159, %v7160
        %v7162 = vrot.slane %v7009, 2
        %v7163 = vsel %vm1249, %v7160, %v7162
        %v7164 = vrot.slane %v7010, 2
        %v7165 = vrot.slane %v7011, 2
        %v7166 = vsel %vm1249, %v7164, %v7165
        %v7167 = vrot.slane %v7012, 2
        %v7168 = vsel %vm1249, %v7165, %v7167
        %7177 = vrot.lane.b32.xlu0 %v7151, 127
        %v7178 = vpop.permute.xlu0 %7177
        %7179 = vrot.lane.b32.xlu0 %v7153, 127
        %v7180 = vpop.permute.xlu0 %7179
        %7181 = vrot.lane.b32.xlu0 %v7156, 127
        %v7182 = vpop.permute.xlu0 %7181
        %7183 = vrot.lane.b32.xlu0 %v7158, 127
        %v7184 = vpop.permute.xlu0 %7183
        %7185 = vrot.lane.b32.xlu0 %v7161, 127
        %v7186 = vpop.permute.xlu0 %7185
        %7187 = vrot.lane.b32.xlu0 %v7163, 127
        %v7188 = vpop.permute.xlu0 %7187
        %7189 = vrot.lane.b32.xlu0 %v7166, 127
        %v7190 = vpop.permute.xlu0 %7189
        %7191 = vrot.lane.b32.xlu0 %v7168, 127
        %v7192 = vpop.permute.xlu0 %7191
        %7201 = vrot.lane.b32.xlu0 %v7151, 126
        %v7202 = vpop.permute.xlu0 %7201
        %7203 = vrot.lane.b32.xlu0 %v7153, 126
        %v7204 = vpop.permute.xlu0 %7203
        %7205 = vrot.lane.b32.xlu0 %v7156, 126
        %v7206 = vpop.permute.xlu0 %7205
        %7207 = vrot.lane.b32.xlu0 %v7158, 126
        %v7208 = vpop.permute.xlu0 %7207
        %7209 = vrot.lane.b32.xlu0 %v7161, 126
        %v7210 = vpop.permute.xlu0 %7209
        %7211 = vrot.lane.b32.xlu0 %v7163, 126
        %v7212 = vpop.permute.xlu0 %7211
        %7213 = vrot.lane.b32.xlu0 %v7166, 126
        %v7214 = vpop.permute.xlu0 %7213
        %7215 = vrot.lane.b32.xlu0 %v7168, 126
        %v7216 = vpop.permute.xlu0 %7215
        %v7225 = vcombine.low %v7001, %v7007
        %v7226 = vcombine.high %v7001, %v7007
        %v7228 = vunpack.c.l.s4 1983009808
        %v7229 = vunpack.c.0.s8 %v7228
        %v7230 = vlaneseq
        %v7231 = vshrl.u32 %v7230, 7
        %v7232 = vsub.s32 %v7229, %v7231
        %v7233 = vrot.slane %v7225, %v7232
        %v7235 = vunpack.c.l.s4 1983009808
        %v7236 = vunpack.c.0.s8 %v7235
        %v7237 = vlaneseq
        %v7238 = vshrl.u32 %v7237, 7
        %v7239 = vsub.s32 %v7236, %v7238
        %v7240 = vrot.slane %v7226, %v7239
        %v7241 = vcombine.low %v7004, %v7010
        %v7242 = vcombine.high %v7004, %v7010
        %v7244 = vunpack.c.l.s4 1983009808
        %v7245 = vunpack.c.0.s8 %v7244
        %v7246 = vlaneseq
        %v7247 = vshrl.u32 %v7246, 7
        %v7248 = vsub.s32 %v7245, %v7247
        %v7249 = vrot.slane %v7241, %v7248
        %v7251 = vunpack.c.l.s4 1983009808
        %v7252 = vunpack.c.0.s8 %v7251
        %v7253 = vlaneseq
        %v7254 = vshrl.u32 %v7253, 7
        %v7255 = vsub.s32 %v7252, %v7254
        %v7256 = vrot.slane %v7242, %v7255
        %v7257 = vcombine.low %v7022, %v7030
        %v7258 = vcombine.high %v7022, %v7030
        %v7260 = vunpack.c.l.s4 1983009808
        %v7261 = vunpack.c.0.s8 %v7260
        %v7262 = vlaneseq
        %v7263 = vshrl.u32 %v7262, 7
        %v7264 = vsub.s32 %v7261, %v7263
        %v7265 = vrot.slane %v7257, %v7264
        %v7267 = vunpack.c.l.s4 1983009808
        %v7268 = vunpack.c.0.s8 %v7267
        %v7269 = vlaneseq
        %v7270 = vshrl.u32 %v7269, 7
        %v7271 = vsub.s32 %v7268, %v7270
        %v7272 = vrot.slane %v7258, %v7271
        %v7273 = vcombine.low %v7026, %v7034
        %v7274 = vcombine.high %v7026, %v7034
        %v7276 = vunpack.c.l.s4 1983009808
        %v7277 = vunpack.c.0.s8 %v7276
        %v7278 = vlaneseq
        %v7279 = vshrl.u32 %v7278, 7
        %v7280 = vsub.s32 %v7277, %v7279
        %v7281 = vrot.slane %v7273, %v7280
        %v7283 = vunpack.c.l.s4 1983009808
        %v7284 = vunpack.c.0.s8 %v7283
        %v7285 = vlaneseq
        %v7286 = vshrl.u32 %v7285, 7
        %v7287 = vsub.s32 %v7284, %v7286
        %v7288 = vrot.slane %v7274, %v7287
        %v7289 = vcombine.low %v7233, %v7249
        %v7290 = vcombine.high %v7233, %v7249
        %v7292 = vunpack.c.l.s4 1934713408
        %v7293 = vunpack.c.0.s8 %v7292
        %v7294 = vlaneseq
        %v7295 = vshrl.u32 %v7294, 7
        %v7296 = vsub.s32 %v7293, %v7295
        %v7297 = vrot.slane %v7289, %v7296
        %v7299 = vunpack.c.l.s4 1934713408
        %v7300 = vunpack.c.0.s8 %v7299
        %v7301 = vlaneseq
        %v7302 = vshrl.u32 %v7301, 7
        %v7303 = vsub.s32 %v7300, %v7302
        %v7304 = vrot.slane %v7290, %v7303
        %v7305 = vcombine.low %v7240, %v7256
        %v7306 = vcombine.high %v7240, %v7256
        %v7308 = vunpack.c.l.s4 1934713408
        %v7309 = vunpack.c.0.s8 %v7308
        %v7310 = vlaneseq
        %v7311 = vshrl.u32 %v7310, 7
        %v7312 = vsub.s32 %v7309, %v7311
        %v7313 = vrot.slane %v7305, %v7312
        %v7315 = vunpack.c.l.s4 1934713408
        %v7316 = vunpack.c.0.s8 %v7315
        %v7317 = vlaneseq
        %v7318 = vshrl.u32 %v7317, 7
        %v7319 = vsub.s32 %v7316, %v7318
        %v7320 = vrot.slane %v7306, %v7319
        %v7321 = vcombine.low %v7265, %v7281
        %v7322 = vcombine.high %v7265, %v7281
        %v7324 = vunpack.c.l.s4 1934713408
        %v7325 = vunpack.c.0.s8 %v7324
        %v7326 = vlaneseq
        %v7327 = vshrl.u32 %v7326, 7
        %v7328 = vsub.s32 %v7325, %v7327
        %v7329 = vrot.slane %v7321, %v7328
        %v7331 = vunpack.c.l.s4 1934713408
        %v7332 = vunpack.c.0.s8 %v7331
        %v7333 = vlaneseq
        %v7334 = vshrl.u32 %v7333, 7
        %v7335 = vsub.s32 %v7332, %v7334
        %v7336 = vrot.slane %v7322, %v7335
        %v7337 = vcombine.low %v7272, %v7288
        %v7338 = vcombine.high %v7272, %v7288
        %v7340 = vunpack.c.l.s4 1934713408
        %v7341 = vunpack.c.0.s8 %v7340
        %v7342 = vlaneseq
        %v7343 = vshrl.u32 %v7342, 7
        %v7344 = vsub.s32 %v7341, %v7343
        %v7345 = vrot.slane %v7337, %v7344
        %v7347 = vunpack.c.l.s4 1934713408
        %v7348 = vunpack.c.0.s8 %v7347
        %v7349 = vlaneseq
        %v7350 = vshrl.u32 %v7349, 7
        %v7351 = vsub.s32 %v7348, %v7350
        %v7352 = vrot.slane %v7338, %v7351
        %v7353 = vcombine.low %v7297, %v7329
        %v7354 = vcombine.high %v7297, %v7329
        %v7355 = vcombine.low %v7304, %v7336
        %v7356 = vcombine.high %v7304, %v7336
        %v7357 = vcombine.low %v7313, %v7345
        %v7358 = vcombine.high %v7313, %v7345
        %v7359 = vcombine.low %v7320, %v7352
        %v7360 = vcombine.high %v7320, %v7352
        %v7361 = vcombine.low %v7046, %v7054
        %v7362 = vcombine.high %v7046, %v7054
        %v7364 = vunpack.c.l.s4 1983009808
        %v7365 = vunpack.c.0.s8 %v7364
        %v7366 = vlaneseq
        %v7367 = vshrl.u32 %v7366, 7
        %v7368 = vsub.s32 %v7365, %v7367
        %v7369 = vrot.slane %v7361, %v7368
        %v7371 = vunpack.c.l.s4 1983009808
        %v7372 = vunpack.c.0.s8 %v7371
        %v7373 = vlaneseq
        %v7374 = vshrl.u32 %v7373, 7
        %v7375 = vsub.s32 %v7372, %v7374
        %v7376 = vrot.slane %v7362, %v7375
        %v7377 = vcombine.low %v7050, %v7058
        %v7378 = vcombine.high %v7050, %v7058
        %v7380 = vunpack.c.l.s4 1983009808
        %v7381 = vunpack.c.0.s8 %v7380
        %v7382 = vlaneseq
        %v7383 = vshrl.u32 %v7382, 7
        %v7384 = vsub.s32 %v7381, %v7383
        %v7385 = vrot.slane %v7377, %v7384
        %v7387 = vunpack.c.l.s4 1983009808
        %v7388 = vunpack.c.0.s8 %v7387
        %v7389 = vlaneseq
        %v7390 = vshrl.u32 %v7389, 7
        %v7391 = vsub.s32 %v7388, %v7390
        %v7392 = vrot.slane %v7378, %v7391
        %v7393 = vcombine.low %v7075, %v7085
        %v7394 = vcombine.high %v7075, %v7085
        %v7396 = vunpack.c.l.s4 1983009808
        %v7397 = vunpack.c.0.s8 %v7396
        %v7398 = vlaneseq
        %v7399 = vshrl.u32 %v7398, 7
        %v7400 = vsub.s32 %v7397, %v7399
        %v7401 = vrot.slane %v7393, %v7400
        %v7403 = vunpack.c.l.s4 1983009808
        %v7404 = vunpack.c.0.s8 %v7403
        %v7405 = vlaneseq
        %v7406 = vshrl.u32 %v7405, 7
        %v7407 = vsub.s32 %v7404, %v7406
        %v7408 = vrot.slane %v7394, %v7407
        %v7409 = vcombine.low %v7080, %v7090
        %v7410 = vcombine.high %v7080, %v7090
        %v7412 = vunpack.c.l.s4 1983009808
        %v7413 = vunpack.c.0.s8 %v7412
        %v7414 = vlaneseq
        %v7415 = vshrl.u32 %v7414, 7
        %v7416 = vsub.s32 %v7413, %v7415
        %v7417 = vrot.slane %v7409, %v7416
        %v7419 = vunpack.c.l.s4 1983009808
        %v7420 = vunpack.c.0.s8 %v7419
        %v7421 = vlaneseq
        %v7422 = vshrl.u32 %v7421, 7
        %v7423 = vsub.s32 %v7420, %v7422
        %v7424 = vrot.slane %v7410, %v7423
        %v7425 = vcombine.low %v7369, %v7385
        %v7426 = vcombine.high %v7369, %v7385
        %v7428 = vunpack.c.l.s4 1934713408
        %v7429 = vunpack.c.0.s8 %v7428
        %v7430 = vlaneseq
        %v7431 = vshrl.u32 %v7430, 7
        %v7432 = vsub.s32 %v7429, %v7431
        %v7433 = vrot.slane %v7425, %v7432
        %v7435 = vunpack.c.l.s4 1934713408
        %v7436 = vunpack.c.0.s8 %v7435
        %v7437 = vlaneseq
        %v7438 = vshrl.u32 %v7437, 7
        %v7439 = vsub.s32 %v7436, %v7438
        %v7440 = vrot.slane %v7426, %v7439
        %v7441 = vcombine.low %v7376, %v7392
        %v7442 = vcombine.high %v7376, %v7392
        %v7444 = vunpack.c.l.s4 1934713408
        %v7445 = vunpack.c.0.s8 %v7444
        %v7446 = vlaneseq
        %v7447 = vshrl.u32 %v7446, 7
        %v7448 = vsub.s32 %v7445, %v7447
        %v7449 = vrot.slane %v7441, %v7448
        %v7451 = vunpack.c.l.s4 1934713408
        %v7452 = vunpack.c.0.s8 %v7451
        %v7453 = vlaneseq
        %v7454 = vshrl.u32 %v7453, 7
        %v7455 = vsub.s32 %v7452, %v7454
        %v7456 = vrot.slane %v7442, %v7455
        %v7457 = vcombine.low %v7401, %v7417
        %v7458 = vcombine.high %v7401, %v7417
        %v7460 = vunpack.c.l.s4 1934713408
        %v7461 = vunpack.c.0.s8 %v7460
        %v7462 = vlaneseq
        %v7463 = vshrl.u32 %v7462, 7
        %v7464 = vsub.s32 %v7461, %v7463
        %v7465 = vrot.slane %v7457, %v7464
        %v7467 = vunpack.c.l.s4 1934713408
        %v7468 = vunpack.c.0.s8 %v7467
        %v7469 = vlaneseq
        %v7470 = vshrl.u32 %v7469, 7
        %v7471 = vsub.s32 %v7468, %v7470
        %v7472 = vrot.slane %v7458, %v7471
        %v7473 = vcombine.low %v7408, %v7424
        %v7474 = vcombine.high %v7408, %v7424
        %v7476 = vunpack.c.l.s4 1934713408
        %v7477 = vunpack.c.0.s8 %v7476
        %v7478 = vlaneseq
        %v7479 = vshrl.u32 %v7478, 7
        %v7480 = vsub.s32 %v7477, %v7479
        %v7481 = vrot.slane %v7473, %v7480
        %v7483 = vunpack.c.l.s4 1934713408
        %v7484 = vunpack.c.0.s8 %v7483
        %v7485 = vlaneseq
        %v7486 = vshrl.u32 %v7485, 7
        %v7487 = vsub.s32 %v7484, %v7486
        %v7488 = vrot.slane %v7474, %v7487
        %v7489 = vcombine.low %v7433, %v7465
        %v7490 = vcombine.high %v7433, %v7465
        %v7491 = vcombine.low %v7440, %v7472
        %v7492 = vcombine.high %v7440, %v7472
        %v7493 = vcombine.low %v7449, %v7481
        %v7494 = vcombine.high %v7449, %v7481
        %v7495 = vcombine.low %v7456, %v7488
        %v7496 = vcombine.high %v7456, %v7488
        %v7497 = vcombine.low %v7102, %v7110
        %v7498 = vcombine.high %v7102, %v7110
        %v7500 = vunpack.c.l.s4 1983009808
        %v7501 = vunpack.c.0.s8 %v7500
        %v7502 = vlaneseq
        %v7503 = vshrl.u32 %v7502, 7
        %v7504 = vsub.s32 %v7501, %v7503
        %v7505 = vrot.slane %v7497, %v7504
        %v7507 = vunpack.c.l.s4 1983009808
        %v7508 = vunpack.c.0.s8 %v7507
        %v7509 = vlaneseq
        %v7510 = vshrl.u32 %v7509, 7
        %v7511 = vsub.s32 %v7508, %v7510
        %v7512 = vrot.slane %v7498, %v7511
        %v7513 = vcombine.low %v7106, %v7114
        %v7514 = vcombine.high %v7106, %v7114
        %v7516 = vunpack.c.l.s4 1983009808
        %v7517 = vunpack.c.0.s8 %v7516
        %v7518 = vlaneseq
        %v7519 = vshrl.u32 %v7518, 7
        %v7520 = vsub.s32 %v7517, %v7519
        %v7521 = vrot.slane %v7513, %v7520
        %v7523 = vunpack.c.l.s4 1983009808
        %v7524 = vunpack.c.0.s8 %v7523
        %v7525 = vlaneseq
        %v7526 = vshrl.u32 %v7525, 7
        %v7527 = vsub.s32 %v7524, %v7526
        %v7528 = vrot.slane %v7514, %v7527
        %v7529 = vcombine.low %v7126, %v7134
        %v7530 = vcombine.high %v7126, %v7134
        %v7532 = vunpack.c.l.s4 1983009808
        %v7533 = vunpack.c.0.s8 %v7532
        %v7534 = vlaneseq
        %v7535 = vshrl.u32 %v7534, 7
        %v7536 = vsub.s32 %v7533, %v7535
        %v7537 = vrot.slane %v7529, %v7536
        %v7539 = vunpack.c.l.s4 1983009808
        %v7540 = vunpack.c.0.s8 %v7539
        %v7541 = vlaneseq
        %v7542 = vshrl.u32 %v7541, 7
        %v7543 = vsub.s32 %v7540, %v7542
        %v7544 = vrot.slane %v7530, %v7543
        %v7545 = vcombine.low %v7130, %v7138
        %v7546 = vcombine.high %v7130, %v7138
        %v7548 = vunpack.c.l.s4 1983009808
        %v7549 = vunpack.c.0.s8 %v7548
        %v7550 = vlaneseq
        %v7551 = vshrl.u32 %v7550, 7
        %v7552 = vsub.s32 %v7549, %v7551
        %v7553 = vrot.slane %v7545, %v7552
        %v7555 = vunpack.c.l.s4 1983009808
        %v7556 = vunpack.c.0.s8 %v7555
        %v7557 = vlaneseq
        %v7558 = vshrl.u32 %v7557, 7
        %v7559 = vsub.s32 %v7556, %v7558
        %v7560 = vrot.slane %v7546, %v7559
        %v7561 = vcombine.low %v7505, %v7521
        %v7562 = vcombine.high %v7505, %v7521
        %v7564 = vunpack.c.l.s4 1934713408
        %v7565 = vunpack.c.0.s8 %v7564
        %v7566 = vlaneseq
        %v7567 = vshrl.u32 %v7566, 7
        %v7568 = vsub.s32 %v7565, %v7567
        %v7569 = vrot.slane %v7561, %v7568
        %v7571 = vunpack.c.l.s4 1934713408
        %v7572 = vunpack.c.0.s8 %v7571
        %v7573 = vlaneseq
        %v7574 = vshrl.u32 %v7573, 7
        %v7575 = vsub.s32 %v7572, %v7574
        %v7576 = vrot.slane %v7562, %v7575
        %v7577 = vcombine.low %v7512, %v7528
        %v7578 = vcombine.high %v7512, %v7528
        %v7580 = vunpack.c.l.s4 1934713408
        %v7581 = vunpack.c.0.s8 %v7580
        %v7582 = vlaneseq
        %v7583 = vshrl.u32 %v7582, 7
        %v7584 = vsub.s32 %v7581, %v7583
        %v7585 = vrot.slane %v7577, %v7584
        %v7587 = vunpack.c.l.s4 1934713408
        %v7588 = vunpack.c.0.s8 %v7587
        %v7589 = vlaneseq
        %v7590 = vshrl.u32 %v7589, 7
        %v7591 = vsub.s32 %v7588, %v7590
        %v7592 = vrot.slane %v7578, %v7591
        %v7593 = vcombine.low %v7537, %v7553
        %v7594 = vcombine.high %v7537, %v7553
        %v7596 = vunpack.c.l.s4 1934713408
        %v7597 = vunpack.c.0.s8 %v7596
        %v7598 = vlaneseq
        %v7599 = vshrl.u32 %v7598, 7
        %v7600 = vsub.s32 %v7597, %v7599
        %v7601 = vrot.slane %v7593, %v7600
        %v7603 = vunpack.c.l.s4 1934713408
        %v7604 = vunpack.c.0.s8 %v7603
        %v7605 = vlaneseq
        %v7606 = vshrl.u32 %v7605, 7
        %v7607 = vsub.s32 %v7604, %v7606
        %v7608 = vrot.slane %v7594, %v7607
        %v7609 = vcombine.low %v7544, %v7560
        %v7610 = vcombine.high %v7544, %v7560
        %v7612 = vunpack.c.l.s4 1934713408
        %v7613 = vunpack.c.0.s8 %v7612
        %v7614 = vlaneseq
        %v7615 = vshrl.u32 %v7614, 7
        %v7616 = vsub.s32 %v7613, %v7615
        %v7617 = vrot.slane %v7609, %v7616
        %v7619 = vunpack.c.l.s4 1934713408
        %v7620 = vunpack.c.0.s8 %v7619
        %v7621 = vlaneseq
        %v7622 = vshrl.u32 %v7621, 7
        %v7623 = vsub.s32 %v7620, %v7622
        %v7624 = vrot.slane %v7610, %v7623
        %v7625 = vcombine.low %v7569, %v7601
        %v7626 = vcombine.high %v7569, %v7601
        %v7627 = vcombine.low %v7576, %v7608
        %v7628 = vcombine.high %v7576, %v7608
        %v7629 = vcombine.low %v7585, %v7617
        %v7630 = vcombine.high %v7585, %v7617
        %v7631 = vcombine.low %v7592, %v7624
        %v7632 = vcombine.high %v7592, %v7624
        %v7633 = vcombine.low %v7151, %v7161
        %v7634 = vcombine.high %v7151, %v7161
        %v7636 = vunpack.c.l.s4 1983009808
        %v7637 = vunpack.c.0.s8 %v7636
        %v7638 = vlaneseq
        %v7639 = vshrl.u32 %v7638, 7
        %v7640 = vsub.s32 %v7637, %v7639
        %v7641 = vrot.slane %v7633, %v7640
        %v7643 = vunpack.c.l.s4 1983009808
        %v7644 = vunpack.c.0.s8 %v7643
        %v7645 = vlaneseq
        %v7646 = vshrl.u32 %v7645, 7
        %v7647 = vsub.s32 %v7644, %v7646
        %v7648 = vrot.slane %v7634, %v7647
        %v7649 = vcombine.low %v7156, %v7166
        %v7650 = vcombine.high %v7156, %v7166
        %v7652 = vunpack.c.l.s4 1983009808
        %v7653 = vunpack.c.0.s8 %v7652
        %v7654 = vlaneseq
        %v7655 = vshrl.u32 %v7654, 7
        %v7656 = vsub.s32 %v7653, %v7655
        %v7657 = vrot.slane %v7649, %v7656
        %v7659 = vunpack.c.l.s4 1983009808
        %v7660 = vunpack.c.0.s8 %v7659
        %v7661 = vlaneseq
        %v7662 = vshrl.u32 %v7661, 7
        %v7663 = vsub.s32 %v7660, %v7662
        %v7664 = vrot.slane %v7650, %v7663
        %v7665 = vcombine.low %v7178, %v7186
        %v7666 = vcombine.high %v7178, %v7186
        %v7668 = vunpack.c.l.s4 1983009808
        %v7669 = vunpack.c.0.s8 %v7668
        %v7670 = vlaneseq
        %v7671 = vshrl.u32 %v7670, 7
        %v7672 = vsub.s32 %v7669, %v7671
        %v7673 = vrot.slane %v7665, %v7672
        %v7675 = vunpack.c.l.s4 1983009808
        %v7676 = vunpack.c.0.s8 %v7675
        %v7677 = vlaneseq
        %v7678 = vshrl.u32 %v7677, 7
        %v7679 = vsub.s32 %v7676, %v7678
        %v7680 = vrot.slane %v7666, %v7679
        %v7681 = vcombine.low %v7182, %v7190
        %v7682 = vcombine.high %v7182, %v7190
        %v7684 = vunpack.c.l.s4 1983009808
        %v7685 = vunpack.c.0.s8 %v7684
        %v7686 = vlaneseq
        %v7687 = vshrl.u32 %v7686, 7
        %v7688 = vsub.s32 %v7685, %v7687
        %v7689 = vrot.slane %v7681, %v7688
        %v7691 = vunpack.c.l.s4 1983009808
        %v7692 = vunpack.c.0.s8 %v7691
        %v7693 = vlaneseq
        %v7694 = vshrl.u32 %v7693, 7
        %v7695 = vsub.s32 %v7692, %v7694
        %v7696 = vrot.slane %v7682, %v7695
        %v7697 = vcombine.low %v7641, %v7657
        %v7698 = vcombine.high %v7641, %v7657
        %v7700 = vunpack.c.l.s4 1934713408
        %v7701 = vunpack.c.0.s8 %v7700
        %v7702 = vlaneseq
        %v7703 = vshrl.u32 %v7702, 7
        %v7704 = vsub.s32 %v7701, %v7703
        %v7705 = vrot.slane %v7697, %v7704
        %v7707 = vunpack.c.l.s4 1934713408
        %v7708 = vunpack.c.0.s8 %v7707
        %v7709 = vlaneseq
        %v7710 = vshrl.u32 %v7709, 7
        %v7711 = vsub.s32 %v7708, %v7710
        %v7712 = vrot.slane %v7698, %v7711
        %v7713 = vcombine.low %v7648, %v7664
        %v7714 = vcombine.high %v7648, %v7664
        %v7716 = vunpack.c.l.s4 1934713408
        %v7717 = vunpack.c.0.s8 %v7716
        %v7718 = vlaneseq
        %v7719 = vshrl.u32 %v7718, 7
        %v7720 = vsub.s32 %v7717, %v7719
        %v7721 = vrot.slane %v7713, %v7720
        %v7723 = vunpack.c.l.s4 1934713408
        %v7724 = vunpack.c.0.s8 %v7723
        %v7725 = vlaneseq
        %v7726 = vshrl.u32 %v7725, 7
        %v7727 = vsub.s32 %v7724, %v7726
        %v7728 = vrot.slane %v7714, %v7727
        %v7729 = vcombine.low %v7673, %v7689
        %v7730 = vcombine.high %v7673, %v7689
        %v7732 = vunpack.c.l.s4 1934713408
        %v7733 = vunpack.c.0.s8 %v7732
        %v7734 = vlaneseq
        %v7735 = vshrl.u32 %v7734, 7
        %v7736 = vsub.s32 %v7733, %v7735
        %v7737 = vrot.slane %v7729, %v7736
        %v7739 = vunpack.c.l.s4 1934713408
        %v7740 = vunpack.c.0.s8 %v7739
        %v7741 = vlaneseq
        %v7742 = vshrl.u32 %v7741, 7
        %v7743 = vsub.s32 %v7740, %v7742
        %v7744 = vrot.slane %v7730, %v7743
        %v7745 = vcombine.low %v7680, %v7696
        %v7746 = vcombine.high %v7680, %v7696
        %v7748 = vunpack.c.l.s4 1934713408
        %v7749 = vunpack.c.0.s8 %v7748
        %v7750 = vlaneseq
        %v7751 = vshrl.u32 %v7750, 7
        %v7752 = vsub.s32 %v7749, %v7751
        %v7753 = vrot.slane %v7745, %v7752
        %v7755 = vunpack.c.l.s4 1934713408
        %v7756 = vunpack.c.0.s8 %v7755
        %v7757 = vlaneseq
        %v7758 = vshrl.u32 %v7757, 7
        %v7759 = vsub.s32 %v7756, %v7758
        %v7760 = vrot.slane %v7746, %v7759
        %v7761 = vcombine.low %v7705, %v7737
        %v7762 = vcombine.high %v7705, %v7737
        %v7763 = vcombine.low %v7712, %v7744
        %v7764 = vcombine.high %v7712, %v7744
        %v7765 = vcombine.low %v7721, %v7753
        %v7766 = vcombine.high %v7721, %v7753
        %v7767 = vcombine.low %v7728, %v7760
        %v7768 = vcombine.high %v7728, %v7760
        %v7769 = vcombine.low %v7202, %v7210
        %v7770 = vcombine.high %v7202, %v7210
        %v7772 = vunpack.c.l.s4 1983009808
        %v7773 = vunpack.c.0.s8 %v7772
        %v7774 = vlaneseq
        %v7775 = vshrl.u32 %v7774, 7
        %v7776 = vsub.s32 %v7773, %v7775
        %v7777 = vrot.slane %v7769, %v7776
        %v7779 = vunpack.c.l.s4 1983009808
        %v7780 = vunpack.c.0.s8 %v7779
        %v7781 = vlaneseq
        %v7782 = vshrl.u32 %v7781, 7
        %v7783 = vsub.s32 %v7780, %v7782
        %v7784 = vrot.slane %v7770, %v7783
        %v7785 = vcombine.low %v7206, %v7214
        %v7786 = vcombine.high %v7206, %v7214
        %v7788 = vunpack.c.l.s4 1983009808
        %v7789 = vunpack.c.0.s8 %v7788
        %v7790 = vlaneseq
        %v7791 = vshrl.u32 %v7790, 7
        %v7792 = vsub.s32 %v7789, %v7791
        %v7793 = vrot.slane %v7785, %v7792
        %v7795 = vunpack.c.l.s4 1983009808
        %v7796 = vunpack.c.0.s8 %v7795
        %v7797 = vlaneseq
        %v7798 = vshrl.u32 %v7797, 7
        %v7799 = vsub.s32 %v7796, %v7798
        %v7800 = vrot.slane %v7786, %v7799
        %v7801 = vcombine.low %v7777, %v7793
        %v7802 = vcombine.high %v7777, %v7793
        %v7804 = vunpack.c.l.s4 1934713408
        %v7805 = vunpack.c.0.s8 %v7804
        %v7806 = vlaneseq
        %v7807 = vshrl.u32 %v7806, 7
        %v7808 = vsub.s32 %v7805, %v7807
        %v7809 = vrot.slane %v7801, %v7808
        %v7811 = vunpack.c.l.s4 1934713408
        %v7812 = vunpack.c.0.s8 %v7811
        %v7813 = vlaneseq
        %v7814 = vshrl.u32 %v7813, 7
        %v7815 = vsub.s32 %v7812, %v7814
        %v7816 = vrot.slane %v7802, %v7815
        %v7817 = vcombine.low %v7784, %v7800
        %v7818 = vcombine.high %v7784, %v7800
        %v7820 = vunpack.c.l.s4 1934713408
        %v7821 = vunpack.c.0.s8 %v7820
        %v7822 = vlaneseq
        %v7823 = vshrl.u32 %v7822, 7
        %v7824 = vsub.s32 %v7821, %v7823
        %v7825 = vrot.slane %v7817, %v7824
        %v7827 = vunpack.c.l.s4 1934713408
        %v7828 = vunpack.c.0.s8 %v7827
        %v7829 = vlaneseq
        %v7830 = vshrl.u32 %v7829, 7
        %v7831 = vsub.s32 %v7828, %v7830
        %v7832 = vrot.slane %v7818, %v7831
        %v7833 = vcombine.high %v7809, 0.0
        %v7834 = vcombine.high %v7816, 0.0
        %v7835 = vcombine.high %v7825, 0.0
        %v7836 = vcombine.high %v7832, 0.0
        %v7837 = vcombine.low %v7002, %v7008
        %v7838 = vcombine.high %v7002, %v7008
        %v7840 = vunpack.c.l.s4 1983009808
        %v7841 = vunpack.c.0.s8 %v7840
        %v7842 = vlaneseq
        %v7843 = vshrl.u32 %v7842, 7
        %v7844 = vsub.s32 %v7841, %v7843
        %v7845 = vrot.slane %v7837, %v7844
        %v7847 = vunpack.c.l.s4 1983009808
        %v7848 = vunpack.c.0.s8 %v7847
        %v7849 = vlaneseq
        %v7850 = vshrl.u32 %v7849, 7
        %v7851 = vsub.s32 %v7848, %v7850
        %v7852 = vrot.slane %v7838, %v7851
        %v7853 = vcombine.low %v7005, %v7011
        %v7854 = vcombine.high %v7005, %v7011
        %v7856 = vunpack.c.l.s4 1983009808
        %v7857 = vunpack.c.0.s8 %v7856
        %v7858 = vlaneseq
        %v7859 = vshrl.u32 %v7858, 7
        %v7860 = vsub.s32 %v7857, %v7859
        %v7861 = vrot.slane %v7853, %v7860
        %v7863 = vunpack.c.l.s4 1983009808
        %v7864 = vunpack.c.0.s8 %v7863
        %v7865 = vlaneseq
        %v7866 = vshrl.u32 %v7865, 7
        %v7867 = vsub.s32 %v7864, %v7866
        %v7868 = vrot.slane %v7854, %v7867
        %v7869 = vcombine.low %v7024, %v7032
        %v7870 = vcombine.high %v7024, %v7032
        %v7872 = vunpack.c.l.s4 1983009808
        %v7873 = vunpack.c.0.s8 %v7872
        %v7874 = vlaneseq
        %v7875 = vshrl.u32 %v7874, 7
        %v7876 = vsub.s32 %v7873, %v7875
        %v7877 = vrot.slane %v7869, %v7876
        %v7879 = vunpack.c.l.s4 1983009808
        %v7880 = vunpack.c.0.s8 %v7879
        %v7881 = vlaneseq
        %v7882 = vshrl.u32 %v7881, 7
        %v7883 = vsub.s32 %v7880, %v7882
        %v7884 = vrot.slane %v7870, %v7883
        %v7885 = vcombine.low %v7028, %v7036
        %v7886 = vcombine.high %v7028, %v7036
        %v7888 = vunpack.c.l.s4 1983009808
        %v7889 = vunpack.c.0.s8 %v7888
        %v7890 = vlaneseq
        %v7891 = vshrl.u32 %v7890, 7
        %v7892 = vsub.s32 %v7889, %v7891
        %v7893 = vrot.slane %v7885, %v7892
        %v7895 = vunpack.c.l.s4 1983009808
        %v7896 = vunpack.c.0.s8 %v7895
        %v7897 = vlaneseq
        %v7898 = vshrl.u32 %v7897, 7
        %v7899 = vsub.s32 %v7896, %v7898
        %v7900 = vrot.slane %v7886, %v7899
        %v7901 = vcombine.low %v7845, %v7861
        %v7902 = vcombine.high %v7845, %v7861
        %v7904 = vunpack.c.l.s4 1934713408
        %v7905 = vunpack.c.0.s8 %v7904
        %v7906 = vlaneseq
        %v7907 = vshrl.u32 %v7906, 7
        %v7908 = vsub.s32 %v7905, %v7907
        %v7909 = vrot.slane %v7901, %v7908
        %v7911 = vunpack.c.l.s4 1934713408
        %v7912 = vunpack.c.0.s8 %v7911
        %v7913 = vlaneseq
        %v7914 = vshrl.u32 %v7913, 7
        %v7915 = vsub.s32 %v7912, %v7914
        %v7916 = vrot.slane %v7902, %v7915
        %v7917 = vcombine.low %v7852, %v7868
        %v7918 = vcombine.high %v7852, %v7868
        %v7920 = vunpack.c.l.s4 1934713408
        %v7921 = vunpack.c.0.s8 %v7920
        %v7922 = vlaneseq
        %v7923 = vshrl.u32 %v7922, 7
        %v7924 = vsub.s32 %v7921, %v7923
        %v7925 = vrot.slane %v7917, %v7924
        %v7927 = vunpack.c.l.s4 1934713408
        %v7928 = vunpack.c.0.s8 %v7927
        %v7929 = vlaneseq
        %v7930 = vshrl.u32 %v7929, 7
        %v7931 = vsub.s32 %v7928, %v7930
        %v7932 = vrot.slane %v7918, %v7931
        %v7933 = vcombine.low %v7877, %v7893
        %v7934 = vcombine.high %v7877, %v7893
        %v7936 = vunpack.c.l.s4 1934713408
        %v7937 = vunpack.c.0.s8 %v7936
        %v7938 = vlaneseq
        %v7939 = vshrl.u32 %v7938, 7
        %v7940 = vsub.s32 %v7937, %v7939
        %v7941 = vrot.slane %v7933, %v7940
        %v7943 = vunpack.c.l.s4 1934713408
        %v7944 = vunpack.c.0.s8 %v7943
        %v7945 = vlaneseq
        %v7946 = vshrl.u32 %v7945, 7
        %v7947 = vsub.s32 %v7944, %v7946
        %v7948 = vrot.slane %v7934, %v7947
        %v7949 = vcombine.low %v7884, %v7900
        %v7950 = vcombine.high %v7884, %v7900
        %v7952 = vunpack.c.l.s4 1934713408
        %v7953 = vunpack.c.0.s8 %v7952
        %v7954 = vlaneseq
        %v7955 = vshrl.u32 %v7954, 7
        %v7956 = vsub.s32 %v7953, %v7955
        %v7957 = vrot.slane %v7949, %v7956
        %v7959 = vunpack.c.l.s4 1934713408
        %v7960 = vunpack.c.0.s8 %v7959
        %v7961 = vlaneseq
        %v7962 = vshrl.u32 %v7961, 7
        %v7963 = vsub.s32 %v7960, %v7962
        %v7964 = vrot.slane %v7950, %v7963
        %v7965 = vcombine.low %v7909, %v7941
        %v7966 = vcombine.high %v7909, %v7941
        %v7967 = vcombine.low %v7916, %v7948
        %v7968 = vcombine.high %v7916, %v7948
        %v7969 = vcombine.low %v7925, %v7957
        %v7970 = vcombine.high %v7925, %v7957
        %v7971 = vcombine.low %v7932, %v7964
        %v7972 = vcombine.high %v7932, %v7964
        %v7973 = vcombine.low %v7048, %v7056
        %v7974 = vcombine.high %v7048, %v7056
        %v7976 = vunpack.c.l.s4 1983009808
        %v7977 = vunpack.c.0.s8 %v7976
        %v7978 = vlaneseq
        %v7979 = vshrl.u32 %v7978, 7
        %v7980 = vsub.s32 %v7977, %v7979
        %v7981 = vrot.slane %v7973, %v7980
        %v7983 = vunpack.c.l.s4 1983009808
        %v7984 = vunpack.c.0.s8 %v7983
        %v7985 = vlaneseq
        %v7986 = vshrl.u32 %v7985, 7
        %v7987 = vsub.s32 %v7984, %v7986
        %v7988 = vrot.slane %v7974, %v7987
        %v7989 = vcombine.low %v7052, %v7060
        %v7990 = vcombine.high %v7052, %v7060
        %v7992 = vunpack.c.l.s4 1983009808
        %v7993 = vunpack.c.0.s8 %v7992
        %v7994 = vlaneseq
        %v7995 = vshrl.u32 %v7994, 7
        %v7996 = vsub.s32 %v7993, %v7995
        %v7997 = vrot.slane %v7989, %v7996
        %v7999 = vunpack.c.l.s4 1983009808
        %v8000 = vunpack.c.0.s8 %v7999
        %v8001 = vlaneseq
        %v8002 = vshrl.u32 %v8001, 7
        %v8003 = vsub.s32 %v8000, %v8002
        %v8004 = vrot.slane %v7990, %v8003
        %v8005 = vcombine.low %v7077, %v7087
        %v8006 = vcombine.high %v7077, %v7087
        %v8008 = vunpack.c.l.s4 1983009808
        %v8009 = vunpack.c.0.s8 %v8008
        %v8010 = vlaneseq
        %v8011 = vshrl.u32 %v8010, 7
        %v8012 = vsub.s32 %v8009, %v8011
        %v8013 = vrot.slane %v8005, %v8012
        %v8015 = vunpack.c.l.s4 1983009808
        %v8016 = vunpack.c.0.s8 %v8015
        %v8017 = vlaneseq
        %v8018 = vshrl.u32 %v8017, 7
        %v8019 = vsub.s32 %v8016, %v8018
        %v8020 = vrot.slane %v8006, %v8019
        %v8021 = vcombine.low %v7082, %v7092
        %v8022 = vcombine.high %v7082, %v7092
        %v8024 = vunpack.c.l.s4 1983009808
        %v8025 = vunpack.c.0.s8 %v8024
        %v8026 = vlaneseq
        %v8027 = vshrl.u32 %v8026, 7
        %v8028 = vsub.s32 %v8025, %v8027
        %v8029 = vrot.slane %v8021, %v8028
        %v8031 = vunpack.c.l.s4 1983009808
        %v8032 = vunpack.c.0.s8 %v8031
        %v8033 = vlaneseq
        %v8034 = vshrl.u32 %v8033, 7
        %v8035 = vsub.s32 %v8032, %v8034
        %v8036 = vrot.slane %v8022, %v8035
        %v8037 = vcombine.low %v7981, %v7997
        %v8038 = vcombine.high %v7981, %v7997
        %v8040 = vunpack.c.l.s4 1934713408
        %v8041 = vunpack.c.0.s8 %v8040
        %v8042 = vlaneseq
        %v8043 = vshrl.u32 %v8042, 7
        %v8044 = vsub.s32 %v8041, %v8043
        %v8045 = vrot.slane %v8037, %v8044
        %v8047 = vunpack.c.l.s4 1934713408
        %v8048 = vunpack.c.0.s8 %v8047
        %v8049 = vlaneseq
        %v8050 = vshrl.u32 %v8049, 7
        %v8051 = vsub.s32 %v8048, %v8050
        %v8052 = vrot.slane %v8038, %v8051
        %v8053 = vcombine.low %v7988, %v8004
        %v8054 = vcombine.high %v7988, %v8004
        %v8056 = vunpack.c.l.s4 1934713408
        %v8057 = vunpack.c.0.s8 %v8056
        %v8058 = vlaneseq
        %v8059 = vshrl.u32 %v8058, 7
        %v8060 = vsub.s32 %v8057, %v8059
        %v8061 = vrot.slane %v8053, %v8060
        %v8063 = vunpack.c.l.s4 1934713408
        %v8064 = vunpack.c.0.s8 %v8063
        %v8065 = vlaneseq
        %v8066 = vshrl.u32 %v8065, 7
        %v8067 = vsub.s32 %v8064, %v8066
        %v8068 = vrot.slane %v8054, %v8067
        %v8069 = vcombine.low %v8013, %v8029
        %v8070 = vcombine.high %v8013, %v8029
        %v8072 = vunpack.c.l.s4 1934713408
        %v8073 = vunpack.c.0.s8 %v8072
        %v8074 = vlaneseq
        %v8075 = vshrl.u32 %v8074, 7
        %v8076 = vsub.s32 %v8073, %v8075
        %v8077 = vrot.slane %v8069, %v8076
        %v8079 = vunpack.c.l.s4 1934713408
        %v8080 = vunpack.c.0.s8 %v8079
        %v8081 = vlaneseq
        %v8082 = vshrl.u32 %v8081, 7
        %v8083 = vsub.s32 %v8080, %v8082
        %v8084 = vrot.slane %v8070, %v8083
        %v8085 = vcombine.low %v8020, %v8036
        %v8086 = vcombine.high %v8020, %v8036
        %v8088 = vunpack.c.l.s4 1934713408
        %v8089 = vunpack.c.0.s8 %v8088
        %v8090 = vlaneseq
        %v8091 = vshrl.u32 %v8090, 7
        %v8092 = vsub.s32 %v8089, %v8091
        %v8093 = vrot.slane %v8085, %v8092
        %v8095 = vunpack.c.l.s4 1934713408
        %v8096 = vunpack.c.0.s8 %v8095
        %v8097 = vlaneseq
        %v8098 = vshrl.u32 %v8097, 7
        %v8099 = vsub.s32 %v8096, %v8098
        %v8100 = vrot.slane %v8086, %v8099
        %v8101 = vcombine.low %v8045, %v8077
        %v8102 = vcombine.high %v8045, %v8077
        %v8103 = vcombine.low %v8052, %v8084
        %v8104 = vcombine.high %v8052, %v8084
        %v8105 = vcombine.low %v8061, %v8093
        %v8106 = vcombine.high %v8061, %v8093
        %v8107 = vcombine.low %v8068, %v8100
        %v8108 = vcombine.high %v8068, %v8100
        %v8109 = vcombine.low %v7104, %v7112
        %v8110 = vcombine.high %v7104, %v7112
        %v8112 = vunpack.c.l.s4 1983009808
        %v8113 = vunpack.c.0.s8 %v8112
        %v8114 = vlaneseq
        %v8115 = vshrl.u32 %v8114, 7
        %v8116 = vsub.s32 %v8113, %v8115
        %v8117 = vrot.slane %v8109, %v8116
        %v8119 = vunpack.c.l.s4 1983009808
        %v8120 = vunpack.c.0.s8 %v8119
        %v8121 = vlaneseq
        %v8122 = vshrl.u32 %v8121, 7
        %v8123 = vsub.s32 %v8120, %v8122
        %v8124 = vrot.slane %v8110, %v8123
        %v8125 = vcombine.low %v7108, %v7116
        %v8126 = vcombine.high %v7108, %v7116
        %v8128 = vunpack.c.l.s4 1983009808
        %v8129 = vunpack.c.0.s8 %v8128
        %v8130 = vlaneseq
        %v8131 = vshrl.u32 %v8130, 7
        %v8132 = vsub.s32 %v8129, %v8131
        %v8133 = vrot.slane %v8125, %v8132
        %v8135 = vunpack.c.l.s4 1983009808
        %v8136 = vunpack.c.0.s8 %v8135
        %v8137 = vlaneseq
        %v8138 = vshrl.u32 %v8137, 7
        %v8139 = vsub.s32 %v8136, %v8138
        %v8140 = vrot.slane %v8126, %v8139
        %v8141 = vcombine.low %v7128, %v7136
        %v8142 = vcombine.high %v7128, %v7136
        %v8144 = vunpack.c.l.s4 1983009808
        %v8145 = vunpack.c.0.s8 %v8144
        %v8146 = vlaneseq
        %v8147 = vshrl.u32 %v8146, 7
        %v8148 = vsub.s32 %v8145, %v8147
        %v8149 = vrot.slane %v8141, %v8148
        %v8151 = vunpack.c.l.s4 1983009808
        %v8152 = vunpack.c.0.s8 %v8151
        %v8153 = vlaneseq
        %v8154 = vshrl.u32 %v8153, 7
        %v8155 = vsub.s32 %v8152, %v8154
        %v8156 = vrot.slane %v8142, %v8155
        %v8157 = vcombine.low %v7132, %v7140
        %v8158 = vcombine.high %v7132, %v7140
        %v8160 = vunpack.c.l.s4 1983009808
        %v8161 = vunpack.c.0.s8 %v8160
        %v8162 = vlaneseq
        %v8163 = vshrl.u32 %v8162, 7
        %v8164 = vsub.s32 %v8161, %v8163
        %v8165 = vrot.slane %v8157, %v8164
        %v8167 = vunpack.c.l.s4 1983009808
        %v8168 = vunpack.c.0.s8 %v8167
        %v8169 = vlaneseq
        %v8170 = vshrl.u32 %v8169, 7
        %v8171 = vsub.s32 %v8168, %v8170
        %v8172 = vrot.slane %v8158, %v8171
        %v8173 = vcombine.low %v8117, %v8133
        %v8174 = vcombine.high %v8117, %v8133
        %v8176 = vunpack.c.l.s4 1934713408
        %v8177 = vunpack.c.0.s8 %v8176
        %v8178 = vlaneseq
        %v8179 = vshrl.u32 %v8178, 7
        %v8180 = vsub.s32 %v8177, %v8179
        %v8181 = vrot.slane %v8173, %v8180
        %v8183 = vunpack.c.l.s4 1934713408
        %v8184 = vunpack.c.0.s8 %v8183
        %v8185 = vlaneseq
        %v8186 = vshrl.u32 %v8185, 7
        %v8187 = vsub.s32 %v8184, %v8186
        %v8188 = vrot.slane %v8174, %v8187
        %v8189 = vcombine.low %v8124, %v8140
        %v8190 = vcombine.high %v8124, %v8140
        %v8192 = vunpack.c.l.s4 1934713408
        %v8193 = vunpack.c.0.s8 %v8192
        %v8194 = vlaneseq
        %v8195 = vshrl.u32 %v8194, 7
        %v8196 = vsub.s32 %v8193, %v8195
        %v8197 = vrot.slane %v8189, %v8196
        %v8199 = vunpack.c.l.s4 1934713408
        %v8200 = vunpack.c.0.s8 %v8199
        %v8201 = vlaneseq
        %v8202 = vshrl.u32 %v8201, 7
        %v8203 = vsub.s32 %v8200, %v8202
        %v8204 = vrot.slane %v8190, %v8203
        %v8205 = vcombine.low %v8149, %v8165
        %v8206 = vcombine.high %v8149, %v8165
        %v8208 = vunpack.c.l.s4 1934713408
        %v8209 = vunpack.c.0.s8 %v8208
        %v8210 = vlaneseq
        %v8211 = vshrl.u32 %v8210, 7
        %v8212 = vsub.s32 %v8209, %v8211
        %v8213 = vrot.slane %v8205, %v8212
        %v8215 = vunpack.c.l.s4 1934713408
        %v8216 = vunpack.c.0.s8 %v8215
        %v8217 = vlaneseq
        %v8218 = vshrl.u32 %v8217, 7
        %v8219 = vsub.s32 %v8216, %v8218
        %v8220 = vrot.slane %v8206, %v8219
        %v8221 = vcombine.low %v8156, %v8172
        %v8222 = vcombine.high %v8156, %v8172
        %v8224 = vunpack.c.l.s4 1934713408
        %v8225 = vunpack.c.0.s8 %v8224
        %v8226 = vlaneseq
        %v8227 = vshrl.u32 %v8226, 7
        %v8228 = vsub.s32 %v8225, %v8227
        %v8229 = vrot.slane %v8221, %v8228
        %v8231 = vunpack.c.l.s4 1934713408
        %v8232 = vunpack.c.0.s8 %v8231
        %v8233 = vlaneseq
        %v8234 = vshrl.u32 %v8233, 7
        %v8235 = vsub.s32 %v8232, %v8234
        %v8236 = vrot.slane %v8222, %v8235
        %v8237 = vcombine.low %v8181, %v8213
        %v8238 = vcombine.high %v8181, %v8213
        %v8239 = vcombine.low %v8188, %v8220
        %v8240 = vcombine.high %v8188, %v8220
        %v8241 = vcombine.low %v8197, %v8229
        %v8242 = vcombine.high %v8197, %v8229
        %v8243 = vcombine.low %v8204, %v8236
        %v8244 = vcombine.high %v8204, %v8236
        %v8245 = vcombine.low %v7153, %v7163
        %v8246 = vcombine.high %v7153, %v7163
        %v8248 = vunpack.c.l.s4 1983009808
        %v8249 = vunpack.c.0.s8 %v8248
        %v8250 = vlaneseq
        %v8251 = vshrl.u32 %v8250, 7
        %v8252 = vsub.s32 %v8249, %v8251
        %v8253 = vrot.slane %v8245, %v8252
        %v8255 = vunpack.c.l.s4 1983009808
        %v8256 = vunpack.c.0.s8 %v8255
        %v8257 = vlaneseq
        %v8258 = vshrl.u32 %v8257, 7
        %v8259 = vsub.s32 %v8256, %v8258
        %v8260 = vrot.slane %v8246, %v8259
        %v8261 = vcombine.low %v7158, %v7168
        %v8262 = vcombine.high %v7158, %v7168
        %v8264 = vunpack.c.l.s4 1983009808
        %v8265 = vunpack.c.0.s8 %v8264
        %v8266 = vlaneseq
        %v8267 = vshrl.u32 %v8266, 7
        %v8268 = vsub.s32 %v8265, %v8267
        %v8269 = vrot.slane %v8261, %v8268
        %v8271 = vunpack.c.l.s4 1983009808
        %v8272 = vunpack.c.0.s8 %v8271
        %v8273 = vlaneseq
        %v8274 = vshrl.u32 %v8273, 7
        %v8275 = vsub.s32 %v8272, %v8274
        %v8276 = vrot.slane %v8262, %v8275
        %v8277 = vcombine.low %v7180, %v7188
        %v8278 = vcombine.high %v7180, %v7188
        %v8280 = vunpack.c.l.s4 1983009808
        %v8281 = vunpack.c.0.s8 %v8280
        %v8282 = vlaneseq
        %v8283 = vshrl.u32 %v8282, 7
        %v8284 = vsub.s32 %v8281, %v8283
        %v8285 = vrot.slane %v8277, %v8284
        %v8287 = vunpack.c.l.s4 1983009808
        %v8288 = vunpack.c.0.s8 %v8287
        %v8289 = vlaneseq
        %v8290 = vshrl.u32 %v8289, 7
        %v8291 = vsub.s32 %v8288, %v8290
        %v8292 = vrot.slane %v8278, %v8291
        %v8293 = vcombine.low %v7184, %v7192
        %v8294 = vcombine.high %v7184, %v7192
        %v8296 = vunpack.c.l.s4 1983009808
        %v8297 = vunpack.c.0.s8 %v8296
        %v8298 = vlaneseq
        %v8299 = vshrl.u32 %v8298, 7
        %v8300 = vsub.s32 %v8297, %v8299
        %v8301 = vrot.slane %v8293, %v8300
        %v8303 = vunpack.c.l.s4 1983009808
        %v8304 = vunpack.c.0.s8 %v8303
        %v8305 = vlaneseq
        %v8306 = vshrl.u32 %v8305, 7
        %v8307 = vsub.s32 %v8304, %v8306
        %v8308 = vrot.slane %v8294, %v8307
        %v8309 = vcombine.low %v8253, %v8269
        %v8310 = vcombine.high %v8253, %v8269
        %v8312 = vunpack.c.l.s4 1934713408
        %v8313 = vunpack.c.0.s8 %v8312
        %v8314 = vlaneseq
        %v8315 = vshrl.u32 %v8314, 7
        %v8316 = vsub.s32 %v8313, %v8315
        %v8317 = vrot.slane %v8309, %v8316
        %v8319 = vunpack.c.l.s4 1934713408
        %v8320 = vunpack.c.0.s8 %v8319
        %v8321 = vlaneseq
        %v8322 = vshrl.u32 %v8321, 7
        %v8323 = vsub.s32 %v8320, %v8322
        %v8324 = vrot.slane %v8310, %v8323
        %v8325 = vcombine.low %v8260, %v8276
        %v8326 = vcombine.high %v8260, %v8276
        %v8328 = vunpack.c.l.s4 1934713408
        %v8329 = vunpack.c.0.s8 %v8328
        %v8330 = vlaneseq
        %v8331 = vshrl.u32 %v8330, 7
        %v8332 = vsub.s32 %v8329, %v8331
        %v8333 = vrot.slane %v8325, %v8332
        %v8335 = vunpack.c.l.s4 1934713408
        %v8336 = vunpack.c.0.s8 %v8335
        %v8337 = vlaneseq
        %v8338 = vshrl.u32 %v8337, 7
        %v8339 = vsub.s32 %v8336, %v8338
        %v8340 = vrot.slane %v8326, %v8339
        %v8341 = vcombine.low %v8285, %v8301
        %v8342 = vcombine.high %v8285, %v8301
        %v8344 = vunpack.c.l.s4 1934713408
        %v8345 = vunpack.c.0.s8 %v8344
        %v8346 = vlaneseq
        %v8347 = vshrl.u32 %v8346, 7
        %v8348 = vsub.s32 %v8345, %v8347
        %v8349 = vrot.slane %v8341, %v8348
        %v8351 = vunpack.c.l.s4 1934713408
        %v8352 = vunpack.c.0.s8 %v8351
        %v8353 = vlaneseq
        %v8354 = vshrl.u32 %v8353, 7
        %v8355 = vsub.s32 %v8352, %v8354
        %v8356 = vrot.slane %v8342, %v8355
        %v8357 = vcombine.low %v8292, %v8308
        %v8358 = vcombine.high %v8292, %v8308
        %v8360 = vunpack.c.l.s4 1934713408
        %v8361 = vunpack.c.0.s8 %v8360
        %v8362 = vlaneseq
        %v8363 = vshrl.u32 %v8362, 7
        %v8364 = vsub.s32 %v8361, %v8363
        %v8365 = vrot.slane %v8357, %v8364
        %v8367 = vunpack.c.l.s4 1934713408
        %v8368 = vunpack.c.0.s8 %v8367
        %v8369 = vlaneseq
        %v8370 = vshrl.u32 %v8369, 7
        %v8371 = vsub.s32 %v8368, %v8370
        %v8372 = vrot.slane %v8358, %v8371
        %v8373 = vcombine.low %v8317, %v8349
        %v8374 = vcombine.high %v8317, %v8349
        %v8375 = vcombine.low %v8324, %v8356
        %v8376 = vcombine.high %v8324, %v8356
        %v8377 = vcombine.low %v8333, %v8365
        %v8378 = vcombine.high %v8333, %v8365
        %v8379 = vcombine.low %v8340, %v8372
        %v8380 = vcombine.high %v8340, %v8372
        %v8381 = vcombine.low %v7204, %v7212
        %v8382 = vcombine.high %v7204, %v7212
        %v8384 = vunpack.c.l.s4 1983009808
        %v8385 = vunpack.c.0.s8 %v8384
        %v8386 = vlaneseq
        %v8387 = vshrl.u32 %v8386, 7
        %v8388 = vsub.s32 %v8385, %v8387
        %v8389 = vrot.slane %v8381, %v8388
        %v8391 = vunpack.c.l.s4 1983009808
        %v8392 = vunpack.c.0.s8 %v8391
        %v8393 = vlaneseq
        %v8394 = vshrl.u32 %v8393, 7
        %v8395 = vsub.s32 %v8392, %v8394
        %v8396 = vrot.slane %v8382, %v8395
        %v8397 = vcombine.low %v7208, %v7216
        %v8398 = vcombine.high %v7208, %v7216
        %v8400 = vunpack.c.l.s4 1983009808
        %v8401 = vunpack.c.0.s8 %v8400
        %v8402 = vlaneseq
        %v8403 = vshrl.u32 %v8402, 7
        %v8404 = vsub.s32 %v8401, %v8403
        %v8405 = vrot.slane %v8397, %v8404
        %v8407 = vunpack.c.l.s4 1983009808
        %v8408 = vunpack.c.0.s8 %v8407
        %v8409 = vlaneseq
        %v8410 = vshrl.u32 %v8409, 7
        %v8411 = vsub.s32 %v8408, %v8410
        %v8412 = vrot.slane %v8398, %v8411
        %v8413 = vcombine.low %v8389, %v8405
        %v8414 = vcombine.high %v8389, %v8405
        %v8416 = vunpack.c.l.s4 1934713408
        %v8417 = vunpack.c.0.s8 %v8416
        %v8418 = vlaneseq
        %v8419 = vshrl.u32 %v8418, 7
        %v8420 = vsub.s32 %v8417, %v8419
        %v8421 = vrot.slane %v8413, %v8420
        %v8423 = vunpack.c.l.s4 1934713408
        %v8424 = vunpack.c.0.s8 %v8423
        %v8425 = vlaneseq
        %v8426 = vshrl.u32 %v8425, 7
        %v8427 = vsub.s32 %v8424, %v8426
        %v8428 = vrot.slane %v8414, %v8427
        %v8429 = vcombine.low %v8396, %v8412
        %v8430 = vcombine.high %v8396, %v8412
        %v8432 = vunpack.c.l.s4 1934713408
        %v8433 = vunpack.c.0.s8 %v8432
        %v8434 = vlaneseq
        %v8435 = vshrl.u32 %v8434, 7
        %v8436 = vsub.s32 %v8433, %v8435
        %v8437 = vrot.slane %v8429, %v8436
        %v8439 = vunpack.c.l.s4 1934713408
        %v8440 = vunpack.c.0.s8 %v8439
        %v8441 = vlaneseq
        %v8442 = vshrl.u32 %v8441, 7
        %v8443 = vsub.s32 %v8440, %v8442
        %v8444 = vrot.slane %v8430, %v8443
        %v8445 = vcombine.high %v8421, 0.0
        %v8446 = vcombine.high %v8428, 0.0
        %v8447 = vcombine.high %v8437, 0.0
        %v8448 = vcombine.high %v8444, 0.0
        %8454 = vrot.lane.b32.xlu0 %v7354, 16
        %v8455 = vpop.permute.xlu0 %8454
        %8456 = vrot.lane.b32.xlu0 %v7490, 16
        %v8457 = vpop.permute.xlu0 %8456
        %8458 = vrot.lane.b32.xlu0 %v7626, 16
        %v8459 = vpop.permute.xlu0 %8458
        %8460 = vrot.lane.b32.xlu0 %v7762, 16
        %v8461 = vpop.permute.xlu0 %8460
        %8462 = vrot.lane.b32.xlu0 %v7833, 16
        %v8463 = vpop.permute.xlu0 %8462
        %8474 = vrot.lane.b32.xlu0 %v7355, 32
        %v8475 = vpop.permute.xlu0 %8474
        %8476 = vrot.lane.b32.xlu0 %v7491, 32
        %v8477 = vpop.permute.xlu0 %8476
        %8478 = vrot.lane.b32.xlu0 %v7627, 32
        %v8479 = vpop.permute.xlu0 %8478
        %8480 = vrot.lane.b32.xlu0 %v7763, 32
        %v8481 = vpop.permute.xlu0 %8480
        %8482 = vrot.lane.b32.xlu0 %v7816, 32
        %v8483 = vpop.permute.xlu0 %8482
        %8494 = vrot.lane.b32.xlu0 %v7356, 48
        %v8495 = vpop.permute.xlu0 %8494
        %8496 = vrot.lane.b32.xlu0 %v7492, 48
        %v8497 = vpop.permute.xlu0 %8496
        %8498 = vrot.lane.b32.xlu0 %v7628, 48
        %v8499 = vpop.permute.xlu0 %8498
        %8500 = vrot.lane.b32.xlu0 %v7764, 48
        %v8501 = vpop.permute.xlu0 %8500
        %8502 = vrot.lane.b32.xlu0 %v7834, 48
        %v8503 = vpop.permute.xlu0 %8502
        %8514 = vrot.lane.b32.xlu0 %v7357, 64
        %v8515 = vpop.permute.xlu0 %8514
        %8516 = vrot.lane.b32.xlu0 %v7493, 64
        %v8517 = vpop.permute.xlu0 %8516
        %8518 = vrot.lane.b32.xlu0 %v7629, 64
        %v8519 = vpop.permute.xlu0 %8518
        %8520 = vrot.lane.b32.xlu0 %v7765, 64
        %v8521 = vpop.permute.xlu0 %8520
        %8522 = vrot.lane.b32.xlu0 %v7825, 64
        %v8523 = vpop.permute.xlu0 %8522
        %8534 = vrot.lane.b32.xlu0 %v7358, 80
        %v8535 = vpop.permute.xlu0 %8534
        %8536 = vrot.lane.b32.xlu0 %v7494, 80
        %v8537 = vpop.permute.xlu0 %8536
        %8538 = vrot.lane.b32.xlu0 %v7630, 80
        %v8539 = vpop.permute.xlu0 %8538
        %8540 = vrot.lane.b32.xlu0 %v7766, 80
        %v8541 = vpop.permute.xlu0 %8540
        %8542 = vrot.lane.b32.xlu0 %v7835, 80
        %v8543 = vpop.permute.xlu0 %8542
        %8554 = vrot.lane.b32.xlu0 %v7359, 96
        %v8555 = vpop.permute.xlu0 %8554
        %8556 = vrot.lane.b32.xlu0 %v7495, 96
        %v8557 = vpop.permute.xlu0 %8556
        %8558 = vrot.lane.b32.xlu0 %v7631, 96
        %v8559 = vpop.permute.xlu0 %8558
        %8560 = vrot.lane.b32.xlu0 %v7767, 96
        %v8561 = vpop.permute.xlu0 %8560
        %8562 = vrot.lane.b32.xlu0 %v7832, 96
        %v8563 = vpop.permute.xlu0 %8562
        %8574 = vrot.lane.b32.xlu0 %v7360, 112
        %v8575 = vpop.permute.xlu0 %8574
        %8576 = vrot.lane.b32.xlu0 %v7496, 112
        %v8577 = vpop.permute.xlu0 %8576
        %8578 = vrot.lane.b32.xlu0 %v7632, 112
        %v8579 = vpop.permute.xlu0 %8578
        %8580 = vrot.lane.b32.xlu0 %v7768, 112
        %v8581 = vpop.permute.xlu0 %8580
        %8582 = vrot.lane.b32.xlu0 %v7836, 112
        %v8583 = vpop.permute.xlu0 %8582
        %8594 = vrot.lane.b32.xlu0 %v7966, 16
        %v8595 = vpop.permute.xlu0 %8594
        %8596 = vrot.lane.b32.xlu0 %v8102, 16
        %v8597 = vpop.permute.xlu0 %8596
        %8598 = vrot.lane.b32.xlu0 %v8238, 16
        %v8599 = vpop.permute.xlu0 %8598
        %8600 = vrot.lane.b32.xlu0 %v8374, 16
        %v8601 = vpop.permute.xlu0 %8600
        %8602 = vrot.lane.b32.xlu0 %v8445, 16
        %v8603 = vpop.permute.xlu0 %8602
        %8614 = vrot.lane.b32.xlu0 %v7967, 32
        %v8615 = vpop.permute.xlu0 %8614
        %8616 = vrot.lane.b32.xlu0 %v8103, 32
        %v8617 = vpop.permute.xlu0 %8616
        %8618 = vrot.lane.b32.xlu0 %v8239, 32
        %v8619 = vpop.permute.xlu0 %8618
        %8620 = vrot.lane.b32.xlu0 %v8375, 32
        %v8621 = vpop.permute.xlu0 %8620
        %8622 = vrot.lane.b32.xlu0 %v8428, 32
        %v8623 = vpop.permute.xlu0 %8622
        %8634 = vrot.lane.b32.xlu0 %v7968, 48
        %v8635 = vpop.permute.xlu0 %8634
        %8636 = vrot.lane.b32.xlu0 %v8104, 48
        %v8637 = vpop.permute.xlu0 %8636
        %8638 = vrot.lane.b32.xlu0 %v8240, 48
        %v8639 = vpop.permute.xlu0 %8638
        %8640 = vrot.lane.b32.xlu0 %v8376, 48
        %v8641 = vpop.permute.xlu0 %8640
        %8642 = vrot.lane.b32.xlu0 %v8446, 48
        %v8643 = vpop.permute.xlu0 %8642
        %8654 = vrot.lane.b32.xlu0 %v7969, 64
        %v8655 = vpop.permute.xlu0 %8654
        %8656 = vrot.lane.b32.xlu0 %v8105, 64
        %v8657 = vpop.permute.xlu0 %8656
        %8658 = vrot.lane.b32.xlu0 %v8241, 64
        %v8659 = vpop.permute.xlu0 %8658
        %8660 = vrot.lane.b32.xlu0 %v8377, 64
        %v8661 = vpop.permute.xlu0 %8660
        %8662 = vrot.lane.b32.xlu0 %v8437, 64
        %v8663 = vpop.permute.xlu0 %8662
        %8674 = vrot.lane.b32.xlu0 %v7970, 80
        %v8675 = vpop.permute.xlu0 %8674
        %8676 = vrot.lane.b32.xlu0 %v8106, 80
        %v8677 = vpop.permute.xlu0 %8676
        %8678 = vrot.lane.b32.xlu0 %v8242, 80
        %v8679 = vpop.permute.xlu0 %8678
        %8680 = vrot.lane.b32.xlu0 %v8378, 80
        %v8681 = vpop.permute.xlu0 %8680
        %8682 = vrot.lane.b32.xlu0 %v8447, 80
        %v8683 = vpop.permute.xlu0 %8682
        %8694 = vrot.lane.b32.xlu0 %v7971, 96
        %v8695 = vpop.permute.xlu0 %8694
        %8696 = vrot.lane.b32.xlu0 %v8107, 96
        %v8697 = vpop.permute.xlu0 %8696
        %8698 = vrot.lane.b32.xlu0 %v8243, 96
        %v8699 = vpop.permute.xlu0 %8698
        %8700 = vrot.lane.b32.xlu0 %v8379, 96
        %v8701 = vpop.permute.xlu0 %8700
        %8702 = vrot.lane.b32.xlu0 %v8444, 96
        %v8703 = vpop.permute.xlu0 %8702
        %8714 = vrot.lane.b32.xlu0 %v7972, 112
        %v8715 = vpop.permute.xlu0 %8714
        %8716 = vrot.lane.b32.xlu0 %v8108, 112
        %v8717 = vpop.permute.xlu0 %8716
        %8718 = vrot.lane.b32.xlu0 %v8244, 112
        %v8719 = vpop.permute.xlu0 %8718
        %8720 = vrot.lane.b32.xlu0 %v8380, 112
        %v8721 = vpop.permute.xlu0 %8720
        %8722 = vrot.lane.b32.xlu0 %v8448, 112
        %v8723 = vpop.permute.xlu0 %8722
        %v8729 = vsel %vm4354, %v7353, %v8455
        %v8730 = vsel %vm4354, %v7489, %v8457
        %v8731 = vsel %vm4354, %v7625, %v8459
        %v8732 = vsel %vm4354, %v7761, %v8461
        %v8733 = vsel %vm4354, %v7809, %v8463
        %v8734 = vsel %vm4364, %v8729, %v8475
        %v8735 = vsel %vm4364, %v8730, %v8477
        %v8736 = vsel %vm4364, %v8731, %v8479
        %v8737 = vsel %vm4364, %v8732, %v8481
        %v8738 = vsel %vm4364, %v8733, %v8483
        %v8739 = vsel %vm4374, %v8734, %v8495
        %v8740 = vsel %vm4374, %v8735, %v8497
        %v8741 = vsel %vm4374, %v8736, %v8499
        %v8742 = vsel %vm4374, %v8737, %v8501
        %v8743 = vsel %vm4374, %v8738, %v8503
        %v8744 = vsel %vm4384, %v8739, %v8515
        %v8745 = vsel %vm4384, %v8740, %v8517
        %v8746 = vsel %vm4384, %v8741, %v8519
        %v8747 = vsel %vm4384, %v8742, %v8521
        %v8748 = vsel %vm4384, %v8743, %v8523
        %v8749 = vsel %vm4394, %v8744, %v8535
        %v8750 = vsel %vm4394, %v8745, %v8537
        %v8751 = vsel %vm4394, %v8746, %v8539
        %v8752 = vsel %vm4394, %v8747, %v8541
        %v8753 = vsel %vm4394, %v8748, %v8543
        %v8754 = vsel %vm4404, %v8749, %v8555
        %v8755 = vsel %vm4404, %v8750, %v8557
        %v8756 = vsel %vm4404, %v8751, %v8559
        %v8757 = vsel %vm4404, %v8752, %v8561
        %v8758 = vsel %vm4404, %v8753, %v8563
        %v8759 = vsel %vm4414, %v8754, %v8575
        %v8760 = vsel %vm4414, %v8755, %v8577
        %v8761 = vsel %vm4414, %v8756, %v8579
        %v8762 = vsel %vm4414, %v8757, %v8581
        %v8763 = vsel %vm4414, %v8758, %v8583
        %v8764 = vsel %vm4354, %v7965, %v8595
        %v8765 = vsel %vm4354, %v8101, %v8597
        %v8766 = vsel %vm4354, %v8237, %v8599
        %v8767 = vsel %vm4354, %v8373, %v8601
        %v8768 = vsel %vm4354, %v8421, %v8603
        %v8769 = vsel %vm4364, %v8764, %v8615
        %v8770 = vsel %vm4364, %v8765, %v8617
        %v8771 = vsel %vm4364, %v8766, %v8619
        %v8772 = vsel %vm4364, %v8767, %v8621
        %v8773 = vsel %vm4364, %v8768, %v8623
        %v8774 = vsel %vm4374, %v8769, %v8635
        %v8775 = vsel %vm4374, %v8770, %v8637
        %v8776 = vsel %vm4374, %v8771, %v8639
        %v8777 = vsel %vm4374, %v8772, %v8641
        %v8778 = vsel %vm4374, %v8773, %v8643
        %v8779 = vsel %vm4384, %v8774, %v8655
        %v8780 = vsel %vm4384, %v8775, %v8657
        %v8781 = vsel %vm4384, %v8776, %v8659
        %v8782 = vsel %vm4384, %v8777, %v8661
        %v8783 = vsel %vm4384, %v8778, %v8663
        %v8784 = vsel %vm4394, %v8779, %v8675
        %v8785 = vsel %vm4394, %v8780, %v8677
        %v8786 = vsel %vm4394, %v8781, %v8679
        %v8787 = vsel %vm4394, %v8782, %v8681
        %v8788 = vsel %vm4394, %v8783, %v8683
        %v8789 = vsel %vm4404, %v8784, %v8695
        %v8790 = vsel %vm4404, %v8785, %v8697
        %v8791 = vsel %vm4404, %v8786, %v8699
        %v8792 = vsel %vm4404, %v8787, %v8701
        %v8793 = vsel %vm4404, %v8788, %v8703
        %v8794 = vsel %vm4414, %v8789, %v8715
        %v8795 = vsel %vm4414, %v8790, %v8717
        %v8796 = vsel %vm4414, %v8791, %v8719
        %v8797 = vsel %vm4414, %v8792, %v8721
        %v8798 = vsel %vm4414, %v8793, %v8723
        %8799 = vset.pattern.permute.xlu0 2
        %8800 = vperm.xlu0 %8799, %v763
        %v8801 = vpop.permute.xlu0 %8800
        %v8804 = vsel %vm6644, %v6908, 0
        %v8807 = vsel %vm6648, %v8763, 0
        %v8810 = vsel %vm6648, %v8798, 0
        %8812 = vmatprep.subr.mxu0 0.0
        %8813 = vmatpush1.msra.mxu0 0.0
        %8814 = vmatprep.subr.mxu0 0.0
        %8815 = vmatpush1.msra.mxu0 0.0
        %8816 = vmatprep.subr.mxu0 0.0
        %8817 = vmatpush1.msra.mxu0 0.0
        %8818 = vmatprep.subr.mxu0 0.0
        %8819 = vmatpush1.msra.mxu0 0.0
        %8820 = vmatprep.subr.mxu0 0.0
        %8821 = vmatpush1.msra.mxu0 0.0
        %8822 = vmatprep.subr.mxu0 0.0
        %8823 = vmatpush1.msra.mxu0 0.0
        %8824 = vmatprep.subr.mxu0 0.0
        %8825 = vmatpush1.msra.mxu0 0.0
        %8826 = vmatprep.subr.mxu0 0.0
        %8827 = vmatpush1.msra.mxu0 0.0
        %8828 = vmatprep.subr.mxu0 0.0
        %8829 = vmatpush1.msra.mxu0 0.0
        %8830 = vmatprep.subr.mxu0 0.0
        %8831 = vmatpush1.msra.mxu0 0.0
        %8832 = vmatprep.subr.mxu0 0.0
        %8833 = vmatpush1.msra.mxu0 0.0
        %8834 = vmatprep.subr.mxu0 %v8810
        %8835 = vmatpush1.msra.mxu0 %v8807
        %8836 = vmatprep.subr.mxu0 %v8797
        %8837 = vmatpush1.msra.mxu0 %v8762
        %8838 = vmatprep.subr.mxu0 %v8796
        %8839 = vmatpush1.msra.mxu0 %v8761
        %8840 = vmatprep.subr.mxu0 %v8795
        %8841 = vmatpush1.msra.mxu0 %v8760
        %8842 = vmatprep.subr.mxu0 %v8794
        %8843 = vmatpush1.msra.mxu0 %v8759
        %8844 = vmatprep.subr.mxu0 0.0
        %8845 = vmatpush2.msra.mxu0 0.0
        %8846 = vmatprep.subr.mxu0 0.0
        %8847 = vmatpush2.msra.mxu0 0.0
        %8848 = vmatprep.subr.mxu0 0.0
        %8849 = vmatpush2.msra.mxu0 0.0
        %8850 = vmatprep.subr.mxu0 0.0
        %8851 = vmatpush2.msra.mxu0 0.0
        %8852 = vmatprep.subr.mxu0 0.0
        %8853 = vmatpush2.msra.mxu0 0.0
        %8854 = vmatprep.subr.mxu0 0.0
        %8855 = vmatpush2.msra.mxu0 0.0
        %8856 = vmatprep.subr.mxu0 0.0
        %8857 = vmatpush2.msra.mxu0 0.0
        %8858 = vmatprep.subr.mxu0 0.0
        %8859 = vmatpush2.msra.mxu0 0.0
        %8860 = vmatprep.subr.mxu0 0.0
        %8861 = vmatpush2.msra.mxu0 0.0
        %8862 = vmatprep.subr.mxu0 0.0
        %8863 = vmatpush2.msra.mxu0 0.0
        %8864 = vmatprep.subr.mxu0 0.0
        %8865 = vmatpush2.msra.mxu0 0.0
        %8866 = vmatprep.subr.mxu0 0.0
        %8867 = vmatpush2.msra.mxu0 0.0
        %8868 = vmatprep.subr.mxu0 0.0
        %8869 = vmatpush2.msra.mxu0 0.0
        %8870 = vmatprep.subr.mxu0 0.0
        %8871 = vmatpush2.msra.mxu0 0.0
        %8872 = vmatprep.subr.mxu0 0.0
        %8873 = vmatpush2.msra.mxu0 0.0
        %8874 = vmatprep.subr.mxu0 0.0
        %8875 = vmatpush2.msra.mxu0 0.0
        %8876 = vmatprep.mubr.f32.mxu0 0.0
        %8877 = vmatmul.mubr.f32.gmra.mxu0 %v8804
        %v8878 = vpop.f32.mrf.mxu0
        %v8879 = vadd.f32 %v8801, %v8878
        %v8880 = vpop.f32.mrf.mxu0
        %v8881 = vadd.f32 %v8801, %v8880
        %8882 = vdwg.mxu0
        %v8883 = vmax.f32 %v8879, 0.0
        %v8884 = vmax.f32 %v8881, 0.0
        %v8887 = vcombine.low %v8883, %v8884
        %8889 = vst [vmem:[%s338] sm:$0xff] %v8887
        %s8890 = sand.u32 %s211, 1
        %s8891 = scalar_lea.sflag [#allocation4], %s8890
        %s8892 = sand.u32 %s211, 1
        %s8893 = smul.addr %s8892, 8
        %s8894 = scalar_lea.vmem [#allocation5], %s8893
        // Predicated region
        $region57: #{tpu_custom_call.1} parent=51 // pred_check
          %p8895 = pneg %p221
        $region58: #{tpu_custom_call.1} parent=51 // pred_check_branch
          %8897 = sbr.rel (%p8895) target = $region60
        $region59: #{tpu_custom_call.1} parent=51 // pred_region
          %s8899 = ssub.s32 128, 128
          %8900 = vsyncadd %s8891, %s8899
          %s8901 = smul.addr %s25, 2
          %s8902 = smul.addr %s8901, 64
          %s8903 = scalar_lea.hbm %s8, %s8902
          %s8905 = sshll.u32 %s8894, 4
          %s8906 = int_to_ptr.vmem [resolvable:$true] %s8905
          %8908 = dma.vmem_to_hbm [thread:$0]  %s8906, 128, %s8903, %s8891
        $region60: #{tpu_custom_call.1} parent=51 // pred_fallthru
          _
      $region52: #{tpu_custom_call.1} parent=5 // pred_fallthru
        _
      %p8909 = scmp.le.s32.totalorder 2, %s20
      // Predicated region
      $region61: #{tpu_custom_call.1} parent=5 // pred_check
        %p8910 = pneg %p8909
      $region62: #{tpu_custom_call.1} parent=5 // pred_check_branch
        %8912 = sbr.rel (%p8910) target = $region64
      $region63: #{tpu_custom_call.1} parent=5 // pred_region
        %s8913 = ssub.s32 %s20, 2
        // Predicated region
        $region65: #{tpu_custom_call.1} parent=63 // pred_check
          %p8914 = pneg %p227
        $region66: #{tpu_custom_call.1} parent=63 // pred_check_branch
          %8916 = sbr.rel (%p8914) target = $region68
        $region67: #{tpu_custom_call.1} parent=63 // pred_region
          %s8917 = sand.u32 %s212, 1
          %s8918 = scalar_lea.sflag [#allocation4], %s8917
          %s8919 = sand.u32 %s212, 1
          %s8920 = smul.addr %s8919, 8
          %s8921 = scalar_lea.vmem [#allocation5], %s8920
          %8922 = dma.done %s8918, 128
        $region68: #{tpu_custom_call.1} parent=63 // pred_fallthru
          _
      $region64: #{tpu_custom_call.1} parent=5 // pred_fallthru
        _
    $region6: #{tpu_custom_call.1} parent=1 // loop_footer
      %s24 = sadd.s32 1, %s20
    $region7: #{tpu_custom_call.1} parent=1 // loop_footer_branch
      %19 = sbr.rel target = $region3
    $region8: #{tpu_custom_call.1} parent=1 // loop_exit
      _
    %8923 = vsyncpa [#allocation3], 1
    %s8924 = scalar_lea.sflag [#allocation3], 1
    %8925 = vsyncpa %s8924, 1
    %8926 = vsyncpa [#allocation4], 1
    %s8927 = scalar_lea.sflag [#allocation4], 1
    %8928 = vsyncpa %s8927, 1

</llo_original>
